<compile_context>
chip_gen: v7x
topology: tpu7x:2x2x1
jax: 0.10.0
libtpu: 0.0.40
codegen_flags: <defaults>
</compile_context>

<pallas_src>
import jax
import jax.numpy as jnp
from jax.experimental import pallas as pl
from jax.experimental.pallas import tpu as pltpu

EPS = 1e-5
NEG_SLOPE = 0.2


# ------------------------------ fused kernel ------------------------------- #

def _encoder_block_kernel(x_ref, w1_ref, b1_ref, g1_ref, bt1_ref,
                          w2_ref, b2_ref, g2_ref, bt2_ref, o_ref):
    """x_ref: (B,H,W,Cin) f32; w*: (9*Cin|9*Cout, Cout) bf16; b/g/bt: (1,Cout) f32.
    o_ref: (B, H//2, W//2, Cout) f32."""
    B, H, W, _ = x_ref.shape
    Cout = o_ref.shape[-1]

    def pad_hw1(t):
        """Zero-pad H and W by 1 on each side (value-level, stays in VMEM)."""
        Bv, Hv, Wv, Cv = t.shape
        zr = jnp.zeros((Bv, 1, Wv, Cv), t.dtype)
        t = jnp.concatenate([zr, t, zr], axis=1)
        zc = jnp.zeros((Bv, Hv + 2, 1, Cv), t.dtype)
        return jnp.concatenate([zc, t, zc], axis=2)

    def conv_bn_lrelu(x_nhwc, w_ref, b_ref, g_ref, bt_ref):
        """3x3 'same' conv + BatchNorm(batch stats) + LeakyReLU(0.2).
        Returns (B*H*W, Cout) float32."""
        C = x_nhwc.shape[-1]
        xp = pad_hw1(x_nhwc)                                    # (B, H+2, W+2, C)
        # In-VMEM im2col: 9 shifted views, concatenated on the lane axis.
        taps = [xp[:, dy:dy + H, dx:dx + W, :].reshape(B * H * W, C)
                for dy in range(3) for dx in range(3)]
        patches = jnp.concatenate(taps, axis=1)                 # (B*H*W, 9*C) bf16
        y = jnp.dot(patches, w_ref[...],                        # bf16 x bf16 -> f32
                    preferred_element_type=jnp.float32)
        y = y + b_ref[...]                                      # conv bias
        mean = jnp.mean(y, axis=0, keepdims=True)               # per-channel stats
        var = jnp.mean((y - mean) ** 2, axis=0, keepdims=True)  # biased variance
        y = (y - mean) * jax.lax.rsqrt(var + EPS) * g_ref[...] + bt_ref[...]
        return jnp.where(y > 0, y, NEG_SLOPE * y)

    x = x_ref[...].astype(jnp.bfloat16)
    y1 = conv_bn_lrelu(x, w1_ref, b1_ref, g1_ref, bt1_ref)      # (B*H*W, Cout) f32
    y1 = y1.reshape(B, H, W, Cout).astype(jnp.bfloat16)
    y2 = conv_bn_lrelu(y1, w2_ref, b2_ref, g2_ref, bt2_ref)     # (B*H*W, Cout) f32

    # MaxPool2d(kernel=2, stride=2) fused in the epilogue.
    y2 = y2.reshape(B * H * (W // 2), 2, Cout)
    y2 = jnp.max(y2, axis=1)                                    # horizontal pairs
    y2 = y2.reshape(B, H // 2, 2, W // 2, Cout)
    y2 = jnp.max(y2, axis=2)                                    # vertical pairs
    o_ref[...] = y2.astype(o_ref.dtype)


# ------------------------------- wrappers ----------------------------------- #

def encoder_block_nhwc(x_nhwc, p):
    B, H, W, _ = x_nhwc.shape
    Cout = p["w2"].shape[1]
    vmem = pl.BlockSpec(memory_space=pltpu.MemorySpace.VMEM)
    return pl.pallas_call(
        _encoder_block_kernel,
        out_shape=jax.ShapeDtypeStruct((B, H // 2, W // 2, Cout), jnp.float32),
        in_specs=[vmem] * 9,
        out_specs=vmem,
    )(x_nhwc, p["w1"], p["b1"], p["g1"], p["bt1"],
      p["w2"], p["b2"], p["g2"], p["bt2"])


def encoder_block_forward(x_nchw, p):
    """PyTorch-layout forward: (B, Cin, H, W) -> (B, Cout, H//2, W//2)."""
    x_nhwc = jnp.transpose(x_nchw, (0, 2, 3, 1))
    y = encoder_block_nhwc(x_nhwc, p)
    return jnp.transpose(y, (0, 3, 1, 2))


# ------------------------------ parameters ---------------------------------- #

def make_params(key, in_channels, out_channels):
    ks = jax.random.split(key, 2)

    def conv_p(k, cin, cout, prefix):
        kw, kb, kg, kbt = jax.random.split(k, 4)
        w = jax.random.normal(kw, (3, 3, cin, cout), jnp.float32) / jnp.sqrt(9.0 * cin)
        return {
            # rows ordered (dy, dx, ci) — matches the in-kernel im2col tap order
            prefix + "w": w.reshape(9 * cin, cout).astype(jnp.bfloat16),
            prefix + "b": 0.1 * jax.random.normal(kb, (1, cout), jnp.float32),
            prefix + "g": 1.0 + 0.1 * jax.random.normal(kg, (1, cout), jnp.float32),
            prefix + "bt": 0.1 * jax.random.normal(kbt, (1, cout), jnp.float32),
        }

    p = {}
    c1 = conv_p(ks[0], in_channels, out_channels, "")
    p.update(w1=c1["w"], b1=c1["b"], g1=c1["g"], bt1=c1["bt"])
    c2 = conv_p(ks[1], out_channels, out_channels, "")
    p.update(w2=c2["w"], b2=c2["b"], g2=c2["g"], bt2=c2["bt"])
    return p


# ------------------------------ reference ----------------------------------- #

def _reference_forward(x_nchw, p):
    """Pure-JAX f32 reference (same quantized bf16 weights, f32 activations)."""
    def conv_bn_lrelu(x, w, b, g, bt):
        B, H, W, C = x.shape
        cout = w.shape[1]
        xp = jnp.pad(x, ((0, 0), (1, 1), (1, 1), (0, 0)))
        cols = [xp[:, dy:dy + H, dx:dx + W, :] for dy in range(3) for dx in range(3)]
        pat = jnp.concatenate(cols, axis=-1).reshape(B * H * W, 9 * C)
        y = pat @ w.astype(jnp.float32) + b
        mean = y.mean(0, keepdims=True)
        var = ((y - mean) ** 2).mean(0, keepdims=True)
        y = (y - mean) * jax.lax.rsqrt(var + EPS) * g + bt
        y = jnp.where(y > 0, y, NEG_SLOPE * y)
        return y.reshape(B, H, W, cout)

    h = jnp.transpose(x_nchw, (0, 2, 3, 1))
    h = conv_bn_lrelu(h, p["w1"], p["b1"], p["g1"], p["bt1"])
    h = conv_bn_lrelu(h, p["w2"], p["b2"], p["g2"], p["bt2"])
    B, H, W, C = h.shape
    h = h.reshape(B, H // 2, 2, W // 2, 2, C).max(axis=(2, 4))
    return jnp.transpose(h, (0, 3, 1, 2))


# TODO(synk): BatchNorm running-stat (running_mean/var) buffer updates — a
# training-mode side effect — are not reproduced; they do not affect the output.

if __name__ == "__main__":
    B, CIN, COUT, S = 2, 4, 64, 16
    kx, kp = jax.random.split(jax.random.PRNGKey(0))
    x = jax.random.normal(kx, (B, CIN, S, S), jnp.float32)
    params = make_params(kp, CIN, COUT)

    out = jax.block_until_ready(jax.jit(encoder_block_forward)(x, params))

    assert out.shape == (B, COUT, S // 2, S // 2), out.shape
    assert bool(jnp.all(jnp.isfinite(out)))

    ref = _reference_forward(x, params)
    max_err = float(jnp.max(jnp.abs(out - ref)))
    assert max_err < 0.1, f"max abs error vs f32 reference: {max_err}"

    print("KERNEL_OK")
</pallas_src>

<mosaic_0001>
module attributes {stable_mosaic.version = 11 : i64} {
  func.func @_encoder_block_kernel(%arg0: memref<2x16x16x4xf32, #tpu.memory_space<vmem>>, %arg1: memref<36x64xbf16, #tpu.memory_space<vmem>>, %arg2: memref<1x64xf32, #tpu.memory_space<vmem>>, %arg3: memref<1x64xf32, #tpu.memory_space<vmem>>, %arg4: memref<1x64xf32, #tpu.memory_space<vmem>>, %arg5: memref<576x64xbf16, #tpu.memory_space<vmem>>, %arg6: memref<1x64xf32, #tpu.memory_space<vmem>>, %arg7: memref<1x64xf32, #tpu.memory_space<vmem>>, %arg8: memref<1x64xf32, #tpu.memory_space<vmem>>, %arg9: memref<2x8x8x64xf32, #tpu.memory_space<vmem>>) attributes {dimension_semantics = [], scalar_prefetch = 0 : i64, scratch_operands = 0 : i64, tpu.core_type = #tpu.core_type<tc>} {
    %c0 = arith.constant 0 : index
    %c0_0 = arith.constant 0 : index
    %c0_1 = arith.constant 0 : index
    %c0_2 = arith.constant 0 : index
    %0 = vector.load %arg0[%c0, %c0_0, %c0_1, %c0_2] : memref<2x16x16x4xf32, #tpu.memory_space<vmem>>, vector<2x16x16x4xf32>
    %1 = arith.truncf %0 : vector<2x16x16x4xf32> to vector<2x16x16x4xbf16>
    %cst = arith.constant 0.000000e+00 : bf16
    %2 = vector.broadcast %cst : bf16 to vector<2x1x16x4xbf16>
    %3 = tpu.concatenate %2, %1, %2 in 1 : vector<2x1x16x4xbf16>, vector<2x16x16x4xbf16>, vector<2x1x16x4xbf16> -> vector<2x18x16x4xbf16>
    %cst_3 = arith.constant 0.000000e+00 : bf16
    %4 = vector.broadcast %cst_3 : bf16 to vector<2x18x1x4xbf16>
    %5 = tpu.concatenate %4, %3, %4 in 2 : vector<2x18x1x4xbf16>, vector<2x18x16x4xbf16>, vector<2x18x1x4xbf16> -> vector<2x18x18x4xbf16>
    %6 = vector.extract_strided_slice %5 {offsets = [0, 0, 0, 0], sizes = [2, 16, 16, 4], strides = [1, 1, 1, 1]} : vector<2x18x18x4xbf16> to vector<2x16x16x4xbf16>
    %7 = vector.shape_cast %6 : vector<2x16x16x4xbf16> to vector<512x4xbf16>
    %8 = vector.extract_strided_slice %5 {offsets = [0, 0, 1, 0], sizes = [2, 16, 16, 4], strides = [1, 1, 1, 1]} : vector<2x18x18x4xbf16> to vector<2x16x16x4xbf16>
    %9 = vector.shape_cast %8 : vector<2x16x16x4xbf16> to vector<512x4xbf16>
    %10 = vector.extract_strided_slice %5 {offsets = [0, 0, 2, 0], sizes = [2, 16, 16, 4], strides = [1, 1, 1, 1]} : vector<2x18x18x4xbf16> to vector<2x16x16x4xbf16>
    %11 = vector.shape_cast %10 : vector<2x16x16x4xbf16> to vector<512x4xbf16>
    %12 = vector.extract_strided_slice %5 {offsets = [0, 1, 0, 0], sizes = [2, 16, 16, 4], strides = [1, 1, 1, 1]} : vector<2x18x18x4xbf16> to vector<2x16x16x4xbf16>
    %13 = vector.shape_cast %12 : vector<2x16x16x4xbf16> to vector<512x4xbf16>
    %14 = vector.extract_strided_slice %5 {offsets = [0, 1, 1, 0], sizes = [2, 16, 16, 4], strides = [1, 1, 1, 1]} : vector<2x18x18x4xbf16> to vector<2x16x16x4xbf16>
    %15 = vector.shape_cast %14 : vector<2x16x16x4xbf16> to vector<512x4xbf16>
    %16 = vector.extract_strided_slice %5 {offsets = [0, 1, 2, 0], sizes = [2, 16, 16, 4], strides = [1, 1, 1, 1]} : vector<2x18x18x4xbf16> to vector<2x16x16x4xbf16>
    %17 = vector.shape_cast %16 : vector<2x16x16x4xbf16> to vector<512x4xbf16>
    %18 = vector.extract_strided_slice %5 {offsets = [0, 2, 0, 0], sizes = [2, 16, 16, 4], strides = [1, 1, 1, 1]} : vector<2x18x18x4xbf16> to vector<2x16x16x4xbf16>
    %19 = vector.shape_cast %18 : vector<2x16x16x4xbf16> to vector<512x4xbf16>
    %20 = vector.extract_strided_slice %5 {offsets = [0, 2, 1, 0], sizes = [2, 16, 16, 4], strides = [1, 1, 1, 1]} : vector<2x18x18x4xbf16> to vector<2x16x16x4xbf16>
    %21 = vector.shape_cast %20 : vector<2x16x16x4xbf16> to vector<512x4xbf16>
    %22 = vector.extract_strided_slice %5 {offsets = [0, 2, 2, 0], sizes = [2, 16, 16, 4], strides = [1, 1, 1, 1]} : vector<2x18x18x4xbf16> to vector<2x16x16x4xbf16>
    %23 = vector.shape_cast %22 : vector<2x16x16x4xbf16> to vector<512x4xbf16>
    %24 = tpu.concatenate %7, %9, %11, %13, %15, %17, %19, %21, %23 in 1 : vector<512x4xbf16>, vector<512x4xbf16>, vector<512x4xbf16>, vector<512x4xbf16>, vector<512x4xbf16>, vector<512x4xbf16>, vector<512x4xbf16>, vector<512x4xbf16>, vector<512x4xbf16> -> vector<512x36xbf16>
    %c0_4 = arith.constant 0 : index
    %c0_5 = arith.constant 0 : index
    %25 = vector.load %arg1[%c0_4, %c0_5] : memref<36x64xbf16, #tpu.memory_space<vmem>>, vector<36x64xbf16>
    %cst_6 = arith.constant dense<0.000000e+00> : vector<512x64xf32>
    %26 = tpu.matmul %24, %25, %cst_6 {dimension_numbers = #tpu.dot_dimension_numbers<[1], [0], [0], [1], [0, 0, 1, 1], [], []>} : vector<512x36xbf16>, vector<36x64xbf16>, vector<512x64xf32> -> vector<512x64xf32>
    %c0_7 = arith.constant 0 : index
    %c0_8 = arith.constant 0 : index
    %27 = vector.load %arg2[%c0_7, %c0_8] : memref<1x64xf32, #tpu.memory_space<vmem>>, vector<1x64xf32>
    %28 = vector.broadcast %27 : vector<1x64xf32> to vector<512x64xf32>
    %29 = arith.addf %26, %28 : vector<512x64xf32>
    %cst_9 = arith.constant dense<0.000000e+00> : vector<64xf32>
    %30 = vector.multi_reduction <add>, %29, %cst_9 [0] : vector<512x64xf32> to vector<64xf32>
    %31 = vector.shape_cast %30 : vector<64xf32> to vector<1x64xf32>
    %cst_10 = arith.constant 5.120000e+02 : f32
    %32 = vector.broadcast %cst_10 : f32 to vector<1x64xf32>
    %33 = arith.divf %31, %32 : vector<1x64xf32>
    %34 = vector.broadcast %33 : vector<1x64xf32> to vector<512x64xf32>
    %35 = arith.subf %29, %34 : vector<512x64xf32>
    %36 = arith.mulf %35, %35 : vector<512x64xf32>
    %cst_11 = arith.constant dense<0.000000e+00> : vector<64xf32>
    %37 = vector.multi_reduction <add>, %36, %cst_11 [0] : vector<512x64xf32> to vector<64xf32>
    %38 = vector.shape_cast %37 : vector<64xf32> to vector<1x64xf32>
    %cst_12 = arith.constant 5.120000e+02 : f32
    %39 = vector.broadcast %cst_12 : f32 to vector<1x64xf32>
    %40 = arith.divf %38, %39 : vector<1x64xf32>
    %41 = vector.broadcast %33 : vector<1x64xf32> to vector<512x64xf32>
    %42 = arith.subf %29, %41 : vector<512x64xf32>
    %cst_13 = arith.constant 9.99999974E-6 : f32
    %43 = vector.broadcast %cst_13 : f32 to vector<1x64xf32>
    %44 = arith.addf %40, %43 : vector<1x64xf32>
    %45 = math.rsqrt %44 : vector<1x64xf32>
    %46 = vector.broadcast %45 : vector<1x64xf32> to vector<512x64xf32>
    %47 = arith.mulf %42, %46 : vector<512x64xf32>
    %c0_14 = arith.constant 0 : index
    %c0_15 = arith.constant 0 : index
    %48 = vector.load %arg3[%c0_14, %c0_15] : memref<1x64xf32, #tpu.memory_space<vmem>>, vector<1x64xf32>
    %49 = vector.broadcast %48 : vector<1x64xf32> to vector<512x64xf32>
    %50 = arith.mulf %47, %49 : vector<512x64xf32>
    %c0_16 = arith.constant 0 : index
    %c0_17 = arith.constant 0 : index
    %51 = vector.load %arg4[%c0_16, %c0_17] : memref<1x64xf32, #tpu.memory_space<vmem>>, vector<1x64xf32>
    %52 = vector.broadcast %51 : vector<1x64xf32> to vector<512x64xf32>
    %53 = arith.addf %50, %52 : vector<512x64xf32>
    %cst_18 = arith.constant 0.000000e+00 : f32
    %54 = vector.broadcast %cst_18 : f32 to vector<512x64xf32>
    %55 = arith.cmpf ogt, %53, %54 : vector<512x64xf32>
    %cst_19 = arith.constant 2.000000e-01 : f32
    %56 = vector.broadcast %cst_19 : f32 to vector<512x64xf32>
    %57 = arith.mulf %56, %53 : vector<512x64xf32>
    %58 = arith.select %55, %53, %57 : vector<512x64xi1>, vector<512x64xf32>
    %59 = vector.shape_cast %58 : vector<512x64xf32> to vector<2x16x16x64xf32>
    %60 = arith.truncf %59 : vector<2x16x16x64xf32> to vector<2x16x16x64xbf16>
    %cst_20 = arith.constant 0.000000e+00 : bf16
    %61 = vector.broadcast %cst_20 : bf16 to vector<2x1x16x64xbf16>
    %62 = tpu.concatenate %61, %60, %61 in 1 : vector<2x1x16x64xbf16>, vector<2x16x16x64xbf16>, vector<2x1x16x64xbf16> -> vector<2x18x16x64xbf16>
    %cst_21 = arith.constant 0.000000e+00 : bf16
    %63 = vector.broadcast %cst_21 : bf16 to vector<2x18x1x64xbf16>
    %64 = tpu.concatenate %63, %62, %63 in 2 : vector<2x18x1x64xbf16>, vector<2x18x16x64xbf16>, vector<2x18x1x64xbf16> -> vector<2x18x18x64xbf16>
    %65 = vector.extract_strided_slice %64 {offsets = [0, 0, 0, 0], sizes = [2, 16, 16, 64], strides = [1, 1, 1, 1]} : vector<2x18x18x64xbf16> to vector<2x16x16x64xbf16>
    %66 = vector.shape_cast %65 : vector<2x16x16x64xbf16> to vector<512x64xbf16>
    %67 = vector.extract_strided_slice %64 {offsets = [0, 0, 1, 0], sizes = [2, 16, 16, 64], strides = [1, 1, 1, 1]} : vector<2x18x18x64xbf16> to vector<2x16x16x64xbf16>
    %68 = vector.shape_cast %67 : vector<2x16x16x64xbf16> to vector<512x64xbf16>
    %69 = vector.extract_strided_slice %64 {offsets = [0, 0, 2, 0], sizes = [2, 16, 16, 64], strides = [1, 1, 1, 1]} : vector<2x18x18x64xbf16> to vector<2x16x16x64xbf16>
    %70 = vector.shape_cast %69 : vector<2x16x16x64xbf16> to vector<512x64xbf16>
    %71 = vector.extract_strided_slice %64 {offsets = [0, 1, 0, 0], sizes = [2, 16, 16, 64], strides = [1, 1, 1, 1]} : vector<2x18x18x64xbf16> to vector<2x16x16x64xbf16>
    %72 = vector.shape_cast %71 : vector<2x16x16x64xbf16> to vector<512x64xbf16>
    %73 = vector.extract_strided_slice %64 {offsets = [0, 1, 1, 0], sizes = [2, 16, 16, 64], strides = [1, 1, 1, 1]} : vector<2x18x18x64xbf16> to vector<2x16x16x64xbf16>
    %74 = vector.shape_cast %73 : vector<2x16x16x64xbf16> to vector<512x64xbf16>
    %75 = vector.extract_strided_slice %64 {offsets = [0, 1, 2, 0], sizes = [2, 16, 16, 64], strides = [1, 1, 1, 1]} : vector<2x18x18x64xbf16> to vector<2x16x16x64xbf16>
    %76 = vector.shape_cast %75 : vector<2x16x16x64xbf16> to vector<512x64xbf16>
    %77 = vector.extract_strided_slice %64 {offsets = [0, 2, 0, 0], sizes = [2, 16, 16, 64], strides = [1, 1, 1, 1]} : vector<2x18x18x64xbf16> to vector<2x16x16x64xbf16>
    %78 = vector.shape_cast %77 : vector<2x16x16x64xbf16> to vector<512x64xbf16>
    %79 = vector.extract_strided_slice %64 {offsets = [0, 2, 1, 0], sizes = [2, 16, 16, 64], strides = [1, 1, 1, 1]} : vector<2x18x18x64xbf16> to vector<2x16x16x64xbf16>
    %80 = vector.shape_cast %79 : vector<2x16x16x64xbf16> to vector<512x64xbf16>
    %81 = vector.extract_strided_slice %64 {offsets = [0, 2, 2, 0], sizes = [2, 16, 16, 64], strides = [1, 1, 1, 1]} : vector<2x18x18x64xbf16> to vector<2x16x16x64xbf16>
    %82 = vector.shape_cast %81 : vector<2x16x16x64xbf16> to vector<512x64xbf16>
    %83 = tpu.concatenate %66, %68, %70, %72, %74, %76, %78, %80, %82 in 1 : vector<512x64xbf16>, vector<512x64xbf16>, vector<512x64xbf16>, vector<512x64xbf16>, vector<512x64xbf16>, vector<512x64xbf16>, vector<512x64xbf16>, vector<512x64xbf16>, vector<512x64xbf16> -> vector<512x576xbf16>
    %c0_22 = arith.constant 0 : index
    %c0_23 = arith.constant 0 : index
    %84 = vector.load %arg5[%c0_22, %c0_23] : memref<576x64xbf16, #tpu.memory_space<vmem>>, vector<576x64xbf16>
    %cst_24 = arith.constant dense<0.000000e+00> : vector<512x64xf32>
    %85 = tpu.matmul %83, %84, %cst_24 {dimension_numbers = #tpu.dot_dimension_numbers<[1], [0], [0], [1], [0, 0, 1, 1], [], []>} : vector<512x576xbf16>, vector<576x64xbf16>, vector<512x64xf32> -> vector<512x64xf32>
    %c0_25 = arith.constant 0 : index
    %c0_26 = arith.constant 0 : index
    %86 = vector.load %arg6[%c0_25, %c0_26] : memref<1x64xf32, #tpu.memory_space<vmem>>, vector<1x64xf32>
    %87 = vector.broadcast %86 : vector<1x64xf32> to vector<512x64xf32>
    %88 = arith.addf %85, %87 : vector<512x64xf32>
    %cst_27 = arith.constant dense<0.000000e+00> : vector<64xf32>
    %89 = vector.multi_reduction <add>, %88, %cst_27 [0] : vector<512x64xf32> to vector<64xf32>
    %90 = vector.shape_cast %89 : vector<64xf32> to vector<1x64xf32>
    %cst_28 = arith.constant 5.120000e+02 : f32
    %91 = vector.broadcast %cst_28 : f32 to vector<1x64xf32>
    %92 = arith.divf %90, %91 : vector<1x64xf32>
    %93 = vector.broadcast %92 : vector<1x64xf32> to vector<512x64xf32>
    %94 = arith.subf %88, %93 : vector<512x64xf32>
    %95 = arith.mulf %94, %94 : vector<512x64xf32>
    %cst_29 = arith.constant dense<0.000000e+00> : vector<64xf32>
    %96 = vector.multi_reduction <add>, %95, %cst_29 [0] : vector<512x64xf32> to vector<64xf32>
    %97 = vector.shape_cast %96 : vector<64xf32> to vector<1x64xf32>
    %cst_30 = arith.constant 5.120000e+02 : f32
    %98 = vector.broadcast %cst_30 : f32 to vector<1x64xf32>
    %99 = arith.divf %97, %98 : vector<1x64xf32>
    %100 = vector.broadcast %92 : vector<1x64xf32> to vector<512x64xf32>
    %101 = arith.subf %88, %100 : vector<512x64xf32>
    %cst_31 = arith.constant 9.99999974E-6 : f32
    %102 = vector.broadcast %cst_31 : f32 to vector<1x64xf32>
    %103 = arith.addf %99, %102 : vector<1x64xf32>
    %104 = math.rsqrt %103 : vector<1x64xf32>
    %105 = vector.broadcast %104 : vector<1x64xf32> to vector<512x64xf32>
    %106 = arith.mulf %101, %105 : vector<512x64xf32>
    %c0_32 = arith.constant 0 : index
    %c0_33 = arith.constant 0 : index
    %107 = vector.load %arg7[%c0_32, %c0_33] : memref<1x64xf32, #tpu.memory_space<vmem>>, vector<1x64xf32>
    %108 = vector.broadcast %107 : vector<1x64xf32> to vector<512x64xf32>
    %109 = arith.mulf %106, %108 : vector<512x64xf32>
    %c0_34 = arith.constant 0 : index
    %c0_35 = arith.constant 0 : index
    %110 = vector.load %arg8[%c0_34, %c0_35] : memref<1x64xf32, #tpu.memory_space<vmem>>, vector<1x64xf32>
    %111 = vector.broadcast %110 : vector<1x64xf32> to vector<512x64xf32>
    %112 = arith.addf %109, %111 : vector<512x64xf32>
    %cst_36 = arith.constant 0.000000e+00 : f32
    %113 = vector.broadcast %cst_36 : f32 to vector<512x64xf32>
    %114 = arith.cmpf ogt, %112, %113 : vector<512x64xf32>
    %cst_37 = arith.constant 2.000000e-01 : f32
    %115 = vector.broadcast %cst_37 : f32 to vector<512x64xf32>
    %116 = arith.mulf %115, %112 : vector<512x64xf32>
    %117 = arith.select %114, %112, %116 : vector<512x64xi1>, vector<512x64xf32>
    %118 = vector.shape_cast %117 : vector<512x64xf32> to vector<256x2x64xf32>
    %cst_38 = arith.constant dense<0xFF800000> : vector<256x64xf32>
    %119 = vector.multi_reduction <maximumf>, %118, %cst_38 [1] : vector<256x2x64xf32> to vector<256x64xf32>
    %120 = vector.shape_cast %119 : vector<256x64xf32> to vector<2x8x2x8x64xf32>
    %cst_39 = arith.constant dense<0xFF800000> : vector<2x8x8x64xf32>
    %121 = vector.multi_reduction <maximumf>, %120, %cst_39 [2] : vector<2x8x2x8x64xf32> to vector<2x8x8x64xf32>
    %c0_40 = arith.constant 0 : index
    %c0_41 = arith.constant 0 : index
    %c0_42 = arith.constant 0 : index
    %c0_43 = arith.constant 0 : index
    %122 = vector.load %arg9[%c0_40, %c0_41, %c0_42, %c0_43] : memref<2x8x8x64xf32, #tpu.memory_space<vmem>>, vector<2x8x8x64xf32>
    tpu.vector_store %arg9[%c0_40, %c0_41, %c0_42, %c0_43], %121 {strides = array<i32>} : memref<2x8x8x64xf32, #tpu.memory_space<vmem>>, vector<2x8x8x64xf32>,
    return
  }
}

</mosaic_0001>

<llo_original>
// kernel: encoder_block_forward.1
$region0: #{encoder_block_forward.1}
  #allocation0 [shape = 'u32[]', space=smem, size = 0x4, offset = 0x4, fixed_abs, tag = 'smem constant byte address 0x4 - core index']
  #allocation1 [shape = 'u32[144,128]{1,0:T(1,128)}', space=vmem, size = 0x12000, scoped, tag = 'internal scratch']
  %s0 = inlined_call_operand.vmem [shape: f32[2,16,16,4], index: 0, kind: input, shape index: {}]
  %s1 = inlined_call_operand.vmem [shape: bf16[36,64], index: 1, kind: input, shape index: {}]
  %s2 = inlined_call_operand.vmem [shape: f32[1,64], index: 2, kind: input, shape index: {}]
  %s3 = inlined_call_operand.vmem [shape: f32[1,64], index: 3, kind: input, shape index: {}]
  %s4 = inlined_call_operand.vmem [shape: f32[1,64], index: 4, kind: input, shape index: {}]
  %s5 = inlined_call_operand.vmem [shape: bf16[576,64], index: 5, kind: input, shape index: {}]
  %s6 = inlined_call_operand.vmem [shape: f32[1,64], index: 6, kind: input, shape index: {}]
  %s7 = inlined_call_operand.vmem [shape: f32[1,64], index: 7, kind: input, shape index: {}]
  %s8 = inlined_call_operand.vmem [shape: f32[1,64], index: 8, kind: input, shape index: {}]
  %s9 = inlined_call_operand.hbm [shape: f32[2,8,8,64], index: 9, kind: output, shape index: {}]
  %s10 = sld [smem:[#allocation0]]
  $region46: #{encoder_block_forward.1} parent=0
    _
  %s12 = ssub.s32 1, %s10
  %s13 = scalar_select 0, %s12, %s10
  $region1: #{encoder_block_forward.1} parent=0
    #allocation2 [shape = 'u8[65536]{0}', space=vmem, size = 0x10000, scoped, tag = 'output window, operand 0, single buffered']
    #allocation3 [shape = 's32[1]{0}', space=sflag, size = 0x4, scoped, tag = 'scoped memory for encoder_block_forward.1']
    %14 = vsyncpa [#allocation3], 0
    // Predicated region
    $region2: #{encoder_block_forward.1} parent=1 // pred_check
      _
    $region3: #{encoder_block_forward.1} parent=1 // pred_check_branch
      %16 = sbr.rel (0) target = $region5
    $region4: #{encoder_block_forward.1} parent=1 // pred_region
      _
    $region5: #{encoder_block_forward.1} parent=1 // pred_fallthru
      _
    // Predicated region
    $region6: #{encoder_block_forward.1} parent=1 // pred_check
      _
    $region7: #{encoder_block_forward.1} parent=1 // pred_check_branch
      %18 = sbr.rel (0) target = $region9
    $region8: #{encoder_block_forward.1} parent=1 // pred_region
      _
    $region9: #{encoder_block_forward.1} parent=1 // pred_fallthru
      _
    // Predicated region
    $region10: #{encoder_block_forward.1} parent=1 // pred_check
      _
    $region11: #{encoder_block_forward.1} parent=1 // pred_check_branch
      %20 = sbr.rel (0) target = $region13
    $region12: #{encoder_block_forward.1} parent=1 // pred_region
      _
    $region13: #{encoder_block_forward.1} parent=1 // pred_fallthru
      _
    // Predicated region
    $region14: #{encoder_block_forward.1} parent=1 // pred_check
      _
    $region15: #{encoder_block_forward.1} parent=1 // pred_check_branch
      %22 = sbr.rel (0) target = $region17
    $region16: #{encoder_block_forward.1} parent=1 // pred_region
      _
    $region17: #{encoder_block_forward.1} parent=1 // pred_fallthru
      _
    // Predicated region
    $region18: #{encoder_block_forward.1} parent=1 // pred_check
      _
    $region19: #{encoder_block_forward.1} parent=1 // pred_check_branch
      %24 = sbr.rel (0) target = $region21
    $region20: #{encoder_block_forward.1} parent=1 // pred_region
      _
    $region21: #{encoder_block_forward.1} parent=1 // pred_fallthru
      _
    // Predicated region
    $region22: #{encoder_block_forward.1} parent=1 // pred_check
      _
    $region23: #{encoder_block_forward.1} parent=1 // pred_check_branch
      %26 = sbr.rel (0) target = $region25
    $region24: #{encoder_block_forward.1} parent=1 // pred_region
      _
    $region25: #{encoder_block_forward.1} parent=1 // pred_fallthru
      _
    // Predicated region
    $region26: #{encoder_block_forward.1} parent=1 // pred_check
      _
    $region27: #{encoder_block_forward.1} parent=1 // pred_check_branch
      %28 = sbr.rel (0) target = $region29
    $region28: #{encoder_block_forward.1} parent=1 // pred_region
      _
    $region29: #{encoder_block_forward.1} parent=1 // pred_fallthru
      _
    // Predicated region
    $region30: #{encoder_block_forward.1} parent=1 // pred_check
      _
    $region31: #{encoder_block_forward.1} parent=1 // pred_check_branch
      %30 = sbr.rel (0) target = $region33
    $region32: #{encoder_block_forward.1} parent=1 // pred_region
      _
    $region33: #{encoder_block_forward.1} parent=1 // pred_fallthru
      _
    // Predicated region
    $region34: #{encoder_block_forward.1} parent=1 // pred_check
      _
    $region35: #{encoder_block_forward.1} parent=1 // pred_check_branch
      %32 = sbr.rel (0) target = $region37
    $region36: #{encoder_block_forward.1} parent=1 // pred_region
      _
    $region37: #{encoder_block_forward.1} parent=1 // pred_fallthru
      _
    %v34 = vld [vmem:[%s0] sm:$0xff]
    %v35 = vld [vmem:[%s0 + $0x8] sm:$0xff]
    %v36 = vld [vmem:[%s0 + $0x10] sm:$0xff]
    %v37 = vld [vmem:[%s0 + $0x18] sm:$0xff]
    %v38 = vld [vmem:[%s0 + $0x20] sm:$0xff]
    %v39 = vld [vmem:[%s0 + $0x28] sm:$0xff]
    %v40 = vld [vmem:[%s0 + $0x30] sm:$0xff]
    %v41 = vld [vmem:[%s0 + $0x38] sm:$0xff]
    %v42 = vld [vmem:[%s0 + $0x40] sm:$0xff]
    %v43 = vld [vmem:[%s0 + $0x48] sm:$0xff]
    %v44 = vld [vmem:[%s0 + $0x50] sm:$0xff]
    %v45 = vld [vmem:[%s0 + $0x58] sm:$0xff]
    %v46 = vld [vmem:[%s0 + $0x60] sm:$0xff]
    %v47 = vld [vmem:[%s0 + $0x68] sm:$0xff]
    %v48 = vld [vmem:[%s0 + $0x70] sm:$0xff]
    %v49 = vld [vmem:[%s0 + $0x78] sm:$0xff]
    %v50 = vld [vmem:[%s0 + $0x80] sm:$0xff]
    %v51 = vld [vmem:[%s0 + $0x88] sm:$0xff]
    %v52 = vld [vmem:[%s0 + $0x90] sm:$0xff]
    %v53 = vld [vmem:[%s0 + $0x98] sm:$0xff]
    %v54 = vld [vmem:[%s0 + $0xa0] sm:$0xff]
    %v55 = vld [vmem:[%s0 + $0xa8] sm:$0xff]
    %v56 = vld [vmem:[%s0 + $0xb0] sm:$0xff]
    %v57 = vld [vmem:[%s0 + $0xb8] sm:$0xff]
    %v58 = vld [vmem:[%s0 + $0xc0] sm:$0xff]
    %v59 = vld [vmem:[%s0 + $0xc8] sm:$0xff]
    %v60 = vld [vmem:[%s0 + $0xd0] sm:$0xff]
    %v61 = vld [vmem:[%s0 + $0xd8] sm:$0xff]
    %v62 = vld [vmem:[%s0 + $0xe0] sm:$0xff]
    %v63 = vld [vmem:[%s0 + $0xe8] sm:$0xff]
    %v64 = vld [vmem:[%s0 + $0xf0] sm:$0xff]
    %v65 = vld [vmem:[%s0 + $0xf8] sm:$0xff]
    %v66 = vld [vmem:[%s0 + $0x100] sm:$0xff]
    %v67 = vld [vmem:[%s0 + $0x108] sm:$0xff]
    %v68 = vld [vmem:[%s0 + $0x110] sm:$0xff]
    %v69 = vld [vmem:[%s0 + $0x118] sm:$0xff]
    %v70 = vld [vmem:[%s0 + $0x120] sm:$0xff]
    %v71 = vld [vmem:[%s0 + $0x128] sm:$0xff]
    %v72 = vld [vmem:[%s0 + $0x130] sm:$0xff]
    %v73 = vld [vmem:[%s0 + $0x138] sm:$0xff]
    %v74 = vld [vmem:[%s0 + $0x140] sm:$0xff]
    %v75 = vld [vmem:[%s0 + $0x148] sm:$0xff]
    %v76 = vld [vmem:[%s0 + $0x150] sm:$0xff]
    %v77 = vld [vmem:[%s0 + $0x158] sm:$0xff]
    %v78 = vld [vmem:[%s0 + $0x160] sm:$0xff]
    %v79 = vld [vmem:[%s0 + $0x168] sm:$0xff]
    %v80 = vld [vmem:[%s0 + $0x170] sm:$0xff]
    %v81 = vld [vmem:[%s0 + $0x178] sm:$0xff]
    %v82 = vld [vmem:[%s0 + $0x180] sm:$0xff]
    %v83 = vld [vmem:[%s0 + $0x188] sm:$0xff]
    %v84 = vld [vmem:[%s0 + $0x190] sm:$0xff]
    %v85 = vld [vmem:[%s0 + $0x198] sm:$0xff]
    %v86 = vld [vmem:[%s0 + $0x1a0] sm:$0xff]
    %v87 = vld [vmem:[%s0 + $0x1a8] sm:$0xff]
    %v88 = vld [vmem:[%s0 + $0x1b0] sm:$0xff]
    %v89 = vld [vmem:[%s0 + $0x1b8] sm:$0xff]
    %v90 = vld [vmem:[%s0 + $0x1c0] sm:$0xff]
    %v91 = vld [vmem:[%s0 + $0x1c8] sm:$0xff]
    %v92 = vld [vmem:[%s0 + $0x1d0] sm:$0xff]
    %v93 = vld [vmem:[%s0 + $0x1d8] sm:$0xff]
    %v94 = vld [vmem:[%s0 + $0x1e0] sm:$0xff]
    %v95 = vld [vmem:[%s0 + $0x1e8] sm:$0xff]
    %v96 = vld [vmem:[%s0 + $0x1f0] sm:$0xff]
    %v97 = vld [vmem:[%s0 + $0x1f8] sm:$0xff]
    %v98 = vpack.c.bf16 %v35, %v34
    %v99 = vpack.c.bf16 %v37, %v36
    %v100 = vpack.c.bf16 %v39, %v38
    %v101 = vpack.c.bf16 %v41, %v40
    %v102 = vpack.c.bf16 %v43, %v42
    %v103 = vpack.c.bf16 %v45, %v44
    %v104 = vpack.c.bf16 %v47, %v46
    %v105 = vpack.c.bf16 %v49, %v48
    %v106 = vpack.c.bf16 %v51, %v50
    %v107 = vpack.c.bf16 %v53, %v52
    %v108 = vpack.c.bf16 %v55, %v54
    %v109 = vpack.c.bf16 %v57, %v56
    %v110 = vpack.c.bf16 %v59, %v58
    %v111 = vpack.c.bf16 %v61, %v60
    %v112 = vpack.c.bf16 %v63, %v62
    %v113 = vpack.c.bf16 %v65, %v64
    %v114 = vpack.c.bf16 %v67, %v66
    %v115 = vpack.c.bf16 %v69, %v68
    %v116 = vpack.c.bf16 %v71, %v70
    %v117 = vpack.c.bf16 %v73, %v72
    %v118 = vpack.c.bf16 %v75, %v74
    %v119 = vpack.c.bf16 %v77, %v76
    %v120 = vpack.c.bf16 %v79, %v78
    %v121 = vpack.c.bf16 %v81, %v80
    %v122 = vpack.c.bf16 %v83, %v82
    %v123 = vpack.c.bf16 %v85, %v84
    %v124 = vpack.c.bf16 %v87, %v86
    %v125 = vpack.c.bf16 %v89, %v88
    %v126 = vpack.c.bf16 %v91, %v90
    %v127 = vpack.c.bf16 %v93, %v92
    %v128 = vpack.c.bf16 %v95, %v94
    %v129 = vpack.c.bf16 %v97, %v96
    %v131 = vshrl.u32 0, 16
    %v133 = vrot.slane %v131, 7
    %v134 = vshll.u32 0, 16
    %v136 = vor.u32 %v133, %v134
    %v138 = vshrl.u32 %v98, 16
    %v140 = vrot.slane %v138, 7
    %v141 = vshll.u32 %v98, 16
    %v143 = vor.u32 %v140, %v141
    %v145 = vshrl.u32 %v99, 16
    %v147 = vrot.slane %v145, 7
    %v148 = vshll.u32 %v99, 16
    %v150 = vor.u32 %v147, %v148
    %v152 = vshrl.u32 %v100, 16
    %v154 = vrot.slane %v152, 7
    %v155 = vshll.u32 %v100, 16
    %v157 = vor.u32 %v154, %v155
    %v159 = vshrl.u32 %v101, 16
    %v161 = vrot.slane %v159, 7
    %v162 = vshll.u32 %v101, 16
    %v164 = vor.u32 %v161, %v162
    %v166 = vshrl.u32 %v102, 16
    %v168 = vrot.slane %v166, 7
    %v169 = vshll.u32 %v102, 16
    %v171 = vor.u32 %v168, %v169
    %v173 = vshrl.u32 %v103, 16
    %v175 = vrot.slane %v173, 7
    %v176 = vshll.u32 %v103, 16
    %v178 = vor.u32 %v175, %v176
    %v180 = vshrl.u32 %v104, 16
    %v182 = vrot.slane %v180, 7
    %v183 = vshll.u32 %v104, 16
    %v185 = vor.u32 %v182, %v183
    %v187 = vshrl.u32 %v105, 16
    %v189 = vrot.slane %v187, 7
    %v190 = vshll.u32 %v105, 16
    %v192 = vor.u32 %v189, %v190
    %v194 = vshrl.u32 %v106, 16
    %v196 = vrot.slane %v194, 7
    %v197 = vshll.u32 %v106, 16
    %v199 = vor.u32 %v196, %v197
    %v201 = vshrl.u32 %v107, 16
    %v203 = vrot.slane %v201, 7
    %v204 = vshll.u32 %v107, 16
    %v206 = vor.u32 %v203, %v204
    %v208 = vshrl.u32 %v108, 16
    %v210 = vrot.slane %v208, 7
    %v211 = vshll.u32 %v108, 16
    %v213 = vor.u32 %v210, %v211
    %v215 = vshrl.u32 %v109, 16
    %v217 = vrot.slane %v215, 7
    %v218 = vshll.u32 %v109, 16
    %v220 = vor.u32 %v217, %v218
    %v222 = vshrl.u32 %v110, 16
    %v224 = vrot.slane %v222, 7
    %v225 = vshll.u32 %v110, 16
    %v227 = vor.u32 %v224, %v225
    %v229 = vshrl.u32 %v111, 16
    %v231 = vrot.slane %v229, 7
    %v232 = vshll.u32 %v111, 16
    %v234 = vor.u32 %v231, %v232
    %v236 = vshrl.u32 %v112, 16
    %v238 = vrot.slane %v236, 7
    %v239 = vshll.u32 %v112, 16
    %v241 = vor.u32 %v238, %v239
    %v243 = vshrl.u32 %v113, 16
    %v245 = vrot.slane %v243, 7
    %v246 = vshll.u32 %v113, 16
    %v248 = vor.u32 %v245, %v246
    %v250 = vshrl.u32 %v114, 16
    %v252 = vrot.slane %v250, 7
    %v253 = vshll.u32 %v114, 16
    %v255 = vor.u32 %v252, %v253
    %v257 = vshrl.u32 %v115, 16
    %v259 = vrot.slane %v257, 7
    %v260 = vshll.u32 %v115, 16
    %v262 = vor.u32 %v259, %v260
    %v264 = vshrl.u32 %v116, 16
    %v266 = vrot.slane %v264, 7
    %v267 = vshll.u32 %v116, 16
    %v269 = vor.u32 %v266, %v267
    %v271 = vshrl.u32 %v117, 16
    %v273 = vrot.slane %v271, 7
    %v274 = vshll.u32 %v117, 16
    %v276 = vor.u32 %v273, %v274
    %v278 = vshrl.u32 %v118, 16
    %v280 = vrot.slane %v278, 7
    %v281 = vshll.u32 %v118, 16
    %v283 = vor.u32 %v280, %v281
    %v285 = vshrl.u32 %v119, 16
    %v287 = vrot.slane %v285, 7
    %v288 = vshll.u32 %v119, 16
    %v290 = vor.u32 %v287, %v288
    %v292 = vshrl.u32 %v120, 16
    %v294 = vrot.slane %v292, 7
    %v295 = vshll.u32 %v120, 16
    %v297 = vor.u32 %v294, %v295
    %v299 = vshrl.u32 %v121, 16
    %v301 = vrot.slane %v299, 7
    %v302 = vshll.u32 %v121, 16
    %v304 = vor.u32 %v301, %v302
    %v306 = vshrl.u32 %v122, 16
    %v308 = vrot.slane %v306, 7
    %v309 = vshll.u32 %v122, 16
    %v311 = vor.u32 %v308, %v309
    %v313 = vshrl.u32 %v123, 16
    %v315 = vrot.slane %v313, 7
    %v316 = vshll.u32 %v123, 16
    %v318 = vor.u32 %v315, %v316
    %v320 = vshrl.u32 %v124, 16
    %v322 = vrot.slane %v320, 7
    %v323 = vshll.u32 %v124, 16
    %v325 = vor.u32 %v322, %v323
    %v327 = vshrl.u32 %v125, 16
    %v329 = vrot.slane %v327, 7
    %v330 = vshll.u32 %v125, 16
    %v332 = vor.u32 %v329, %v330
    %v334 = vshrl.u32 %v126, 16
    %v336 = vrot.slane %v334, 7
    %v337 = vshll.u32 %v126, 16
    %v339 = vor.u32 %v336, %v337
    %v341 = vshrl.u32 %v127, 16
    %v343 = vrot.slane %v341, 7
    %v344 = vshll.u32 %v127, 16
    %v346 = vor.u32 %v343, %v344
    %v348 = vshrl.u32 %v128, 16
    %v350 = vrot.slane %v348, 7
    %v351 = vshll.u32 %v128, 16
    %v353 = vor.u32 %v350, %v351
    %v355 = vshrl.u32 %v129, 16
    %v357 = vrot.slane %v355, 7
    %v358 = vshll.u32 %v129, 16
    %v360 = vor.u32 %v357, %v358
    %vm427 = vcmask 1040384
    %vm428 = vsmask.f32 256
    %vm429 = vmand %vm427, %vm428
    %v430 = vsel %vm429, 0, %v136
    %v431 = vsel %vm429, 0, %v143
    %v432 = vsel %vm429, 0, %v150
    %v433 = vsel %vm429, 0, %v157
    %v434 = vsel %vm429, 0, %v164
    %v435 = vsel %vm429, 0, %v171
    %v436 = vsel %vm429, 0, %v178
    %v437 = vsel %vm429, 0, %v185
    %v438 = vsel %vm429, 0, %v192
    %v439 = vsel %vm429, 0, %v199
    %v440 = vsel %vm429, 0, %v206
    %v441 = vsel %vm429, 0, %v213
    %v442 = vsel %vm429, 0, %v220
    %v443 = vsel %vm429, 0, %v227
    %v444 = vsel %vm429, 0, %v234
    %v445 = vsel %vm429, 0, %v241
    %v446 = vsel %vm429, 0, %v248
    %v447 = vsel %vm429, 0, %v255
    %v448 = vsel %vm429, 0, %v262
    %v449 = vsel %vm429, 0, %v269
    %v450 = vsel %vm429, 0, %v276
    %v451 = vsel %vm429, 0, %v283
    %v452 = vsel %vm429, 0, %v290
    %v453 = vsel %vm429, 0, %v297
    %v454 = vsel %vm429, 0, %v304
    %v455 = vsel %vm429, 0, %v311
    %v456 = vsel %vm429, 0, %v318
    %v457 = vsel %vm429, 0, %v325
    %v458 = vsel %vm429, 0, %v332
    %v459 = vsel %vm429, 0, %v339
    %v460 = vsel %vm429, 0, %v346
    %v461 = vsel %vm429, 0, %v353
    %v462 = vsel %vm429, 0, %v360
    %v463 = vsel %vm429, %v133, 0
    %v464 = vsel %vm429, %v140, 0
    %v465 = vsel %vm429, %v147, 0
    %v466 = vsel %vm429, %v154, 0
    %v467 = vsel %vm429, %v161, 0
    %v468 = vsel %vm429, %v168, 0
    %v469 = vsel %vm429, %v175, 0
    %v470 = vsel %vm429, %v182, 0
    %v471 = vsel %vm429, %v189, 0
    %v472 = vsel %vm429, %v196, 0
    %v473 = vsel %vm429, %v203, 0
    %v474 = vsel %vm429, %v210, 0
    %v475 = vsel %vm429, %v217, 0
    %v476 = vsel %vm429, %v224, 0
    %v477 = vsel %vm429, %v231, 0
    %v478 = vsel %vm429, %v238, 0
    %v479 = vsel %vm429, %v245, 0
    %v480 = vsel %vm429, %v252, 0
    %v481 = vsel %vm429, %v259, 0
    %v482 = vsel %vm429, %v266, 0
    %v483 = vsel %vm429, %v273, 0
    %v484 = vsel %vm429, %v280, 0
    %v485 = vsel %vm429, %v287, 0
    %v486 = vsel %vm429, %v294, 0
    %v487 = vsel %vm429, %v301, 0
    %v488 = vsel %vm429, %v308, 0
    %v489 = vsel %vm429, %v315, 0
    %v490 = vsel %vm429, %v322, 0
    %v491 = vsel %vm429, %v329, 0
    %v492 = vsel %vm429, %v336, 0
    %v493 = vsel %vm429, %v343, 0
    %v494 = vsel %vm429, %v350, 0
    %v495 = vsel %vm429, %v357, 0
    %vm496 = vsmask.f32 7424
    %v498 = vshrl.u32 %v430, 16
    %v500 = vshll.u32 %v430, 16
    %v502 = vrot.slane %v500, 1
    %v503 = vor.u32 %v498, %v502
    %v505 = vshll.u32 %v463, 16
    %v507 = vrot.slane %v505, 1
    %v508 = vsel %vm496, %v503, %v507
    %v510 = vshrl.u32 %v431, 16
    %v512 = vshll.u32 %v431, 16
    %v514 = vrot.slane %v512, 1
    %v515 = vor.u32 %v510, %v514
    %v517 = vshll.u32 %v464, 16
    %v519 = vrot.slane %v517, 1
    %v520 = vsel %vm496, %v515, %v519
    %v522 = vshrl.u32 %v432, 16
    %v524 = vshll.u32 %v432, 16
    %v526 = vrot.slane %v524, 1
    %v527 = vor.u32 %v522, %v526
    %v529 = vshll.u32 %v465, 16
    %v531 = vrot.slane %v529, 1
    %v532 = vsel %vm496, %v527, %v531
    %v534 = vshrl.u32 %v433, 16
    %v536 = vshll.u32 %v433, 16
    %v538 = vrot.slane %v536, 1
    %v539 = vor.u32 %v534, %v538
    %v541 = vshll.u32 %v466, 16
    %v543 = vrot.slane %v541, 1
    %v544 = vsel %vm496, %v539, %v543
    %v546 = vshrl.u32 %v434, 16
    %v548 = vshll.u32 %v434, 16
    %v550 = vrot.slane %v548, 1
    %v551 = vor.u32 %v546, %v550
    %v553 = vshll.u32 %v467, 16
    %v555 = vrot.slane %v553, 1
    %v556 = vsel %vm496, %v551, %v555
    %v558 = vshrl.u32 %v435, 16
    %v560 = vshll.u32 %v435, 16
    %v562 = vrot.slane %v560, 1
    %v563 = vor.u32 %v558, %v562
    %v565 = vshll.u32 %v468, 16
    %v567 = vrot.slane %v565, 1
    %v568 = vsel %vm496, %v563, %v567
    %v570 = vshrl.u32 %v436, 16
    %v572 = vshll.u32 %v436, 16
    %v574 = vrot.slane %v572, 1
    %v575 = vor.u32 %v570, %v574
    %v577 = vshll.u32 %v469, 16
    %v579 = vrot.slane %v577, 1
    %v580 = vsel %vm496, %v575, %v579
    %v582 = vshrl.u32 %v437, 16
    %v584 = vshll.u32 %v437, 16
    %v586 = vrot.slane %v584, 1
    %v587 = vor.u32 %v582, %v586
    %v589 = vshll.u32 %v470, 16
    %v591 = vrot.slane %v589, 1
    %v592 = vsel %vm496, %v587, %v591
    %v594 = vshrl.u32 %v438, 16
    %v596 = vshll.u32 %v438, 16
    %v598 = vrot.slane %v596, 1
    %v599 = vor.u32 %v594, %v598
    %v601 = vshll.u32 %v471, 16
    %v603 = vrot.slane %v601, 1
    %v604 = vsel %vm496, %v599, %v603
    %v606 = vshrl.u32 %v439, 16
    %v608 = vshll.u32 %v439, 16
    %v610 = vrot.slane %v608, 1
    %v611 = vor.u32 %v606, %v610
    %v613 = vshll.u32 %v472, 16
    %v615 = vrot.slane %v613, 1
    %v616 = vsel %vm496, %v611, %v615
    %v618 = vshrl.u32 %v440, 16
    %v620 = vshll.u32 %v440, 16
    %v622 = vrot.slane %v620, 1
    %v623 = vor.u32 %v618, %v622
    %v625 = vshll.u32 %v473, 16
    %v627 = vrot.slane %v625, 1
    %v628 = vsel %vm496, %v623, %v627
    %v630 = vshrl.u32 %v441, 16
    %v632 = vshll.u32 %v441, 16
    %v634 = vrot.slane %v632, 1
    %v635 = vor.u32 %v630, %v634
    %v637 = vshll.u32 %v474, 16
    %v639 = vrot.slane %v637, 1
    %v640 = vsel %vm496, %v635, %v639
    %v642 = vshrl.u32 %v442, 16
    %v644 = vshll.u32 %v442, 16
    %v646 = vrot.slane %v644, 1
    %v647 = vor.u32 %v642, %v646
    %v649 = vshll.u32 %v475, 16
    %v651 = vrot.slane %v649, 1
    %v652 = vsel %vm496, %v647, %v651
    %v654 = vshrl.u32 %v443, 16
    %v656 = vshll.u32 %v443, 16
    %v658 = vrot.slane %v656, 1
    %v659 = vor.u32 %v654, %v658
    %v661 = vshll.u32 %v476, 16
    %v663 = vrot.slane %v661, 1
    %v664 = vsel %vm496, %v659, %v663
    %v666 = vshrl.u32 %v444, 16
    %v668 = vshll.u32 %v444, 16
    %v670 = vrot.slane %v668, 1
    %v671 = vor.u32 %v666, %v670
    %v673 = vshll.u32 %v477, 16
    %v675 = vrot.slane %v673, 1
    %v676 = vsel %vm496, %v671, %v675
    %v678 = vshrl.u32 %v445, 16
    %v680 = vshll.u32 %v445, 16
    %v682 = vrot.slane %v680, 1
    %v683 = vor.u32 %v678, %v682
    %v685 = vshll.u32 %v478, 16
    %v687 = vrot.slane %v685, 1
    %v688 = vsel %vm496, %v683, %v687
    %v690 = vshrl.u32 %v447, 16
    %v692 = vshll.u32 %v447, 16
    %v694 = vrot.slane %v692, 1
    %v695 = vor.u32 %v690, %v694
    %v697 = vshll.u32 %v480, 16
    %v699 = vrot.slane %v697, 1
    %v700 = vsel %vm496, %v695, %v699
    %v702 = vshrl.u32 %v448, 16
    %v704 = vshll.u32 %v448, 16
    %v706 = vrot.slane %v704, 1
    %v707 = vor.u32 %v702, %v706
    %v709 = vshll.u32 %v481, 16
    %v711 = vrot.slane %v709, 1
    %v712 = vsel %vm496, %v707, %v711
    %v714 = vshrl.u32 %v449, 16
    %v716 = vshll.u32 %v449, 16
    %v718 = vrot.slane %v716, 1
    %v719 = vor.u32 %v714, %v718
    %v721 = vshll.u32 %v482, 16
    %v723 = vrot.slane %v721, 1
    %v724 = vsel %vm496, %v719, %v723
    %v726 = vshrl.u32 %v450, 16
    %v728 = vshll.u32 %v450, 16
    %v730 = vrot.slane %v728, 1
    %v731 = vor.u32 %v726, %v730
    %v733 = vshll.u32 %v483, 16
    %v735 = vrot.slane %v733, 1
    %v736 = vsel %vm496, %v731, %v735
    %v738 = vshrl.u32 %v451, 16
    %v740 = vshll.u32 %v451, 16
    %v742 = vrot.slane %v740, 1
    %v743 = vor.u32 %v738, %v742
    %v745 = vshll.u32 %v484, 16
    %v747 = vrot.slane %v745, 1
    %v748 = vsel %vm496, %v743, %v747
    %v750 = vshrl.u32 %v452, 16
    %v752 = vshll.u32 %v452, 16
    %v754 = vrot.slane %v752, 1
    %v755 = vor.u32 %v750, %v754
    %v757 = vshll.u32 %v485, 16
    %v759 = vrot.slane %v757, 1
    %v760 = vsel %vm496, %v755, %v759
    %v762 = vshrl.u32 %v453, 16
    %v764 = vshll.u32 %v453, 16
    %v766 = vrot.slane %v764, 1
    %v767 = vor.u32 %v762, %v766
    %v769 = vshll.u32 %v486, 16
    %v771 = vrot.slane %v769, 1
    %v772 = vsel %vm496, %v767, %v771
    %v774 = vshrl.u32 %v454, 16
    %v776 = vshll.u32 %v454, 16
    %v778 = vrot.slane %v776, 1
    %v779 = vor.u32 %v774, %v778
    %v781 = vshll.u32 %v487, 16
    %v783 = vrot.slane %v781, 1
    %v784 = vsel %vm496, %v779, %v783
    %v786 = vshrl.u32 %v455, 16
    %v788 = vshll.u32 %v455, 16
    %v790 = vrot.slane %v788, 1
    %v791 = vor.u32 %v786, %v790
    %v793 = vshll.u32 %v488, 16
    %v795 = vrot.slane %v793, 1
    %v796 = vsel %vm496, %v791, %v795
    %v798 = vshrl.u32 %v456, 16
    %v800 = vshll.u32 %v456, 16
    %v802 = vrot.slane %v800, 1
    %v803 = vor.u32 %v798, %v802
    %v805 = vshll.u32 %v489, 16
    %v807 = vrot.slane %v805, 1
    %v808 = vsel %vm496, %v803, %v807
    %v810 = vshrl.u32 %v457, 16
    %v812 = vshll.u32 %v457, 16
    %v814 = vrot.slane %v812, 1
    %v815 = vor.u32 %v810, %v814
    %v817 = vshll.u32 %v490, 16
    %v819 = vrot.slane %v817, 1
    %v820 = vsel %vm496, %v815, %v819
    %v822 = vshrl.u32 %v458, 16
    %v824 = vshll.u32 %v458, 16
    %v826 = vrot.slane %v824, 1
    %v827 = vor.u32 %v822, %v826
    %v829 = vshll.u32 %v491, 16
    %v831 = vrot.slane %v829, 1
    %v832 = vsel %vm496, %v827, %v831
    %v834 = vshrl.u32 %v459, 16
    %v836 = vshll.u32 %v459, 16
    %v838 = vrot.slane %v836, 1
    %v839 = vor.u32 %v834, %v838
    %v841 = vshll.u32 %v492, 16
    %v843 = vrot.slane %v841, 1
    %v844 = vsel %vm496, %v839, %v843
    %v846 = vshrl.u32 %v460, 16
    %v848 = vshll.u32 %v460, 16
    %v850 = vrot.slane %v848, 1
    %v851 = vor.u32 %v846, %v850
    %v853 = vshll.u32 %v493, 16
    %v855 = vrot.slane %v853, 1
    %v856 = vsel %vm496, %v851, %v855
    %v858 = vshrl.u32 %v461, 16
    %v860 = vshll.u32 %v461, 16
    %v862 = vrot.slane %v860, 1
    %v863 = vor.u32 %v858, %v862
    %v865 = vshll.u32 %v494, 16
    %v867 = vrot.slane %v865, 1
    %v868 = vsel %vm496, %v863, %v867
    %vm931 = vcmask 1046528
    %v932 = vrot.slane %v430, 1
    %v933 = vrot.slane %v463, 1
    %v934 = vsel %vm931, %v932, %v933
    %v935 = vrot.slane %v431, 1
    %v936 = vrot.slane %v464, 1
    %v937 = vsel %vm931, %v935, %v936
    %v938 = vrot.slane %v432, 1
    %v939 = vrot.slane %v465, 1
    %v940 = vsel %vm931, %v938, %v939
    %v941 = vrot.slane %v433, 1
    %v942 = vrot.slane %v466, 1
    %v943 = vsel %vm931, %v941, %v942
    %v944 = vrot.slane %v434, 1
    %v945 = vrot.slane %v467, 1
    %v946 = vsel %vm931, %v944, %v945
    %v947 = vrot.slane %v435, 1
    %v948 = vrot.slane %v468, 1
    %v949 = vsel %vm931, %v947, %v948
    %v950 = vrot.slane %v436, 1
    %v951 = vrot.slane %v469, 1
    %v952 = vsel %vm931, %v950, %v951
    %v953 = vrot.slane %v437, 1
    %v954 = vrot.slane %v470, 1
    %v955 = vsel %vm931, %v953, %v954
    %v956 = vrot.slane %v438, 1
    %v957 = vrot.slane %v471, 1
    %v958 = vsel %vm931, %v956, %v957
    %v959 = vrot.slane %v439, 1
    %v960 = vrot.slane %v472, 1
    %v961 = vsel %vm931, %v959, %v960
    %v962 = vrot.slane %v440, 1
    %v963 = vrot.slane %v473, 1
    %v964 = vsel %vm931, %v962, %v963
    %v965 = vrot.slane %v441, 1
    %v966 = vrot.slane %v474, 1
    %v967 = vsel %vm931, %v965, %v966
    %v968 = vrot.slane %v442, 1
    %v969 = vrot.slane %v475, 1
    %v970 = vsel %vm931, %v968, %v969
    %v971 = vrot.slane %v443, 1
    %v972 = vrot.slane %v476, 1
    %v973 = vsel %vm931, %v971, %v972
    %v974 = vrot.slane %v444, 1
    %v975 = vrot.slane %v477, 1
    %v976 = vsel %vm931, %v974, %v975
    %v977 = vrot.slane %v445, 1
    %v978 = vrot.slane %v478, 1
    %v979 = vsel %vm931, %v977, %v978
    %v980 = vrot.slane %v447, 1
    %v981 = vrot.slane %v480, 1
    %v982 = vsel %vm931, %v980, %v981
    %v983 = vrot.slane %v448, 1
    %v984 = vrot.slane %v481, 1
    %v985 = vsel %vm931, %v983, %v984
    %v986 = vrot.slane %v449, 1
    %v987 = vrot.slane %v482, 1
    %v988 = vsel %vm931, %v986, %v987
    %v989 = vrot.slane %v450, 1
    %v990 = vrot.slane %v483, 1
    %v991 = vsel %vm931, %v989, %v990
    %v992 = vrot.slane %v451, 1
    %v993 = vrot.slane %v484, 1
    %v994 = vsel %vm931, %v992, %v993
    %v995 = vrot.slane %v452, 1
    %v996 = vrot.slane %v485, 1
    %v997 = vsel %vm931, %v995, %v996
    %v998 = vrot.slane %v453, 1
    %v999 = vrot.slane %v486, 1
    %v1000 = vsel %vm931, %v998, %v999
    %v1001 = vrot.slane %v454, 1
    %v1002 = vrot.slane %v487, 1
    %v1003 = vsel %vm931, %v1001, %v1002
    %v1004 = vrot.slane %v455, 1
    %v1005 = vrot.slane %v488, 1
    %v1006 = vsel %vm931, %v1004, %v1005
    %v1007 = vrot.slane %v456, 1
    %v1008 = vrot.slane %v489, 1
    %v1009 = vsel %vm931, %v1007, %v1008
    %v1010 = vrot.slane %v457, 1
    %v1011 = vrot.slane %v490, 1
    %v1012 = vsel %vm931, %v1010, %v1011
    %v1013 = vrot.slane %v458, 1
    %v1014 = vrot.slane %v491, 1
    %v1015 = vsel %vm931, %v1013, %v1014
    %v1016 = vrot.slane %v459, 1
    %v1017 = vrot.slane %v492, 1
    %v1018 = vsel %vm931, %v1016, %v1017
    %v1019 = vrot.slane %v460, 1
    %v1020 = vrot.slane %v493, 1
    %v1021 = vsel %vm931, %v1019, %v1020
    %v1022 = vrot.slane %v461, 1
    %v1023 = vrot.slane %v494, 1
    %v1024 = vsel %vm931, %v1022, %v1023
    %v1026 = vshrl.u32 %v446, 16
    %v1028 = vshll.u32 %v446, 16
    %v1030 = vrot.slane %v1028, 1
    %v1031 = vor.u32 %v1026, %v1030
    %v1033 = vshll.u32 %v479, 16
    %v1035 = vrot.slane %v1033, 1
    %v1036 = vsel %vm496, %v1031, %v1035
    %v1038 = vshrl.u32 %v462, 16
    %v1040 = vshll.u32 %v462, 16
    %v1042 = vrot.slane %v1040, 1
    %v1043 = vor.u32 %v1038, %v1042
    %v1045 = vshll.u32 %v495, 16
    %v1047 = vrot.slane %v1045, 1
    %v1048 = vsel %vm496, %v1043, %v1047
    %v1053 = vrot.slane %v446, 1
    %v1054 = vrot.slane %v479, 1
    %v1055 = vsel %vm931, %v1053, %v1054
    %v1056 = vrot.slane %v462, 1
    %v1057 = vrot.slane %v495, 1
    %v1058 = vsel %vm931, %v1056, %v1057
    %1059 = vrot.lane.b32.xlu0 %v508, 4
    %v1060 = vpop.permute.xlu0 %1059
    %1061 = vrot.lane.b32.xlu0 %v520, 4
    %v1062 = vpop.permute.xlu0 %1061
    %1063 = vrot.lane.b32.xlu0 %v532, 4
    %v1064 = vpop.permute.xlu0 %1063
    %1065 = vrot.lane.b32.xlu0 %v544, 4
    %v1066 = vpop.permute.xlu0 %1065
    %1067 = vrot.lane.b32.xlu0 %v556, 4
    %v1068 = vpop.permute.xlu0 %1067
    %1069 = vrot.lane.b32.xlu0 %v568, 4
    %v1070 = vpop.permute.xlu0 %1069
    %1071 = vrot.lane.b32.xlu0 %v580, 4
    %v1072 = vpop.permute.xlu0 %1071
    %1073 = vrot.lane.b32.xlu0 %v592, 4
    %v1074 = vpop.permute.xlu0 %1073
    %1075 = vrot.lane.b32.xlu0 %v604, 4
    %v1076 = vpop.permute.xlu0 %1075
    %1077 = vrot.lane.b32.xlu0 %v616, 4
    %v1078 = vpop.permute.xlu0 %1077
    %1079 = vrot.lane.b32.xlu0 %v628, 4
    %v1080 = vpop.permute.xlu0 %1079
    %1081 = vrot.lane.b32.xlu0 %v640, 4
    %v1082 = vpop.permute.xlu0 %1081
    %1083 = vrot.lane.b32.xlu0 %v652, 4
    %v1084 = vpop.permute.xlu0 %1083
    %1085 = vrot.lane.b32.xlu0 %v664, 4
    %v1086 = vpop.permute.xlu0 %1085
    %1087 = vrot.lane.b32.xlu0 %v676, 4
    %v1088 = vpop.permute.xlu0 %1087
    %1089 = vrot.lane.b32.xlu0 %v688, 4
    %v1090 = vpop.permute.xlu0 %1089
    %1091 = vrot.lane.b32.xlu0 %v700, 4
    %v1092 = vpop.permute.xlu0 %1091
    %1093 = vrot.lane.b32.xlu0 %v712, 4
    %v1094 = vpop.permute.xlu0 %1093
    %1095 = vrot.lane.b32.xlu0 %v724, 4
    %v1096 = vpop.permute.xlu0 %1095
    %1097 = vrot.lane.b32.xlu0 %v736, 4
    %v1098 = vpop.permute.xlu0 %1097
    %1099 = vrot.lane.b32.xlu0 %v748, 4
    %v1100 = vpop.permute.xlu0 %1099
    %1101 = vrot.lane.b32.xlu0 %v760, 4
    %v1102 = vpop.permute.xlu0 %1101
    %1103 = vrot.lane.b32.xlu0 %v772, 4
    %v1104 = vpop.permute.xlu0 %1103
    %1105 = vrot.lane.b32.xlu0 %v784, 4
    %v1106 = vpop.permute.xlu0 %1105
    %1107 = vrot.lane.b32.xlu0 %v796, 4
    %v1108 = vpop.permute.xlu0 %1107
    %1109 = vrot.lane.b32.xlu0 %v808, 4
    %v1110 = vpop.permute.xlu0 %1109
    %1111 = vrot.lane.b32.xlu0 %v820, 4
    %v1112 = vpop.permute.xlu0 %1111
    %1113 = vrot.lane.b32.xlu0 %v832, 4
    %v1114 = vpop.permute.xlu0 %1113
    %1115 = vrot.lane.b32.xlu0 %v844, 4
    %v1116 = vpop.permute.xlu0 %1115
    %1117 = vrot.lane.b32.xlu0 %v856, 4
    %v1118 = vpop.permute.xlu0 %1117
    %1119 = vrot.lane.b32.xlu0 %v868, 4
    %v1120 = vpop.permute.xlu0 %1119
    %1121 = vrot.lane.b32.xlu0 %v934, 8
    %v1122 = vpop.permute.xlu0 %1121
    %1123 = vrot.lane.b32.xlu0 %v937, 8
    %v1124 = vpop.permute.xlu0 %1123
    %1125 = vrot.lane.b32.xlu0 %v940, 8
    %v1126 = vpop.permute.xlu0 %1125
    %1127 = vrot.lane.b32.xlu0 %v943, 8
    %v1128 = vpop.permute.xlu0 %1127
    %1129 = vrot.lane.b32.xlu0 %v946, 8
    %v1130 = vpop.permute.xlu0 %1129
    %1131 = vrot.lane.b32.xlu0 %v949, 8
    %v1132 = vpop.permute.xlu0 %1131
    %1133 = vrot.lane.b32.xlu0 %v952, 8
    %v1134 = vpop.permute.xlu0 %1133
    %1135 = vrot.lane.b32.xlu0 %v955, 8
    %v1136 = vpop.permute.xlu0 %1135
    %1137 = vrot.lane.b32.xlu0 %v958, 8
    %v1138 = vpop.permute.xlu0 %1137
    %1139 = vrot.lane.b32.xlu0 %v961, 8
    %v1140 = vpop.permute.xlu0 %1139
    %1141 = vrot.lane.b32.xlu0 %v964, 8
    %v1142 = vpop.permute.xlu0 %1141
    %1143 = vrot.lane.b32.xlu0 %v967, 8
    %v1144 = vpop.permute.xlu0 %1143
    %1145 = vrot.lane.b32.xlu0 %v970, 8
    %v1146 = vpop.permute.xlu0 %1145
    %1147 = vrot.lane.b32.xlu0 %v973, 8
    %v1148 = vpop.permute.xlu0 %1147
    %1149 = vrot.lane.b32.xlu0 %v976, 8
    %v1150 = vpop.permute.xlu0 %1149
    %1151 = vrot.lane.b32.xlu0 %v979, 8
    %v1152 = vpop.permute.xlu0 %1151
    %1153 = vrot.lane.b32.xlu0 %v982, 8
    %v1154 = vpop.permute.xlu0 %1153
    %1155 = vrot.lane.b32.xlu0 %v985, 8
    %v1156 = vpop.permute.xlu0 %1155
    %1157 = vrot.lane.b32.xlu0 %v988, 8
    %v1158 = vpop.permute.xlu0 %1157
    %1159 = vrot.lane.b32.xlu0 %v991, 8
    %v1160 = vpop.permute.xlu0 %1159
    %1161 = vrot.lane.b32.xlu0 %v994, 8
    %v1162 = vpop.permute.xlu0 %1161
    %1163 = vrot.lane.b32.xlu0 %v997, 8
    %v1164 = vpop.permute.xlu0 %1163
    %1165 = vrot.lane.b32.xlu0 %v1000, 8
    %v1166 = vpop.permute.xlu0 %1165
    %1167 = vrot.lane.b32.xlu0 %v1003, 8
    %v1168 = vpop.permute.xlu0 %1167
    %1169 = vrot.lane.b32.xlu0 %v1006, 8
    %v1170 = vpop.permute.xlu0 %1169
    %1171 = vrot.lane.b32.xlu0 %v1009, 8
    %v1172 = vpop.permute.xlu0 %1171
    %1173 = vrot.lane.b32.xlu0 %v1012, 8
    %v1174 = vpop.permute.xlu0 %1173
    %1175 = vrot.lane.b32.xlu0 %v1015, 8
    %v1176 = vpop.permute.xlu0 %1175
    %1177 = vrot.lane.b32.xlu0 %v1018, 8
    %v1178 = vpop.permute.xlu0 %1177
    %1179 = vrot.lane.b32.xlu0 %v1021, 8
    %v1180 = vpop.permute.xlu0 %1179
    %1181 = vrot.lane.b32.xlu0 %v1024, 8
    %v1182 = vpop.permute.xlu0 %1181
    %1183 = vrot.lane.b32.xlu0 %v431, 12
    %v1184 = vpop.permute.xlu0 %1183
    %1185 = vrot.lane.b32.xlu0 %v432, 12
    %v1186 = vpop.permute.xlu0 %1185
    %1187 = vrot.lane.b32.xlu0 %v433, 12
    %v1188 = vpop.permute.xlu0 %1187
    %1189 = vrot.lane.b32.xlu0 %v434, 12
    %v1190 = vpop.permute.xlu0 %1189
    %1191 = vrot.lane.b32.xlu0 %v435, 12
    %v1192 = vpop.permute.xlu0 %1191
    %1193 = vrot.lane.b32.xlu0 %v436, 12
    %v1194 = vpop.permute.xlu0 %1193
    %1195 = vrot.lane.b32.xlu0 %v437, 12
    %v1196 = vpop.permute.xlu0 %1195
    %1197 = vrot.lane.b32.xlu0 %v438, 12
    %v1198 = vpop.permute.xlu0 %1197
    %1199 = vrot.lane.b32.xlu0 %v439, 12
    %v1200 = vpop.permute.xlu0 %1199
    %1201 = vrot.lane.b32.xlu0 %v440, 12
    %v1202 = vpop.permute.xlu0 %1201
    %1203 = vrot.lane.b32.xlu0 %v441, 12
    %v1204 = vpop.permute.xlu0 %1203
    %1205 = vrot.lane.b32.xlu0 %v442, 12
    %v1206 = vpop.permute.xlu0 %1205
    %1207 = vrot.lane.b32.xlu0 %v443, 12
    %v1208 = vpop.permute.xlu0 %1207
    %1209 = vrot.lane.b32.xlu0 %v444, 12
    %v1210 = vpop.permute.xlu0 %1209
    %1211 = vrot.lane.b32.xlu0 %v445, 12
    %v1212 = vpop.permute.xlu0 %1211
    %1213 = vrot.lane.b32.xlu0 %v446, 12
    %v1214 = vpop.permute.xlu0 %1213
    %1215 = vrot.lane.b32.xlu0 %v447, 12
    %v1216 = vpop.permute.xlu0 %1215
    %1217 = vrot.lane.b32.xlu0 %v448, 12
    %v1218 = vpop.permute.xlu0 %1217
    %1219 = vrot.lane.b32.xlu0 %v449, 12
    %v1220 = vpop.permute.xlu0 %1219
    %1221 = vrot.lane.b32.xlu0 %v450, 12
    %v1222 = vpop.permute.xlu0 %1221
    %1223 = vrot.lane.b32.xlu0 %v451, 12
    %v1224 = vpop.permute.xlu0 %1223
    %1225 = vrot.lane.b32.xlu0 %v452, 12
    %v1226 = vpop.permute.xlu0 %1225
    %1227 = vrot.lane.b32.xlu0 %v453, 12
    %v1228 = vpop.permute.xlu0 %1227
    %1229 = vrot.lane.b32.xlu0 %v454, 12
    %v1230 = vpop.permute.xlu0 %1229
    %1231 = vrot.lane.b32.xlu0 %v455, 12
    %v1232 = vpop.permute.xlu0 %1231
    %1233 = vrot.lane.b32.xlu0 %v456, 12
    %v1234 = vpop.permute.xlu0 %1233
    %1235 = vrot.lane.b32.xlu0 %v457, 12
    %v1236 = vpop.permute.xlu0 %1235
    %1237 = vrot.lane.b32.xlu0 %v458, 12
    %v1238 = vpop.permute.xlu0 %1237
    %1239 = vrot.lane.b32.xlu0 %v459, 12
    %v1240 = vpop.permute.xlu0 %1239
    %1241 = vrot.lane.b32.xlu0 %v460, 12
    %v1242 = vpop.permute.xlu0 %1241
    %1243 = vrot.lane.b32.xlu0 %v461, 12
    %v1244 = vpop.permute.xlu0 %1243
    %1245 = vrot.lane.b32.xlu0 %v462, 12
    %v1246 = vpop.permute.xlu0 %1245
    %1247 = vrot.lane.b32.xlu0 %v520, 16
    %v1248 = vpop.permute.xlu0 %1247
    %1249 = vrot.lane.b32.xlu0 %v532, 16
    %v1250 = vpop.permute.xlu0 %1249
    %1251 = vrot.lane.b32.xlu0 %v544, 16
    %v1252 = vpop.permute.xlu0 %1251
    %1253 = vrot.lane.b32.xlu0 %v556, 16
    %v1254 = vpop.permute.xlu0 %1253
    %1255 = vrot.lane.b32.xlu0 %v568, 16
    %v1256 = vpop.permute.xlu0 %1255
    %1257 = vrot.lane.b32.xlu0 %v580, 16
    %v1258 = vpop.permute.xlu0 %1257
    %1259 = vrot.lane.b32.xlu0 %v592, 16
    %v1260 = vpop.permute.xlu0 %1259
    %1261 = vrot.lane.b32.xlu0 %v604, 16
    %v1262 = vpop.permute.xlu0 %1261
    %1263 = vrot.lane.b32.xlu0 %v616, 16
    %v1264 = vpop.permute.xlu0 %1263
    %1265 = vrot.lane.b32.xlu0 %v628, 16
    %v1266 = vpop.permute.xlu0 %1265
    %1267 = vrot.lane.b32.xlu0 %v640, 16
    %v1268 = vpop.permute.xlu0 %1267
    %1269 = vrot.lane.b32.xlu0 %v652, 16
    %v1270 = vpop.permute.xlu0 %1269
    %1271 = vrot.lane.b32.xlu0 %v664, 16
    %v1272 = vpop.permute.xlu0 %1271
    %1273 = vrot.lane.b32.xlu0 %v676, 16
    %v1274 = vpop.permute.xlu0 %1273
    %1275 = vrot.lane.b32.xlu0 %v688, 16
    %v1276 = vpop.permute.xlu0 %1275
    %1277 = vrot.lane.b32.xlu0 %v1036, 16
    %v1278 = vpop.permute.xlu0 %1277
    %1279 = vrot.lane.b32.xlu0 %v700, 16
    %v1280 = vpop.permute.xlu0 %1279
    %1281 = vrot.lane.b32.xlu0 %v712, 16
    %v1282 = vpop.permute.xlu0 %1281
    %1283 = vrot.lane.b32.xlu0 %v724, 16
    %v1284 = vpop.permute.xlu0 %1283
    %1285 = vrot.lane.b32.xlu0 %v736, 16
    %v1286 = vpop.permute.xlu0 %1285
    %1287 = vrot.lane.b32.xlu0 %v748, 16
    %v1288 = vpop.permute.xlu0 %1287
    %1289 = vrot.lane.b32.xlu0 %v760, 16
    %v1290 = vpop.permute.xlu0 %1289
    %1291 = vrot.lane.b32.xlu0 %v772, 16
    %v1292 = vpop.permute.xlu0 %1291
    %1293 = vrot.lane.b32.xlu0 %v784, 16
    %v1294 = vpop.permute.xlu0 %1293
    %1295 = vrot.lane.b32.xlu0 %v796, 16
    %v1296 = vpop.permute.xlu0 %1295
    %1297 = vrot.lane.b32.xlu0 %v808, 16
    %v1298 = vpop.permute.xlu0 %1297
    %1299 = vrot.lane.b32.xlu0 %v820, 16
    %v1300 = vpop.permute.xlu0 %1299
    %1301 = vrot.lane.b32.xlu0 %v832, 16
    %v1302 = vpop.permute.xlu0 %1301
    %1303 = vrot.lane.b32.xlu0 %v844, 16
    %v1304 = vpop.permute.xlu0 %1303
    %1305 = vrot.lane.b32.xlu0 %v856, 16
    %v1306 = vpop.permute.xlu0 %1305
    %1307 = vrot.lane.b32.xlu0 %v868, 16
    %v1308 = vpop.permute.xlu0 %1307
    %1309 = vrot.lane.b32.xlu0 %v1048, 16
    %v1310 = vpop.permute.xlu0 %1309
    %1311 = vrot.lane.b32.xlu0 %v937, 20
    %v1312 = vpop.permute.xlu0 %1311
    %1313 = vrot.lane.b32.xlu0 %v940, 20
    %v1314 = vpop.permute.xlu0 %1313
    %1315 = vrot.lane.b32.xlu0 %v943, 20
    %v1316 = vpop.permute.xlu0 %1315
    %1317 = vrot.lane.b32.xlu0 %v946, 20
    %v1318 = vpop.permute.xlu0 %1317
    %1319 = vrot.lane.b32.xlu0 %v949, 20
    %v1320 = vpop.permute.xlu0 %1319
    %1321 = vrot.lane.b32.xlu0 %v952, 20
    %v1322 = vpop.permute.xlu0 %1321
    %1323 = vrot.lane.b32.xlu0 %v955, 20
    %v1324 = vpop.permute.xlu0 %1323
    %1325 = vrot.lane.b32.xlu0 %v958, 20
    %v1326 = vpop.permute.xlu0 %1325
    %1327 = vrot.lane.b32.xlu0 %v961, 20
    %v1328 = vpop.permute.xlu0 %1327
    %1329 = vrot.lane.b32.xlu0 %v964, 20
    %v1330 = vpop.permute.xlu0 %1329
    %1331 = vrot.lane.b32.xlu0 %v967, 20
    %v1332 = vpop.permute.xlu0 %1331
    %1333 = vrot.lane.b32.xlu0 %v970, 20
    %v1334 = vpop.permute.xlu0 %1333
    %1335 = vrot.lane.b32.xlu0 %v973, 20
    %v1336 = vpop.permute.xlu0 %1335
    %1337 = vrot.lane.b32.xlu0 %v976, 20
    %v1338 = vpop.permute.xlu0 %1337
    %1339 = vrot.lane.b32.xlu0 %v979, 20
    %v1340 = vpop.permute.xlu0 %1339
    %1341 = vrot.lane.b32.xlu0 %v1055, 20
    %v1342 = vpop.permute.xlu0 %1341
    %1343 = vrot.lane.b32.xlu0 %v982, 20
    %v1344 = vpop.permute.xlu0 %1343
    %1345 = vrot.lane.b32.xlu0 %v985, 20
    %v1346 = vpop.permute.xlu0 %1345
    %1347 = vrot.lane.b32.xlu0 %v988, 20
    %v1348 = vpop.permute.xlu0 %1347
    %1349 = vrot.lane.b32.xlu0 %v991, 20
    %v1350 = vpop.permute.xlu0 %1349
    %1351 = vrot.lane.b32.xlu0 %v994, 20
    %v1352 = vpop.permute.xlu0 %1351
    %1353 = vrot.lane.b32.xlu0 %v997, 20
    %v1354 = vpop.permute.xlu0 %1353
    %1355 = vrot.lane.b32.xlu0 %v1000, 20
    %v1356 = vpop.permute.xlu0 %1355
    %1357 = vrot.lane.b32.xlu0 %v1003, 20
    %v1358 = vpop.permute.xlu0 %1357
    %1359 = vrot.lane.b32.xlu0 %v1006, 20
    %v1360 = vpop.permute.xlu0 %1359
    %1361 = vrot.lane.b32.xlu0 %v1009, 20
    %v1362 = vpop.permute.xlu0 %1361
    %1363 = vrot.lane.b32.xlu0 %v1012, 20
    %v1364 = vpop.permute.xlu0 %1363
    %1365 = vrot.lane.b32.xlu0 %v1015, 20
    %v1366 = vpop.permute.xlu0 %1365
    %1367 = vrot.lane.b32.xlu0 %v1018, 20
    %v1368 = vpop.permute.xlu0 %1367
    %1369 = vrot.lane.b32.xlu0 %v1021, 20
    %v1370 = vpop.permute.xlu0 %1369
    %1371 = vrot.lane.b32.xlu0 %v1024, 20
    %v1372 = vpop.permute.xlu0 %1371
    %1373 = vrot.lane.b32.xlu0 %v1058, 20
    %v1374 = vpop.permute.xlu0 %1373
    %1375 = vrot.lane.b32.xlu0 %v432, 24
    %v1376 = vpop.permute.xlu0 %1375
    %1377 = vrot.lane.b32.xlu0 %v433, 24
    %v1378 = vpop.permute.xlu0 %1377
    %1379 = vrot.lane.b32.xlu0 %v434, 24
    %v1380 = vpop.permute.xlu0 %1379
    %1381 = vrot.lane.b32.xlu0 %v435, 24
    %v1382 = vpop.permute.xlu0 %1381
    %1383 = vrot.lane.b32.xlu0 %v436, 24
    %v1384 = vpop.permute.xlu0 %1383
    %1385 = vrot.lane.b32.xlu0 %v437, 24
    %v1386 = vpop.permute.xlu0 %1385
    %1387 = vrot.lane.b32.xlu0 %v438, 24
    %v1388 = vpop.permute.xlu0 %1387
    %1389 = vrot.lane.b32.xlu0 %v439, 24
    %v1390 = vpop.permute.xlu0 %1389
    %1391 = vrot.lane.b32.xlu0 %v440, 24
    %v1392 = vpop.permute.xlu0 %1391
    %1393 = vrot.lane.b32.xlu0 %v441, 24
    %v1394 = vpop.permute.xlu0 %1393
    %1395 = vrot.lane.b32.xlu0 %v442, 24
    %v1396 = vpop.permute.xlu0 %1395
    %1397 = vrot.lane.b32.xlu0 %v443, 24
    %v1398 = vpop.permute.xlu0 %1397
    %1399 = vrot.lane.b32.xlu0 %v444, 24
    %v1400 = vpop.permute.xlu0 %1399
    %1401 = vrot.lane.b32.xlu0 %v445, 24
    %v1402 = vpop.permute.xlu0 %1401
    %1403 = vrot.lane.b32.xlu0 %v446, 24
    %v1404 = vpop.permute.xlu0 %1403
    %1405 = vrot.lane.b32.xlu0 %v430, 24
    %v1406 = vpop.permute.xlu0 %1405
    %1407 = vrot.lane.b32.xlu0 %v448, 24
    %v1408 = vpop.permute.xlu0 %1407
    %1409 = vrot.lane.b32.xlu0 %v449, 24
    %v1410 = vpop.permute.xlu0 %1409
    %1411 = vrot.lane.b32.xlu0 %v450, 24
    %v1412 = vpop.permute.xlu0 %1411
    %1413 = vrot.lane.b32.xlu0 %v451, 24
    %v1414 = vpop.permute.xlu0 %1413
    %1415 = vrot.lane.b32.xlu0 %v452, 24
    %v1416 = vpop.permute.xlu0 %1415
    %1417 = vrot.lane.b32.xlu0 %v453, 24
    %v1418 = vpop.permute.xlu0 %1417
    %1419 = vrot.lane.b32.xlu0 %v454, 24
    %v1420 = vpop.permute.xlu0 %1419
    %1421 = vrot.lane.b32.xlu0 %v455, 24
    %v1422 = vpop.permute.xlu0 %1421
    %1423 = vrot.lane.b32.xlu0 %v456, 24
    %v1424 = vpop.permute.xlu0 %1423
    %1425 = vrot.lane.b32.xlu0 %v457, 24
    %v1426 = vpop.permute.xlu0 %1425
    %1427 = vrot.lane.b32.xlu0 %v458, 24
    %v1428 = vpop.permute.xlu0 %1427
    %1429 = vrot.lane.b32.xlu0 %v459, 24
    %v1430 = vpop.permute.xlu0 %1429
    %1431 = vrot.lane.b32.xlu0 %v460, 24
    %v1432 = vpop.permute.xlu0 %1431
    %1433 = vrot.lane.b32.xlu0 %v461, 24
    %v1434 = vpop.permute.xlu0 %1433
    %1435 = vrot.lane.b32.xlu0 %v462, 24
    %v1436 = vpop.permute.xlu0 %1435
    %1437 = vrot.lane.b32.xlu0 %v532, 28
    %v1438 = vpop.permute.xlu0 %1437
    %1439 = vrot.lane.b32.xlu0 %v544, 28
    %v1440 = vpop.permute.xlu0 %1439
    %1441 = vrot.lane.b32.xlu0 %v556, 28
    %v1442 = vpop.permute.xlu0 %1441
    %1443 = vrot.lane.b32.xlu0 %v568, 28
    %v1444 = vpop.permute.xlu0 %1443
    %1445 = vrot.lane.b32.xlu0 %v580, 28
    %v1446 = vpop.permute.xlu0 %1445
    %1447 = vrot.lane.b32.xlu0 %v592, 28
    %v1448 = vpop.permute.xlu0 %1447
    %1449 = vrot.lane.b32.xlu0 %v604, 28
    %v1450 = vpop.permute.xlu0 %1449
    %1451 = vrot.lane.b32.xlu0 %v616, 28
    %v1452 = vpop.permute.xlu0 %1451
    %1453 = vrot.lane.b32.xlu0 %v628, 28
    %v1454 = vpop.permute.xlu0 %1453
    %1455 = vrot.lane.b32.xlu0 %v640, 28
    %v1456 = vpop.permute.xlu0 %1455
    %1457 = vrot.lane.b32.xlu0 %v652, 28
    %v1458 = vpop.permute.xlu0 %1457
    %1459 = vrot.lane.b32.xlu0 %v664, 28
    %v1460 = vpop.permute.xlu0 %1459
    %1461 = vrot.lane.b32.xlu0 %v676, 28
    %v1462 = vpop.permute.xlu0 %1461
    %1463 = vrot.lane.b32.xlu0 %v688, 28
    %v1464 = vpop.permute.xlu0 %1463
    %1465 = vrot.lane.b32.xlu0 %v1036, 28
    %v1466 = vpop.permute.xlu0 %1465
    %1467 = vrot.lane.b32.xlu0 %v508, 28
    %v1468 = vpop.permute.xlu0 %1467
    %1469 = vrot.lane.b32.xlu0 %v712, 28
    %v1470 = vpop.permute.xlu0 %1469
    %1471 = vrot.lane.b32.xlu0 %v724, 28
    %v1472 = vpop.permute.xlu0 %1471
    %1473 = vrot.lane.b32.xlu0 %v736, 28
    %v1474 = vpop.permute.xlu0 %1473
    %1475 = vrot.lane.b32.xlu0 %v748, 28
    %v1476 = vpop.permute.xlu0 %1475
    %1477 = vrot.lane.b32.xlu0 %v760, 28
    %v1478 = vpop.permute.xlu0 %1477
    %1479 = vrot.lane.b32.xlu0 %v772, 28
    %v1480 = vpop.permute.xlu0 %1479
    %1481 = vrot.lane.b32.xlu0 %v784, 28
    %v1482 = vpop.permute.xlu0 %1481
    %1483 = vrot.lane.b32.xlu0 %v796, 28
    %v1484 = vpop.permute.xlu0 %1483
    %1485 = vrot.lane.b32.xlu0 %v808, 28
    %v1486 = vpop.permute.xlu0 %1485
    %1487 = vrot.lane.b32.xlu0 %v820, 28
    %v1488 = vpop.permute.xlu0 %1487
    %1489 = vrot.lane.b32.xlu0 %v832, 28
    %v1490 = vpop.permute.xlu0 %1489
    %1491 = vrot.lane.b32.xlu0 %v844, 28
    %v1492 = vpop.permute.xlu0 %1491
    %1493 = vrot.lane.b32.xlu0 %v856, 28
    %v1494 = vpop.permute.xlu0 %1493
    %1495 = vrot.lane.b32.xlu0 %v868, 28
    %v1496 = vpop.permute.xlu0 %1495
    %1497 = vrot.lane.b32.xlu0 %v1048, 28
    %v1498 = vpop.permute.xlu0 %1497
    %1499 = vrot.lane.b32.xlu0 %v940, 32
    %v1500 = vpop.permute.xlu0 %1499
    %1501 = vrot.lane.b32.xlu0 %v943, 32
    %v1502 = vpop.permute.xlu0 %1501
    %1503 = vrot.lane.b32.xlu0 %v946, 32
    %v1504 = vpop.permute.xlu0 %1503
    %1505 = vrot.lane.b32.xlu0 %v949, 32
    %v1506 = vpop.permute.xlu0 %1505
    %1507 = vrot.lane.b32.xlu0 %v952, 32
    %v1508 = vpop.permute.xlu0 %1507
    %1509 = vrot.lane.b32.xlu0 %v955, 32
    %v1510 = vpop.permute.xlu0 %1509
    %1511 = vrot.lane.b32.xlu0 %v958, 32
    %v1512 = vpop.permute.xlu0 %1511
    %1513 = vrot.lane.b32.xlu0 %v961, 32
    %v1514 = vpop.permute.xlu0 %1513
    %1515 = vrot.lane.b32.xlu0 %v964, 32
    %v1516 = vpop.permute.xlu0 %1515
    %1517 = vrot.lane.b32.xlu0 %v967, 32
    %v1518 = vpop.permute.xlu0 %1517
    %1519 = vrot.lane.b32.xlu0 %v970, 32
    %v1520 = vpop.permute.xlu0 %1519
    %1521 = vrot.lane.b32.xlu0 %v973, 32
    %v1522 = vpop.permute.xlu0 %1521
    %1523 = vrot.lane.b32.xlu0 %v976, 32
    %v1524 = vpop.permute.xlu0 %1523
    %1525 = vrot.lane.b32.xlu0 %v979, 32
    %v1526 = vpop.permute.xlu0 %1525
    %1527 = vrot.lane.b32.xlu0 %v1055, 32
    %v1528 = vpop.permute.xlu0 %1527
    %1529 = vrot.lane.b32.xlu0 %v934, 32
    %v1530 = vpop.permute.xlu0 %1529
    %1531 = vrot.lane.b32.xlu0 %v985, 32
    %v1532 = vpop.permute.xlu0 %1531
    %1533 = vrot.lane.b32.xlu0 %v988, 32
    %v1534 = vpop.permute.xlu0 %1533
    %1535 = vrot.lane.b32.xlu0 %v991, 32
    %v1536 = vpop.permute.xlu0 %1535
    %1537 = vrot.lane.b32.xlu0 %v994, 32
    %v1538 = vpop.permute.xlu0 %1537
    %1539 = vrot.lane.b32.xlu0 %v997, 32
    %v1540 = vpop.permute.xlu0 %1539
    %1541 = vrot.lane.b32.xlu0 %v1000, 32
    %v1542 = vpop.permute.xlu0 %1541
    %1543 = vrot.lane.b32.xlu0 %v1003, 32
    %v1544 = vpop.permute.xlu0 %1543
    %1545 = vrot.lane.b32.xlu0 %v1006, 32
    %v1546 = vpop.permute.xlu0 %1545
    %1547 = vrot.lane.b32.xlu0 %v1009, 32
    %v1548 = vpop.permute.xlu0 %1547
    %1549 = vrot.lane.b32.xlu0 %v1012, 32
    %v1550 = vpop.permute.xlu0 %1549
    %1551 = vrot.lane.b32.xlu0 %v1015, 32
    %v1552 = vpop.permute.xlu0 %1551
    %1553 = vrot.lane.b32.xlu0 %v1018, 32
    %v1554 = vpop.permute.xlu0 %1553
    %1555 = vrot.lane.b32.xlu0 %v1021, 32
    %v1556 = vpop.permute.xlu0 %1555
    %1557 = vrot.lane.b32.xlu0 %v1024, 32
    %v1558 = vpop.permute.xlu0 %1557
    %1559 = vrot.lane.b32.xlu0 %v1058, 32
    %v1560 = vpop.permute.xlu0 %1559
    %vm1561 = vcmask 31744
    %v1563 = vsel %vm1561, %v430, %v1060
    %v1565 = vsel %vm1561, %v431, %v1062
    %v1567 = vsel %vm1561, %v432, %v1064
    %v1569 = vsel %vm1561, %v433, %v1066
    %v1571 = vsel %vm1561, %v434, %v1068
    %v1573 = vsel %vm1561, %v435, %v1070
    %v1575 = vsel %vm1561, %v436, %v1072
    %v1577 = vsel %vm1561, %v437, %v1074
    %v1579 = vsel %vm1561, %v438, %v1076
    %v1581 = vsel %vm1561, %v439, %v1078
    %v1583 = vsel %vm1561, %v440, %v1080
    %v1585 = vsel %vm1561, %v441, %v1082
    %v1587 = vsel %vm1561, %v442, %v1084
    %v1589 = vsel %vm1561, %v443, %v1086
    %v1591 = vsel %vm1561, %v444, %v1088
    %v1593 = vsel %vm1561, %v445, %v1090
    %v1595 = vsel %vm1561, %v447, %v1092
    %v1597 = vsel %vm1561, %v448, %v1094
    %v1599 = vsel %vm1561, %v449, %v1096
    %v1601 = vsel %vm1561, %v450, %v1098
    %v1603 = vsel %vm1561, %v451, %v1100
    %v1605 = vsel %vm1561, %v452, %v1102
    %v1607 = vsel %vm1561, %v453, %v1104
    %v1609 = vsel %vm1561, %v454, %v1106
    %v1611 = vsel %vm1561, %v455, %v1108
    %v1613 = vsel %vm1561, %v456, %v1110
    %v1615 = vsel %vm1561, %v457, %v1112
    %v1617 = vsel %vm1561, %v458, %v1114
    %v1619 = vsel %vm1561, %v459, %v1116
    %v1621 = vsel %vm1561, %v460, %v1118
    %v1623 = vsel %vm1561, %v461, %v1120
    %vm1624 = vcmask 64512
    %v1626 = vsel %vm1624, %v1563, %v1122
    %v1628 = vsel %vm1624, %v1565, %v1124
    %v1630 = vsel %vm1624, %v1567, %v1126
    %v1632 = vsel %vm1624, %v1569, %v1128
    %v1634 = vsel %vm1624, %v1571, %v1130
    %v1636 = vsel %vm1624, %v1573, %v1132
    %v1638 = vsel %vm1624, %v1575, %v1134
    %v1640 = vsel %vm1624, %v1577, %v1136
    %v1642 = vsel %vm1624, %v1579, %v1138
    %v1644 = vsel %vm1624, %v1581, %v1140
    %v1646 = vsel %vm1624, %v1583, %v1142
    %v1648 = vsel %vm1624, %v1585, %v1144
    %v1650 = vsel %vm1624, %v1587, %v1146
    %v1652 = vsel %vm1624, %v1589, %v1148
    %v1654 = vsel %vm1624, %v1591, %v1150
    %v1656 = vsel %vm1624, %v1593, %v1152
    %v1658 = vsel %vm1624, %v1595, %v1154
    %v1660 = vsel %vm1624, %v1597, %v1156
    %v1662 = vsel %vm1624, %v1599, %v1158
    %v1664 = vsel %vm1624, %v1601, %v1160
    %v1666 = vsel %vm1624, %v1603, %v1162
    %v1668 = vsel %vm1624, %v1605, %v1164
    %v1670 = vsel %vm1624, %v1607, %v1166
    %v1672 = vsel %vm1624, %v1609, %v1168
    %v1674 = vsel %vm1624, %v1611, %v1170
    %v1676 = vsel %vm1624, %v1613, %v1172
    %v1678 = vsel %vm1624, %v1615, %v1174
    %v1680 = vsel %vm1624, %v1617, %v1176
    %v1682 = vsel %vm1624, %v1619, %v1178
    %v1684 = vsel %vm1624, %v1621, %v1180
    %v1686 = vsel %vm1624, %v1623, %v1182
    %vm1687 = vcmask 97280
    %v1689 = vsel %vm1687, %v1626, %v1184
    %v1691 = vsel %vm1687, %v1628, %v1186
    %v1693 = vsel %vm1687, %v1630, %v1188
    %v1695 = vsel %vm1687, %v1632, %v1190
    %v1697 = vsel %vm1687, %v1634, %v1192
    %v1699 = vsel %vm1687, %v1636, %v1194
    %v1701 = vsel %vm1687, %v1638, %v1196
    %v1703 = vsel %vm1687, %v1640, %v1198
    %v1705 = vsel %vm1687, %v1642, %v1200
    %v1707 = vsel %vm1687, %v1644, %v1202
    %v1709 = vsel %vm1687, %v1646, %v1204
    %v1711 = vsel %vm1687, %v1648, %v1206
    %v1713 = vsel %vm1687, %v1650, %v1208
    %v1715 = vsel %vm1687, %v1652, %v1210
    %v1717 = vsel %vm1687, %v1654, %v1212
    %v1719 = vsel %vm1687, %v1656, %v1214
    %v1721 = vsel %vm1687, %v1626, %v1216
    %v1723 = vsel %vm1687, %v1658, %v1218
    %v1725 = vsel %vm1687, %v1660, %v1220
    %v1727 = vsel %vm1687, %v1662, %v1222
    %v1729 = vsel %vm1687, %v1664, %v1224
    %v1731 = vsel %vm1687, %v1666, %v1226
    %v1733 = vsel %vm1687, %v1668, %v1228
    %v1735 = vsel %vm1687, %v1670, %v1230
    %v1737 = vsel %vm1687, %v1672, %v1232
    %v1739 = vsel %vm1687, %v1674, %v1234
    %v1741 = vsel %vm1687, %v1676, %v1236
    %v1743 = vsel %vm1687, %v1678, %v1238
    %v1745 = vsel %vm1687, %v1680, %v1240
    %v1747 = vsel %vm1687, %v1682, %v1242
    %v1749 = vsel %vm1687, %v1684, %v1244
    %v1751 = vsel %vm1687, %v1686, %v1246
    %vm1752 = vcmask 130048
    %v1754 = vsel %vm1752, %v1689, %v1248
    %v1756 = vsel %vm1752, %v1691, %v1250
    %v1758 = vsel %vm1752, %v1693, %v1252
    %v1760 = vsel %vm1752, %v1695, %v1254
    %v1762 = vsel %vm1752, %v1697, %v1256
    %v1764 = vsel %vm1752, %v1699, %v1258
    %v1766 = vsel %vm1752, %v1701, %v1260
    %v1768 = vsel %vm1752, %v1703, %v1262
    %v1770 = vsel %vm1752, %v1705, %v1264
    %v1772 = vsel %vm1752, %v1707, %v1266
    %v1774 = vsel %vm1752, %v1709, %v1268
    %v1776 = vsel %vm1752, %v1711, %v1270
    %v1778 = vsel %vm1752, %v1713, %v1272
    %v1780 = vsel %vm1752, %v1715, %v1274
    %v1782 = vsel %vm1752, %v1717, %v1276
    %v1784 = vsel %vm1752, %v1719, %v1278
    %v1786 = vsel %vm1752, %v1721, %v1280
    %v1788 = vsel %vm1752, %v1723, %v1282
    %v1790 = vsel %vm1752, %v1725, %v1284
    %v1792 = vsel %vm1752, %v1727, %v1286
    %v1794 = vsel %vm1752, %v1729, %v1288
    %v1796 = vsel %vm1752, %v1731, %v1290
    %v1798 = vsel %vm1752, %v1733, %v1292
    %v1800 = vsel %vm1752, %v1735, %v1294
    %v1802 = vsel %vm1752, %v1737, %v1296
    %v1804 = vsel %vm1752, %v1739, %v1298
    %v1806 = vsel %vm1752, %v1741, %v1300
    %v1808 = vsel %vm1752, %v1743, %v1302
    %v1810 = vsel %vm1752, %v1745, %v1304
    %v1812 = vsel %vm1752, %v1747, %v1306
    %v1814 = vsel %vm1752, %v1749, %v1308
    %v1816 = vsel %vm1752, %v1751, %v1310
    %vm1817 = vcmask 162816
    %v1819 = vsel %vm1817, %v1754, %v1312
    %v1821 = vsel %vm1817, %v1756, %v1314
    %v1823 = vsel %vm1817, %v1758, %v1316
    %v1825 = vsel %vm1817, %v1760, %v1318
    %v1827 = vsel %vm1817, %v1762, %v1320
    %v1829 = vsel %vm1817, %v1764, %v1322
    %v1831 = vsel %vm1817, %v1766, %v1324
    %v1833 = vsel %vm1817, %v1768, %v1326
    %v1835 = vsel %vm1817, %v1770, %v1328
    %v1837 = vsel %vm1817, %v1772, %v1330
    %v1839 = vsel %vm1817, %v1774, %v1332
    %v1841 = vsel %vm1817, %v1776, %v1334
    %v1843 = vsel %vm1817, %v1778, %v1336
    %v1845 = vsel %vm1817, %v1780, %v1338
    %v1847 = vsel %vm1817, %v1782, %v1340
    %v1849 = vsel %vm1817, %v1784, %v1342
    %v1851 = vsel %vm1817, %v1786, %v1344
    %v1853 = vsel %vm1817, %v1788, %v1346
    %v1855 = vsel %vm1817, %v1790, %v1348
    %v1857 = vsel %vm1817, %v1792, %v1350
    %v1859 = vsel %vm1817, %v1794, %v1352
    %v1861 = vsel %vm1817, %v1796, %v1354
    %v1863 = vsel %vm1817, %v1798, %v1356
    %v1865 = vsel %vm1817, %v1800, %v1358
    %v1867 = vsel %vm1817, %v1802, %v1360
    %v1869 = vsel %vm1817, %v1804, %v1362
    %v1871 = vsel %vm1817, %v1806, %v1364
    %v1873 = vsel %vm1817, %v1808, %v1366
    %v1875 = vsel %vm1817, %v1810, %v1368
    %v1877 = vsel %vm1817, %v1812, %v1370
    %v1879 = vsel %vm1817, %v1814, %v1372
    %v1881 = vsel %vm1817, %v1816, %v1374
    %vm1882 = vcmask 195584
    %v1884 = vsel %vm1882, %v1819, %v1376
    %v1886 = vsel %vm1882, %v1821, %v1378
    %v1888 = vsel %vm1882, %v1823, %v1380
    %v1890 = vsel %vm1882, %v1825, %v1382
    %v1892 = vsel %vm1882, %v1827, %v1384
    %v1894 = vsel %vm1882, %v1829, %v1386
    %v1896 = vsel %vm1882, %v1831, %v1388
    %v1898 = vsel %vm1882, %v1833, %v1390
    %v1900 = vsel %vm1882, %v1835, %v1392
    %v1902 = vsel %vm1882, %v1837, %v1394
    %v1904 = vsel %vm1882, %v1839, %v1396
    %v1906 = vsel %vm1882, %v1841, %v1398
    %v1908 = vsel %vm1882, %v1843, %v1400
    %v1910 = vsel %vm1882, %v1845, %v1402
    %v1912 = vsel %vm1882, %v1847, %v1404
    %v1914 = vsel %vm1882, %v1849, %v1406
    %v1916 = vsel %vm1882, %v1851, %v1408
    %v1918 = vsel %vm1882, %v1853, %v1410
    %v1920 = vsel %vm1882, %v1855, %v1412
    %v1922 = vsel %vm1882, %v1857, %v1414
    %v1924 = vsel %vm1882, %v1859, %v1416
    %v1926 = vsel %vm1882, %v1861, %v1418
    %v1928 = vsel %vm1882, %v1863, %v1420
    %v1930 = vsel %vm1882, %v1865, %v1422
    %v1932 = vsel %vm1882, %v1867, %v1424
    %v1934 = vsel %vm1882, %v1869, %v1426
    %v1936 = vsel %vm1882, %v1871, %v1428
    %v1938 = vsel %vm1882, %v1873, %v1430
    %v1940 = vsel %vm1882, %v1875, %v1432
    %v1942 = vsel %vm1882, %v1877, %v1434
    %v1944 = vsel %vm1882, %v1879, %v1436
    %v1945 = vsel %vm1882, %v1881, %v1406
    %vm1946 = vcmask 228352
    %v1948 = vsel %vm1946, %v1884, %v1438
    %v1950 = vsel %vm1946, %v1886, %v1440
    %v1952 = vsel %vm1946, %v1888, %v1442
    %v1954 = vsel %vm1946, %v1890, %v1444
    %v1956 = vsel %vm1946, %v1892, %v1446
    %v1958 = vsel %vm1946, %v1894, %v1448
    %v1960 = vsel %vm1946, %v1896, %v1450
    %v1962 = vsel %vm1946, %v1898, %v1452
    %v1964 = vsel %vm1946, %v1900, %v1454
    %v1966 = vsel %vm1946, %v1902, %v1456
    %v1968 = vsel %vm1946, %v1904, %v1458
    %v1970 = vsel %vm1946, %v1906, %v1460
    %v1972 = vsel %vm1946, %v1908, %v1462
    %v1974 = vsel %vm1946, %v1910, %v1464
    %v1976 = vsel %vm1946, %v1912, %v1466
    %v1978 = vsel %vm1946, %v1914, %v1468
    %v1980 = vsel %vm1946, %v1916, %v1470
    %v1982 = vsel %vm1946, %v1918, %v1472
    %v1984 = vsel %vm1946, %v1920, %v1474
    %v1986 = vsel %vm1946, %v1922, %v1476
    %v1988 = vsel %vm1946, %v1924, %v1478
    %v1990 = vsel %vm1946, %v1926, %v1480
    %v1992 = vsel %vm1946, %v1928, %v1482
    %v1994 = vsel %vm1946, %v1930, %v1484
    %v1996 = vsel %vm1946, %v1932, %v1486
    %v1998 = vsel %vm1946, %v1934, %v1488
    %v2000 = vsel %vm1946, %v1936, %v1490
    %v2002 = vsel %vm1946, %v1938, %v1492
    %v2004 = vsel %vm1946, %v1940, %v1494
    %v2006 = vsel %vm1946, %v1942, %v1496
    %v2008 = vsel %vm1946, %v1944, %v1498
    %v2009 = vsel %vm1946, %v1945, %v1468
    %vm2010 = vcmask 261120
    %v2012 = vsel %vm2010, %v1948, %v1500
    %v2014 = vsel %vm2010, %v1950, %v1502
    %v2016 = vsel %vm2010, %v1952, %v1504
    %v2018 = vsel %vm2010, %v1954, %v1506
    %v2020 = vsel %vm2010, %v1956, %v1508
    %v2022 = vsel %vm2010, %v1958, %v1510
    %v2024 = vsel %vm2010, %v1960, %v1512
    %v2026 = vsel %vm2010, %v1962, %v1514
    %v2028 = vsel %vm2010, %v1964, %v1516
    %v2030 = vsel %vm2010, %v1966, %v1518
    %v2032 = vsel %vm2010, %v1968, %v1520
    %v2034 = vsel %vm2010, %v1970, %v1522
    %v2036 = vsel %vm2010, %v1972, %v1524
    %v2038 = vsel %vm2010, %v1974, %v1526
    %v2040 = vsel %vm2010, %v1976, %v1528
    %v2042 = vsel %vm2010, %v1978, %v1530
    %v2044 = vsel %vm2010, %v1980, %v1532
    %v2046 = vsel %vm2010, %v1982, %v1534
    %v2048 = vsel %vm2010, %v1984, %v1536
    %v2050 = vsel %vm2010, %v1986, %v1538
    %v2052 = vsel %vm2010, %v1988, %v1540
    %v2054 = vsel %vm2010, %v1990, %v1542
    %v2056 = vsel %vm2010, %v1992, %v1544
    %v2058 = vsel %vm2010, %v1994, %v1546
    %v2060 = vsel %vm2010, %v1996, %v1548
    %v2062 = vsel %vm2010, %v1998, %v1550
    %v2064 = vsel %vm2010, %v2000, %v1552
    %v2066 = vsel %vm2010, %v2002, %v1554
    %v2068 = vsel %vm2010, %v2004, %v1556
    %v2070 = vsel %vm2010, %v2006, %v1558
    %v2072 = vsel %vm2010, %v2008, %v1560
    %v2073 = vsel %vm2010, %v2009, %v1530
    %v2074 = vld [vmem:[%s1] sm:$0xf]
    %v2075 = vld [vmem:[%s1 + $0x4] sm:$0xf]
    %v2076 = vld [vmem:[%s1 + $0x8] sm:$0xf]
    %v2077 = vld [vmem:[%s1 + $0xc] sm:$0xf]
    %v2078 = vld [vmem:[%s1 + $0x10] sm:$0x3]
    %v2079 = vld [vmem:[%s2] sm:$0x1]
    %v2081 = vlaneseq
    %v2082 = vshrl.u32 %v2081, 7
    %v2083 = vsub.s32 0, %v2082
    %v2084 = vrot.slane %v2079, %v2083
    %v2091 = vunpack.c.l.b16 %v2074
    %v2092 = vunpack.c.l.b16 %v2075
    %v2093 = vunpack.c.l.b16 %v2076
    %v2094 = vunpack.c.l.b16 %v2077
    %v2095 = vunpack.c.l.b16 %v2078
    %v2096 = vpack.c.b16 %v2092, %v2091
    %v2097 = vpack.c.b16 %v2094, %v2093
    %v2098 = vpack.c.b16 %v2095, %v2095
    %vm2101 = vcmask 293888
    %v2102 = vsel %vm2101, %v2012, 0
    %v2104 = vsel %vm2101, %v2014, 0
    %v2106 = vsel %vm2101, %v2016, 0
    %v2108 = vsel %vm2101, %v2018, 0
    %v2110 = vsel %vm2101, %v2020, 0
    %v2112 = vsel %vm2101, %v2022, 0
    %v2114 = vsel %vm2101, %v2024, 0
    %v2116 = vsel %vm2101, %v2026, 0
    %v2118 = vsel %vm2101, %v2028, 0
    %v2120 = vsel %vm2101, %v2030, 0
    %v2122 = vsel %vm2101, %v2032, 0
    %v2124 = vsel %vm2101, %v2034, 0
    %v2126 = vsel %vm2101, %v2036, 0
    %v2128 = vsel %vm2101, %v2038, 0
    %v2130 = vsel %vm2101, %v2040, 0
    %v2132 = vsel %vm2101, %v2042, 0
    %v2134 = vsel %vm2101, %v2044, 0
    %v2136 = vsel %vm2101, %v2046, 0
    %v2138 = vsel %vm2101, %v2048, 0
    %v2140 = vsel %vm2101, %v2050, 0
    %v2142 = vsel %vm2101, %v2052, 0
    %v2144 = vsel %vm2101, %v2054, 0
    %v2146 = vsel %vm2101, %v2056, 0
    %v2148 = vsel %vm2101, %v2058, 0
    %v2150 = vsel %vm2101, %v2060, 0
    %v2152 = vsel %vm2101, %v2062, 0
    %v2154 = vsel %vm2101, %v2064, 0
    %v2156 = vsel %vm2101, %v2066, 0
    %v2158 = vsel %vm2101, %v2068, 0
    %v2160 = vsel %vm2101, %v2070, 0
    %v2162 = vsel %vm2101, %v2072, 0
    %v2164 = vsel %vm2101, %v2073, 0
    %vm2166 = vcmask 1041408
    %v2168 = vsel %vm2166, %v2098, 0
    %2170 = vmatprep.subr.bf16.mxu0 0
    %2171 = vmatpush1.bf16.msra.mxu0 %v2096
    %2172 = vmatprep.subr.bf16.mxu0 0
    %2173 = vmatpush1.bf16.msra.mxu0 %v2097
    %2174 = vmatprep.subr.bf16.mxu0 0
    %2175 = vmatpush1.bf16.msra.mxu0 %v2168
    %2176 = vmatprep.subr.bf16.mxu0 0
    %2177 = vmatpush1.bf16.msra.mxu0 0
    %2178 = vmatprep.subr.bf16.mxu0 0
    %2179 = vmatpush1.bf16.msra.mxu0 0
    %2180 = vmatprep.subr.bf16.mxu0 0
    %2181 = vmatpush1.bf16.msra.mxu0 0
    %2182 = vmatprep.subr.bf16.mxu0 0
    %2183 = vmatpush1.bf16.msra.mxu0 0
    %2184 = vmatprep.subr.bf16.mxu0 0
    %2185 = vmatpush1.bf16.msra.mxu0 0
    %2186 = vmatprep.subr.bf16.mxu0 0
    %2187 = vmatpush1.bf16.msra.mxu0 0
    %2188 = vmatprep.subr.bf16.mxu0 0
    %2189 = vmatpush1.bf16.msra.mxu0 0
    %2190 = vmatprep.subr.bf16.mxu0 0
    %2191 = vmatpush1.bf16.msra.mxu0 0
    %2192 = vmatprep.subr.bf16.mxu0 0
    %2193 = vmatpush1.bf16.msra.mxu0 0
    %2194 = vmatprep.subr.bf16.mxu0 0
    %2195 = vmatpush1.bf16.msra.mxu0 0
    %2196 = vmatprep.subr.bf16.mxu0 0
    %2197 = vmatpush1.bf16.msra.mxu0 0
    %2198 = vmatprep.subr.bf16.mxu0 0
    %2199 = vmatpush1.bf16.msra.mxu0 0
    %2200 = vmatprep.subr.bf16.mxu0 0
    %2201 = vmatpush1.bf16.msra.mxu0 0
    %2202 = vmatprep.mubr.bf16.mxu0 0
    %2203 = vmatmul.mubr.bf16.gmra.mrb[0].mxu0 %v2102
    %v2204 = vpop.f32.mrb[0].mxu0
    %v2205 = vadd.f32 %v2084, %v2204
    %v2206 = vpop.f32.mrb[0].mxu0
    %v2207 = vpop.f32.mrb[0].mxu0
    %v2208 = vadd.f32 %v2084, %v2207
    %v2209 = vpop.f32.mrb[0].mxu0
    %2210 = vmatprep.mubr.bf16.mxu0 0
    %2211 = vmatmul.mubr.bf16.gmra.mrb[0].mxu0 %v2104
    %v2212 = vpop.f32.mrb[0].mxu0
    %v2213 = vadd.f32 %v2084, %v2212
    %v2214 = vpop.f32.mrb[0].mxu0
    %v2215 = vpop.f32.mrb[0].mxu0
    %v2216 = vadd.f32 %v2084, %v2215
    %v2217 = vpop.f32.mrb[0].mxu0
    %2218 = vmatprep.mubr.bf16.mxu0 0
    %2219 = vmatmul.mubr.bf16.gmra.mrb[0].mxu0 %v2106
    %v2220 = vpop.f32.mrb[0].mxu0
    %v2221 = vadd.f32 %v2084, %v2220
    %v2222 = vpop.f32.mrb[0].mxu0
    %v2223 = vpop.f32.mrb[0].mxu0
    %v2224 = vadd.f32 %v2084, %v2223
    %v2225 = vpop.f32.mrb[0].mxu0
    %2226 = vmatprep.mubr.bf16.mxu0 0
    %2227 = vmatmul.mubr.bf16.gmra.mrb[0].mxu0 %v2108
    %v2228 = vpop.f32.mrb[0].mxu0
    %v2229 = vadd.f32 %v2084, %v2228
    %v2230 = vpop.f32.mrb[0].mxu0
    %v2231 = vpop.f32.mrb[0].mxu0
    %v2232 = vadd.f32 %v2084, %v2231
    %v2233 = vpop.f32.mrb[0].mxu0
    %2234 = vmatprep.mubr.bf16.mxu0 0
    %2235 = vmatmul.mubr.bf16.gmra.mrb[0].mxu0 %v2110
    %v2236 = vpop.f32.mrb[0].mxu0
    %v2237 = vadd.f32 %v2084, %v2236
    %v2238 = vpop.f32.mrb[0].mxu0
    %v2239 = vpop.f32.mrb[0].mxu0
    %v2240 = vadd.f32 %v2084, %v2239
    %v2241 = vpop.f32.mrb[0].mxu0
    %2242 = vmatprep.mubr.bf16.mxu0 0
    %2243 = vmatmul.mubr.bf16.gmra.mrb[0].mxu0 %v2112
    %v2244 = vpop.f32.mrb[0].mxu0
    %v2245 = vadd.f32 %v2084, %v2244
    %v2246 = vpop.f32.mrb[0].mxu0
    %v2247 = vpop.f32.mrb[0].mxu0
    %v2248 = vadd.f32 %v2084, %v2247
    %v2249 = vpop.f32.mrb[0].mxu0
    %2250 = vmatprep.mubr.bf16.mxu0 0
    %2251 = vmatmul.mubr.bf16.gmra.mrb[0].mxu0 %v2114
    %v2252 = vpop.f32.mrb[0].mxu0
    %v2253 = vadd.f32 %v2084, %v2252
    %v2254 = vpop.f32.mrb[0].mxu0
    %v2255 = vpop.f32.mrb[0].mxu0
    %v2256 = vadd.f32 %v2084, %v2255
    %v2257 = vpop.f32.mrb[0].mxu0
    %2258 = vmatprep.mubr.bf16.mxu0 0
    %2259 = vmatmul.mubr.bf16.gmra.mrb[0].mxu0 %v2116
    %v2260 = vpop.f32.mrb[0].mxu0
    %v2261 = vadd.f32 %v2084, %v2260
    %v2262 = vpop.f32.mrb[0].mxu0
    %v2263 = vpop.f32.mrb[0].mxu0
    %v2264 = vadd.f32 %v2084, %v2263
    %v2265 = vpop.f32.mrb[0].mxu0
    %2266 = vmatprep.mubr.bf16.mxu0 0
    %2267 = vmatmul.mubr.bf16.gmra.mrb[0].mxu0 %v2118
    %v2268 = vpop.f32.mrb[0].mxu0
    %v2269 = vadd.f32 %v2084, %v2268
    %v2270 = vpop.f32.mrb[0].mxu0
    %v2271 = vpop.f32.mrb[0].mxu0
    %v2272 = vadd.f32 %v2084, %v2271
    %v2273 = vpop.f32.mrb[0].mxu0
    %2274 = vmatprep.mubr.bf16.mxu0 0
    %2275 = vmatmul.mubr.bf16.gmra.mrb[0].mxu0 %v2120
    %v2276 = vpop.f32.mrb[0].mxu0
    %v2277 = vadd.f32 %v2084, %v2276
    %v2278 = vpop.f32.mrb[0].mxu0
    %v2279 = vpop.f32.mrb[0].mxu0
    %v2280 = vadd.f32 %v2084, %v2279
    %v2281 = vpop.f32.mrb[0].mxu0
    %2282 = vmatprep.mubr.bf16.mxu0 0
    %2283 = vmatmul.mubr.bf16.gmra.mrb[0].mxu0 %v2122
    %v2284 = vpop.f32.mrb[0].mxu0
    %v2285 = vadd.f32 %v2084, %v2284
    %v2286 = vpop.f32.mrb[0].mxu0
    %v2287 = vpop.f32.mrb[0].mxu0
    %v2288 = vadd.f32 %v2084, %v2287
    %v2289 = vpop.f32.mrb[0].mxu0
    %2290 = vmatprep.mubr.bf16.mxu0 0
    %2291 = vmatmul.mubr.bf16.gmra.mrb[0].mxu0 %v2124
    %v2292 = vpop.f32.mrb[0].mxu0
    %v2293 = vadd.f32 %v2084, %v2292
    %v2294 = vpop.f32.mrb[0].mxu0
    %v2295 = vpop.f32.mrb[0].mxu0
    %v2296 = vadd.f32 %v2084, %v2295
    %v2297 = vpop.f32.mrb[0].mxu0
    %2298 = vmatprep.mubr.bf16.mxu0 0
    %2299 = vmatmul.mubr.bf16.gmra.mrb[0].mxu0 %v2126
    %v2300 = vpop.f32.mrb[0].mxu0
    %v2301 = vadd.f32 %v2084, %v2300
    %v2302 = vpop.f32.mrb[0].mxu0
    %v2303 = vpop.f32.mrb[0].mxu0
    %v2304 = vadd.f32 %v2084, %v2303
    %v2305 = vpop.f32.mrb[0].mxu0
    %2306 = vmatprep.mubr.bf16.mxu0 0
    %2307 = vmatmul.mubr.bf16.gmra.mrb[0].mxu0 %v2128
    %v2308 = vpop.f32.mrb[0].mxu0
    %v2309 = vadd.f32 %v2084, %v2308
    %v2310 = vpop.f32.mrb[0].mxu0
    %v2311 = vpop.f32.mrb[0].mxu0
    %v2312 = vadd.f32 %v2084, %v2311
    %v2313 = vpop.f32.mrb[0].mxu0
    %2314 = vmatprep.mubr.bf16.mxu0 0
    %2315 = vmatmul.mubr.bf16.gmra.mrb[0].mxu0 %v2130
    %v2316 = vpop.f32.mrb[0].mxu0
    %v2317 = vadd.f32 %v2084, %v2316
    %v2318 = vpop.f32.mrb[0].mxu0
    %v2319 = vpop.f32.mrb[0].mxu0
    %v2320 = vadd.f32 %v2084, %v2319
    %v2321 = vpop.f32.mrb[0].mxu0
    %2322 = vmatprep.mubr.bf16.mxu0 0
    %2323 = vmatmul.mubr.bf16.gmra.mrb[0].mxu0 %v2132
    %v2324 = vpop.f32.mrb[0].mxu0
    %v2325 = vadd.f32 %v2084, %v2324
    %v2326 = vpop.f32.mrb[0].mxu0
    %v2327 = vpop.f32.mrb[0].mxu0
    %v2328 = vadd.f32 %v2084, %v2327
    %v2329 = vpop.f32.mrb[0].mxu0
    %2330 = vmatprep.mubr.bf16.mxu0 0
    %2331 = vmatmul.mubr.bf16.gmra.mrb[0].mxu0 %v2134
    %v2332 = vpop.f32.mrb[0].mxu0
    %v2333 = vadd.f32 %v2084, %v2332
    %v2334 = vpop.f32.mrb[0].mxu0
    %v2335 = vpop.f32.mrb[0].mxu0
    %v2336 = vadd.f32 %v2084, %v2335
    %v2337 = vpop.f32.mrb[0].mxu0
    %2338 = vmatprep.mubr.bf16.mxu0 0
    %2339 = vmatmul.mubr.bf16.gmra.mrb[0].mxu0 %v2136
    %v2340 = vpop.f32.mrb[0].mxu0
    %v2341 = vadd.f32 %v2084, %v2340
    %v2342 = vpop.f32.mrb[0].mxu0
    %v2343 = vpop.f32.mrb[0].mxu0
    %v2344 = vadd.f32 %v2084, %v2343
    %v2345 = vpop.f32.mrb[0].mxu0
    %2346 = vmatprep.mubr.bf16.mxu0 0
    %2347 = vmatmul.mubr.bf16.gmra.mrb[0].mxu0 %v2138
    %v2348 = vpop.f32.mrb[0].mxu0
    %v2349 = vadd.f32 %v2084, %v2348
    %v2350 = vpop.f32.mrb[0].mxu0
    %v2351 = vpop.f32.mrb[0].mxu0
    %v2352 = vadd.f32 %v2084, %v2351
    %v2353 = vpop.f32.mrb[0].mxu0
    %2354 = vmatprep.mubr.bf16.mxu0 0
    %2355 = vmatmul.mubr.bf16.gmra.mrb[0].mxu0 %v2140
    %v2356 = vpop.f32.mrb[0].mxu0
    %v2357 = vadd.f32 %v2084, %v2356
    %v2358 = vpop.f32.mrb[0].mxu0
    %v2359 = vpop.f32.mrb[0].mxu0
    %v2360 = vadd.f32 %v2084, %v2359
    %v2361 = vpop.f32.mrb[0].mxu0
    %2362 = vmatprep.mubr.bf16.mxu0 0
    %2363 = vmatmul.mubr.bf16.gmra.mrb[0].mxu0 %v2142
    %v2364 = vpop.f32.mrb[0].mxu0
    %v2365 = vadd.f32 %v2084, %v2364
    %v2366 = vpop.f32.mrb[0].mxu0
    %v2367 = vpop.f32.mrb[0].mxu0
    %v2368 = vadd.f32 %v2084, %v2367
    %v2369 = vpop.f32.mrb[0].mxu0
    %2370 = vmatprep.mubr.bf16.mxu0 0
    %2371 = vmatmul.mubr.bf16.gmra.mrb[0].mxu0 %v2144
    %v2372 = vpop.f32.mrb[0].mxu0
    %v2373 = vadd.f32 %v2084, %v2372
    %v2374 = vpop.f32.mrb[0].mxu0
    %v2375 = vpop.f32.mrb[0].mxu0
    %v2376 = vadd.f32 %v2084, %v2375
    %v2377 = vpop.f32.mrb[0].mxu0
    %2378 = vmatprep.mubr.bf16.mxu0 0
    %2379 = vmatmul.mubr.bf16.gmra.mrb[0].mxu0 %v2146
    %v2380 = vpop.f32.mrb[0].mxu0
    %v2381 = vadd.f32 %v2084, %v2380
    %v2382 = vpop.f32.mrb[0].mxu0
    %v2383 = vpop.f32.mrb[0].mxu0
    %v2384 = vadd.f32 %v2084, %v2383
    %v2385 = vpop.f32.mrb[0].mxu0
    %2386 = vmatprep.mubr.bf16.mxu0 0
    %2387 = vmatmul.mubr.bf16.gmra.mrb[0].mxu0 %v2148
    %v2388 = vpop.f32.mrb[0].mxu0
    %v2389 = vadd.f32 %v2084, %v2388
    %v2390 = vpop.f32.mrb[0].mxu0
    %v2391 = vpop.f32.mrb[0].mxu0
    %v2392 = vadd.f32 %v2084, %v2391
    %v2393 = vpop.f32.mrb[0].mxu0
    %2394 = vmatprep.mubr.bf16.mxu0 0
    %2395 = vmatmul.mubr.bf16.gmra.mrb[0].mxu0 %v2150
    %v2396 = vpop.f32.mrb[0].mxu0
    %v2397 = vadd.f32 %v2084, %v2396
    %v2398 = vpop.f32.mrb[0].mxu0
    %v2399 = vpop.f32.mrb[0].mxu0
    %v2400 = vadd.f32 %v2084, %v2399
    %v2401 = vpop.f32.mrb[0].mxu0
    %2402 = vmatprep.mubr.bf16.mxu0 0
    %2403 = vmatmul.mubr.bf16.gmra.mrb[0].mxu0 %v2152
    %v2404 = vpop.f32.mrb[0].mxu0
    %v2405 = vadd.f32 %v2084, %v2404
    %v2406 = vpop.f32.mrb[0].mxu0
    %v2407 = vpop.f32.mrb[0].mxu0
    %v2408 = vadd.f32 %v2084, %v2407
    %v2409 = vpop.f32.mrb[0].mxu0
    %2410 = vmatprep.mubr.bf16.mxu0 0
    %2411 = vmatmul.mubr.bf16.gmra.mrb[0].mxu0 %v2154
    %v2412 = vpop.f32.mrb[0].mxu0
    %v2413 = vadd.f32 %v2084, %v2412
    %v2414 = vpop.f32.mrb[0].mxu0
    %v2415 = vpop.f32.mrb[0].mxu0
    %v2416 = vadd.f32 %v2084, %v2415
    %v2417 = vpop.f32.mrb[0].mxu0
    %2418 = vmatprep.mubr.bf16.mxu0 0
    %2419 = vmatmul.mubr.bf16.gmra.mrb[0].mxu0 %v2156
    %v2420 = vpop.f32.mrb[0].mxu0
    %v2421 = vadd.f32 %v2084, %v2420
    %v2422 = vpop.f32.mrb[0].mxu0
    %v2423 = vpop.f32.mrb[0].mxu0
    %v2424 = vadd.f32 %v2084, %v2423
    %v2425 = vpop.f32.mrb[0].mxu0
    %2426 = vmatprep.mubr.bf16.mxu0 0
    %2427 = vmatmul.mubr.bf16.gmra.mrb[0].mxu0 %v2158
    %v2428 = vpop.f32.mrb[0].mxu0
    %v2429 = vadd.f32 %v2084, %v2428
    %v2430 = vpop.f32.mrb[0].mxu0
    %v2431 = vpop.f32.mrb[0].mxu0
    %v2432 = vadd.f32 %v2084, %v2431
    %v2433 = vpop.f32.mrb[0].mxu0
    %2434 = vmatprep.mubr.bf16.mxu0 0
    %2435 = vmatmul.mubr.bf16.gmra.mrb[0].mxu0 %v2160
    %v2436 = vpop.f32.mrb[0].mxu0
    %v2437 = vadd.f32 %v2084, %v2436
    %v2438 = vpop.f32.mrb[0].mxu0
    %v2439 = vpop.f32.mrb[0].mxu0
    %v2440 = vadd.f32 %v2084, %v2439
    %v2441 = vpop.f32.mrb[0].mxu0
    %2442 = vmatprep.mubr.bf16.mxu0 0
    %2443 = vmatmul.mubr.bf16.gmra.mrb[0].mxu0 %v2162
    %v2444 = vpop.f32.mrb[0].mxu0
    %v2445 = vadd.f32 %v2084, %v2444
    %v2446 = vpop.f32.mrb[0].mxu0
    %v2447 = vpop.f32.mrb[0].mxu0
    %v2448 = vadd.f32 %v2084, %v2447
    %v2449 = vpop.f32.mrb[0].mxu0
    %2450 = vmatprep.mubr.bf16.mxu0 0
    %2451 = vmatmul.mubr.bf16.gmra.mrb[0].mxu0 %v2164
    %v2452 = vpop.f32.mrb[0].mxu0
    %v2453 = vadd.f32 %v2084, %v2452
    %v2454 = vpop.f32.mrb[0].mxu0
    %v2455 = vpop.f32.mrb[0].mxu0
    %v2456 = vadd.f32 %v2084, %v2455
    %v2457 = vpop.f32.mrb[0].mxu0
    %2458 = vdwg.mxu0
    %vm2459 = vcmask 523264
    %v2460 = vsel %vm2459, %v2205, 0.0
    %v2461 = vsel %vm2459, %v2208, 0.0
    %v2462 = vadd.f32 %v2460, %v2461
    %v2463 = vsel %vm2459, %v2213, 0.0
    %v2464 = vadd.f32 %v2462, %v2463
    %v2465 = vsel %vm2459, %v2216, 0.0
    %v2466 = vadd.f32 %v2464, %v2465
    %v2467 = vsel %vm2459, %v2221, 0.0
    %v2468 = vadd.f32 %v2466, %v2467
    %v2469 = vsel %vm2459, %v2224, 0.0
    %v2470 = vadd.f32 %v2468, %v2469
    %v2471 = vsel %vm2459, %v2229, 0.0
    %v2472 = vadd.f32 %v2470, %v2471
    %v2473 = vsel %vm2459, %v2232, 0.0
    %v2474 = vadd.f32 %v2472, %v2473
    %v2475 = vsel %vm2459, %v2237, 0.0
    %v2476 = vadd.f32 %v2474, %v2475
    %v2477 = vsel %vm2459, %v2240, 0.0
    %v2478 = vadd.f32 %v2476, %v2477
    %v2479 = vsel %vm2459, %v2245, 0.0
    %v2480 = vadd.f32 %v2478, %v2479
    %v2481 = vsel %vm2459, %v2248, 0.0
    %v2482 = vadd.f32 %v2480, %v2481
    %v2483 = vsel %vm2459, %v2253, 0.0
    %v2484 = vadd.f32 %v2482, %v2483
    %v2485 = vsel %vm2459, %v2256, 0.0
    %v2486 = vadd.f32 %v2484, %v2485
    %v2487 = vsel %vm2459, %v2261, 0.0
    %v2488 = vadd.f32 %v2486, %v2487
    %v2489 = vsel %vm2459, %v2264, 0.0
    %v2490 = vadd.f32 %v2488, %v2489
    %v2491 = vsel %vm2459, %v2269, 0.0
    %v2492 = vadd.f32 %v2490, %v2491
    %v2493 = vsel %vm2459, %v2272, 0.0
    %v2494 = vadd.f32 %v2492, %v2493
    %v2495 = vsel %vm2459, %v2277, 0.0
    %v2496 = vadd.f32 %v2494, %v2495
    %v2497 = vsel %vm2459, %v2280, 0.0
    %v2498 = vadd.f32 %v2496, %v2497
    %v2499 = vsel %vm2459, %v2285, 0.0
    %v2500 = vadd.f32 %v2498, %v2499
    %v2501 = vsel %vm2459, %v2288, 0.0
    %v2502 = vadd.f32 %v2500, %v2501
    %v2503 = vsel %vm2459, %v2293, 0.0
    %v2504 = vadd.f32 %v2502, %v2503
    %v2505 = vsel %vm2459, %v2296, 0.0
    %v2506 = vadd.f32 %v2504, %v2505
    %v2507 = vsel %vm2459, %v2301, 0.0
    %v2508 = vadd.f32 %v2506, %v2507
    %v2509 = vsel %vm2459, %v2304, 0.0
    %v2510 = vadd.f32 %v2508, %v2509
    %v2511 = vsel %vm2459, %v2309, 0.0
    %v2512 = vadd.f32 %v2510, %v2511
    %v2513 = vsel %vm2459, %v2312, 0.0
    %v2514 = vadd.f32 %v2512, %v2513
    %v2515 = vsel %vm2459, %v2317, 0.0
    %v2516 = vadd.f32 %v2514, %v2515
    %v2517 = vsel %vm2459, %v2320, 0.0
    %v2518 = vadd.f32 %v2516, %v2517
    %v2519 = vsel %vm2459, %v2325, 0.0
    %v2520 = vadd.f32 %v2518, %v2519
    %v2521 = vsel %vm2459, %v2328, 0.0
    %v2522 = vadd.f32 %v2520, %v2521
    %v2523 = vsel %vm2459, %v2333, 0.0
    %v2524 = vadd.f32 %v2522, %v2523
    %v2525 = vsel %vm2459, %v2336, 0.0
    %v2526 = vadd.f32 %v2524, %v2525
    %v2527 = vsel %vm2459, %v2341, 0.0
    %v2528 = vadd.f32 %v2526, %v2527
    %v2529 = vsel %vm2459, %v2344, 0.0
    %v2530 = vadd.f32 %v2528, %v2529
    %v2531 = vsel %vm2459, %v2349, 0.0
    %v2532 = vadd.f32 %v2530, %v2531
    %v2533 = vsel %vm2459, %v2352, 0.0
    %v2534 = vadd.f32 %v2532, %v2533
    %v2535 = vsel %vm2459, %v2357, 0.0
    %v2536 = vadd.f32 %v2534, %v2535
    %v2537 = vsel %vm2459, %v2360, 0.0
    %v2538 = vadd.f32 %v2536, %v2537
    %v2539 = vsel %vm2459, %v2365, 0.0
    %v2540 = vadd.f32 %v2538, %v2539
    %v2541 = vsel %vm2459, %v2368, 0.0
    %v2542 = vadd.f32 %v2540, %v2541
    %v2543 = vsel %vm2459, %v2373, 0.0
    %v2544 = vadd.f32 %v2542, %v2543
    %v2545 = vsel %vm2459, %v2376, 0.0
    %v2546 = vadd.f32 %v2544, %v2545
    %v2547 = vsel %vm2459, %v2381, 0.0
    %v2548 = vadd.f32 %v2546, %v2547
    %v2549 = vsel %vm2459, %v2384, 0.0
    %v2550 = vadd.f32 %v2548, %v2549
    %v2551 = vsel %vm2459, %v2389, 0.0
    %v2552 = vadd.f32 %v2550, %v2551
    %v2553 = vsel %vm2459, %v2392, 0.0
    %v2554 = vadd.f32 %v2552, %v2553
    %v2555 = vsel %vm2459, %v2397, 0.0
    %v2556 = vadd.f32 %v2554, %v2555
    %v2557 = vsel %vm2459, %v2400, 0.0
    %v2558 = vadd.f32 %v2556, %v2557
    %v2559 = vsel %vm2459, %v2405, 0.0
    %v2560 = vadd.f32 %v2558, %v2559
    %v2561 = vsel %vm2459, %v2408, 0.0
    %v2562 = vadd.f32 %v2560, %v2561
    %v2563 = vsel %vm2459, %v2413, 0.0
    %v2564 = vadd.f32 %v2562, %v2563
    %v2565 = vsel %vm2459, %v2416, 0.0
    %v2566 = vadd.f32 %v2564, %v2565
    %v2567 = vsel %vm2459, %v2421, 0.0
    %v2568 = vadd.f32 %v2566, %v2567
    %v2569 = vsel %vm2459, %v2424, 0.0
    %v2570 = vadd.f32 %v2568, %v2569
    %v2571 = vsel %vm2459, %v2429, 0.0
    %v2572 = vadd.f32 %v2570, %v2571
    %v2573 = vsel %vm2459, %v2432, 0.0
    %v2574 = vadd.f32 %v2572, %v2573
    %v2575 = vsel %vm2459, %v2437, 0.0
    %v2576 = vadd.f32 %v2574, %v2575
    %v2577 = vsel %vm2459, %v2440, 0.0
    %v2578 = vadd.f32 %v2576, %v2577
    %v2579 = vsel %vm2459, %v2445, 0.0
    %v2580 = vadd.f32 %v2578, %v2579
    %v2581 = vsel %vm2459, %v2448, 0.0
    %v2582 = vadd.f32 %v2580, %v2581
    %v2583 = vsel %vm2459, %v2453, 0.0
    %v2584 = vadd.f32 %v2582, %v2583
    %v2585 = vsel %vm2459, %v2456, 0.0
    %v2586 = vadd.f32 %v2584, %v2585
    %v2587 = vrot.slane %v2586, 4
    %v2588 = vadd.f32 %v2586, %v2587
    %v2589 = vrot.slane %v2588, 2
    %v2590 = vadd.f32 %v2588, %v2589
    %v2591 = vrot.slane %v2590, 1
    %v2592 = vadd.f32 %v2590, %v2591
    %v2593 = vrcp.pop 512.0
    %v2594 = vmul.f32 %v2592, %v2593
    %v2595 = vsub.f32 %v2205, %v2594
    %v2596 = vsub.f32 %v2208, %v2594
    %v2597 = vsub.f32 %v2213, %v2594
    %v2598 = vsub.f32 %v2216, %v2594
    %v2599 = vsub.f32 %v2221, %v2594
    %v2600 = vsub.f32 %v2224, %v2594
    %v2601 = vsub.f32 %v2229, %v2594
    %v2602 = vsub.f32 %v2232, %v2594
    %v2603 = vsub.f32 %v2237, %v2594
    %v2604 = vsub.f32 %v2240, %v2594
    %v2605 = vsub.f32 %v2245, %v2594
    %v2606 = vsub.f32 %v2248, %v2594
    %v2607 = vsub.f32 %v2253, %v2594
    %v2608 = vsub.f32 %v2256, %v2594
    %v2609 = vsub.f32 %v2261, %v2594
    %v2610 = vsub.f32 %v2264, %v2594
    %v2611 = vsub.f32 %v2269, %v2594
    %v2612 = vsub.f32 %v2272, %v2594
    %v2613 = vsub.f32 %v2277, %v2594
    %v2614 = vsub.f32 %v2280, %v2594
    %v2615 = vsub.f32 %v2285, %v2594
    %v2616 = vsub.f32 %v2288, %v2594
    %v2617 = vsub.f32 %v2293, %v2594
    %v2618 = vsub.f32 %v2296, %v2594
    %v2619 = vsub.f32 %v2301, %v2594
    %v2620 = vsub.f32 %v2304, %v2594
    %v2621 = vsub.f32 %v2309, %v2594
    %v2622 = vsub.f32 %v2312, %v2594
    %v2623 = vsub.f32 %v2317, %v2594
    %v2624 = vsub.f32 %v2320, %v2594
    %v2625 = vsub.f32 %v2325, %v2594
    %v2626 = vsub.f32 %v2328, %v2594
    %v2627 = vsub.f32 %v2333, %v2594
    %v2628 = vsub.f32 %v2336, %v2594
    %v2629 = vsub.f32 %v2341, %v2594
    %v2630 = vsub.f32 %v2344, %v2594
    %v2631 = vsub.f32 %v2349, %v2594
    %v2632 = vsub.f32 %v2352, %v2594
    %v2633 = vsub.f32 %v2357, %v2594
    %v2634 = vsub.f32 %v2360, %v2594
    %v2635 = vsub.f32 %v2365, %v2594
    %v2636 = vsub.f32 %v2368, %v2594
    %v2637 = vsub.f32 %v2373, %v2594
    %v2638 = vsub.f32 %v2376, %v2594
    %v2639 = vsub.f32 %v2381, %v2594
    %v2640 = vsub.f32 %v2384, %v2594
    %v2641 = vsub.f32 %v2389, %v2594
    %v2642 = vsub.f32 %v2392, %v2594
    %v2643 = vsub.f32 %v2397, %v2594
    %v2644 = vsub.f32 %v2400, %v2594
    %v2645 = vsub.f32 %v2405, %v2594
    %v2646 = vsub.f32 %v2408, %v2594
    %v2647 = vsub.f32 %v2413, %v2594
    %v2648 = vsub.f32 %v2416, %v2594
    %v2649 = vsub.f32 %v2421, %v2594
    %v2650 = vsub.f32 %v2424, %v2594
    %v2651 = vsub.f32 %v2429, %v2594
    %v2652 = vsub.f32 %v2432, %v2594
    %v2653 = vsub.f32 %v2437, %v2594
    %v2654 = vsub.f32 %v2440, %v2594
    %v2655 = vsub.f32 %v2445, %v2594
    %v2656 = vsub.f32 %v2448, %v2594
    %v2657 = vsub.f32 %v2453, %v2594
    %v2658 = vsub.f32 %v2456, %v2594
    %v2659 = vmul.f32 %v2595, %v2595
    %v2660 = vmul.f32 %v2596, %v2596
    %v2661 = vmul.f32 %v2597, %v2597
    %v2662 = vmul.f32 %v2598, %v2598
    %v2663 = vmul.f32 %v2599, %v2599
    %v2664 = vmul.f32 %v2600, %v2600
    %v2665 = vmul.f32 %v2601, %v2601
    %v2666 = vmul.f32 %v2602, %v2602
    %v2667 = vmul.f32 %v2603, %v2603
    %v2668 = vmul.f32 %v2604, %v2604
    %v2669 = vmul.f32 %v2605, %v2605
    %v2670 = vmul.f32 %v2606, %v2606
    %v2671 = vmul.f32 %v2607, %v2607
    %v2672 = vmul.f32 %v2608, %v2608
    %v2673 = vmul.f32 %v2609, %v2609
    %v2674 = vmul.f32 %v2610, %v2610
    %v2675 = vmul.f32 %v2611, %v2611
    %v2676 = vmul.f32 %v2612, %v2612
    %v2677 = vmul.f32 %v2613, %v2613
    %v2678 = vmul.f32 %v2614, %v2614
    %v2679 = vmul.f32 %v2615, %v2615
    %v2680 = vmul.f32 %v2616, %v2616
    %v2681 = vmul.f32 %v2617, %v2617
    %v2682 = vmul.f32 %v2618, %v2618
    %v2683 = vmul.f32 %v2619, %v2619
    %v2684 = vmul.f32 %v2620, %v2620
    %v2685 = vmul.f32 %v2621, %v2621
    %v2686 = vmul.f32 %v2622, %v2622
    %v2687 = vmul.f32 %v2623, %v2623
    %v2688 = vmul.f32 %v2624, %v2624
    %v2689 = vmul.f32 %v2625, %v2625
    %v2690 = vmul.f32 %v2626, %v2626
    %v2691 = vmul.f32 %v2627, %v2627
    %v2692 = vmul.f32 %v2628, %v2628
    %v2693 = vmul.f32 %v2629, %v2629
    %v2694 = vmul.f32 %v2630, %v2630
    %v2695 = vmul.f32 %v2631, %v2631
    %v2696 = vmul.f32 %v2632, %v2632
    %v2697 = vmul.f32 %v2633, %v2633
    %v2698 = vmul.f32 %v2634, %v2634
    %v2699 = vmul.f32 %v2635, %v2635
    %v2700 = vmul.f32 %v2636, %v2636
    %v2701 = vmul.f32 %v2637, %v2637
    %v2702 = vmul.f32 %v2638, %v2638
    %v2703 = vmul.f32 %v2639, %v2639
    %v2704 = vmul.f32 %v2640, %v2640
    %v2705 = vmul.f32 %v2641, %v2641
    %v2706 = vmul.f32 %v2642, %v2642
    %v2707 = vmul.f32 %v2643, %v2643
    %v2708 = vmul.f32 %v2644, %v2644
    %v2709 = vmul.f32 %v2645, %v2645
    %v2710 = vmul.f32 %v2646, %v2646
    %v2711 = vmul.f32 %v2647, %v2647
    %v2712 = vmul.f32 %v2648, %v2648
    %v2713 = vmul.f32 %v2649, %v2649
    %v2714 = vmul.f32 %v2650, %v2650
    %v2715 = vmul.f32 %v2651, %v2651
    %v2716 = vmul.f32 %v2652, %v2652
    %v2717 = vmul.f32 %v2653, %v2653
    %v2718 = vmul.f32 %v2654, %v2654
    %v2719 = vmul.f32 %v2655, %v2655
    %v2720 = vmul.f32 %v2656, %v2656
    %v2721 = vmul.f32 %v2657, %v2657
    %v2722 = vmul.f32 %v2658, %v2658
    %v2723 = vsel %vm2459, %v2659, 0.0
    %v2724 = vsel %vm2459, %v2660, 0.0
    %v2725 = vadd.f32 %v2723, %v2724
    %v2726 = vsel %vm2459, %v2661, 0.0
    %v2727 = vadd.f32 %v2725, %v2726
    %v2728 = vsel %vm2459, %v2662, 0.0
    %v2729 = vadd.f32 %v2727, %v2728
    %v2730 = vsel %vm2459, %v2663, 0.0
    %v2731 = vadd.f32 %v2729, %v2730
    %v2732 = vsel %vm2459, %v2664, 0.0
    %v2733 = vadd.f32 %v2731, %v2732
    %v2734 = vsel %vm2459, %v2665, 0.0
    %v2735 = vadd.f32 %v2733, %v2734
    %v2736 = vsel %vm2459, %v2666, 0.0
    %v2737 = vadd.f32 %v2735, %v2736
    %v2738 = vsel %vm2459, %v2667, 0.0
    %v2739 = vadd.f32 %v2737, %v2738
    %v2740 = vsel %vm2459, %v2668, 0.0
    %v2741 = vadd.f32 %v2739, %v2740
    %v2742 = vsel %vm2459, %v2669, 0.0
    %v2743 = vadd.f32 %v2741, %v2742
    %v2744 = vsel %vm2459, %v2670, 0.0
    %v2745 = vadd.f32 %v2743, %v2744
    %v2746 = vsel %vm2459, %v2671, 0.0
    %v2747 = vadd.f32 %v2745, %v2746
    %v2748 = vsel %vm2459, %v2672, 0.0
    %v2749 = vadd.f32 %v2747, %v2748
    %v2750 = vsel %vm2459, %v2673, 0.0
    %v2751 = vadd.f32 %v2749, %v2750
    %v2752 = vsel %vm2459, %v2674, 0.0
    %v2753 = vadd.f32 %v2751, %v2752
    %v2754 = vsel %vm2459, %v2675, 0.0
    %v2755 = vadd.f32 %v2753, %v2754
    %v2756 = vsel %vm2459, %v2676, 0.0
    %v2757 = vadd.f32 %v2755, %v2756
    %v2758 = vsel %vm2459, %v2677, 0.0
    %v2759 = vadd.f32 %v2757, %v2758
    %v2760 = vsel %vm2459, %v2678, 0.0
    %v2761 = vadd.f32 %v2759, %v2760
    %v2762 = vsel %vm2459, %v2679, 0.0
    %v2763 = vadd.f32 %v2761, %v2762
    %v2764 = vsel %vm2459, %v2680, 0.0
    %v2765 = vadd.f32 %v2763, %v2764
    %v2766 = vsel %vm2459, %v2681, 0.0
    %v2767 = vadd.f32 %v2765, %v2766
    %v2768 = vsel %vm2459, %v2682, 0.0
    %v2769 = vadd.f32 %v2767, %v2768
    %v2770 = vsel %vm2459, %v2683, 0.0
    %v2771 = vadd.f32 %v2769, %v2770
    %v2772 = vsel %vm2459, %v2684, 0.0
    %v2773 = vadd.f32 %v2771, %v2772
    %v2774 = vsel %vm2459, %v2685, 0.0
    %v2775 = vadd.f32 %v2773, %v2774
    %v2776 = vsel %vm2459, %v2686, 0.0
    %v2777 = vadd.f32 %v2775, %v2776
    %v2778 = vsel %vm2459, %v2687, 0.0
    %v2779 = vadd.f32 %v2777, %v2778
    %v2780 = vsel %vm2459, %v2688, 0.0
    %v2781 = vadd.f32 %v2779, %v2780
    %v2782 = vsel %vm2459, %v2689, 0.0
    %v2783 = vadd.f32 %v2781, %v2782
    %v2784 = vsel %vm2459, %v2690, 0.0
    %v2785 = vadd.f32 %v2783, %v2784
    %v2786 = vsel %vm2459, %v2691, 0.0
    %v2787 = vadd.f32 %v2785, %v2786
    %v2788 = vsel %vm2459, %v2692, 0.0
    %v2789 = vadd.f32 %v2787, %v2788
    %v2790 = vsel %vm2459, %v2693, 0.0
    %v2791 = vadd.f32 %v2789, %v2790
    %v2792 = vsel %vm2459, %v2694, 0.0
    %v2793 = vadd.f32 %v2791, %v2792
    %v2794 = vsel %vm2459, %v2695, 0.0
    %v2795 = vadd.f32 %v2793, %v2794
    %v2796 = vsel %vm2459, %v2696, 0.0
    %v2797 = vadd.f32 %v2795, %v2796
    %v2798 = vsel %vm2459, %v2697, 0.0
    %v2799 = vadd.f32 %v2797, %v2798
    %v2800 = vsel %vm2459, %v2698, 0.0
    %v2801 = vadd.f32 %v2799, %v2800
    %v2802 = vsel %vm2459, %v2699, 0.0
    %v2803 = vadd.f32 %v2801, %v2802
    %v2804 = vsel %vm2459, %v2700, 0.0
    %v2805 = vadd.f32 %v2803, %v2804
    %v2806 = vsel %vm2459, %v2701, 0.0
    %v2807 = vadd.f32 %v2805, %v2806
    %v2808 = vsel %vm2459, %v2702, 0.0
    %v2809 = vadd.f32 %v2807, %v2808
    %v2810 = vsel %vm2459, %v2703, 0.0
    %v2811 = vadd.f32 %v2809, %v2810
    %v2812 = vsel %vm2459, %v2704, 0.0
    %v2813 = vadd.f32 %v2811, %v2812
    %v2814 = vsel %vm2459, %v2705, 0.0
    %v2815 = vadd.f32 %v2813, %v2814
    %v2816 = vsel %vm2459, %v2706, 0.0
    %v2817 = vadd.f32 %v2815, %v2816
    %v2818 = vsel %vm2459, %v2707, 0.0
    %v2819 = vadd.f32 %v2817, %v2818
    %v2820 = vsel %vm2459, %v2708, 0.0
    %v2821 = vadd.f32 %v2819, %v2820
    %v2822 = vsel %vm2459, %v2709, 0.0
    %v2823 = vadd.f32 %v2821, %v2822
    %v2824 = vsel %vm2459, %v2710, 0.0
    %v2825 = vadd.f32 %v2823, %v2824
    %v2826 = vsel %vm2459, %v2711, 0.0
    %v2827 = vadd.f32 %v2825, %v2826
    %v2828 = vsel %vm2459, %v2712, 0.0
    %v2829 = vadd.f32 %v2827, %v2828
    %v2830 = vsel %vm2459, %v2713, 0.0
    %v2831 = vadd.f32 %v2829, %v2830
    %v2832 = vsel %vm2459, %v2714, 0.0
    %v2833 = vadd.f32 %v2831, %v2832
    %v2834 = vsel %vm2459, %v2715, 0.0
    %v2835 = vadd.f32 %v2833, %v2834
    %v2836 = vsel %vm2459, %v2716, 0.0
    %v2837 = vadd.f32 %v2835, %v2836
    %v2838 = vsel %vm2459, %v2717, 0.0
    %v2839 = vadd.f32 %v2837, %v2838
    %v2840 = vsel %vm2459, %v2718, 0.0
    %v2841 = vadd.f32 %v2839, %v2840
    %v2842 = vsel %vm2459, %v2719, 0.0
    %v2843 = vadd.f32 %v2841, %v2842
    %v2844 = vsel %vm2459, %v2720, 0.0
    %v2845 = vadd.f32 %v2843, %v2844
    %v2846 = vsel %vm2459, %v2721, 0.0
    %v2847 = vadd.f32 %v2845, %v2846
    %v2848 = vsel %vm2459, %v2722, 0.0
    %v2849 = vadd.f32 %v2847, %v2848
    %v2850 = vrot.slane %v2849, 4
    %v2851 = vadd.f32 %v2849, %v2850
    %v2852 = vrot.slane %v2851, 2
    %v2853 = vadd.f32 %v2851, %v2852
    %v2854 = vrot.slane %v2853, 1
    %v2855 = vadd.f32 %v2853, %v2854
    %v2856 = vmul.f32 %v2855, %v2593
    %v2857 = vadd.f32 %v2856, 1e-05
    %v2858 = vrsqrt.pop %v2857
    %v2859 = vmul.f32 %v2595, %v2858
    %v2860 = vmul.f32 %v2596, %v2858
    %v2861 = vmul.f32 %v2597, %v2858
    %v2862 = vmul.f32 %v2598, %v2858
    %v2863 = vmul.f32 %v2599, %v2858
    %v2864 = vmul.f32 %v2600, %v2858
    %v2865 = vmul.f32 %v2601, %v2858
    %v2866 = vmul.f32 %v2602, %v2858
    %v2867 = vmul.f32 %v2603, %v2858
    %v2868 = vmul.f32 %v2604, %v2858
    %v2869 = vmul.f32 %v2605, %v2858
    %v2870 = vmul.f32 %v2606, %v2858
    %v2871 = vmul.f32 %v2607, %v2858
    %v2872 = vmul.f32 %v2608, %v2858
    %v2873 = vmul.f32 %v2609, %v2858
    %v2874 = vmul.f32 %v2610, %v2858
    %v2875 = vmul.f32 %v2611, %v2858
    %v2876 = vmul.f32 %v2612, %v2858
    %v2877 = vmul.f32 %v2613, %v2858
    %v2878 = vmul.f32 %v2614, %v2858
    %v2879 = vmul.f32 %v2615, %v2858
    %v2880 = vmul.f32 %v2616, %v2858
    %v2881 = vmul.f32 %v2617, %v2858
    %v2882 = vmul.f32 %v2618, %v2858
    %v2883 = vmul.f32 %v2619, %v2858
    %v2884 = vmul.f32 %v2620, %v2858
    %v2885 = vmul.f32 %v2621, %v2858
    %v2886 = vmul.f32 %v2622, %v2858
    %v2887 = vmul.f32 %v2623, %v2858
    %v2888 = vmul.f32 %v2624, %v2858
    %v2889 = vmul.f32 %v2625, %v2858
    %v2890 = vmul.f32 %v2626, %v2858
    %v2891 = vmul.f32 %v2627, %v2858
    %v2892 = vmul.f32 %v2628, %v2858
    %v2893 = vmul.f32 %v2629, %v2858
    %v2894 = vmul.f32 %v2630, %v2858
    %v2895 = vmul.f32 %v2631, %v2858
    %v2896 = vmul.f32 %v2632, %v2858
    %v2897 = vmul.f32 %v2633, %v2858
    %v2898 = vmul.f32 %v2634, %v2858
    %v2899 = vmul.f32 %v2635, %v2858
    %v2900 = vmul.f32 %v2636, %v2858
    %v2901 = vmul.f32 %v2637, %v2858
    %v2902 = vmul.f32 %v2638, %v2858
    %v2903 = vmul.f32 %v2639, %v2858
    %v2904 = vmul.f32 %v2640, %v2858
    %v2905 = vmul.f32 %v2641, %v2858
    %v2906 = vmul.f32 %v2642, %v2858
    %v2907 = vmul.f32 %v2643, %v2858
    %v2908 = vmul.f32 %v2644, %v2858
    %v2909 = vmul.f32 %v2645, %v2858
    %v2910 = vmul.f32 %v2646, %v2858
    %v2911 = vmul.f32 %v2647, %v2858
    %v2912 = vmul.f32 %v2648, %v2858
    %v2913 = vmul.f32 %v2649, %v2858
    %v2914 = vmul.f32 %v2650, %v2858
    %v2915 = vmul.f32 %v2651, %v2858
    %v2916 = vmul.f32 %v2652, %v2858
    %v2917 = vmul.f32 %v2653, %v2858
    %v2918 = vmul.f32 %v2654, %v2858
    %v2919 = vmul.f32 %v2655, %v2858
    %v2920 = vmul.f32 %v2656, %v2858
    %v2921 = vmul.f32 %v2657, %v2858
    %v2922 = vmul.f32 %v2658, %v2858
    %v2923 = vld [vmem:[%s3] sm:$0x1]
    %v2925 = vlaneseq
    %v2926 = vshrl.u32 %v2925, 7
    %v2927 = vsub.s32 0, %v2926
    %v2928 = vrot.slane %v2923, %v2927
    %v2930 = vmul.f32 %v2859, %v2928
    %v2931 = vmul.f32 %v2860, %v2928
    %v2932 = vmul.f32 %v2861, %v2928
    %v2933 = vmul.f32 %v2862, %v2928
    %v2934 = vmul.f32 %v2863, %v2928
    %v2935 = vmul.f32 %v2864, %v2928
    %v2936 = vmul.f32 %v2865, %v2928
    %v2937 = vmul.f32 %v2866, %v2928
    %v2938 = vmul.f32 %v2867, %v2928
    %v2939 = vmul.f32 %v2868, %v2928
    %v2940 = vmul.f32 %v2869, %v2928
    %v2941 = vmul.f32 %v2870, %v2928
    %v2942 = vmul.f32 %v2871, %v2928
    %v2943 = vmul.f32 %v2872, %v2928
    %v2944 = vmul.f32 %v2873, %v2928
    %v2945 = vmul.f32 %v2874, %v2928
    %v2946 = vmul.f32 %v2875, %v2928
    %v2947 = vmul.f32 %v2876, %v2928
    %v2948 = vmul.f32 %v2877, %v2928
    %v2949 = vmul.f32 %v2878, %v2928
    %v2950 = vmul.f32 %v2879, %v2928
    %v2951 = vmul.f32 %v2880, %v2928
    %v2952 = vmul.f32 %v2881, %v2928
    %v2953 = vmul.f32 %v2882, %v2928
    %v2954 = vmul.f32 %v2883, %v2928
    %v2955 = vmul.f32 %v2884, %v2928
    %v2956 = vmul.f32 %v2885, %v2928
    %v2957 = vmul.f32 %v2886, %v2928
    %v2958 = vmul.f32 %v2887, %v2928
    %v2959 = vmul.f32 %v2888, %v2928
    %v2960 = vmul.f32 %v2889, %v2928
    %v2961 = vmul.f32 %v2890, %v2928
    %v2962 = vmul.f32 %v2891, %v2928
    %v2963 = vmul.f32 %v2892, %v2928
    %v2964 = vmul.f32 %v2893, %v2928
    %v2965 = vmul.f32 %v2894, %v2928
    %v2966 = vmul.f32 %v2895, %v2928
    %v2967 = vmul.f32 %v2896, %v2928
    %v2968 = vmul.f32 %v2897, %v2928
    %v2969 = vmul.f32 %v2898, %v2928
    %v2970 = vmul.f32 %v2899, %v2928
    %v2971 = vmul.f32 %v2900, %v2928
    %v2972 = vmul.f32 %v2901, %v2928
    %v2973 = vmul.f32 %v2902, %v2928
    %v2974 = vmul.f32 %v2903, %v2928
    %v2975 = vmul.f32 %v2904, %v2928
    %v2976 = vmul.f32 %v2905, %v2928
    %v2977 = vmul.f32 %v2906, %v2928
    %v2978 = vmul.f32 %v2907, %v2928
    %v2979 = vmul.f32 %v2908, %v2928
    %v2980 = vmul.f32 %v2909, %v2928
    %v2981 = vmul.f32 %v2910, %v2928
    %v2982 = vmul.f32 %v2911, %v2928
    %v2983 = vmul.f32 %v2912, %v2928
    %v2984 = vmul.f32 %v2913, %v2928
    %v2985 = vmul.f32 %v2914, %v2928
    %v2986 = vmul.f32 %v2915, %v2928
    %v2987 = vmul.f32 %v2916, %v2928
    %v2988 = vmul.f32 %v2917, %v2928
    %v2989 = vmul.f32 %v2918, %v2928
    %v2990 = vmul.f32 %v2919, %v2928
    %v2991 = vmul.f32 %v2920, %v2928
    %v2992 = vmul.f32 %v2921, %v2928
    %v2993 = vmul.f32 %v2922, %v2928
    %v2994 = vld [vmem:[%s4] sm:$0x1]
    %v2996 = vlaneseq
    %v2997 = vshrl.u32 %v2996, 7
    %v2998 = vsub.s32 0, %v2997
    %v2999 = vrot.slane %v2994, %v2998
    %v3001 = vadd.f32 %v2930, %v2999
    %v3002 = vadd.f32 %v2931, %v2999
    %v3003 = vadd.f32 %v2932, %v2999
    %v3004 = vadd.f32 %v2933, %v2999
    %v3005 = vadd.f32 %v2934, %v2999
    %v3006 = vadd.f32 %v2935, %v2999
    %v3007 = vadd.f32 %v2936, %v2999
    %v3008 = vadd.f32 %v2937, %v2999
    %v3009 = vadd.f32 %v2938, %v2999
    %v3010 = vadd.f32 %v2939, %v2999
    %v3011 = vadd.f32 %v2940, %v2999
    %v3012 = vadd.f32 %v2941, %v2999
    %v3013 = vadd.f32 %v2942, %v2999
    %v3014 = vadd.f32 %v2943, %v2999
    %v3015 = vadd.f32 %v2944, %v2999
    %v3016 = vadd.f32 %v2945, %v2999
    %v3017 = vadd.f32 %v2946, %v2999
    %v3018 = vadd.f32 %v2947, %v2999
    %v3019 = vadd.f32 %v2948, %v2999
    %v3020 = vadd.f32 %v2949, %v2999
    %v3021 = vadd.f32 %v2950, %v2999
    %v3022 = vadd.f32 %v2951, %v2999
    %v3023 = vadd.f32 %v2952, %v2999
    %v3024 = vadd.f32 %v2953, %v2999
    %v3025 = vadd.f32 %v2954, %v2999
    %v3026 = vadd.f32 %v2955, %v2999
    %v3027 = vadd.f32 %v2956, %v2999
    %v3028 = vadd.f32 %v2957, %v2999
    %v3029 = vadd.f32 %v2958, %v2999
    %v3030 = vadd.f32 %v2959, %v2999
    %v3031 = vadd.f32 %v2960, %v2999
    %v3032 = vadd.f32 %v2961, %v2999
    %v3033 = vadd.f32 %v2962, %v2999
    %v3034 = vadd.f32 %v2963, %v2999
    %v3035 = vadd.f32 %v2964, %v2999
    %v3036 = vadd.f32 %v2965, %v2999
    %v3037 = vadd.f32 %v2966, %v2999
    %v3038 = vadd.f32 %v2967, %v2999
    %v3039 = vadd.f32 %v2968, %v2999
    %v3040 = vadd.f32 %v2969, %v2999
    %v3041 = vadd.f32 %v2970, %v2999
    %v3042 = vadd.f32 %v2971, %v2999
    %v3043 = vadd.f32 %v2972, %v2999
    %v3044 = vadd.f32 %v2973, %v2999
    %v3045 = vadd.f32 %v2974, %v2999
    %v3046 = vadd.f32 %v2975, %v2999
    %v3047 = vadd.f32 %v2976, %v2999
    %v3048 = vadd.f32 %v2977, %v2999
    %v3049 = vadd.f32 %v2978, %v2999
    %v3050 = vadd.f32 %v2979, %v2999
    %v3051 = vadd.f32 %v2980, %v2999
    %v3052 = vadd.f32 %v2981, %v2999
    %v3053 = vadd.f32 %v2982, %v2999
    %v3054 = vadd.f32 %v2983, %v2999
    %v3055 = vadd.f32 %v2984, %v2999
    %v3056 = vadd.f32 %v2985, %v2999
    %v3057 = vadd.f32 %v2986, %v2999
    %v3058 = vadd.f32 %v2987, %v2999
    %v3059 = vadd.f32 %v2988, %v2999
    %v3060 = vadd.f32 %v2989, %v2999
    %v3061 = vadd.f32 %v2990, %v2999
    %v3062 = vadd.f32 %v2991, %v2999
    %v3063 = vadd.f32 %v2992, %v2999
    %v3064 = vadd.f32 %v2993, %v2999
    %vm3065 = vcmp.gt.f32.partialorder %v3001, 0.0
    %vm3066 = vcmp.gt.f32.partialorder %v3002, 0.0
    %vm3067 = vcmp.gt.f32.partialorder %v3003, 0.0
    %vm3068 = vcmp.gt.f32.partialorder %v3004, 0.0
    %vm3069 = vcmp.gt.f32.partialorder %v3005, 0.0
    %vm3070 = vcmp.gt.f32.partialorder %v3006, 0.0
    %vm3071 = vcmp.gt.f32.partialorder %v3007, 0.0
    %vm3072 = vcmp.gt.f32.partialorder %v3008, 0.0
    %vm3073 = vcmp.gt.f32.partialorder %v3009, 0.0
    %vm3074 = vcmp.gt.f32.partialorder %v3010, 0.0
    %vm3075 = vcmp.gt.f32.partialorder %v3011, 0.0
    %vm3076 = vcmp.gt.f32.partialorder %v3012, 0.0
    %vm3077 = vcmp.gt.f32.partialorder %v3013, 0.0
    %vm3078 = vcmp.gt.f32.partialorder %v3014, 0.0
    %vm3079 = vcmp.gt.f32.partialorder %v3015, 0.0
    %vm3080 = vcmp.gt.f32.partialorder %v3016, 0.0
    %vm3081 = vcmp.gt.f32.partialorder %v3017, 0.0
    %vm3082 = vcmp.gt.f32.partialorder %v3018, 0.0
    %vm3083 = vcmp.gt.f32.partialorder %v3019, 0.0
    %vm3084 = vcmp.gt.f32.partialorder %v3020, 0.0
    %vm3085 = vcmp.gt.f32.partialorder %v3021, 0.0
    %vm3086 = vcmp.gt.f32.partialorder %v3022, 0.0
    %vm3087 = vcmp.gt.f32.partialorder %v3023, 0.0
    %vm3088 = vcmp.gt.f32.partialorder %v3024, 0.0
    %vm3089 = vcmp.gt.f32.partialorder %v3025, 0.0
    %vm3090 = vcmp.gt.f32.partialorder %v3026, 0.0
    %vm3091 = vcmp.gt.f32.partialorder %v3027, 0.0
    %vm3092 = vcmp.gt.f32.partialorder %v3028, 0.0
    %vm3093 = vcmp.gt.f32.partialorder %v3029, 0.0
    %vm3094 = vcmp.gt.f32.partialorder %v3030, 0.0
    %vm3095 = vcmp.gt.f32.partialorder %v3031, 0.0
    %vm3096 = vcmp.gt.f32.partialorder %v3032, 0.0
    %vm3097 = vcmp.gt.f32.partialorder %v3033, 0.0
    %vm3098 = vcmp.gt.f32.partialorder %v3034, 0.0
    %vm3099 = vcmp.gt.f32.partialorder %v3035, 0.0
    %vm3100 = vcmp.gt.f32.partialorder %v3036, 0.0
    %vm3101 = vcmp.gt.f32.partialorder %v3037, 0.0
    %vm3102 = vcmp.gt.f32.partialorder %v3038, 0.0
    %vm3103 = vcmp.gt.f32.partialorder %v3039, 0.0
    %vm3104 = vcmp.gt.f32.partialorder %v3040, 0.0
    %vm3105 = vcmp.gt.f32.partialorder %v3041, 0.0
    %vm3106 = vcmp.gt.f32.partialorder %v3042, 0.0
    %vm3107 = vcmp.gt.f32.partialorder %v3043, 0.0
    %vm3108 = vcmp.gt.f32.partialorder %v3044, 0.0
    %vm3109 = vcmp.gt.f32.partialorder %v3045, 0.0
    %vm3110 = vcmp.gt.f32.partialorder %v3046, 0.0
    %vm3111 = vcmp.gt.f32.partialorder %v3047, 0.0
    %vm3112 = vcmp.gt.f32.partialorder %v3048, 0.0
    %vm3113 = vcmp.gt.f32.partialorder %v3049, 0.0
    %vm3114 = vcmp.gt.f32.partialorder %v3050, 0.0
    %vm3115 = vcmp.gt.f32.partialorder %v3051, 0.0
    %vm3116 = vcmp.gt.f32.partialorder %v3052, 0.0
    %vm3117 = vcmp.gt.f32.partialorder %v3053, 0.0
    %vm3118 = vcmp.gt.f32.partialorder %v3054, 0.0
    %vm3119 = vcmp.gt.f32.partialorder %v3055, 0.0
    %vm3120 = vcmp.gt.f32.partialorder %v3056, 0.0
    %vm3121 = vcmp.gt.f32.partialorder %v3057, 0.0
    %vm3122 = vcmp.gt.f32.partialorder %v3058, 0.0
    %vm3123 = vcmp.gt.f32.partialorder %v3059, 0.0
    %vm3124 = vcmp.gt.f32.partialorder %v3060, 0.0
    %vm3125 = vcmp.gt.f32.partialorder %v3061, 0.0
    %vm3126 = vcmp.gt.f32.partialorder %v3062, 0.0
    %vm3127 = vcmp.gt.f32.partialorder %v3063, 0.0
    %vm3128 = vcmp.gt.f32.partialorder %v3064, 0.0
    %v3129 = vmul.f32 %v3001, 0.2
    %v3130 = vmul.f32 %v3002, 0.2
    %v3131 = vmul.f32 %v3003, 0.2
    %v3132 = vmul.f32 %v3004, 0.2
    %v3133 = vmul.f32 %v3005, 0.2
    %v3134 = vmul.f32 %v3006, 0.2
    %v3135 = vmul.f32 %v3007, 0.2
    %v3136 = vmul.f32 %v3008, 0.2
    %v3137 = vmul.f32 %v3009, 0.2
    %v3138 = vmul.f32 %v3010, 0.2
    %v3139 = vmul.f32 %v3011, 0.2
    %v3140 = vmul.f32 %v3012, 0.2
    %v3141 = vmul.f32 %v3013, 0.2
    %v3142 = vmul.f32 %v3014, 0.2
    %v3143 = vmul.f32 %v3015, 0.2
    %v3144 = vmul.f32 %v3016, 0.2
    %v3145 = vmul.f32 %v3017, 0.2
    %v3146 = vmul.f32 %v3018, 0.2
    %v3147 = vmul.f32 %v3019, 0.2
    %v3148 = vmul.f32 %v3020, 0.2
    %v3149 = vmul.f32 %v3021, 0.2
    %v3150 = vmul.f32 %v3022, 0.2
    %v3151 = vmul.f32 %v3023, 0.2
    %v3152 = vmul.f32 %v3024, 0.2
    %v3153 = vmul.f32 %v3025, 0.2
    %v3154 = vmul.f32 %v3026, 0.2
    %v3155 = vmul.f32 %v3027, 0.2
    %v3156 = vmul.f32 %v3028, 0.2
    %v3157 = vmul.f32 %v3029, 0.2
    %v3158 = vmul.f32 %v3030, 0.2
    %v3159 = vmul.f32 %v3031, 0.2
    %v3160 = vmul.f32 %v3032, 0.2
    %v3161 = vmul.f32 %v3033, 0.2
    %v3162 = vmul.f32 %v3034, 0.2
    %v3163 = vmul.f32 %v3035, 0.2
    %v3164 = vmul.f32 %v3036, 0.2
    %v3165 = vmul.f32 %v3037, 0.2
    %v3166 = vmul.f32 %v3038, 0.2
    %v3167 = vmul.f32 %v3039, 0.2
    %v3168 = vmul.f32 %v3040, 0.2
    %v3169 = vmul.f32 %v3041, 0.2
    %v3170 = vmul.f32 %v3042, 0.2
    %v3171 = vmul.f32 %v3043, 0.2
    %v3172 = vmul.f32 %v3044, 0.2
    %v3173 = vmul.f32 %v3045, 0.2
    %v3174 = vmul.f32 %v3046, 0.2
    %v3175 = vmul.f32 %v3047, 0.2
    %v3176 = vmul.f32 %v3048, 0.2
    %v3177 = vmul.f32 %v3049, 0.2
    %v3178 = vmul.f32 %v3050, 0.2
    %v3179 = vmul.f32 %v3051, 0.2
    %v3180 = vmul.f32 %v3052, 0.2
    %v3181 = vmul.f32 %v3053, 0.2
    %v3182 = vmul.f32 %v3054, 0.2
    %v3183 = vmul.f32 %v3055, 0.2
    %v3184 = vmul.f32 %v3056, 0.2
    %v3185 = vmul.f32 %v3057, 0.2
    %v3186 = vmul.f32 %v3058, 0.2
    %v3187 = vmul.f32 %v3059, 0.2
    %v3188 = vmul.f32 %v3060, 0.2
    %v3189 = vmul.f32 %v3061, 0.2
    %v3190 = vmul.f32 %v3062, 0.2
    %v3191 = vmul.f32 %v3063, 0.2
    %v3192 = vmul.f32 %v3064, 0.2
    %v3193 = vsel %vm3065, %v3001, %v3129
    %v3194 = vsel %vm3066, %v3002, %v3130
    %v3195 = vsel %vm3067, %v3003, %v3131
    %v3196 = vsel %vm3068, %v3004, %v3132
    %v3197 = vsel %vm3069, %v3005, %v3133
    %v3198 = vsel %vm3070, %v3006, %v3134
    %v3199 = vsel %vm3071, %v3007, %v3135
    %v3200 = vsel %vm3072, %v3008, %v3136
    %v3201 = vsel %vm3073, %v3009, %v3137
    %v3202 = vsel %vm3074, %v3010, %v3138
    %v3203 = vsel %vm3075, %v3011, %v3139
    %v3204 = vsel %vm3076, %v3012, %v3140
    %v3205 = vsel %vm3077, %v3013, %v3141
    %v3206 = vsel %vm3078, %v3014, %v3142
    %v3207 = vsel %vm3079, %v3015, %v3143
    %v3208 = vsel %vm3080, %v3016, %v3144
    %v3209 = vsel %vm3081, %v3017, %v3145
    %v3210 = vsel %vm3082, %v3018, %v3146
    %v3211 = vsel %vm3083, %v3019, %v3147
    %v3212 = vsel %vm3084, %v3020, %v3148
    %v3213 = vsel %vm3085, %v3021, %v3149
    %v3214 = vsel %vm3086, %v3022, %v3150
    %v3215 = vsel %vm3087, %v3023, %v3151
    %v3216 = vsel %vm3088, %v3024, %v3152
    %v3217 = vsel %vm3089, %v3025, %v3153
    %v3218 = vsel %vm3090, %v3026, %v3154
    %v3219 = vsel %vm3091, %v3027, %v3155
    %v3220 = vsel %vm3092, %v3028, %v3156
    %v3221 = vsel %vm3093, %v3029, %v3157
    %v3222 = vsel %vm3094, %v3030, %v3158
    %v3223 = vsel %vm3095, %v3031, %v3159
    %v3224 = vsel %vm3096, %v3032, %v3160
    %v3225 = vsel %vm3097, %v3033, %v3161
    %v3226 = vsel %vm3098, %v3034, %v3162
    %v3227 = vsel %vm3099, %v3035, %v3163
    %v3228 = vsel %vm3100, %v3036, %v3164
    %v3229 = vsel %vm3101, %v3037, %v3165
    %v3230 = vsel %vm3102, %v3038, %v3166
    %v3231 = vsel %vm3103, %v3039, %v3167
    %v3232 = vsel %vm3104, %v3040, %v3168
    %v3233 = vsel %vm3105, %v3041, %v3169
    %v3234 = vsel %vm3106, %v3042, %v3170
    %v3235 = vsel %vm3107, %v3043, %v3171
    %v3236 = vsel %vm3108, %v3044, %v3172
    %v3237 = vsel %vm3109, %v3045, %v3173
    %v3238 = vsel %vm3110, %v3046, %v3174
    %v3239 = vsel %vm3111, %v3047, %v3175
    %v3240 = vsel %vm3112, %v3048, %v3176
    %v3241 = vsel %vm3113, %v3049, %v3177
    %v3242 = vsel %vm3114, %v3050, %v3178
    %v3243 = vsel %vm3115, %v3051, %v3179
    %v3244 = vsel %vm3116, %v3052, %v3180
    %v3245 = vsel %vm3117, %v3053, %v3181
    %v3246 = vsel %vm3118, %v3054, %v3182
    %v3247 = vsel %vm3119, %v3055, %v3183
    %v3248 = vsel %vm3120, %v3056, %v3184
    %v3249 = vsel %vm3121, %v3057, %v3185
    %v3250 = vsel %vm3122, %v3058, %v3186
    %v3251 = vsel %vm3123, %v3059, %v3187
    %v3252 = vsel %vm3124, %v3060, %v3188
    %v3253 = vsel %vm3125, %v3061, %v3189
    %v3254 = vsel %vm3126, %v3062, %v3190
    %v3255 = vsel %vm3127, %v3063, %v3191
    %v3256 = vsel %vm3128, %v3064, %v3192
    %v3257 = vpack.c.bf16 %v3194, %v3193
    %v3258 = vpack.c.bf16 %v3196, %v3195
    %v3259 = vpack.c.bf16 %v3198, %v3197
    %v3260 = vpack.c.bf16 %v3200, %v3199
    %v3261 = vpack.c.bf16 %v3202, %v3201
    %v3262 = vpack.c.bf16 %v3204, %v3203
    %v3263 = vpack.c.bf16 %v3206, %v3205
    %v3264 = vpack.c.bf16 %v3208, %v3207
    %v3265 = vpack.c.bf16 %v3210, %v3209
    %v3266 = vpack.c.bf16 %v3212, %v3211
    %v3267 = vpack.c.bf16 %v3214, %v3213
    %v3268 = vpack.c.bf16 %v3216, %v3215
    %v3269 = vpack.c.bf16 %v3218, %v3217
    %v3270 = vpack.c.bf16 %v3220, %v3219
    %v3271 = vpack.c.bf16 %v3222, %v3221
    %v3272 = vpack.c.bf16 %v3224, %v3223
    %v3273 = vpack.c.bf16 %v3226, %v3225
    %v3274 = vpack.c.bf16 %v3228, %v3227
    %v3275 = vpack.c.bf16 %v3230, %v3229
    %v3276 = vpack.c.bf16 %v3232, %v3231
    %v3277 = vpack.c.bf16 %v3234, %v3233
    %v3278 = vpack.c.bf16 %v3236, %v3235
    %v3279 = vpack.c.bf16 %v3238, %v3237
    %v3280 = vpack.c.bf16 %v3240, %v3239
    %v3281 = vpack.c.bf16 %v3242, %v3241
    %v3282 = vpack.c.bf16 %v3244, %v3243
    %v3283 = vpack.c.bf16 %v3246, %v3245
    %v3284 = vpack.c.bf16 %v3248, %v3247
    %v3285 = vpack.c.bf16 %v3250, %v3249
    %v3286 = vpack.c.bf16 %v3252, %v3251
    %v3287 = vpack.c.bf16 %v3254, %v3253
    %v3288 = vpack.c.bf16 %v3256, %v3255
    %v3290 = vshrl.u32 %v3257, 16
    %v3292 = vrot.slane %v3290, 7
    %v3293 = vshll.u32 %v3257, 16
    %v3295 = vor.u32 %v3292, %v3293
    %v3297 = vshrl.u32 %v3258, 16
    %v3299 = vrot.slane %v3297, 7
    %v3300 = vshll.u32 %v3258, 16
    %v3302 = vor.u32 %v3299, %v3300
    %v3304 = vshrl.u32 %v3259, 16
    %v3306 = vrot.slane %v3304, 7
    %v3307 = vshll.u32 %v3259, 16
    %v3309 = vor.u32 %v3306, %v3307
    %v3311 = vshrl.u32 %v3260, 16
    %v3313 = vrot.slane %v3311, 7
    %v3314 = vshll.u32 %v3260, 16
    %v3316 = vor.u32 %v3313, %v3314
    %v3318 = vshrl.u32 %v3261, 16
    %v3320 = vrot.slane %v3318, 7
    %v3321 = vshll.u32 %v3261, 16
    %v3323 = vor.u32 %v3320, %v3321
    %v3325 = vshrl.u32 %v3262, 16
    %v3327 = vrot.slane %v3325, 7
    %v3328 = vshll.u32 %v3262, 16
    %v3330 = vor.u32 %v3327, %v3328
    %v3332 = vshrl.u32 %v3263, 16
    %v3334 = vrot.slane %v3332, 7
    %v3335 = vshll.u32 %v3263, 16
    %v3337 = vor.u32 %v3334, %v3335
    %v3339 = vshrl.u32 %v3264, 16
    %v3341 = vrot.slane %v3339, 7
    %v3342 = vshll.u32 %v3264, 16
    %v3344 = vor.u32 %v3341, %v3342
    %v3346 = vshrl.u32 %v3265, 16
    %v3348 = vrot.slane %v3346, 7
    %v3349 = vshll.u32 %v3265, 16
    %v3351 = vor.u32 %v3348, %v3349
    %v3353 = vshrl.u32 %v3266, 16
    %v3355 = vrot.slane %v3353, 7
    %v3356 = vshll.u32 %v3266, 16
    %v3358 = vor.u32 %v3355, %v3356
    %v3360 = vshrl.u32 %v3267, 16
    %v3362 = vrot.slane %v3360, 7
    %v3363 = vshll.u32 %v3267, 16
    %v3365 = vor.u32 %v3362, %v3363
    %v3367 = vshrl.u32 %v3268, 16
    %v3369 = vrot.slane %v3367, 7
    %v3370 = vshll.u32 %v3268, 16
    %v3372 = vor.u32 %v3369, %v3370
    %v3374 = vshrl.u32 %v3269, 16
    %v3376 = vrot.slane %v3374, 7
    %v3377 = vshll.u32 %v3269, 16
    %v3379 = vor.u32 %v3376, %v3377
    %v3381 = vshrl.u32 %v3270, 16
    %v3383 = vrot.slane %v3381, 7
    %v3384 = vshll.u32 %v3270, 16
    %v3386 = vor.u32 %v3383, %v3384
    %v3388 = vshrl.u32 %v3271, 16
    %v3390 = vrot.slane %v3388, 7
    %v3391 = vshll.u32 %v3271, 16
    %v3393 = vor.u32 %v3390, %v3391
    %v3395 = vshrl.u32 %v3272, 16
    %v3397 = vrot.slane %v3395, 7
    %v3398 = vshll.u32 %v3272, 16
    %v3400 = vor.u32 %v3397, %v3398
    %v3402 = vshrl.u32 %v3273, 16
    %v3404 = vrot.slane %v3402, 7
    %v3405 = vshll.u32 %v3273, 16
    %v3407 = vor.u32 %v3404, %v3405
    %v3409 = vshrl.u32 %v3274, 16
    %v3411 = vrot.slane %v3409, 7
    %v3412 = vshll.u32 %v3274, 16
    %v3414 = vor.u32 %v3411, %v3412
    %v3416 = vshrl.u32 %v3275, 16
    %v3418 = vrot.slane %v3416, 7
    %v3419 = vshll.u32 %v3275, 16
    %v3421 = vor.u32 %v3418, %v3419
    %v3423 = vshrl.u32 %v3276, 16
    %v3425 = vrot.slane %v3423, 7
    %v3426 = vshll.u32 %v3276, 16
    %v3428 = vor.u32 %v3425, %v3426
    %v3430 = vshrl.u32 %v3277, 16
    %v3432 = vrot.slane %v3430, 7
    %v3433 = vshll.u32 %v3277, 16
    %v3435 = vor.u32 %v3432, %v3433
    %v3437 = vshrl.u32 %v3278, 16
    %v3439 = vrot.slane %v3437, 7
    %v3440 = vshll.u32 %v3278, 16
    %v3442 = vor.u32 %v3439, %v3440
    %v3444 = vshrl.u32 %v3279, 16
    %v3446 = vrot.slane %v3444, 7
    %v3447 = vshll.u32 %v3279, 16
    %v3449 = vor.u32 %v3446, %v3447
    %v3451 = vshrl.u32 %v3280, 16
    %v3453 = vrot.slane %v3451, 7
    %v3454 = vshll.u32 %v3280, 16
    %v3456 = vor.u32 %v3453, %v3454
    %v3458 = vshrl.u32 %v3281, 16
    %v3460 = vrot.slane %v3458, 7
    %v3461 = vshll.u32 %v3281, 16
    %v3463 = vor.u32 %v3460, %v3461
    %v3465 = vshrl.u32 %v3282, 16
    %v3467 = vrot.slane %v3465, 7
    %v3468 = vshll.u32 %v3282, 16
    %v3470 = vor.u32 %v3467, %v3468
    %v3472 = vshrl.u32 %v3283, 16
    %v3474 = vrot.slane %v3472, 7
    %v3475 = vshll.u32 %v3283, 16
    %v3477 = vor.u32 %v3474, %v3475
    %v3479 = vshrl.u32 %v3284, 16
    %v3481 = vrot.slane %v3479, 7
    %v3482 = vshll.u32 %v3284, 16
    %v3484 = vor.u32 %v3481, %v3482
    %v3486 = vshrl.u32 %v3285, 16
    %v3488 = vrot.slane %v3486, 7
    %v3489 = vshll.u32 %v3285, 16
    %v3491 = vor.u32 %v3488, %v3489
    %v3493 = vshrl.u32 %v3286, 16
    %v3495 = vrot.slane %v3493, 7
    %v3496 = vshll.u32 %v3286, 16
    %v3498 = vor.u32 %v3495, %v3496
    %v3500 = vshrl.u32 %v3287, 16
    %v3502 = vrot.slane %v3500, 7
    %v3503 = vshll.u32 %v3287, 16
    %v3505 = vor.u32 %v3502, %v3503
    %v3507 = vshrl.u32 %v3288, 16
    %v3509 = vrot.slane %v3507, 7
    %v3510 = vshll.u32 %v3288, 16
    %v3512 = vor.u32 %v3509, %v3510
    %v3577 = vsel %vm429, 0, %v3295
    %v3578 = vsel %vm429, 0, %v3302
    %v3579 = vsel %vm429, 0, %v3309
    %v3580 = vsel %vm429, 0, %v3316
    %v3581 = vsel %vm429, 0, %v3323
    %v3582 = vsel %vm429, 0, %v3330
    %v3583 = vsel %vm429, 0, %v3337
    %v3584 = vsel %vm429, 0, %v3344
    %v3585 = vsel %vm429, 0, %v3351
    %v3586 = vsel %vm429, 0, %v3358
    %v3587 = vsel %vm429, 0, %v3365
    %v3588 = vsel %vm429, 0, %v3372
    %v3589 = vsel %vm429, 0, %v3379
    %v3590 = vsel %vm429, 0, %v3386
    %v3591 = vsel %vm429, 0, %v3393
    %v3592 = vsel %vm429, 0, %v3400
    %v3593 = vsel %vm429, 0, %v3407
    %v3594 = vsel %vm429, 0, %v3414
    %v3595 = vsel %vm429, 0, %v3421
    %v3596 = vsel %vm429, 0, %v3428
    %v3597 = vsel %vm429, 0, %v3435
    %v3598 = vsel %vm429, 0, %v3442
    %v3599 = vsel %vm429, 0, %v3449
    %v3600 = vsel %vm429, 0, %v3456
    %v3601 = vsel %vm429, 0, %v3463
    %v3602 = vsel %vm429, 0, %v3470
    %v3603 = vsel %vm429, 0, %v3477
    %v3604 = vsel %vm429, 0, %v3484
    %v3605 = vsel %vm429, 0, %v3491
    %v3606 = vsel %vm429, 0, %v3498
    %v3607 = vsel %vm429, 0, %v3505
    %v3608 = vsel %vm429, 0, %v3512
    %v3609 = vsel %vm429, %v3292, 0
    %v3610 = vsel %vm429, %v3299, 0
    %v3611 = vsel %vm429, %v3306, 0
    %v3612 = vsel %vm429, %v3313, 0
    %v3613 = vsel %vm429, %v3320, 0
    %v3614 = vsel %vm429, %v3327, 0
    %v3615 = vsel %vm429, %v3334, 0
    %v3616 = vsel %vm429, %v3341, 0
    %v3617 = vsel %vm429, %v3348, 0
    %v3618 = vsel %vm429, %v3355, 0
    %v3619 = vsel %vm429, %v3362, 0
    %v3620 = vsel %vm429, %v3369, 0
    %v3621 = vsel %vm429, %v3376, 0
    %v3622 = vsel %vm429, %v3383, 0
    %v3623 = vsel %vm429, %v3390, 0
    %v3624 = vsel %vm429, %v3397, 0
    %v3625 = vsel %vm429, %v3404, 0
    %v3626 = vsel %vm429, %v3411, 0
    %v3627 = vsel %vm429, %v3418, 0
    %v3628 = vsel %vm429, %v3425, 0
    %v3629 = vsel %vm429, %v3432, 0
    %v3630 = vsel %vm429, %v3439, 0
    %v3631 = vsel %vm429, %v3446, 0
    %v3632 = vsel %vm429, %v3453, 0
    %v3633 = vsel %vm429, %v3460, 0
    %v3634 = vsel %vm429, %v3467, 0
    %v3635 = vsel %vm429, %v3474, 0
    %v3636 = vsel %vm429, %v3481, 0
    %v3637 = vsel %vm429, %v3488, 0
    %v3638 = vsel %vm429, %v3495, 0
    %v3639 = vsel %vm429, %v3502, 0
    %v3640 = vsel %vm429, %v3509, 0
    %v3642 = vshrl.u32 %v3577, 16
    %v3644 = vshll.u32 %v3577, 16
    %v3646 = vrot.slane %v3644, 1
    %v3647 = vor.u32 %v3642, %v3646
    %v3649 = vshll.u32 %v3609, 16
    %v3651 = vrot.slane %v3649, 1
    %v3652 = vsel %vm496, %v3647, %v3651
    %v3654 = vshrl.u32 %v3578, 16
    %v3656 = vshll.u32 %v3578, 16
    %v3658 = vrot.slane %v3656, 1
    %v3659 = vor.u32 %v3654, %v3658
    %v3661 = vshll.u32 %v3610, 16
    %v3663 = vrot.slane %v3661, 1
    %v3664 = vsel %vm496, %v3659, %v3663
    %v3666 = vshrl.u32 %v3579, 16
    %v3668 = vshll.u32 %v3579, 16
    %v3670 = vrot.slane %v3668, 1
    %v3671 = vor.u32 %v3666, %v3670
    %v3673 = vshll.u32 %v3611, 16
    %v3675 = vrot.slane %v3673, 1
    %v3676 = vsel %vm496, %v3671, %v3675
    %v3678 = vshrl.u32 %v3580, 16
    %v3680 = vshll.u32 %v3580, 16
    %v3682 = vrot.slane %v3680, 1
    %v3683 = vor.u32 %v3678, %v3682
    %v3685 = vshll.u32 %v3612, 16
    %v3687 = vrot.slane %v3685, 1
    %v3688 = vsel %vm496, %v3683, %v3687
    %v3690 = vshrl.u32 %v3581, 16
    %v3692 = vshll.u32 %v3581, 16
    %v3694 = vrot.slane %v3692, 1
    %v3695 = vor.u32 %v3690, %v3694
    %v3697 = vshll.u32 %v3613, 16
    %v3699 = vrot.slane %v3697, 1
    %v3700 = vsel %vm496, %v3695, %v3699
    %v3702 = vshrl.u32 %v3582, 16
    %v3704 = vshll.u32 %v3582, 16
    %v3706 = vrot.slane %v3704, 1
    %v3707 = vor.u32 %v3702, %v3706
    %v3709 = vshll.u32 %v3614, 16
    %v3711 = vrot.slane %v3709, 1
    %v3712 = vsel %vm496, %v3707, %v3711
    %v3714 = vshrl.u32 %v3583, 16
    %v3716 = vshll.u32 %v3583, 16
    %v3718 = vrot.slane %v3716, 1
    %v3719 = vor.u32 %v3714, %v3718
    %v3721 = vshll.u32 %v3615, 16
    %v3723 = vrot.slane %v3721, 1
    %v3724 = vsel %vm496, %v3719, %v3723
    %v3726 = vshrl.u32 %v3584, 16
    %v3728 = vshll.u32 %v3584, 16
    %v3730 = vrot.slane %v3728, 1
    %v3731 = vor.u32 %v3726, %v3730
    %v3733 = vshll.u32 %v3616, 16
    %v3735 = vrot.slane %v3733, 1
    %v3736 = vsel %vm496, %v3731, %v3735
    %v3738 = vshrl.u32 %v3585, 16
    %v3740 = vshll.u32 %v3585, 16
    %v3742 = vrot.slane %v3740, 1
    %v3743 = vor.u32 %v3738, %v3742
    %v3745 = vshll.u32 %v3617, 16
    %v3747 = vrot.slane %v3745, 1
    %v3748 = vsel %vm496, %v3743, %v3747
    %v3750 = vshrl.u32 %v3586, 16
    %v3752 = vshll.u32 %v3586, 16
    %v3754 = vrot.slane %v3752, 1
    %v3755 = vor.u32 %v3750, %v3754
    %v3757 = vshll.u32 %v3618, 16
    %v3759 = vrot.slane %v3757, 1
    %v3760 = vsel %vm496, %v3755, %v3759
    %v3762 = vshrl.u32 %v3587, 16
    %v3764 = vshll.u32 %v3587, 16
    %v3766 = vrot.slane %v3764, 1
    %v3767 = vor.u32 %v3762, %v3766
    %v3769 = vshll.u32 %v3619, 16
    %v3771 = vrot.slane %v3769, 1
    %v3772 = vsel %vm496, %v3767, %v3771
    %v3774 = vshrl.u32 %v3588, 16
    %v3776 = vshll.u32 %v3588, 16
    %v3778 = vrot.slane %v3776, 1
    %v3779 = vor.u32 %v3774, %v3778
    %v3781 = vshll.u32 %v3620, 16
    %v3783 = vrot.slane %v3781, 1
    %v3784 = vsel %vm496, %v3779, %v3783
    %v3786 = vshrl.u32 %v3589, 16
    %v3788 = vshll.u32 %v3589, 16
    %v3790 = vrot.slane %v3788, 1
    %v3791 = vor.u32 %v3786, %v3790
    %v3793 = vshll.u32 %v3621, 16
    %v3795 = vrot.slane %v3793, 1
    %v3796 = vsel %vm496, %v3791, %v3795
    %v3798 = vshrl.u32 %v3590, 16
    %v3800 = vshll.u32 %v3590, 16
    %v3802 = vrot.slane %v3800, 1
    %v3803 = vor.u32 %v3798, %v3802
    %v3805 = vshll.u32 %v3622, 16
    %v3807 = vrot.slane %v3805, 1
    %v3808 = vsel %vm496, %v3803, %v3807
    %v3810 = vshrl.u32 %v3591, 16
    %v3812 = vshll.u32 %v3591, 16
    %v3814 = vrot.slane %v3812, 1
    %v3815 = vor.u32 %v3810, %v3814
    %v3817 = vshll.u32 %v3623, 16
    %v3819 = vrot.slane %v3817, 1
    %v3820 = vsel %vm496, %v3815, %v3819
    %v3822 = vshrl.u32 %v3593, 16
    %v3824 = vshll.u32 %v3593, 16
    %v3826 = vrot.slane %v3824, 1
    %v3827 = vor.u32 %v3822, %v3826
    %v3829 = vshll.u32 %v3625, 16
    %v3831 = vrot.slane %v3829, 1
    %v3832 = vsel %vm496, %v3827, %v3831
    %v3834 = vshrl.u32 %v3594, 16
    %v3836 = vshll.u32 %v3594, 16
    %v3838 = vrot.slane %v3836, 1
    %v3839 = vor.u32 %v3834, %v3838
    %v3841 = vshll.u32 %v3626, 16
    %v3843 = vrot.slane %v3841, 1
    %v3844 = vsel %vm496, %v3839, %v3843
    %v3846 = vshrl.u32 %v3595, 16
    %v3848 = vshll.u32 %v3595, 16
    %v3850 = vrot.slane %v3848, 1
    %v3851 = vor.u32 %v3846, %v3850
    %v3853 = vshll.u32 %v3627, 16
    %v3855 = vrot.slane %v3853, 1
    %v3856 = vsel %vm496, %v3851, %v3855
    %v3858 = vshrl.u32 %v3596, 16
    %v3860 = vshll.u32 %v3596, 16
    %v3862 = vrot.slane %v3860, 1
    %v3863 = vor.u32 %v3858, %v3862
    %v3865 = vshll.u32 %v3628, 16
    %v3867 = vrot.slane %v3865, 1
    %v3868 = vsel %vm496, %v3863, %v3867
    %v3870 = vshrl.u32 %v3597, 16
    %v3872 = vshll.u32 %v3597, 16
    %v3874 = vrot.slane %v3872, 1
    %v3875 = vor.u32 %v3870, %v3874
    %v3877 = vshll.u32 %v3629, 16
    %v3879 = vrot.slane %v3877, 1
    %v3880 = vsel %vm496, %v3875, %v3879
    %v3882 = vshrl.u32 %v3598, 16
    %v3884 = vshll.u32 %v3598, 16
    %v3886 = vrot.slane %v3884, 1
    %v3887 = vor.u32 %v3882, %v3886
    %v3889 = vshll.u32 %v3630, 16
    %v3891 = vrot.slane %v3889, 1
    %v3892 = vsel %vm496, %v3887, %v3891
    %v3894 = vshrl.u32 %v3599, 16
    %v3896 = vshll.u32 %v3599, 16
    %v3898 = vrot.slane %v3896, 1
    %v3899 = vor.u32 %v3894, %v3898
    %v3901 = vshll.u32 %v3631, 16
    %v3903 = vrot.slane %v3901, 1
    %v3904 = vsel %vm496, %v3899, %v3903
    %v3906 = vshrl.u32 %v3600, 16
    %v3908 = vshll.u32 %v3600, 16
    %v3910 = vrot.slane %v3908, 1
    %v3911 = vor.u32 %v3906, %v3910
    %v3913 = vshll.u32 %v3632, 16
    %v3915 = vrot.slane %v3913, 1
    %v3916 = vsel %vm496, %v3911, %v3915
    %v3918 = vshrl.u32 %v3601, 16
    %v3920 = vshll.u32 %v3601, 16
    %v3922 = vrot.slane %v3920, 1
    %v3923 = vor.u32 %v3918, %v3922
    %v3925 = vshll.u32 %v3633, 16
    %v3927 = vrot.slane %v3925, 1
    %v3928 = vsel %vm496, %v3923, %v3927
    %v3930 = vshrl.u32 %v3602, 16
    %v3932 = vshll.u32 %v3602, 16
    %v3934 = vrot.slane %v3932, 1
    %v3935 = vor.u32 %v3930, %v3934
    %v3937 = vshll.u32 %v3634, 16
    %v3939 = vrot.slane %v3937, 1
    %v3940 = vsel %vm496, %v3935, %v3939
    %v3942 = vshrl.u32 %v3603, 16
    %v3944 = vshll.u32 %v3603, 16
    %v3946 = vrot.slane %v3944, 1
    %v3947 = vor.u32 %v3942, %v3946
    %v3949 = vshll.u32 %v3635, 16
    %v3951 = vrot.slane %v3949, 1
    %v3952 = vsel %vm496, %v3947, %v3951
    %v3954 = vshrl.u32 %v3604, 16
    %v3956 = vshll.u32 %v3604, 16
    %v3958 = vrot.slane %v3956, 1
    %v3959 = vor.u32 %v3954, %v3958
    %v3961 = vshll.u32 %v3636, 16
    %v3963 = vrot.slane %v3961, 1
    %v3964 = vsel %vm496, %v3959, %v3963
    %v3966 = vshrl.u32 %v3605, 16
    %v3968 = vshll.u32 %v3605, 16
    %v3970 = vrot.slane %v3968, 1
    %v3971 = vor.u32 %v3966, %v3970
    %v3973 = vshll.u32 %v3637, 16
    %v3975 = vrot.slane %v3973, 1
    %v3976 = vsel %vm496, %v3971, %v3975
    %v3978 = vshrl.u32 %v3606, 16
    %v3980 = vshll.u32 %v3606, 16
    %v3982 = vrot.slane %v3980, 1
    %v3983 = vor.u32 %v3978, %v3982
    %v3985 = vshll.u32 %v3638, 16
    %v3987 = vrot.slane %v3985, 1
    %v3988 = vsel %vm496, %v3983, %v3987
    %v3990 = vshrl.u32 %v3607, 16
    %v3992 = vshll.u32 %v3607, 16
    %v3994 = vrot.slane %v3992, 1
    %v3995 = vor.u32 %v3990, %v3994
    %v3997 = vshll.u32 %v3639, 16
    %v3999 = vrot.slane %v3997, 1
    %v4000 = vsel %vm496, %v3995, %v3999
    %v4061 = vrot.slane %v3577, 1
    %v4062 = vrot.slane %v3609, 1
    %v4063 = vsel %vm931, %v4061, %v4062
    %v4064 = vrot.slane %v3578, 1
    %v4065 = vrot.slane %v3610, 1
    %v4066 = vsel %vm931, %v4064, %v4065
    %v4067 = vrot.slane %v3579, 1
    %v4068 = vrot.slane %v3611, 1
    %v4069 = vsel %vm931, %v4067, %v4068
    %v4070 = vrot.slane %v3580, 1
    %v4071 = vrot.slane %v3612, 1
    %v4072 = vsel %vm931, %v4070, %v4071
    %v4073 = vrot.slane %v3581, 1
    %v4074 = vrot.slane %v3613, 1
    %v4075 = vsel %vm931, %v4073, %v4074
    %v4076 = vrot.slane %v3582, 1
    %v4077 = vrot.slane %v3614, 1
    %v4078 = vsel %vm931, %v4076, %v4077
    %v4079 = vrot.slane %v3583, 1
    %v4080 = vrot.slane %v3615, 1
    %v4081 = vsel %vm931, %v4079, %v4080
    %v4082 = vrot.slane %v3584, 1
    %v4083 = vrot.slane %v3616, 1
    %v4084 = vsel %vm931, %v4082, %v4083
    %v4085 = vrot.slane %v3585, 1
    %v4086 = vrot.slane %v3617, 1
    %v4087 = vsel %vm931, %v4085, %v4086
    %v4088 = vrot.slane %v3586, 1
    %v4089 = vrot.slane %v3618, 1
    %v4090 = vsel %vm931, %v4088, %v4089
    %v4091 = vrot.slane %v3587, 1
    %v4092 = vrot.slane %v3619, 1
    %v4093 = vsel %vm931, %v4091, %v4092
    %v4094 = vrot.slane %v3588, 1
    %v4095 = vrot.slane %v3620, 1
    %v4096 = vsel %vm931, %v4094, %v4095
    %v4097 = vrot.slane %v3589, 1
    %v4098 = vrot.slane %v3621, 1
    %v4099 = vsel %vm931, %v4097, %v4098
    %v4100 = vrot.slane %v3590, 1
    %v4101 = vrot.slane %v3622, 1
    %v4102 = vsel %vm931, %v4100, %v4101
    %v4103 = vrot.slane %v3591, 1
    %v4104 = vrot.slane %v3623, 1
    %v4105 = vsel %vm931, %v4103, %v4104
    %v4106 = vrot.slane %v3593, 1
    %v4107 = vrot.slane %v3625, 1
    %v4108 = vsel %vm931, %v4106, %v4107
    %v4109 = vrot.slane %v3594, 1
    %v4110 = vrot.slane %v3626, 1
    %v4111 = vsel %vm931, %v4109, %v4110
    %v4112 = vrot.slane %v3595, 1
    %v4113 = vrot.slane %v3627, 1
    %v4114 = vsel %vm931, %v4112, %v4113
    %v4115 = vrot.slane %v3596, 1
    %v4116 = vrot.slane %v3628, 1
    %v4117 = vsel %vm931, %v4115, %v4116
    %v4118 = vrot.slane %v3597, 1
    %v4119 = vrot.slane %v3629, 1
    %v4120 = vsel %vm931, %v4118, %v4119
    %v4121 = vrot.slane %v3598, 1
    %v4122 = vrot.slane %v3630, 1
    %v4123 = vsel %vm931, %v4121, %v4122
    %v4124 = vrot.slane %v3599, 1
    %v4125 = vrot.slane %v3631, 1
    %v4126 = vsel %vm931, %v4124, %v4125
    %v4127 = vrot.slane %v3600, 1
    %v4128 = vrot.slane %v3632, 1
    %v4129 = vsel %vm931, %v4127, %v4128
    %v4130 = vrot.slane %v3601, 1
    %v4131 = vrot.slane %v3633, 1
    %v4132 = vsel %vm931, %v4130, %v4131
    %v4133 = vrot.slane %v3602, 1
    %v4134 = vrot.slane %v3634, 1
    %v4135 = vsel %vm931, %v4133, %v4134
    %v4136 = vrot.slane %v3603, 1
    %v4137 = vrot.slane %v3635, 1
    %v4138 = vsel %vm931, %v4136, %v4137
    %v4139 = vrot.slane %v3604, 1
    %v4140 = vrot.slane %v3636, 1
    %v4141 = vsel %vm931, %v4139, %v4140
    %v4142 = vrot.slane %v3605, 1
    %v4143 = vrot.slane %v3637, 1
    %v4144 = vsel %vm931, %v4142, %v4143
    %v4145 = vrot.slane %v3606, 1
    %v4146 = vrot.slane %v3638, 1
    %v4147 = vsel %vm931, %v4145, %v4146
    %v4148 = vrot.slane %v3607, 1
    %v4149 = vrot.slane %v3639, 1
    %v4150 = vsel %vm931, %v4148, %v4149
    %v4152 = vshrl.u32 %v3592, 16
    %v4154 = vshll.u32 %v3592, 16
    %v4156 = vrot.slane %v4154, 1
    %v4157 = vor.u32 %v4152, %v4156
    %v4159 = vshll.u32 %v3624, 16
    %v4161 = vrot.slane %v4159, 1
    %v4162 = vsel %vm496, %v4157, %v4161
    %v4164 = vshrl.u32 %v3608, 16
    %v4166 = vshll.u32 %v3608, 16
    %v4168 = vrot.slane %v4166, 1
    %v4169 = vor.u32 %v4164, %v4168
    %v4171 = vshll.u32 %v3640, 16
    %v4173 = vrot.slane %v4171, 1
    %v4174 = vsel %vm496, %v4169, %v4173
    %v4179 = vrot.slane %v3592, 1
    %v4180 = vrot.slane %v3624, 1
    %v4181 = vsel %vm931, %v4179, %v4180
    %v4182 = vrot.slane %v3608, 1
    %v4183 = vrot.slane %v3640, 1
    %v4184 = vsel %vm931, %v4182, %v4183
    %4185 = vrot.lane.b32.xlu0 %v508, 64
    %v4186 = vpop.permute.xlu0 %4185
    %4187 = vrot.lane.b32.xlu0 %v3652, 64
    %v4188 = vpop.permute.xlu0 %4187
    %4189 = vrot.lane.b32.xlu0 %v3664, 64
    %v4190 = vpop.permute.xlu0 %4189
    %4191 = vrot.lane.b32.xlu0 %v3676, 64
    %v4192 = vpop.permute.xlu0 %4191
    %4193 = vrot.lane.b32.xlu0 %v3688, 64
    %v4194 = vpop.permute.xlu0 %4193
    %4195 = vrot.lane.b32.xlu0 %v3700, 64
    %v4196 = vpop.permute.xlu0 %4195
    %4197 = vrot.lane.b32.xlu0 %v3712, 64
    %v4198 = vpop.permute.xlu0 %4197
    %4199 = vrot.lane.b32.xlu0 %v3724, 64
    %v4200 = vpop.permute.xlu0 %4199
    %4201 = vrot.lane.b32.xlu0 %v3736, 64
    %v4202 = vpop.permute.xlu0 %4201
    %4203 = vrot.lane.b32.xlu0 %v3748, 64
    %v4204 = vpop.permute.xlu0 %4203
    %4205 = vrot.lane.b32.xlu0 %v3760, 64
    %v4206 = vpop.permute.xlu0 %4205
    %4207 = vrot.lane.b32.xlu0 %v3772, 64
    %v4208 = vpop.permute.xlu0 %4207
    %4209 = vrot.lane.b32.xlu0 %v3784, 64
    %v4210 = vpop.permute.xlu0 %4209
    %4211 = vrot.lane.b32.xlu0 %v3796, 64
    %v4212 = vpop.permute.xlu0 %4211
    %4213 = vrot.lane.b32.xlu0 %v3808, 64
    %v4214 = vpop.permute.xlu0 %4213
    %4215 = vrot.lane.b32.xlu0 %v3820, 64
    %v4216 = vpop.permute.xlu0 %4215
    %4217 = vrot.lane.b32.xlu0 %v3832, 64
    %v4218 = vpop.permute.xlu0 %4217
    %4219 = vrot.lane.b32.xlu0 %v3844, 64
    %v4220 = vpop.permute.xlu0 %4219
    %4221 = vrot.lane.b32.xlu0 %v3856, 64
    %v4222 = vpop.permute.xlu0 %4221
    %4223 = vrot.lane.b32.xlu0 %v3868, 64
    %v4224 = vpop.permute.xlu0 %4223
    %4225 = vrot.lane.b32.xlu0 %v3880, 64
    %v4226 = vpop.permute.xlu0 %4225
    %4227 = vrot.lane.b32.xlu0 %v3892, 64
    %v4228 = vpop.permute.xlu0 %4227
    %4229 = vrot.lane.b32.xlu0 %v3904, 64
    %v4230 = vpop.permute.xlu0 %4229
    %4231 = vrot.lane.b32.xlu0 %v3916, 64
    %v4232 = vpop.permute.xlu0 %4231
    %4233 = vrot.lane.b32.xlu0 %v3928, 64
    %v4234 = vpop.permute.xlu0 %4233
    %4235 = vrot.lane.b32.xlu0 %v3940, 64
    %v4236 = vpop.permute.xlu0 %4235
    %4237 = vrot.lane.b32.xlu0 %v3952, 64
    %v4238 = vpop.permute.xlu0 %4237
    %4239 = vrot.lane.b32.xlu0 %v3964, 64
    %v4240 = vpop.permute.xlu0 %4239
    %4241 = vrot.lane.b32.xlu0 %v3976, 64
    %v4242 = vpop.permute.xlu0 %4241
    %4243 = vrot.lane.b32.xlu0 %v3988, 64
    %v4244 = vpop.permute.xlu0 %4243
    %4245 = vrot.lane.b32.xlu0 %v4000, 64
    %v4246 = vpop.permute.xlu0 %4245
    %4247 = vrot.lane.b32.xlu0 %v3577, 64
    %v4248 = vpop.permute.xlu0 %4247
    %4249 = vrot.lane.b32.xlu0 %v3578, 64
    %v4250 = vpop.permute.xlu0 %4249
    %4251 = vrot.lane.b32.xlu0 %v3579, 64
    %v4252 = vpop.permute.xlu0 %4251
    %4253 = vrot.lane.b32.xlu0 %v3580, 64
    %v4254 = vpop.permute.xlu0 %4253
    %4255 = vrot.lane.b32.xlu0 %v3581, 64
    %v4256 = vpop.permute.xlu0 %4255
    %4257 = vrot.lane.b32.xlu0 %v3582, 64
    %v4258 = vpop.permute.xlu0 %4257
    %4259 = vrot.lane.b32.xlu0 %v3583, 64
    %v4260 = vpop.permute.xlu0 %4259
    %4261 = vrot.lane.b32.xlu0 %v3584, 64
    %v4262 = vpop.permute.xlu0 %4261
    %4263 = vrot.lane.b32.xlu0 %v3585, 64
    %v4264 = vpop.permute.xlu0 %4263
    %4265 = vrot.lane.b32.xlu0 %v3586, 64
    %v4266 = vpop.permute.xlu0 %4265
    %4267 = vrot.lane.b32.xlu0 %v3587, 64
    %v4268 = vpop.permute.xlu0 %4267
    %4269 = vrot.lane.b32.xlu0 %v3588, 64
    %v4270 = vpop.permute.xlu0 %4269
    %4271 = vrot.lane.b32.xlu0 %v3589, 64
    %v4272 = vpop.permute.xlu0 %4271
    %4273 = vrot.lane.b32.xlu0 %v3590, 64
    %v4274 = vpop.permute.xlu0 %4273
    %4275 = vrot.lane.b32.xlu0 %v3591, 64
    %v4276 = vpop.permute.xlu0 %4275
    %4277 = vrot.lane.b32.xlu0 %v3592, 64
    %v4278 = vpop.permute.xlu0 %4277
    %4279 = vrot.lane.b32.xlu0 %v3593, 64
    %v4280 = vpop.permute.xlu0 %4279
    %4281 = vrot.lane.b32.xlu0 %v3594, 64
    %v4282 = vpop.permute.xlu0 %4281
    %4283 = vrot.lane.b32.xlu0 %v3595, 64
    %v4284 = vpop.permute.xlu0 %4283
    %4285 = vrot.lane.b32.xlu0 %v3596, 64
    %v4286 = vpop.permute.xlu0 %4285
    %4287 = vrot.lane.b32.xlu0 %v3597, 64
    %v4288 = vpop.permute.xlu0 %4287
    %4289 = vrot.lane.b32.xlu0 %v3598, 64
    %v4290 = vpop.permute.xlu0 %4289
    %4291 = vrot.lane.b32.xlu0 %v3599, 64
    %v4292 = vpop.permute.xlu0 %4291
    %4293 = vrot.lane.b32.xlu0 %v3600, 64
    %v4294 = vpop.permute.xlu0 %4293
    %4295 = vrot.lane.b32.xlu0 %v3601, 64
    %v4296 = vpop.permute.xlu0 %4295
    %4297 = vrot.lane.b32.xlu0 %v3602, 64
    %v4298 = vpop.permute.xlu0 %4297
    %4299 = vrot.lane.b32.xlu0 %v3603, 64
    %v4300 = vpop.permute.xlu0 %4299
    %4301 = vrot.lane.b32.xlu0 %v3604, 64
    %v4302 = vpop.permute.xlu0 %4301
    %4303 = vrot.lane.b32.xlu0 %v3605, 64
    %v4304 = vpop.permute.xlu0 %4303
    %4305 = vrot.lane.b32.xlu0 %v3606, 64
    %v4306 = vpop.permute.xlu0 %4305
    %4307 = vrot.lane.b32.xlu0 %v3607, 64
    %v4308 = vpop.permute.xlu0 %4307
    %4309 = vrot.lane.b32.xlu0 %v3608, 64
    %v4310 = vpop.permute.xlu0 %4309
    %4311 = vrot.lane.b32.xlu0 %v4063, 64
    %v4312 = vpop.permute.xlu0 %4311
    %4313 = vrot.lane.b32.xlu0 %v4066, 64
    %v4314 = vpop.permute.xlu0 %4313
    %4315 = vrot.lane.b32.xlu0 %v4069, 64
    %v4316 = vpop.permute.xlu0 %4315
    %4317 = vrot.lane.b32.xlu0 %v4072, 64
    %v4318 = vpop.permute.xlu0 %4317
    %4319 = vrot.lane.b32.xlu0 %v4075, 64
    %v4320 = vpop.permute.xlu0 %4319
    %4321 = vrot.lane.b32.xlu0 %v4078, 64
    %v4322 = vpop.permute.xlu0 %4321
    %4323 = vrot.lane.b32.xlu0 %v4081, 64
    %v4324 = vpop.permute.xlu0 %4323
    %4325 = vrot.lane.b32.xlu0 %v4084, 64
    %v4326 = vpop.permute.xlu0 %4325
    %4327 = vrot.lane.b32.xlu0 %v4087, 64
    %v4328 = vpop.permute.xlu0 %4327
    %4329 = vrot.lane.b32.xlu0 %v4090, 64
    %v4330 = vpop.permute.xlu0 %4329
    %4331 = vrot.lane.b32.xlu0 %v4093, 64
    %v4332 = vpop.permute.xlu0 %4331
    %4333 = vrot.lane.b32.xlu0 %v4096, 64
    %v4334 = vpop.permute.xlu0 %4333
    %4335 = vrot.lane.b32.xlu0 %v4099, 64
    %v4336 = vpop.permute.xlu0 %4335
    %4337 = vrot.lane.b32.xlu0 %v4102, 64
    %v4338 = vpop.permute.xlu0 %4337
    %4339 = vrot.lane.b32.xlu0 %v4105, 64
    %v4340 = vpop.permute.xlu0 %4339
    %4341 = vrot.lane.b32.xlu0 %v4181, 64
    %v4342 = vpop.permute.xlu0 %4341
    %4343 = vrot.lane.b32.xlu0 %v4108, 64
    %v4344 = vpop.permute.xlu0 %4343
    %4345 = vrot.lane.b32.xlu0 %v4111, 64
    %v4346 = vpop.permute.xlu0 %4345
    %4347 = vrot.lane.b32.xlu0 %v4114, 64
    %v4348 = vpop.permute.xlu0 %4347
    %4349 = vrot.lane.b32.xlu0 %v4117, 64
    %v4350 = vpop.permute.xlu0 %4349
    %4351 = vrot.lane.b32.xlu0 %v4120, 64
    %v4352 = vpop.permute.xlu0 %4351
    %4353 = vrot.lane.b32.xlu0 %v4123, 64
    %v4354 = vpop.permute.xlu0 %4353
    %4355 = vrot.lane.b32.xlu0 %v4126, 64
    %v4356 = vpop.permute.xlu0 %4355
    %4357 = vrot.lane.b32.xlu0 %v4129, 64
    %v4358 = vpop.permute.xlu0 %4357
    %4359 = vrot.lane.b32.xlu0 %v4132, 64
    %v4360 = vpop.permute.xlu0 %4359
    %4361 = vrot.lane.b32.xlu0 %v4135, 64
    %v4362 = vpop.permute.xlu0 %4361
    %4363 = vrot.lane.b32.xlu0 %v4138, 64
    %v4364 = vpop.permute.xlu0 %4363
    %4365 = vrot.lane.b32.xlu0 %v4141, 64
    %v4366 = vpop.permute.xlu0 %4365
    %4367 = vrot.lane.b32.xlu0 %v4144, 64
    %v4368 = vpop.permute.xlu0 %4367
    %4369 = vrot.lane.b32.xlu0 %v4147, 64
    %v4370 = vpop.permute.xlu0 %4369
    %4371 = vrot.lane.b32.xlu0 %v4150, 64
    %v4372 = vpop.permute.xlu0 %4371
    %4373 = vrot.lane.b32.xlu0 %v4184, 64
    %v4374 = vpop.permute.xlu0 %4373
    %4375 = vrot.lane.b32.xlu0 %v4162, 64
    %v4376 = vpop.permute.xlu0 %4375
    %4377 = vrot.lane.b32.xlu0 %v4174, 64
    %v4378 = vpop.permute.xlu0 %4377
    %v4380 = vsel %vm2459, %v430, %v4186
    %v4383 = vsel %vm2459, %v3577, %v4188
    %v4386 = vsel %vm2459, %v3578, %v4190
    %v4389 = vsel %vm2459, %v3579, %v4192
    %v4392 = vsel %vm2459, %v3580, %v4194
    %v4395 = vsel %vm2459, %v3581, %v4196
    %v4398 = vsel %vm2459, %v3582, %v4198
    %v4401 = vsel %vm2459, %v3583, %v4200
    %v4404 = vsel %vm2459, %v3584, %v4202
    %v4407 = vsel %vm2459, %v3585, %v4204
    %v4410 = vsel %vm2459, %v3586, %v4206
    %v4413 = vsel %vm2459, %v3587, %v4208
    %v4416 = vsel %vm2459, %v3588, %v4210
    %v4419 = vsel %vm2459, %v3589, %v4212
    %v4422 = vsel %vm2459, %v3590, %v4214
    %v4425 = vsel %vm2459, %v3591, %v4216
    %v4428 = vsel %vm2459, %v3593, %v4218
    %v4431 = vsel %vm2459, %v3594, %v4220
    %v4434 = vsel %vm2459, %v3595, %v4222
    %v4437 = vsel %vm2459, %v3596, %v4224
    %v4440 = vsel %vm2459, %v3597, %v4226
    %v4443 = vsel %vm2459, %v3598, %v4228
    %v4446 = vsel %vm2459, %v3599, %v4230
    %v4449 = vsel %vm2459, %v3600, %v4232
    %v4452 = vsel %vm2459, %v3601, %v4234
    %v4455 = vsel %vm2459, %v3602, %v4236
    %v4458 = vsel %vm2459, %v3603, %v4238
    %v4461 = vsel %vm2459, %v3604, %v4240
    %v4464 = vsel %vm2459, %v3605, %v4242
    %v4467 = vsel %vm2459, %v3606, %v4244
    %v4470 = vsel %vm2459, %v3607, %v4246
    %v4474 = vsel %vm2459, %v934, %v4248
    %v4478 = vsel %vm2459, %v4063, %v4250
    %v4482 = vsel %vm2459, %v4066, %v4252
    %v4486 = vsel %vm2459, %v4069, %v4254
    %v4490 = vsel %vm2459, %v4072, %v4256
    %v4494 = vsel %vm2459, %v4075, %v4258
    %v4498 = vsel %vm2459, %v4078, %v4260
    %v4502 = vsel %vm2459, %v4081, %v4262
    %v4506 = vsel %vm2459, %v4084, %v4264
    %v4510 = vsel %vm2459, %v4087, %v4266
    %v4514 = vsel %vm2459, %v4090, %v4268
    %v4518 = vsel %vm2459, %v4093, %v4270
    %v4522 = vsel %vm2459, %v4096, %v4272
    %v4526 = vsel %vm2459, %v4099, %v4274
    %v4530 = vsel %vm2459, %v4102, %v4276
    %v4534 = vsel %vm2459, %v4105, %v4278
    %v4537 = vsel %vm2459, %v934, %v4280
    %v4541 = vsel %vm2459, %v4108, %v4282
    %v4545 = vsel %vm2459, %v4111, %v4284
    %v4549 = vsel %vm2459, %v4114, %v4286
    %v4553 = vsel %vm2459, %v4117, %v4288
    %v4557 = vsel %vm2459, %v4120, %v4290
    %v4561 = vsel %vm2459, %v4123, %v4292
    %v4565 = vsel %vm2459, %v4126, %v4294
    %v4569 = vsel %vm2459, %v4129, %v4296
    %v4573 = vsel %vm2459, %v4132, %v4298
    %v4577 = vsel %vm2459, %v4135, %v4300
    %v4581 = vsel %vm2459, %v4138, %v4302
    %v4585 = vsel %vm2459, %v4141, %v4304
    %v4589 = vsel %vm2459, %v4144, %v4306
    %v4593 = vsel %vm2459, %v4147, %v4308
    %v4597 = vsel %vm2459, %v4150, %v4310
    %v4601 = vsel %vm2459, %v3652, %v4312
    %v4605 = vsel %vm2459, %v3664, %v4314
    %v4609 = vsel %vm2459, %v3676, %v4316
    %v4613 = vsel %vm2459, %v3688, %v4318
    %v4617 = vsel %vm2459, %v3700, %v4320
    %v4621 = vsel %vm2459, %v3712, %v4322
    %v4625 = vsel %vm2459, %v3724, %v4324
    %v4629 = vsel %vm2459, %v3736, %v4326
    %v4633 = vsel %vm2459, %v3748, %v4328
    %v4637 = vsel %vm2459, %v3760, %v4330
    %v4641 = vsel %vm2459, %v3772, %v4332
    %v4645 = vsel %vm2459, %v3784, %v4334
    %v4649 = vsel %vm2459, %v3796, %v4336
    %v4653 = vsel %vm2459, %v3808, %v4338
    %v4657 = vsel %vm2459, %v3820, %v4340
    %v4661 = vsel %vm2459, %v4162, %v4342
    %v4665 = vsel %vm2459, %v3832, %v4344
    %v4669 = vsel %vm2459, %v3844, %v4346
    %v4673 = vsel %vm2459, %v3856, %v4348
    %v4677 = vsel %vm2459, %v3868, %v4350
    %v4681 = vsel %vm2459, %v3880, %v4352
    %v4685 = vsel %vm2459, %v3892, %v4354
    %v4689 = vsel %vm2459, %v3904, %v4356
    %v4693 = vsel %vm2459, %v3916, %v4358
    %v4697 = vsel %vm2459, %v3928, %v4360
    %v4701 = vsel %vm2459, %v3940, %v4362
    %v4705 = vsel %vm2459, %v3952, %v4364
    %v4709 = vsel %vm2459, %v3964, %v4366
    %v4713 = vsel %vm2459, %v3976, %v4368
    %v4717 = vsel %vm2459, %v3988, %v4370
    %v4721 = vsel %vm2459, %v4000, %v4372
    %v4725 = vsel %vm2459, %v4174, %v4374
    %v4728 = vsel %vm2459, %v3592, %v4376
    %v4731 = vsel %vm2459, %v3608, %v4378
    %v4733 = vld [vmem:[%s5] sm:$0xf]
    %v4734 = vld [vmem:[%s5 + $0x4] sm:$0xf]
    %v4735 = vld [vmem:[%s5 + $0x8] sm:$0xf]
    %v4736 = vld [vmem:[%s5 + $0xc] sm:$0xf]
    %v4737 = vld [vmem:[%s5 + $0x10] sm:$0xf]
    %v4738 = vld [vmem:[%s5 + $0x14] sm:$0xf]
    %v4739 = vld [vmem:[%s5 + $0x18] sm:$0xf]
    %v4740 = vld [vmem:[%s5 + $0x1c] sm:$0xf]
    %v4741 = vld [vmem:[%s5 + $0x20] sm:$0xf]
    %v4742 = vld [vmem:[%s5 + $0x24] sm:$0xf]
    %v4743 = vld [vmem:[%s5 + $0x28] sm:$0xf]
    %v4744 = vld [vmem:[%s5 + $0x2c] sm:$0xf]
    %v4745 = vld [vmem:[%s5 + $0x30] sm:$0xf]
    %v4746 = vld [vmem:[%s5 + $0x34] sm:$0xf]
    %v4747 = vld [vmem:[%s5 + $0x38] sm:$0xf]
    %v4748 = vld [vmem:[%s5 + $0x3c] sm:$0xf]
    %v4749 = vld [vmem:[%s5 + $0x40] sm:$0xf]
    %v4750 = vld [vmem:[%s5 + $0x44] sm:$0xf]
    %v4751 = vld [vmem:[%s5 + $0x48] sm:$0xf]
    %v4752 = vld [vmem:[%s5 + $0x4c] sm:$0xf]
    %v4753 = vld [vmem:[%s5 + $0x50] sm:$0xf]
    %v4754 = vld [vmem:[%s5 + $0x54] sm:$0xf]
    %v4755 = vld [vmem:[%s5 + $0x58] sm:$0xf]
    %v4756 = vld [vmem:[%s5 + $0x5c] sm:$0xf]
    %v4757 = vld [vmem:[%s5 + $0x60] sm:$0xf]
    %v4758 = vld [vmem:[%s5 + $0x64] sm:$0xf]
    %v4759 = vld [vmem:[%s5 + $0x68] sm:$0xf]
    %v4760 = vld [vmem:[%s5 + $0x6c] sm:$0xf]
    %v4761 = vld [vmem:[%s5 + $0x70] sm:$0xf]
    %v4762 = vld [vmem:[%s5 + $0x74] sm:$0xf]
    %v4763 = vld [vmem:[%s5 + $0x78] sm:$0xf]
    %v4764 = vld [vmem:[%s5 + $0x7c] sm:$0xf]
    %v4765 = vld [vmem:[%s5 + $0x80] sm:$0xf]
    %v4766 = vld [vmem:[%s5 + $0x84] sm:$0xf]
    %v4767 = vld [vmem:[%s5 + $0x88] sm:$0xf]
    %v4768 = vld [vmem:[%s5 + $0x8c] sm:$0xf]
    %v4769 = vld [vmem:[%s5 + $0x90] sm:$0xf]
    %v4770 = vld [vmem:[%s5 + $0x94] sm:$0xf]
    %v4771 = vld [vmem:[%s5 + $0x98] sm:$0xf]
    %v4772 = vld [vmem:[%s5 + $0x9c] sm:$0xf]
    %v4773 = vld [vmem:[%s5 + $0xa0] sm:$0xf]
    %v4774 = vld [vmem:[%s5 + $0xa4] sm:$0xf]
    %v4775 = vld [vmem:[%s5 + $0xa8] sm:$0xf]
    %v4776 = vld [vmem:[%s5 + $0xac] sm:$0xf]
    %v4777 = vld [vmem:[%s5 + $0xb0] sm:$0xf]
    %v4778 = vld [vmem:[%s5 + $0xb4] sm:$0xf]
    %v4779 = vld [vmem:[%s5 + $0xb8] sm:$0xf]
    %v4780 = vld [vmem:[%s5 + $0xbc] sm:$0xf]
    %v4781 = vld [vmem:[%s5 + $0xc0] sm:$0xf]
    %v4782 = vld [vmem:[%s5 + $0xc4] sm:$0xf]
    %v4783 = vld [vmem:[%s5 + $0xc8] sm:$0xf]
    %v4784 = vld [vmem:[%s5 + $0xcc] sm:$0xf]
    %v4785 = vld [vmem:[%s5 + $0xd0] sm:$0xf]
    %v4786 = vld [vmem:[%s5 + $0xd4] sm:$0xf]
    %v4787 = vld [vmem:[%s5 + $0xd8] sm:$0xf]
    %v4788 = vld [vmem:[%s5 + $0xdc] sm:$0xf]
    %v4789 = vld [vmem:[%s5 + $0xe0] sm:$0xf]
    %v4790 = vld [vmem:[%s5 + $0xe4] sm:$0xf]
    %v4791 = vld [vmem:[%s5 + $0xe8] sm:$0xf]
    %v4792 = vld [vmem:[%s5 + $0xec] sm:$0xf]
    %v4793 = vld [vmem:[%s5 + $0xf0] sm:$0xf]
    %v4794 = vld [vmem:[%s5 + $0xf4] sm:$0xf]
    %v4795 = vld [vmem:[%s5 + $0xf8] sm:$0xf]
    %v4796 = vld [vmem:[%s5 + $0xfc] sm:$0xf]
    %v4797 = vld [vmem:[%s5 + $0x100] sm:$0xf]
    %v4798 = vld [vmem:[%s5 + $0x104] sm:$0xf]
    %v4799 = vld [vmem:[%s5 + $0x108] sm:$0xf]
    %v4800 = vld [vmem:[%s5 + $0x10c] sm:$0xf]
    %v4801 = vld [vmem:[%s5 + $0x110] sm:$0xf]
    %v4802 = vld [vmem:[%s5 + $0x114] sm:$0xf]
    %v4803 = vld [vmem:[%s5 + $0x118] sm:$0xf]
    %v4804 = vld [vmem:[%s5 + $0x11c] sm:$0xf]
    %v4805 = vld [vmem:[%s6] sm:$0x1]
    %v4807 = vlaneseq
    %v4808 = vshrl.u32 %v4807, 7
    %v4809 = vsub.s32 0, %v4808
    %v4810 = vrot.slane %v4805, %v4809
    %v4884 = vunpack.c.l.b16 %v4733
    %v4885 = vunpack.c.l.b16 %v4734
    %v4886 = vunpack.c.l.b16 %v4735
    %v4887 = vunpack.c.l.b16 %v4736
    %v4888 = vunpack.c.l.b16 %v4737
    %v4889 = vunpack.c.l.b16 %v4738
    %v4890 = vunpack.c.l.b16 %v4739
    %v4891 = vunpack.c.l.b16 %v4740
    %v4892 = vunpack.c.l.b16 %v4741
    %v4893 = vunpack.c.l.b16 %v4742
    %v4894 = vunpack.c.l.b16 %v4743
    %v4895 = vunpack.c.l.b16 %v4744
    %v4896 = vunpack.c.l.b16 %v4745
    %v4897 = vunpack.c.l.b16 %v4746
    %v4898 = vunpack.c.l.b16 %v4747
    %v4899 = vunpack.c.l.b16 %v4748
    %v4900 = vunpack.c.l.b16 %v4749
    %v4901 = vunpack.c.l.b16 %v4750
    %v4902 = vunpack.c.l.b16 %v4751
    %v4903 = vunpack.c.l.b16 %v4752
    %v4904 = vunpack.c.l.b16 %v4753
    %v4905 = vunpack.c.l.b16 %v4754
    %v4906 = vunpack.c.l.b16 %v4755
    %v4907 = vunpack.c.l.b16 %v4756
    %v4908 = vunpack.c.l.b16 %v4757
    %v4909 = vunpack.c.l.b16 %v4758
    %v4910 = vunpack.c.l.b16 %v4759
    %v4911 = vunpack.c.l.b16 %v4760
    %v4912 = vunpack.c.l.b16 %v4761
    %v4913 = vunpack.c.l.b16 %v4762
    %v4914 = vunpack.c.l.b16 %v4763
    %v4915 = vunpack.c.l.b16 %v4764
    %v4916 = vunpack.c.l.b16 %v4765
    %v4917 = vunpack.c.l.b16 %v4766
    %v4918 = vunpack.c.l.b16 %v4767
    %v4919 = vunpack.c.l.b16 %v4768
    %v4920 = vunpack.c.l.b16 %v4769
    %v4921 = vunpack.c.l.b16 %v4770
    %v4922 = vunpack.c.l.b16 %v4771
    %v4923 = vunpack.c.l.b16 %v4772
    %v4924 = vunpack.c.l.b16 %v4773
    %v4925 = vunpack.c.l.b16 %v4774
    %v4926 = vunpack.c.l.b16 %v4775
    %v4927 = vunpack.c.l.b16 %v4776
    %v4928 = vunpack.c.l.b16 %v4777
    %v4929 = vunpack.c.l.b16 %v4778
    %v4930 = vunpack.c.l.b16 %v4779
    %v4931 = vunpack.c.l.b16 %v4780
    %v4932 = vunpack.c.l.b16 %v4781
    %v4933 = vunpack.c.l.b16 %v4782
    %v4934 = vunpack.c.l.b16 %v4783
    %v4935 = vunpack.c.l.b16 %v4784
    %v4936 = vunpack.c.l.b16 %v4785
    %v4937 = vunpack.c.l.b16 %v4786
    %v4938 = vunpack.c.l.b16 %v4787
    %v4939 = vunpack.c.l.b16 %v4788
    %v4940 = vunpack.c.l.b16 %v4789
    %v4941 = vunpack.c.l.b16 %v4790
    %v4942 = vunpack.c.l.b16 %v4791
    %v4943 = vunpack.c.l.b16 %v4792
    %v4944 = vunpack.c.l.b16 %v4793
    %v4945 = vunpack.c.l.b16 %v4794
    %v4946 = vunpack.c.l.b16 %v4795
    %v4947 = vunpack.c.l.b16 %v4796
    %v4948 = vunpack.c.l.b16 %v4797
    %v4949 = vunpack.c.l.b16 %v4798
    %v4950 = vunpack.c.l.b16 %v4799
    %v4951 = vunpack.c.l.b16 %v4800
    %v4952 = vunpack.c.l.b16 %v4801
    %v4953 = vunpack.c.l.b16 %v4802
    %v4954 = vunpack.c.l.b16 %v4803
    %v4955 = vunpack.c.l.b16 %v4804
    %v4956 = vpack.c.b16 %v4885, %v4884
    %v4957 = vpack.c.b16 %v4887, %v4886
    %v4958 = vpack.c.b16 %v4889, %v4888
    %v4959 = vpack.c.b16 %v4891, %v4890
    %v4960 = vpack.c.b16 %v4893, %v4892
    %v4961 = vpack.c.b16 %v4895, %v4894
    %v4962 = vpack.c.b16 %v4897, %v4896
    %v4963 = vpack.c.b16 %v4899, %v4898
    %v4964 = vpack.c.b16 %v4901, %v4900
    %v4965 = vpack.c.b16 %v4903, %v4902
    %v4966 = vpack.c.b16 %v4905, %v4904
    %v4967 = vpack.c.b16 %v4907, %v4906
    %v4968 = vpack.c.b16 %v4909, %v4908
    %v4969 = vpack.c.b16 %v4911, %v4910
    %v4970 = vpack.c.b16 %v4913, %v4912
    %v4971 = vpack.c.b16 %v4915, %v4914
    %v4972 = vpack.c.b16 %v4917, %v4916
    %v4973 = vpack.c.b16 %v4919, %v4918
    %v4974 = vpack.c.b16 %v4921, %v4920
    %v4975 = vpack.c.b16 %v4923, %v4922
    %v4976 = vpack.c.b16 %v4925, %v4924
    %v4977 = vpack.c.b16 %v4927, %v4926
    %v4978 = vpack.c.b16 %v4929, %v4928
    %v4979 = vpack.c.b16 %v4931, %v4930
    %v4980 = vpack.c.b16 %v4933, %v4932
    %v4981 = vpack.c.b16 %v4935, %v4934
    %v4982 = vpack.c.b16 %v4937, %v4936
    %v4983 = vpack.c.b16 %v4939, %v4938
    %v4984 = vpack.c.b16 %v4941, %v4940
    %v4985 = vpack.c.b16 %v4943, %v4942
    %v4986 = vpack.c.b16 %v4945, %v4944
    %v4987 = vpack.c.b16 %v4947, %v4946
    %v4988 = vpack.c.b16 %v4949, %v4948
    %v4989 = vpack.c.b16 %v4951, %v4950
    %v4990 = vpack.c.b16 %v4953, %v4952
    %v4991 = vpack.c.b16 %v4955, %v4954
    %v5028 = vsel %vm2459, %v4066, 0
    %v5030 = vsel %vm2459, %v4069, 0
    %v5032 = vsel %vm2459, %v4072, 0
    %v5034 = vsel %vm2459, %v4075, 0
    %v5036 = vsel %vm2459, %v4078, 0
    %v5038 = vsel %vm2459, %v4081, 0
    %v5040 = vsel %vm2459, %v4084, 0
    %v5042 = vsel %vm2459, %v4087, 0
    %v5044 = vsel %vm2459, %v4090, 0
    %v5046 = vsel %vm2459, %v4093, 0
    %v5048 = vsel %vm2459, %v4096, 0
    %v5050 = vsel %vm2459, %v4099, 0
    %v5052 = vsel %vm2459, %v4102, 0
    %v5054 = vsel %vm2459, %v4105, 0
    %v5057 = vsel %vm2459, %v4181, 0
    %v5059 = vsel %vm2459, %v934, 0
    %v5061 = vsel %vm2459, %v4111, 0
    %v5063 = vsel %vm2459, %v4114, 0
    %v5065 = vsel %vm2459, %v4117, 0
    %v5067 = vsel %vm2459, %v4120, 0
    %v5069 = vsel %vm2459, %v4123, 0
    %v5071 = vsel %vm2459, %v4126, 0
    %v5073 = vsel %vm2459, %v4129, 0
    %v5075 = vsel %vm2459, %v4132, 0
    %v5077 = vsel %vm2459, %v4135, 0
    %v5079 = vsel %vm2459, %v4138, 0
    %v5081 = vsel %vm2459, %v4141, 0
    %v5083 = vsel %vm2459, %v4144, 0
    %v5085 = vsel %vm2459, %v4147, 0
    %v5087 = vsel %vm2459, %v4150, 0
    %v5090 = vsel %vm2459, %v4184, 0
    %5092 = vmatprep.subr.bf16.mxu0 0
    %5093 = vmatpush1.bf16.msra.mxu0 %v4956
    %5094 = vmatprep.subr.bf16.mxu0 0
    %5095 = vmatpush1.bf16.msra.mxu0 %v4957
    %5096 = vmatprep.subr.bf16.mxu0 0
    %5097 = vmatpush1.bf16.msra.mxu0 %v4958
    %5098 = vmatprep.subr.bf16.mxu0 0
    %5099 = vmatpush1.bf16.msra.mxu0 %v4959
    %5100 = vmatprep.subr.bf16.mxu0 0
    %5101 = vmatpush1.bf16.msra.mxu0 %v4960
    %5102 = vmatprep.subr.bf16.mxu0 0
    %5103 = vmatpush1.bf16.msra.mxu0 %v4961
    %5104 = vmatprep.subr.bf16.mxu0 0
    %5105 = vmatpush1.bf16.msra.mxu0 %v4962
    %5106 = vmatprep.subr.bf16.mxu0 0
    %5107 = vmatpush1.bf16.msra.mxu0 %v4963
    %5108 = vmatprep.subr.bf16.mxu0 0
    %5109 = vmatpush1.bf16.msra.mxu0 %v4964
    %5110 = vmatprep.subr.bf16.mxu0 0
    %5111 = vmatpush1.bf16.msra.mxu0 %v4965
    %5112 = vmatprep.subr.bf16.mxu0 0
    %5113 = vmatpush1.bf16.msra.mxu0 %v4966
    %5114 = vmatprep.subr.bf16.mxu0 0
    %5115 = vmatpush1.bf16.msra.mxu0 %v4967
    %5116 = vmatprep.subr.bf16.mxu0 0
    %5117 = vmatpush1.bf16.msra.mxu0 %v4968
    %5118 = vmatprep.subr.bf16.mxu0 0
    %5119 = vmatpush1.bf16.msra.mxu0 %v4969
    %5120 = vmatprep.subr.bf16.mxu0 0
    %5121 = vmatpush1.bf16.msra.mxu0 %v4970
    %5122 = vmatprep.subr.bf16.mxu0 0
    %5123 = vmatpush1.bf16.msra.mxu0 %v4971
    %5124 = vmatprep.mubr.bf16.mxu0 %v4474
    %5125 = vmatmul.mubr.bf16.gmra.mrb[0].mxu0 %v4380
    %v5126 = vpop.f32.mrb[0].mxu0
    %v5127 = vadd.f32 %v4810, %v5126
    %v5128 = vpop.f32.mrb[0].mxu0
    %v5129 = vpop.f32.mrb[0].mxu0
    %v5130 = vadd.f32 %v4810, %v5129
    %v5131 = vpop.f32.mrb[0].mxu0
    %5132 = vmatprep.mubr.bf16.mxu0 %v4478
    %5133 = vmatmul.mubr.bf16.gmra.mrb[0].mxu0 %v4383
    %v5134 = vpop.f32.mrb[0].mxu0
    %v5135 = vadd.f32 %v4810, %v5134
    %v5136 = vpop.f32.mrb[0].mxu0
    %v5137 = vpop.f32.mrb[0].mxu0
    %v5138 = vadd.f32 %v4810, %v5137
    %v5139 = vpop.f32.mrb[0].mxu0
    %5140 = vmatprep.mubr.bf16.mxu0 %v4482
    %5141 = vmatmul.mubr.bf16.gmra.mrb[0].mxu0 %v4386
    %v5142 = vpop.f32.mrb[0].mxu0
    %v5143 = vadd.f32 %v4810, %v5142
    %v5144 = vpop.f32.mrb[0].mxu0
    %v5145 = vpop.f32.mrb[0].mxu0
    %v5146 = vadd.f32 %v4810, %v5145
    %v5147 = vpop.f32.mrb[0].mxu0
    %5148 = vmatprep.mubr.bf16.mxu0 %v4486
    %5149 = vmatmul.mubr.bf16.gmra.mrb[0].mxu0 %v4389
    %v5150 = vpop.f32.mrb[0].mxu0
    %v5151 = vadd.f32 %v4810, %v5150
    %v5152 = vpop.f32.mrb[0].mxu0
    %v5153 = vpop.f32.mrb[0].mxu0
    %v5154 = vadd.f32 %v4810, %v5153
    %v5155 = vpop.f32.mrb[0].mxu0
    %5156 = vmatprep.mubr.bf16.mxu0 %v4490
    %5157 = vmatmul.mubr.bf16.gmra.mrb[0].mxu0 %v4392
    %v5158 = vpop.f32.mrb[0].mxu0
    %v5159 = vadd.f32 %v4810, %v5158
    %v5160 = vpop.f32.mrb[0].mxu0
    %v5161 = vpop.f32.mrb[0].mxu0
    %v5162 = vadd.f32 %v4810, %v5161
    %v5163 = vpop.f32.mrb[0].mxu0
    %5164 = vmatprep.mubr.bf16.mxu0 %v4494
    %5165 = vmatmul.mubr.bf16.gmra.mrb[0].mxu0 %v4395
    %v5166 = vpop.f32.mrb[0].mxu0
    %v5167 = vadd.f32 %v4810, %v5166
    %v5168 = vpop.f32.mrb[0].mxu0
    %v5169 = vpop.f32.mrb[0].mxu0
    %v5170 = vadd.f32 %v4810, %v5169
    %v5171 = vpop.f32.mrb[0].mxu0
    %5172 = vmatprep.mubr.bf16.mxu0 %v4498
    %5173 = vmatmul.mubr.bf16.gmra.mrb[0].mxu0 %v4398
    %v5174 = vpop.f32.mrb[0].mxu0
    %v5175 = vadd.f32 %v4810, %v5174
    %v5176 = vpop.f32.mrb[0].mxu0
    %v5177 = vpop.f32.mrb[0].mxu0
    %v5178 = vadd.f32 %v4810, %v5177
    %v5179 = vpop.f32.mrb[0].mxu0
    %5180 = vmatprep.mubr.bf16.mxu0 %v4502
    %5181 = vmatmul.mubr.bf16.gmra.mrb[0].mxu0 %v4401
    %v5182 = vpop.f32.mrb[0].mxu0
    %v5183 = vadd.f32 %v4810, %v5182
    %v5184 = vpop.f32.mrb[0].mxu0
    %v5185 = vpop.f32.mrb[0].mxu0
    %v5186 = vadd.f32 %v4810, %v5185
    %v5187 = vpop.f32.mrb[0].mxu0
    %5188 = vmatprep.mubr.bf16.mxu0 %v4506
    %5189 = vmatmul.mubr.bf16.gmra.mrb[0].mxu0 %v4404
    %v5190 = vpop.f32.mrb[0].mxu0
    %v5191 = vadd.f32 %v4810, %v5190
    %v5192 = vpop.f32.mrb[0].mxu0
    %v5193 = vpop.f32.mrb[0].mxu0
    %v5194 = vadd.f32 %v4810, %v5193
    %v5195 = vpop.f32.mrb[0].mxu0
    %5196 = vmatprep.mubr.bf16.mxu0 %v4510
    %5197 = vmatmul.mubr.bf16.gmra.mrb[0].mxu0 %v4407
    %v5198 = vpop.f32.mrb[0].mxu0
    %v5199 = vadd.f32 %v4810, %v5198
    %v5200 = vpop.f32.mrb[0].mxu0
    %v5201 = vpop.f32.mrb[0].mxu0
    %v5202 = vadd.f32 %v4810, %v5201
    %v5203 = vpop.f32.mrb[0].mxu0
    %5204 = vmatprep.mubr.bf16.mxu0 %v4514
    %5205 = vmatmul.mubr.bf16.gmra.mrb[0].mxu0 %v4410
    %v5206 = vpop.f32.mrb[0].mxu0
    %v5207 = vadd.f32 %v4810, %v5206
    %v5208 = vpop.f32.mrb[0].mxu0
    %v5209 = vpop.f32.mrb[0].mxu0
    %v5210 = vadd.f32 %v4810, %v5209
    %v5211 = vpop.f32.mrb[0].mxu0
    %5212 = vmatprep.mubr.bf16.mxu0 %v4518
    %5213 = vmatmul.mubr.bf16.gmra.mrb[0].mxu0 %v4413
    %v5214 = vpop.f32.mrb[0].mxu0
    %v5215 = vadd.f32 %v4810, %v5214
    %v5216 = vpop.f32.mrb[0].mxu0
    %v5217 = vpop.f32.mrb[0].mxu0
    %v5218 = vadd.f32 %v4810, %v5217
    %v5219 = vpop.f32.mrb[0].mxu0
    %5220 = vmatprep.mubr.bf16.mxu0 %v4522
    %5221 = vmatmul.mubr.bf16.gmra.mrb[0].mxu0 %v4416
    %v5222 = vpop.f32.mrb[0].mxu0
    %v5223 = vadd.f32 %v4810, %v5222
    %v5224 = vpop.f32.mrb[0].mxu0
    %v5225 = vpop.f32.mrb[0].mxu0
    %v5226 = vadd.f32 %v4810, %v5225
    %v5227 = vpop.f32.mrb[0].mxu0
    %5228 = vmatprep.mubr.bf16.mxu0 %v4526
    %5229 = vmatmul.mubr.bf16.gmra.mrb[0].mxu0 %v4419
    %v5230 = vpop.f32.mrb[0].mxu0
    %v5231 = vadd.f32 %v4810, %v5230
    %v5232 = vpop.f32.mrb[0].mxu0
    %v5233 = vpop.f32.mrb[0].mxu0
    %v5234 = vadd.f32 %v4810, %v5233
    %v5235 = vpop.f32.mrb[0].mxu0
    %5236 = vmatprep.mubr.bf16.mxu0 %v4530
    %5237 = vmatmul.mubr.bf16.gmra.mrb[0].mxu0 %v4422
    %v5238 = vpop.f32.mrb[0].mxu0
    %v5239 = vadd.f32 %v4810, %v5238
    %v5240 = vpop.f32.mrb[0].mxu0
    %v5241 = vpop.f32.mrb[0].mxu0
    %v5242 = vadd.f32 %v4810, %v5241
    %v5243 = vpop.f32.mrb[0].mxu0
    %5244 = vmatprep.mubr.bf16.mxu0 %v4534
    %5245 = vmatmul.mubr.bf16.gmra.mrb[0].mxu0 %v4425
    %v5246 = vpop.f32.mrb[0].mxu0
    %v5247 = vadd.f32 %v4810, %v5246
    %v5248 = vpop.f32.mrb[0].mxu0
    %v5249 = vpop.f32.mrb[0].mxu0
    %v5250 = vadd.f32 %v4810, %v5249
    %v5251 = vpop.f32.mrb[0].mxu0
    %5252 = vmatprep.mubr.bf16.mxu0 %v4537
    %5253 = vmatmul.mubr.bf16.gmra.mrb[0].mxu0 %v4380
    %v5254 = vpop.f32.mrb[0].mxu0
    %v5255 = vadd.f32 %v4810, %v5254
    %v5256 = vpop.f32.mrb[0].mxu0
    %v5257 = vpop.f32.mrb[0].mxu0
    %v5258 = vadd.f32 %v4810, %v5257
    %v5259 = vpop.f32.mrb[0].mxu0
    %5260 = vmatprep.mubr.bf16.mxu0 %v4541
    %5261 = vmatmul.mubr.bf16.gmra.mrb[0].mxu0 %v4428
    %v5262 = vpop.f32.mrb[0].mxu0
    %v5263 = vadd.f32 %v4810, %v5262
    %v5264 = vpop.f32.mrb[0].mxu0
    %v5265 = vpop.f32.mrb[0].mxu0
    %v5266 = vadd.f32 %v4810, %v5265
    %v5267 = vpop.f32.mrb[0].mxu0
    %5268 = vmatprep.mubr.bf16.mxu0 %v4545
    %5269 = vmatmul.mubr.bf16.gmra.mrb[0].mxu0 %v4431
    %v5270 = vpop.f32.mrb[0].mxu0
    %v5271 = vadd.f32 %v4810, %v5270
    %v5272 = vpop.f32.mrb[0].mxu0
    %v5273 = vpop.f32.mrb[0].mxu0
    %v5274 = vadd.f32 %v4810, %v5273
    %v5275 = vpop.f32.mrb[0].mxu0
    %5276 = vmatprep.mubr.bf16.mxu0 %v4549
    %5277 = vmatmul.mubr.bf16.gmra.mrb[0].mxu0 %v4434
    %v5278 = vpop.f32.mrb[0].mxu0
    %v5279 = vadd.f32 %v4810, %v5278
    %v5280 = vpop.f32.mrb[0].mxu0
    %v5281 = vpop.f32.mrb[0].mxu0
    %v5282 = vadd.f32 %v4810, %v5281
    %v5283 = vpop.f32.mrb[0].mxu0
    %5284 = vmatprep.mubr.bf16.mxu0 %v4553
    %5285 = vmatmul.mubr.bf16.gmra.mrb[0].mxu0 %v4437
    %v5286 = vpop.f32.mrb[0].mxu0
    %v5287 = vadd.f32 %v4810, %v5286
    %v5288 = vpop.f32.mrb[0].mxu0
    %v5289 = vpop.f32.mrb[0].mxu0
    %v5290 = vadd.f32 %v4810, %v5289
    %v5291 = vpop.f32.mrb[0].mxu0
    %5292 = vmatprep.mubr.bf16.mxu0 %v4557
    %5293 = vmatmul.mubr.bf16.gmra.mrb[0].mxu0 %v4440
    %v5294 = vpop.f32.mrb[0].mxu0
    %v5295 = vadd.f32 %v4810, %v5294
    %v5296 = vpop.f32.mrb[0].mxu0
    %v5297 = vpop.f32.mrb[0].mxu0
    %v5298 = vadd.f32 %v4810, %v5297
    %v5299 = vpop.f32.mrb[0].mxu0
    %5300 = vmatprep.mubr.bf16.mxu0 %v4561
    %5301 = vmatmul.mubr.bf16.gmra.mrb[0].mxu0 %v4443
    %v5302 = vpop.f32.mrb[0].mxu0
    %v5303 = vadd.f32 %v4810, %v5302
    %v5304 = vpop.f32.mrb[0].mxu0
    %v5305 = vpop.f32.mrb[0].mxu0
    %v5306 = vadd.f32 %v4810, %v5305
    %v5307 = vpop.f32.mrb[0].mxu0
    %5308 = vmatprep.mubr.bf16.mxu0 %v4565
    %5309 = vmatmul.mubr.bf16.gmra.mrb[0].mxu0 %v4446
    %v5310 = vpop.f32.mrb[0].mxu0
    %v5311 = vadd.f32 %v4810, %v5310
    %v5312 = vpop.f32.mrb[0].mxu0
    %v5313 = vpop.f32.mrb[0].mxu0
    %v5314 = vadd.f32 %v4810, %v5313
    %v5315 = vpop.f32.mrb[0].mxu0
    %5316 = vmatprep.mubr.bf16.mxu0 %v4569
    %5317 = vmatmul.mubr.bf16.gmra.mrb[0].mxu0 %v4449
    %v5318 = vpop.f32.mrb[0].mxu0
    %v5319 = vadd.f32 %v4810, %v5318
    %v5320 = vpop.f32.mrb[0].mxu0
    %v5321 = vpop.f32.mrb[0].mxu0
    %v5322 = vadd.f32 %v4810, %v5321
    %v5323 = vpop.f32.mrb[0].mxu0
    %5324 = vmatprep.mubr.bf16.mxu0 %v4573
    %5325 = vmatmul.mubr.bf16.gmra.mrb[0].mxu0 %v4452
    %v5326 = vpop.f32.mrb[0].mxu0
    %v5327 = vadd.f32 %v4810, %v5326
    %v5328 = vpop.f32.mrb[0].mxu0
    %v5329 = vpop.f32.mrb[0].mxu0
    %v5330 = vadd.f32 %v4810, %v5329
    %v5331 = vpop.f32.mrb[0].mxu0
    %5332 = vmatprep.mubr.bf16.mxu0 %v4577
    %5333 = vmatmul.mubr.bf16.gmra.mrb[0].mxu0 %v4455
    %v5334 = vpop.f32.mrb[0].mxu0
    %v5335 = vadd.f32 %v4810, %v5334
    %v5336 = vpop.f32.mrb[0].mxu0
    %v5337 = vpop.f32.mrb[0].mxu0
    %v5338 = vadd.f32 %v4810, %v5337
    %v5339 = vpop.f32.mrb[0].mxu0
    %5340 = vmatprep.mubr.bf16.mxu0 %v4581
    %5341 = vmatmul.mubr.bf16.gmra.mrb[0].mxu0 %v4458
    %v5342 = vpop.f32.mrb[0].mxu0
    %v5343 = vadd.f32 %v4810, %v5342
    %v5344 = vpop.f32.mrb[0].mxu0
    %v5345 = vpop.f32.mrb[0].mxu0
    %v5346 = vadd.f32 %v4810, %v5345
    %v5347 = vpop.f32.mrb[0].mxu0
    %5348 = vmatprep.mubr.bf16.mxu0 %v4585
    %5349 = vmatmul.mubr.bf16.gmra.mrb[0].mxu0 %v4461
    %v5350 = vpop.f32.mrb[0].mxu0
    %v5351 = vadd.f32 %v4810, %v5350
    %v5352 = vpop.f32.mrb[0].mxu0
    %v5353 = vpop.f32.mrb[0].mxu0
    %v5354 = vadd.f32 %v4810, %v5353
    %v5355 = vpop.f32.mrb[0].mxu0
    %5356 = vmatprep.mubr.bf16.mxu0 %v4589
    %5357 = vmatmul.mubr.bf16.gmra.mrb[0].mxu0 %v4464
    %v5358 = vpop.f32.mrb[0].mxu0
    %v5359 = vadd.f32 %v4810, %v5358
    %v5360 = vpop.f32.mrb[0].mxu0
    %v5361 = vpop.f32.mrb[0].mxu0
    %v5362 = vadd.f32 %v4810, %v5361
    %v5363 = vpop.f32.mrb[0].mxu0
    %5364 = vmatprep.mubr.bf16.mxu0 %v4593
    %5365 = vmatmul.mubr.bf16.gmra.mrb[0].mxu0 %v4467
    %v5366 = vpop.f32.mrb[0].mxu0
    %v5367 = vadd.f32 %v4810, %v5366
    %v5368 = vpop.f32.mrb[0].mxu0
    %v5369 = vpop.f32.mrb[0].mxu0
    %v5370 = vadd.f32 %v4810, %v5369
    %v5371 = vpop.f32.mrb[0].mxu0
    %5372 = vmatprep.mubr.bf16.mxu0 %v4597
    %5373 = vmatmul.mubr.bf16.gmra.mrb[0].mxu0 %v4470
    %v5374 = vpop.f32.mrb[0].mxu0
    %v5375 = vadd.f32 %v4810, %v5374
    %v5376 = vpop.f32.mrb[0].mxu0
    %v5377 = vpop.f32.mrb[0].mxu0
    %v5378 = vadd.f32 %v4810, %v5377
    %v5379 = vpop.f32.mrb[0].mxu0
    %5380 = vdwg.mxu0
    %5381 = vmatprep.subr.bf16.mxu0 0
    %5382 = vmatpush1.bf16.msra.mxu0 %v4972
    %5383 = vmatprep.subr.bf16.mxu0 0
    %5384 = vmatpush1.bf16.msra.mxu0 %v4973
    %5385 = vmatprep.subr.bf16.mxu0 0
    %5386 = vmatpush1.bf16.msra.mxu0 %v4974
    %5387 = vmatprep.subr.bf16.mxu0 0
    %5388 = vmatpush1.bf16.msra.mxu0 %v4975
    %5389 = vmatprep.subr.bf16.mxu0 0
    %5390 = vmatpush1.bf16.msra.mxu0 %v4976
    %5391 = vmatprep.subr.bf16.mxu0 0
    %5392 = vmatpush1.bf16.msra.mxu0 %v4977
    %5393 = vmatprep.subr.bf16.mxu0 0
    %5394 = vmatpush1.bf16.msra.mxu0 %v4978
    %5395 = vmatprep.subr.bf16.mxu0 0
    %5396 = vmatpush1.bf16.msra.mxu0 %v4979
    %5397 = vmatprep.subr.bf16.mxu0 0
    %5398 = vmatpush1.bf16.msra.mxu0 %v4980
    %5399 = vmatprep.subr.bf16.mxu0 0
    %5400 = vmatpush1.bf16.msra.mxu0 %v4981
    %5401 = vmatprep.subr.bf16.mxu0 0
    %5402 = vmatpush1.bf16.msra.mxu0 %v4982
    %5403 = vmatprep.subr.bf16.mxu0 0
    %5404 = vmatpush1.bf16.msra.mxu0 %v4983
    %5405 = vmatprep.subr.bf16.mxu0 0
    %5406 = vmatpush1.bf16.msra.mxu0 %v4984
    %5407 = vmatprep.subr.bf16.mxu0 0
    %5408 = vmatpush1.bf16.msra.mxu0 %v4985
    %5409 = vmatprep.subr.bf16.mxu0 0
    %5410 = vmatpush1.bf16.msra.mxu0 %v4986
    %5411 = vmatprep.subr.bf16.mxu0 0
    %5412 = vmatpush1.bf16.msra.mxu0 %v4987
    %5413 = vmatprep.mubr.bf16.mxu0 %v4386
    %5414 = vmatmul.mubr.bf16.gmra.mrb[0].mxu0 %v4601
    %v5415 = vpop.f32.mrb[0].mxu0
    %v5416 = vadd.f32 %v5127, %v5415
    %v5417 = vpop.f32.mrb[0].mxu0
    %v5418 = vpop.f32.mrb[0].mxu0
    %v5419 = vadd.f32 %v5130, %v5418
    %v5420 = vpop.f32.mrb[0].mxu0
    %5421 = vmatprep.mubr.bf16.mxu0 %v4389
    %5422 = vmatmul.mubr.bf16.gmra.mrb[0].mxu0 %v4605
    %v5423 = vpop.f32.mrb[0].mxu0
    %v5424 = vadd.f32 %v5135, %v5423
    %v5425 = vpop.f32.mrb[0].mxu0
    %v5426 = vpop.f32.mrb[0].mxu0
    %v5427 = vadd.f32 %v5138, %v5426
    %v5428 = vpop.f32.mrb[0].mxu0
    %5429 = vmatprep.mubr.bf16.mxu0 %v4392
    %5430 = vmatmul.mubr.bf16.gmra.mrb[0].mxu0 %v4609
    %v5431 = vpop.f32.mrb[0].mxu0
    %v5432 = vadd.f32 %v5143, %v5431
    %v5433 = vpop.f32.mrb[0].mxu0
    %v5434 = vpop.f32.mrb[0].mxu0
    %v5435 = vadd.f32 %v5146, %v5434
    %v5436 = vpop.f32.mrb[0].mxu0
    %5437 = vmatprep.mubr.bf16.mxu0 %v4395
    %5438 = vmatmul.mubr.bf16.gmra.mrb[0].mxu0 %v4613
    %v5439 = vpop.f32.mrb[0].mxu0
    %v5440 = vadd.f32 %v5151, %v5439
    %v5441 = vpop.f32.mrb[0].mxu0
    %v5442 = vpop.f32.mrb[0].mxu0
    %v5443 = vadd.f32 %v5154, %v5442
    %v5444 = vpop.f32.mrb[0].mxu0
    %5445 = vmatprep.mubr.bf16.mxu0 %v4398
    %5446 = vmatmul.mubr.bf16.gmra.mrb[0].mxu0 %v4617
    %v5447 = vpop.f32.mrb[0].mxu0
    %v5448 = vadd.f32 %v5159, %v5447
    %v5449 = vpop.f32.mrb[0].mxu0
    %v5450 = vpop.f32.mrb[0].mxu0
    %v5451 = vadd.f32 %v5162, %v5450
    %v5452 = vpop.f32.mrb[0].mxu0
    %5453 = vmatprep.mubr.bf16.mxu0 %v4401
    %5454 = vmatmul.mubr.bf16.gmra.mrb[0].mxu0 %v4621
    %v5455 = vpop.f32.mrb[0].mxu0
    %v5456 = vadd.f32 %v5167, %v5455
    %v5457 = vpop.f32.mrb[0].mxu0
    %v5458 = vpop.f32.mrb[0].mxu0
    %v5459 = vadd.f32 %v5170, %v5458
    %v5460 = vpop.f32.mrb[0].mxu0
    %5461 = vmatprep.mubr.bf16.mxu0 %v4404
    %5462 = vmatmul.mubr.bf16.gmra.mrb[0].mxu0 %v4625
    %v5463 = vpop.f32.mrb[0].mxu0
    %v5464 = vadd.f32 %v5175, %v5463
    %v5465 = vpop.f32.mrb[0].mxu0
    %v5466 = vpop.f32.mrb[0].mxu0
    %v5467 = vadd.f32 %v5178, %v5466
    %v5468 = vpop.f32.mrb[0].mxu0
    %5469 = vmatprep.mubr.bf16.mxu0 %v4407
    %5470 = vmatmul.mubr.bf16.gmra.mrb[0].mxu0 %v4629
    %v5471 = vpop.f32.mrb[0].mxu0
    %v5472 = vadd.f32 %v5183, %v5471
    %v5473 = vpop.f32.mrb[0].mxu0
    %v5474 = vpop.f32.mrb[0].mxu0
    %v5475 = vadd.f32 %v5186, %v5474
    %v5476 = vpop.f32.mrb[0].mxu0
    %5477 = vmatprep.mubr.bf16.mxu0 %v4410
    %5478 = vmatmul.mubr.bf16.gmra.mrb[0].mxu0 %v4633
    %v5479 = vpop.f32.mrb[0].mxu0
    %v5480 = vadd.f32 %v5191, %v5479
    %v5481 = vpop.f32.mrb[0].mxu0
    %v5482 = vpop.f32.mrb[0].mxu0
    %v5483 = vadd.f32 %v5194, %v5482
    %v5484 = vpop.f32.mrb[0].mxu0
    %5485 = vmatprep.mubr.bf16.mxu0 %v4413
    %5486 = vmatmul.mubr.bf16.gmra.mrb[0].mxu0 %v4637
    %v5487 = vpop.f32.mrb[0].mxu0
    %v5488 = vadd.f32 %v5199, %v5487
    %v5489 = vpop.f32.mrb[0].mxu0
    %v5490 = vpop.f32.mrb[0].mxu0
    %v5491 = vadd.f32 %v5202, %v5490
    %v5492 = vpop.f32.mrb[0].mxu0
    %5493 = vmatprep.mubr.bf16.mxu0 %v4416
    %5494 = vmatmul.mubr.bf16.gmra.mrb[0].mxu0 %v4641
    %v5495 = vpop.f32.mrb[0].mxu0
    %v5496 = vadd.f32 %v5207, %v5495
    %v5497 = vpop.f32.mrb[0].mxu0
    %v5498 = vpop.f32.mrb[0].mxu0
    %v5499 = vadd.f32 %v5210, %v5498
    %v5500 = vpop.f32.mrb[0].mxu0
    %5501 = vmatprep.mubr.bf16.mxu0 %v4419
    %5502 = vmatmul.mubr.bf16.gmra.mrb[0].mxu0 %v4645
    %v5503 = vpop.f32.mrb[0].mxu0
    %v5504 = vadd.f32 %v5215, %v5503
    %v5505 = vpop.f32.mrb[0].mxu0
    %v5506 = vpop.f32.mrb[0].mxu0
    %v5507 = vadd.f32 %v5218, %v5506
    %v5508 = vpop.f32.mrb[0].mxu0
    %5509 = vmatprep.mubr.bf16.mxu0 %v4422
    %5510 = vmatmul.mubr.bf16.gmra.mrb[0].mxu0 %v4649
    %v5511 = vpop.f32.mrb[0].mxu0
    %v5512 = vadd.f32 %v5223, %v5511
    %v5513 = vpop.f32.mrb[0].mxu0
    %v5514 = vpop.f32.mrb[0].mxu0
    %v5515 = vadd.f32 %v5226, %v5514
    %v5516 = vpop.f32.mrb[0].mxu0
    %5517 = vmatprep.mubr.bf16.mxu0 %v4425
    %5518 = vmatmul.mubr.bf16.gmra.mrb[0].mxu0 %v4653
    %v5519 = vpop.f32.mrb[0].mxu0
    %v5520 = vadd.f32 %v5231, %v5519
    %v5521 = vpop.f32.mrb[0].mxu0
    %v5522 = vpop.f32.mrb[0].mxu0
    %v5523 = vadd.f32 %v5234, %v5522
    %v5524 = vpop.f32.mrb[0].mxu0
    %5525 = vmatprep.mubr.bf16.mxu0 %v4728
    %5526 = vmatmul.mubr.bf16.gmra.mrb[0].mxu0 %v4657
    %v5527 = vpop.f32.mrb[0].mxu0
    %v5528 = vadd.f32 %v5239, %v5527
    %v5529 = vpop.f32.mrb[0].mxu0
    %v5530 = vpop.f32.mrb[0].mxu0
    %v5531 = vadd.f32 %v5242, %v5530
    %v5532 = vpop.f32.mrb[0].mxu0
    %5533 = vmatprep.mubr.bf16.mxu0 %v4380
    %5534 = vmatmul.mubr.bf16.gmra.mrb[0].mxu0 %v4661
    %v5535 = vpop.f32.mrb[0].mxu0
    %v5536 = vadd.f32 %v5247, %v5535
    %v5537 = vpop.f32.mrb[0].mxu0
    %v5538 = vpop.f32.mrb[0].mxu0
    %v5539 = vadd.f32 %v5250, %v5538
    %v5540 = vpop.f32.mrb[0].mxu0
    %5541 = vmatprep.mubr.bf16.mxu0 %v4431
    %5542 = vmatmul.mubr.bf16.gmra.mrb[0].mxu0 %v4665
    %v5543 = vpop.f32.mrb[0].mxu0
    %v5544 = vadd.f32 %v5255, %v5543
    %v5545 = vpop.f32.mrb[0].mxu0
    %v5546 = vpop.f32.mrb[0].mxu0
    %v5547 = vadd.f32 %v5258, %v5546
    %v5548 = vpop.f32.mrb[0].mxu0
    %5549 = vmatprep.mubr.bf16.mxu0 %v4434
    %5550 = vmatmul.mubr.bf16.gmra.mrb[0].mxu0 %v4669
    %v5551 = vpop.f32.mrb[0].mxu0
    %v5552 = vadd.f32 %v5263, %v5551
    %v5553 = vpop.f32.mrb[0].mxu0
    %v5554 = vpop.f32.mrb[0].mxu0
    %v5555 = vadd.f32 %v5266, %v5554
    %v5556 = vpop.f32.mrb[0].mxu0
    %5557 = vmatprep.mubr.bf16.mxu0 %v4437
    %5558 = vmatmul.mubr.bf16.gmra.mrb[0].mxu0 %v4673
    %v5559 = vpop.f32.mrb[0].mxu0
    %v5560 = vadd.f32 %v5271, %v5559
    %v5561 = vpop.f32.mrb[0].mxu0
    %v5562 = vpop.f32.mrb[0].mxu0
    %v5563 = vadd.f32 %v5274, %v5562
    %v5564 = vpop.f32.mrb[0].mxu0
    %5565 = vmatprep.mubr.bf16.mxu0 %v4440
    %5566 = vmatmul.mubr.bf16.gmra.mrb[0].mxu0 %v4677
    %v5567 = vpop.f32.mrb[0].mxu0
    %v5568 = vadd.f32 %v5279, %v5567
    %v5569 = vpop.f32.mrb[0].mxu0
    %v5570 = vpop.f32.mrb[0].mxu0
    %v5571 = vadd.f32 %v5282, %v5570
    %v5572 = vpop.f32.mrb[0].mxu0
    %5573 = vmatprep.mubr.bf16.mxu0 %v4443
    %5574 = vmatmul.mubr.bf16.gmra.mrb[0].mxu0 %v4681
    %v5575 = vpop.f32.mrb[0].mxu0
    %v5576 = vadd.f32 %v5287, %v5575
    %v5577 = vpop.f32.mrb[0].mxu0
    %v5578 = vpop.f32.mrb[0].mxu0
    %v5579 = vadd.f32 %v5290, %v5578
    %v5580 = vpop.f32.mrb[0].mxu0
    %5581 = vmatprep.mubr.bf16.mxu0 %v4446
    %5582 = vmatmul.mubr.bf16.gmra.mrb[0].mxu0 %v4685
    %v5583 = vpop.f32.mrb[0].mxu0
    %v5584 = vadd.f32 %v5295, %v5583
    %v5585 = vpop.f32.mrb[0].mxu0
    %v5586 = vpop.f32.mrb[0].mxu0
    %v5587 = vadd.f32 %v5298, %v5586
    %v5588 = vpop.f32.mrb[0].mxu0
    %5589 = vmatprep.mubr.bf16.mxu0 %v4449
    %5590 = vmatmul.mubr.bf16.gmra.mrb[0].mxu0 %v4689
    %v5591 = vpop.f32.mrb[0].mxu0
    %v5592 = vadd.f32 %v5303, %v5591
    %v5593 = vpop.f32.mrb[0].mxu0
    %v5594 = vpop.f32.mrb[0].mxu0
    %v5595 = vadd.f32 %v5306, %v5594
    %v5596 = vpop.f32.mrb[0].mxu0
    %5597 = vmatprep.mubr.bf16.mxu0 %v4452
    %5598 = vmatmul.mubr.bf16.gmra.mrb[0].mxu0 %v4693
    %v5599 = vpop.f32.mrb[0].mxu0
    %v5600 = vadd.f32 %v5311, %v5599
    %v5601 = vpop.f32.mrb[0].mxu0
    %v5602 = vpop.f32.mrb[0].mxu0
    %v5603 = vadd.f32 %v5314, %v5602
    %v5604 = vpop.f32.mrb[0].mxu0
    %5605 = vmatprep.mubr.bf16.mxu0 %v4455
    %5606 = vmatmul.mubr.bf16.gmra.mrb[0].mxu0 %v4697
    %v5607 = vpop.f32.mrb[0].mxu0
    %v5608 = vadd.f32 %v5319, %v5607
    %v5609 = vpop.f32.mrb[0].mxu0
    %v5610 = vpop.f32.mrb[0].mxu0
    %v5611 = vadd.f32 %v5322, %v5610
    %v5612 = vpop.f32.mrb[0].mxu0
    %5613 = vmatprep.mubr.bf16.mxu0 %v4458
    %5614 = vmatmul.mubr.bf16.gmra.mrb[0].mxu0 %v4701
    %v5615 = vpop.f32.mrb[0].mxu0
    %v5616 = vadd.f32 %v5327, %v5615
    %v5617 = vpop.f32.mrb[0].mxu0
    %v5618 = vpop.f32.mrb[0].mxu0
    %v5619 = vadd.f32 %v5330, %v5618
    %v5620 = vpop.f32.mrb[0].mxu0
    %5621 = vmatprep.mubr.bf16.mxu0 %v4461
    %5622 = vmatmul.mubr.bf16.gmra.mrb[0].mxu0 %v4705
    %v5623 = vpop.f32.mrb[0].mxu0
    %v5624 = vadd.f32 %v5335, %v5623
    %v5625 = vpop.f32.mrb[0].mxu0
    %v5626 = vpop.f32.mrb[0].mxu0
    %v5627 = vadd.f32 %v5338, %v5626
    %v5628 = vpop.f32.mrb[0].mxu0
    %5629 = vmatprep.mubr.bf16.mxu0 %v4464
    %5630 = vmatmul.mubr.bf16.gmra.mrb[0].mxu0 %v4709
    %v5631 = vpop.f32.mrb[0].mxu0
    %v5632 = vadd.f32 %v5343, %v5631
    %v5633 = vpop.f32.mrb[0].mxu0
    %v5634 = vpop.f32.mrb[0].mxu0
    %v5635 = vadd.f32 %v5346, %v5634
    %v5636 = vpop.f32.mrb[0].mxu0
    %5637 = vmatprep.mubr.bf16.mxu0 %v4467
    %5638 = vmatmul.mubr.bf16.gmra.mrb[0].mxu0 %v4713
    %v5639 = vpop.f32.mrb[0].mxu0
    %v5640 = vadd.f32 %v5351, %v5639
    %v5641 = vpop.f32.mrb[0].mxu0
    %v5642 = vpop.f32.mrb[0].mxu0
    %v5643 = vadd.f32 %v5354, %v5642
    %v5644 = vpop.f32.mrb[0].mxu0
    %5645 = vmatprep.mubr.bf16.mxu0 %v4470
    %5646 = vmatmul.mubr.bf16.gmra.mrb[0].mxu0 %v4717
    %v5647 = vpop.f32.mrb[0].mxu0
    %v5648 = vadd.f32 %v5359, %v5647
    %v5649 = vpop.f32.mrb[0].mxu0
    %v5650 = vpop.f32.mrb[0].mxu0
    %v5651 = vadd.f32 %v5362, %v5650
    %v5652 = vpop.f32.mrb[0].mxu0
    %5653 = vmatprep.mubr.bf16.mxu0 %v4731
    %5654 = vmatmul.mubr.bf16.gmra.mrb[0].mxu0 %v4721
    %v5655 = vpop.f32.mrb[0].mxu0
    %v5656 = vadd.f32 %v5367, %v5655
    %v5657 = vpop.f32.mrb[0].mxu0
    %v5658 = vpop.f32.mrb[0].mxu0
    %v5659 = vadd.f32 %v5370, %v5658
    %v5660 = vpop.f32.mrb[0].mxu0
    %5661 = vmatprep.mubr.bf16.mxu0 %v4380
    %5662 = vmatmul.mubr.bf16.gmra.mrb[0].mxu0 %v4725
    %v5663 = vpop.f32.mrb[0].mxu0
    %v5664 = vadd.f32 %v5375, %v5663
    %v5665 = vpop.f32.mrb[0].mxu0
    %v5666 = vpop.f32.mrb[0].mxu0
    %v5667 = vadd.f32 %v5378, %v5666
    %v5668 = vpop.f32.mrb[0].mxu0
    %5669 = vdwg.mxu0
    %5670 = vmatprep.subr.bf16.mxu0 0
    %5671 = vmatpush1.bf16.msra.mxu0 %v4988
    %5672 = vmatprep.subr.bf16.mxu0 0
    %5673 = vmatpush1.bf16.msra.mxu0 %v4989
    %5674 = vmatprep.subr.bf16.mxu0 0
    %5675 = vmatpush1.bf16.msra.mxu0 %v4990
    %5676 = vmatprep.subr.bf16.mxu0 0
    %5677 = vmatpush1.bf16.msra.mxu0 %v4991
    %5678 = vmatprep.subr.bf16.mxu0 0
    %5679 = vmatpush1.bf16.msra.mxu0 0
    %5680 = vmatprep.subr.bf16.mxu0 0
    %5681 = vmatpush1.bf16.msra.mxu0 0
    %5682 = vmatprep.subr.bf16.mxu0 0
    %5683 = vmatpush1.bf16.msra.mxu0 0
    %5684 = vmatprep.subr.bf16.mxu0 0
    %5685 = vmatpush1.bf16.msra.mxu0 0
    %5686 = vmatprep.subr.bf16.mxu0 0
    %5687 = vmatpush1.bf16.msra.mxu0 0
    %5688 = vmatprep.subr.bf16.mxu0 0
    %5689 = vmatpush1.bf16.msra.mxu0 0
    %5690 = vmatprep.subr.bf16.mxu0 0
    %5691 = vmatpush1.bf16.msra.mxu0 0
    %5692 = vmatprep.subr.bf16.mxu0 0
    %5693 = vmatpush1.bf16.msra.mxu0 0
    %5694 = vmatprep.subr.bf16.mxu0 0
    %5695 = vmatpush1.bf16.msra.mxu0 0
    %5696 = vmatprep.subr.bf16.mxu0 0
    %5697 = vmatpush1.bf16.msra.mxu0 0
    %5698 = vmatprep.subr.bf16.mxu0 0
    %5699 = vmatpush1.bf16.msra.mxu0 0
    %5700 = vmatprep.subr.bf16.mxu0 0
    %5701 = vmatpush1.bf16.msra.mxu0 0
    %5702 = vmatprep.mubr.bf16.mxu0 0
    %5703 = vmatmul.mubr.bf16.gmra.mrb[0].mxu0 %v5028
    %v5704 = vpop.f32.mrb[0].mxu0
    %v5705 = vadd.f32 %v5416, %v5704
    %v5706 = vpop.f32.mrb[0].mxu0
    %v5707 = vpop.f32.mrb[0].mxu0
    %v5708 = vadd.f32 %v5419, %v5707
    %v5709 = vpop.f32.mrb[0].mxu0
    %5710 = vmatprep.mubr.bf16.mxu0 0
    %5711 = vmatmul.mubr.bf16.gmra.mrb[0].mxu0 %v5030
    %v5712 = vpop.f32.mrb[0].mxu0
    %v5713 = vadd.f32 %v5424, %v5712
    %v5714 = vpop.f32.mrb[0].mxu0
    %v5715 = vpop.f32.mrb[0].mxu0
    %v5716 = vadd.f32 %v5427, %v5715
    %v5717 = vpop.f32.mrb[0].mxu0
    %5718 = vmatprep.mubr.bf16.mxu0 0
    %5719 = vmatmul.mubr.bf16.gmra.mrb[0].mxu0 %v5032
    %v5720 = vpop.f32.mrb[0].mxu0
    %v5721 = vadd.f32 %v5432, %v5720
    %v5722 = vpop.f32.mrb[0].mxu0
    %v5723 = vpop.f32.mrb[0].mxu0
    %v5724 = vadd.f32 %v5435, %v5723
    %v5725 = vpop.f32.mrb[0].mxu0
    %5726 = vmatprep.mubr.bf16.mxu0 0
    %5727 = vmatmul.mubr.bf16.gmra.mrb[0].mxu0 %v5034
    %v5728 = vpop.f32.mrb[0].mxu0
    %v5729 = vadd.f32 %v5440, %v5728
    %v5730 = vpop.f32.mrb[0].mxu0
    %v5731 = vpop.f32.mrb[0].mxu0
    %v5732 = vadd.f32 %v5443, %v5731
    %v5733 = vpop.f32.mrb[0].mxu0
    %5734 = vmatprep.mubr.bf16.mxu0 0
    %5735 = vmatmul.mubr.bf16.gmra.mrb[0].mxu0 %v5036
    %v5736 = vpop.f32.mrb[0].mxu0
    %v5737 = vadd.f32 %v5448, %v5736
    %v5738 = vpop.f32.mrb[0].mxu0
    %v5739 = vpop.f32.mrb[0].mxu0
    %v5740 = vadd.f32 %v5451, %v5739
    %v5741 = vpop.f32.mrb[0].mxu0
    %5742 = vmatprep.mubr.bf16.mxu0 0
    %5743 = vmatmul.mubr.bf16.gmra.mrb[0].mxu0 %v5038
    %v5744 = vpop.f32.mrb[0].mxu0
    %v5745 = vadd.f32 %v5456, %v5744
    %v5746 = vpop.f32.mrb[0].mxu0
    %v5747 = vpop.f32.mrb[0].mxu0
    %v5748 = vadd.f32 %v5459, %v5747
    %v5749 = vpop.f32.mrb[0].mxu0
    %5750 = vmatprep.mubr.bf16.mxu0 0
    %5751 = vmatmul.mubr.bf16.gmra.mrb[0].mxu0 %v5040
    %v5752 = vpop.f32.mrb[0].mxu0
    %v5753 = vadd.f32 %v5464, %v5752
    %v5754 = vpop.f32.mrb[0].mxu0
    %v5755 = vpop.f32.mrb[0].mxu0
    %v5756 = vadd.f32 %v5467, %v5755
    %v5757 = vpop.f32.mrb[0].mxu0
    %5758 = vmatprep.mubr.bf16.mxu0 0
    %5759 = vmatmul.mubr.bf16.gmra.mrb[0].mxu0 %v5042
    %v5760 = vpop.f32.mrb[0].mxu0
    %v5761 = vadd.f32 %v5472, %v5760
    %v5762 = vpop.f32.mrb[0].mxu0
    %v5763 = vpop.f32.mrb[0].mxu0
    %v5764 = vadd.f32 %v5475, %v5763
    %v5765 = vpop.f32.mrb[0].mxu0
    %5766 = vmatprep.mubr.bf16.mxu0 0
    %5767 = vmatmul.mubr.bf16.gmra.mrb[0].mxu0 %v5044
    %v5768 = vpop.f32.mrb[0].mxu0
    %v5769 = vadd.f32 %v5480, %v5768
    %v5770 = vpop.f32.mrb[0].mxu0
    %v5771 = vpop.f32.mrb[0].mxu0
    %v5772 = vadd.f32 %v5483, %v5771
    %v5773 = vpop.f32.mrb[0].mxu0
    %5774 = vmatprep.mubr.bf16.mxu0 0
    %5775 = vmatmul.mubr.bf16.gmra.mrb[0].mxu0 %v5046
    %v5776 = vpop.f32.mrb[0].mxu0
    %v5777 = vadd.f32 %v5488, %v5776
    %v5778 = vpop.f32.mrb[0].mxu0
    %v5779 = vpop.f32.mrb[0].mxu0
    %v5780 = vadd.f32 %v5491, %v5779
    %v5781 = vpop.f32.mrb[0].mxu0
    %5782 = vmatprep.mubr.bf16.mxu0 0
    %5783 = vmatmul.mubr.bf16.gmra.mrb[0].mxu0 %v5048
    %v5784 = vpop.f32.mrb[0].mxu0
    %v5785 = vadd.f32 %v5496, %v5784
    %v5786 = vpop.f32.mrb[0].mxu0
    %v5787 = vpop.f32.mrb[0].mxu0
    %v5788 = vadd.f32 %v5499, %v5787
    %v5789 = vpop.f32.mrb[0].mxu0
    %5790 = vmatprep.mubr.bf16.mxu0 0
    %5791 = vmatmul.mubr.bf16.gmra.mrb[0].mxu0 %v5050
    %v5792 = vpop.f32.mrb[0].mxu0
    %v5793 = vadd.f32 %v5504, %v5792
    %v5794 = vpop.f32.mrb[0].mxu0
    %v5795 = vpop.f32.mrb[0].mxu0
    %v5796 = vadd.f32 %v5507, %v5795
    %v5797 = vpop.f32.mrb[0].mxu0
    %5798 = vmatprep.mubr.bf16.mxu0 0
    %5799 = vmatmul.mubr.bf16.gmra.mrb[0].mxu0 %v5052
    %v5800 = vpop.f32.mrb[0].mxu0
    %v5801 = vadd.f32 %v5512, %v5800
    %v5802 = vpop.f32.mrb[0].mxu0
    %v5803 = vpop.f32.mrb[0].mxu0
    %v5804 = vadd.f32 %v5515, %v5803
    %v5805 = vpop.f32.mrb[0].mxu0
    %5806 = vmatprep.mubr.bf16.mxu0 0
    %5807 = vmatmul.mubr.bf16.gmra.mrb[0].mxu0 %v5054
    %v5808 = vpop.f32.mrb[0].mxu0
    %v5809 = vadd.f32 %v5520, %v5808
    %v5810 = vpop.f32.mrb[0].mxu0
    %v5811 = vpop.f32.mrb[0].mxu0
    %v5812 = vadd.f32 %v5523, %v5811
    %v5813 = vpop.f32.mrb[0].mxu0
    %5814 = vmatprep.mubr.bf16.mxu0 0
    %5815 = vmatmul.mubr.bf16.gmra.mrb[0].mxu0 %v5057
    %v5816 = vpop.f32.mrb[0].mxu0
    %v5817 = vadd.f32 %v5528, %v5816
    %v5818 = vpop.f32.mrb[0].mxu0
    %v5819 = vpop.f32.mrb[0].mxu0
    %v5820 = vadd.f32 %v5531, %v5819
    %v5821 = vpop.f32.mrb[0].mxu0
    %5822 = vmatprep.mubr.bf16.mxu0 0
    %5823 = vmatmul.mubr.bf16.gmra.mrb[0].mxu0 %v5059
    %v5824 = vpop.f32.mrb[0].mxu0
    %v5825 = vadd.f32 %v5536, %v5824
    %v5826 = vpop.f32.mrb[0].mxu0
    %v5827 = vpop.f32.mrb[0].mxu0
    %v5828 = vadd.f32 %v5539, %v5827
    %v5829 = vpop.f32.mrb[0].mxu0
    %5830 = vmatprep.mubr.bf16.mxu0 0
    %5831 = vmatmul.mubr.bf16.gmra.mrb[0].mxu0 %v5061
    %v5832 = vpop.f32.mrb[0].mxu0
    %v5833 = vadd.f32 %v5544, %v5832
    %v5834 = vpop.f32.mrb[0].mxu0
    %v5835 = vpop.f32.mrb[0].mxu0
    %v5836 = vadd.f32 %v5547, %v5835
    %v5837 = vpop.f32.mrb[0].mxu0
    %5838 = vmatprep.mubr.bf16.mxu0 0
    %5839 = vmatmul.mubr.bf16.gmra.mrb[0].mxu0 %v5063
    %v5840 = vpop.f32.mrb[0].mxu0
    %v5841 = vadd.f32 %v5552, %v5840
    %v5842 = vpop.f32.mrb[0].mxu0
    %v5843 = vpop.f32.mrb[0].mxu0
    %v5844 = vadd.f32 %v5555, %v5843
    %v5845 = vpop.f32.mrb[0].mxu0
    %5846 = vmatprep.mubr.bf16.mxu0 0
    %5847 = vmatmul.mubr.bf16.gmra.mrb[0].mxu0 %v5065
    %v5848 = vpop.f32.mrb[0].mxu0
    %v5849 = vadd.f32 %v5560, %v5848
    %v5850 = vpop.f32.mrb[0].mxu0
    %v5851 = vpop.f32.mrb[0].mxu0
    %v5852 = vadd.f32 %v5563, %v5851
    %v5853 = vpop.f32.mrb[0].mxu0
    %5854 = vmatprep.mubr.bf16.mxu0 0
    %5855 = vmatmul.mubr.bf16.gmra.mrb[0].mxu0 %v5067
    %v5856 = vpop.f32.mrb[0].mxu0
    %v5857 = vadd.f32 %v5568, %v5856
    %v5858 = vpop.f32.mrb[0].mxu0
    %v5859 = vpop.f32.mrb[0].mxu0
    %v5860 = vadd.f32 %v5571, %v5859
    %v5861 = vpop.f32.mrb[0].mxu0
    %5862 = vmatprep.mubr.bf16.mxu0 0
    %5863 = vmatmul.mubr.bf16.gmra.mrb[0].mxu0 %v5069
    %v5864 = vpop.f32.mrb[0].mxu0
    %v5865 = vadd.f32 %v5576, %v5864
    %v5866 = vpop.f32.mrb[0].mxu0
    %v5867 = vpop.f32.mrb[0].mxu0
    %v5868 = vadd.f32 %v5579, %v5867
    %v5869 = vpop.f32.mrb[0].mxu0
    %5870 = vmatprep.mubr.bf16.mxu0 0
    %5871 = vmatmul.mubr.bf16.gmra.mrb[0].mxu0 %v5071
    %v5872 = vpop.f32.mrb[0].mxu0
    %v5873 = vadd.f32 %v5584, %v5872
    %v5874 = vpop.f32.mrb[0].mxu0
    %v5875 = vpop.f32.mrb[0].mxu0
    %v5876 = vadd.f32 %v5587, %v5875
    %v5877 = vpop.f32.mrb[0].mxu0
    %5878 = vmatprep.mubr.bf16.mxu0 0
    %5879 = vmatmul.mubr.bf16.gmra.mrb[0].mxu0 %v5073
    %v5880 = vpop.f32.mrb[0].mxu0
    %v5881 = vadd.f32 %v5592, %v5880
    %v5882 = vpop.f32.mrb[0].mxu0
    %v5883 = vpop.f32.mrb[0].mxu0
    %v5884 = vadd.f32 %v5595, %v5883
    %v5885 = vpop.f32.mrb[0].mxu0
    %5886 = vmatprep.mubr.bf16.mxu0 0
    %5887 = vmatmul.mubr.bf16.gmra.mrb[0].mxu0 %v5075
    %v5888 = vpop.f32.mrb[0].mxu0
    %v5889 = vadd.f32 %v5600, %v5888
    %v5890 = vpop.f32.mrb[0].mxu0
    %v5891 = vpop.f32.mrb[0].mxu0
    %v5892 = vadd.f32 %v5603, %v5891
    %v5893 = vpop.f32.mrb[0].mxu0
    %5894 = vmatprep.mubr.bf16.mxu0 0
    %5895 = vmatmul.mubr.bf16.gmra.mrb[0].mxu0 %v5077
    %v5896 = vpop.f32.mrb[0].mxu0
    %v5897 = vadd.f32 %v5608, %v5896
    %v5898 = vpop.f32.mrb[0].mxu0
    %v5899 = vpop.f32.mrb[0].mxu0
    %v5900 = vadd.f32 %v5611, %v5899
    %v5901 = vpop.f32.mrb[0].mxu0
    %5902 = vmatprep.mubr.bf16.mxu0 0
    %5903 = vmatmul.mubr.bf16.gmra.mrb[0].mxu0 %v5079
    %v5904 = vpop.f32.mrb[0].mxu0
    %v5905 = vadd.f32 %v5616, %v5904
    %v5906 = vpop.f32.mrb[0].mxu0
    %v5907 = vpop.f32.mrb[0].mxu0
    %v5908 = vadd.f32 %v5619, %v5907
    %v5909 = vpop.f32.mrb[0].mxu0
    %5910 = vmatprep.mubr.bf16.mxu0 0
    %5911 = vmatmul.mubr.bf16.gmra.mrb[0].mxu0 %v5081
    %v5912 = vpop.f32.mrb[0].mxu0
    %v5913 = vadd.f32 %v5624, %v5912
    %v5914 = vpop.f32.mrb[0].mxu0
    %v5915 = vpop.f32.mrb[0].mxu0
    %v5916 = vadd.f32 %v5627, %v5915
    %v5917 = vpop.f32.mrb[0].mxu0
    %5918 = vmatprep.mubr.bf16.mxu0 0
    %5919 = vmatmul.mubr.bf16.gmra.mrb[0].mxu0 %v5083
    %v5920 = vpop.f32.mrb[0].mxu0
    %v5921 = vadd.f32 %v5632, %v5920
    %v5922 = vpop.f32.mrb[0].mxu0
    %v5923 = vpop.f32.mrb[0].mxu0
    %v5924 = vadd.f32 %v5635, %v5923
    %v5925 = vpop.f32.mrb[0].mxu0
    %5926 = vmatprep.mubr.bf16.mxu0 0
    %5927 = vmatmul.mubr.bf16.gmra.mrb[0].mxu0 %v5085
    %v5928 = vpop.f32.mrb[0].mxu0
    %v5929 = vadd.f32 %v5640, %v5928
    %v5930 = vpop.f32.mrb[0].mxu0
    %v5931 = vpop.f32.mrb[0].mxu0
    %v5932 = vadd.f32 %v5643, %v5931
    %v5933 = vpop.f32.mrb[0].mxu0
    %5934 = vmatprep.mubr.bf16.mxu0 0
    %5935 = vmatmul.mubr.bf16.gmra.mrb[0].mxu0 %v5087
    %v5936 = vpop.f32.mrb[0].mxu0
    %v5937 = vadd.f32 %v5648, %v5936
    %v5938 = vpop.f32.mrb[0].mxu0
    %v5939 = vpop.f32.mrb[0].mxu0
    %v5940 = vadd.f32 %v5651, %v5939
    %v5941 = vpop.f32.mrb[0].mxu0
    %5942 = vmatprep.mubr.bf16.mxu0 0
    %5943 = vmatmul.mubr.bf16.gmra.mrb[0].mxu0 %v5090
    %v5944 = vpop.f32.mrb[0].mxu0
    %v5945 = vadd.f32 %v5656, %v5944
    %v5946 = vpop.f32.mrb[0].mxu0
    %v5947 = vpop.f32.mrb[0].mxu0
    %v5948 = vadd.f32 %v5659, %v5947
    %v5949 = vpop.f32.mrb[0].mxu0
    %5950 = vmatprep.mubr.bf16.mxu0 0
    %5951 = vmatmul.mubr.bf16.gmra.mrb[0].mxu0 %v5059
    %v5952 = vpop.f32.mrb[0].mxu0
    %v5953 = vadd.f32 %v5664, %v5952
    %v5954 = vpop.f32.mrb[0].mxu0
    %v5955 = vpop.f32.mrb[0].mxu0
    %v5956 = vadd.f32 %v5667, %v5955
    %v5957 = vpop.f32.mrb[0].mxu0
    %5958 = vdwg.mxu0
    %v5959 = vsel %vm2459, %v5705, 0.0
    %v5960 = vsel %vm2459, %v5708, 0.0
    %v5961 = vadd.f32 %v5959, %v5960
    %v5962 = vsel %vm2459, %v5713, 0.0
    %v5963 = vadd.f32 %v5961, %v5962
    %v5964 = vsel %vm2459, %v5716, 0.0
    %v5965 = vadd.f32 %v5963, %v5964
    %v5966 = vsel %vm2459, %v5721, 0.0
    %v5967 = vadd.f32 %v5965, %v5966
    %v5968 = vsel %vm2459, %v5724, 0.0
    %v5969 = vadd.f32 %v5967, %v5968
    %v5970 = vsel %vm2459, %v5729, 0.0
    %v5971 = vadd.f32 %v5969, %v5970
    %v5972 = vsel %vm2459, %v5732, 0.0
    %v5973 = vadd.f32 %v5971, %v5972
    %v5974 = vsel %vm2459, %v5737, 0.0
    %v5975 = vadd.f32 %v5973, %v5974
    %v5976 = vsel %vm2459, %v5740, 0.0
    %v5977 = vadd.f32 %v5975, %v5976
    %v5978 = vsel %vm2459, %v5745, 0.0
    %v5979 = vadd.f32 %v5977, %v5978
    %v5980 = vsel %vm2459, %v5748, 0.0
    %v5981 = vadd.f32 %v5979, %v5980
    %v5982 = vsel %vm2459, %v5753, 0.0
    %v5983 = vadd.f32 %v5981, %v5982
    %v5984 = vsel %vm2459, %v5756, 0.0
    %v5985 = vadd.f32 %v5983, %v5984
    %v5986 = vsel %vm2459, %v5761, 0.0
    %v5987 = vadd.f32 %v5985, %v5986
    %v5988 = vsel %vm2459, %v5764, 0.0
    %v5989 = vadd.f32 %v5987, %v5988
    %v5990 = vsel %vm2459, %v5769, 0.0
    %v5991 = vadd.f32 %v5989, %v5990
    %v5992 = vsel %vm2459, %v5772, 0.0
    %v5993 = vadd.f32 %v5991, %v5992
    %v5994 = vsel %vm2459, %v5777, 0.0
    %v5995 = vadd.f32 %v5993, %v5994
    %v5996 = vsel %vm2459, %v5780, 0.0
    %v5997 = vadd.f32 %v5995, %v5996
    %v5998 = vsel %vm2459, %v5785, 0.0
    %v5999 = vadd.f32 %v5997, %v5998
    %v6000 = vsel %vm2459, %v5788, 0.0
    %v6001 = vadd.f32 %v5999, %v6000
    %v6002 = vsel %vm2459, %v5793, 0.0
    %v6003 = vadd.f32 %v6001, %v6002
    %v6004 = vsel %vm2459, %v5796, 0.0
    %v6005 = vadd.f32 %v6003, %v6004
    %v6006 = vsel %vm2459, %v5801, 0.0
    %v6007 = vadd.f32 %v6005, %v6006
    %v6008 = vsel %vm2459, %v5804, 0.0
    %v6009 = vadd.f32 %v6007, %v6008
    %v6010 = vsel %vm2459, %v5809, 0.0
    %v6011 = vadd.f32 %v6009, %v6010
    %v6012 = vsel %vm2459, %v5812, 0.0
    %v6013 = vadd.f32 %v6011, %v6012
    %v6014 = vsel %vm2459, %v5817, 0.0
    %v6015 = vadd.f32 %v6013, %v6014
    %v6016 = vsel %vm2459, %v5820, 0.0
    %v6017 = vadd.f32 %v6015, %v6016
    %v6018 = vsel %vm2459, %v5825, 0.0
    %v6019 = vadd.f32 %v6017, %v6018
    %v6020 = vsel %vm2459, %v5828, 0.0
    %v6021 = vadd.f32 %v6019, %v6020
    %v6022 = vsel %vm2459, %v5833, 0.0
    %v6023 = vadd.f32 %v6021, %v6022
    %v6024 = vsel %vm2459, %v5836, 0.0
    %v6025 = vadd.f32 %v6023, %v6024
    %v6026 = vsel %vm2459, %v5841, 0.0
    %v6027 = vadd.f32 %v6025, %v6026
    %v6028 = vsel %vm2459, %v5844, 0.0
    %v6029 = vadd.f32 %v6027, %v6028
    %v6030 = vsel %vm2459, %v5849, 0.0
    %v6031 = vadd.f32 %v6029, %v6030
    %v6032 = vsel %vm2459, %v5852, 0.0
    %v6033 = vadd.f32 %v6031, %v6032
    %v6034 = vsel %vm2459, %v5857, 0.0
    %v6035 = vadd.f32 %v6033, %v6034
    %v6036 = vsel %vm2459, %v5860, 0.0
    %v6037 = vadd.f32 %v6035, %v6036
    %v6038 = vsel %vm2459, %v5865, 0.0
    %v6039 = vadd.f32 %v6037, %v6038
    %v6040 = vsel %vm2459, %v5868, 0.0
    %v6041 = vadd.f32 %v6039, %v6040
    %v6042 = vsel %vm2459, %v5873, 0.0
    %v6043 = vadd.f32 %v6041, %v6042
    %v6044 = vsel %vm2459, %v5876, 0.0
    %v6045 = vadd.f32 %v6043, %v6044
    %v6046 = vsel %vm2459, %v5881, 0.0
    %v6047 = vadd.f32 %v6045, %v6046
    %v6048 = vsel %vm2459, %v5884, 0.0
    %v6049 = vadd.f32 %v6047, %v6048
    %v6050 = vsel %vm2459, %v5889, 0.0
    %v6051 = vadd.f32 %v6049, %v6050
    %v6052 = vsel %vm2459, %v5892, 0.0
    %v6053 = vadd.f32 %v6051, %v6052
    %v6054 = vsel %vm2459, %v5897, 0.0
    %v6055 = vadd.f32 %v6053, %v6054
    %v6056 = vsel %vm2459, %v5900, 0.0
    %v6057 = vadd.f32 %v6055, %v6056
    %v6058 = vsel %vm2459, %v5905, 0.0
    %v6059 = vadd.f32 %v6057, %v6058
    %v6060 = vsel %vm2459, %v5908, 0.0
    %v6061 = vadd.f32 %v6059, %v6060
    %v6062 = vsel %vm2459, %v5913, 0.0
    %v6063 = vadd.f32 %v6061, %v6062
    %v6064 = vsel %vm2459, %v5916, 0.0
    %v6065 = vadd.f32 %v6063, %v6064
    %v6066 = vsel %vm2459, %v5921, 0.0
    %v6067 = vadd.f32 %v6065, %v6066
    %v6068 = vsel %vm2459, %v5924, 0.0
    %v6069 = vadd.f32 %v6067, %v6068
    %v6070 = vsel %vm2459, %v5929, 0.0
    %v6071 = vadd.f32 %v6069, %v6070
    %v6072 = vsel %vm2459, %v5932, 0.0
    %v6073 = vadd.f32 %v6071, %v6072
    %v6074 = vsel %vm2459, %v5937, 0.0
    %v6075 = vadd.f32 %v6073, %v6074
    %v6076 = vsel %vm2459, %v5940, 0.0
    %v6077 = vadd.f32 %v6075, %v6076
    %v6078 = vsel %vm2459, %v5945, 0.0
    %v6079 = vadd.f32 %v6077, %v6078
    %v6080 = vsel %vm2459, %v5948, 0.0
    %v6081 = vadd.f32 %v6079, %v6080
    %v6082 = vsel %vm2459, %v5953, 0.0
    %v6083 = vadd.f32 %v6081, %v6082
    %v6084 = vsel %vm2459, %v5956, 0.0
    %v6085 = vadd.f32 %v6083, %v6084
    %v6086 = vrot.slane %v6085, 4
    %v6087 = vadd.f32 %v6085, %v6086
    %v6088 = vrot.slane %v6087, 2
    %v6089 = vadd.f32 %v6087, %v6088
    %v6090 = vrot.slane %v6089, 1
    %v6091 = vadd.f32 %v6089, %v6090
    %v6092 = vmul.f32 %v6091, %v2593
    %v6093 = vsub.f32 %v5705, %v6092
    %v6094 = vsub.f32 %v5708, %v6092
    %v6095 = vsub.f32 %v5713, %v6092
    %v6096 = vsub.f32 %v5716, %v6092
    %v6097 = vsub.f32 %v5721, %v6092
    %v6098 = vsub.f32 %v5724, %v6092
    %v6099 = vsub.f32 %v5729, %v6092
    %v6100 = vsub.f32 %v5732, %v6092
    %v6101 = vsub.f32 %v5737, %v6092
    %v6102 = vsub.f32 %v5740, %v6092
    %v6103 = vsub.f32 %v5745, %v6092
    %v6104 = vsub.f32 %v5748, %v6092
    %v6105 = vsub.f32 %v5753, %v6092
    %v6106 = vsub.f32 %v5756, %v6092
    %v6107 = vsub.f32 %v5761, %v6092
    %v6108 = vsub.f32 %v5764, %v6092
    %v6109 = vsub.f32 %v5769, %v6092
    %v6110 = vsub.f32 %v5772, %v6092
    %v6111 = vsub.f32 %v5777, %v6092
    %v6112 = vsub.f32 %v5780, %v6092
    %v6113 = vsub.f32 %v5785, %v6092
    %v6114 = vsub.f32 %v5788, %v6092
    %v6115 = vsub.f32 %v5793, %v6092
    %v6116 = vsub.f32 %v5796, %v6092
    %v6117 = vsub.f32 %v5801, %v6092
    %v6118 = vsub.f32 %v5804, %v6092
    %v6119 = vsub.f32 %v5809, %v6092
    %v6120 = vsub.f32 %v5812, %v6092
    %v6121 = vsub.f32 %v5817, %v6092
    %v6122 = vsub.f32 %v5820, %v6092
    %v6123 = vsub.f32 %v5825, %v6092
    %v6124 = vsub.f32 %v5828, %v6092
    %v6125 = vsub.f32 %v5833, %v6092
    %v6126 = vsub.f32 %v5836, %v6092
    %v6127 = vsub.f32 %v5841, %v6092
    %v6128 = vsub.f32 %v5844, %v6092
    %v6129 = vsub.f32 %v5849, %v6092
    %v6130 = vsub.f32 %v5852, %v6092
    %v6131 = vsub.f32 %v5857, %v6092
    %v6132 = vsub.f32 %v5860, %v6092
    %v6133 = vsub.f32 %v5865, %v6092
    %v6134 = vsub.f32 %v5868, %v6092
    %v6135 = vsub.f32 %v5873, %v6092
    %v6136 = vsub.f32 %v5876, %v6092
    %v6137 = vsub.f32 %v5881, %v6092
    %v6138 = vsub.f32 %v5884, %v6092
    %v6139 = vsub.f32 %v5889, %v6092
    %v6140 = vsub.f32 %v5892, %v6092
    %v6141 = vsub.f32 %v5897, %v6092
    %v6142 = vsub.f32 %v5900, %v6092
    %v6143 = vsub.f32 %v5905, %v6092
    %v6144 = vsub.f32 %v5908, %v6092
    %v6145 = vsub.f32 %v5913, %v6092
    %v6146 = vsub.f32 %v5916, %v6092
    %v6147 = vsub.f32 %v5921, %v6092
    %v6148 = vsub.f32 %v5924, %v6092
    %v6149 = vsub.f32 %v5929, %v6092
    %v6150 = vsub.f32 %v5932, %v6092
    %v6151 = vsub.f32 %v5937, %v6092
    %v6152 = vsub.f32 %v5940, %v6092
    %v6153 = vsub.f32 %v5945, %v6092
    %v6154 = vsub.f32 %v5948, %v6092
    %v6155 = vsub.f32 %v5953, %v6092
    %v6156 = vsub.f32 %v5956, %v6092
    %v6157 = vmul.f32 %v6093, %v6093
    %v6158 = vmul.f32 %v6094, %v6094
    %v6159 = vmul.f32 %v6095, %v6095
    %v6160 = vmul.f32 %v6096, %v6096
    %v6161 = vmul.f32 %v6097, %v6097
    %v6162 = vmul.f32 %v6098, %v6098
    %v6163 = vmul.f32 %v6099, %v6099
    %v6164 = vmul.f32 %v6100, %v6100
    %v6165 = vmul.f32 %v6101, %v6101
    %v6166 = vmul.f32 %v6102, %v6102
    %v6167 = vmul.f32 %v6103, %v6103
    %v6168 = vmul.f32 %v6104, %v6104
    %v6169 = vmul.f32 %v6105, %v6105
    %v6170 = vmul.f32 %v6106, %v6106
    %v6171 = vmul.f32 %v6107, %v6107
    %v6172 = vmul.f32 %v6108, %v6108
    %v6173 = vmul.f32 %v6109, %v6109
    %v6174 = vmul.f32 %v6110, %v6110
    %v6175 = vmul.f32 %v6111, %v6111
    %v6176 = vmul.f32 %v6112, %v6112
    %v6177 = vmul.f32 %v6113, %v6113
    %v6178 = vmul.f32 %v6114, %v6114
    %v6179 = vmul.f32 %v6115, %v6115
    %v6180 = vmul.f32 %v6116, %v6116
    %v6181 = vmul.f32 %v6117, %v6117
    %v6182 = vmul.f32 %v6118, %v6118
    %v6183 = vmul.f32 %v6119, %v6119
    %v6184 = vmul.f32 %v6120, %v6120
    %v6185 = vmul.f32 %v6121, %v6121
    %v6186 = vmul.f32 %v6122, %v6122
    %v6187 = vmul.f32 %v6123, %v6123
    %v6188 = vmul.f32 %v6124, %v6124
    %v6189 = vmul.f32 %v6125, %v6125
    %v6190 = vmul.f32 %v6126, %v6126
    %v6191 = vmul.f32 %v6127, %v6127
    %v6192 = vmul.f32 %v6128, %v6128
    %v6193 = vmul.f32 %v6129, %v6129
    %v6194 = vmul.f32 %v6130, %v6130
    %v6195 = vmul.f32 %v6131, %v6131
    %v6196 = vmul.f32 %v6132, %v6132
    %v6197 = vmul.f32 %v6133, %v6133
    %v6198 = vmul.f32 %v6134, %v6134
    %v6199 = vmul.f32 %v6135, %v6135
    %v6200 = vmul.f32 %v6136, %v6136
    %v6201 = vmul.f32 %v6137, %v6137
    %v6202 = vmul.f32 %v6138, %v6138
    %v6203 = vmul.f32 %v6139, %v6139
    %v6204 = vmul.f32 %v6140, %v6140
    %v6205 = vmul.f32 %v6141, %v6141
    %v6206 = vmul.f32 %v6142, %v6142
    %v6207 = vmul.f32 %v6143, %v6143
    %v6208 = vmul.f32 %v6144, %v6144
    %v6209 = vmul.f32 %v6145, %v6145
    %v6210 = vmul.f32 %v6146, %v6146
    %v6211 = vmul.f32 %v6147, %v6147
    %v6212 = vmul.f32 %v6148, %v6148
    %v6213 = vmul.f32 %v6149, %v6149
    %v6214 = vmul.f32 %v6150, %v6150
    %v6215 = vmul.f32 %v6151, %v6151
    %v6216 = vmul.f32 %v6152, %v6152
    %v6217 = vmul.f32 %v6153, %v6153
    %v6218 = vmul.f32 %v6154, %v6154
    %v6219 = vmul.f32 %v6155, %v6155
    %v6220 = vmul.f32 %v6156, %v6156
    %v6221 = vsel %vm2459, %v6157, 0.0
    %v6222 = vsel %vm2459, %v6158, 0.0
    %v6223 = vadd.f32 %v6221, %v6222
    %v6224 = vsel %vm2459, %v6159, 0.0
    %v6225 = vadd.f32 %v6223, %v6224
    %v6226 = vsel %vm2459, %v6160, 0.0
    %v6227 = vadd.f32 %v6225, %v6226
    %v6228 = vsel %vm2459, %v6161, 0.0
    %v6229 = vadd.f32 %v6227, %v6228
    %v6230 = vsel %vm2459, %v6162, 0.0
    %v6231 = vadd.f32 %v6229, %v6230
    %v6232 = vsel %vm2459, %v6163, 0.0
    %v6233 = vadd.f32 %v6231, %v6232
    %v6234 = vsel %vm2459, %v6164, 0.0
    %v6235 = vadd.f32 %v6233, %v6234
    %v6236 = vsel %vm2459, %v6165, 0.0
    %v6237 = vadd.f32 %v6235, %v6236
    %v6238 = vsel %vm2459, %v6166, 0.0
    %v6239 = vadd.f32 %v6237, %v6238
    %v6240 = vsel %vm2459, %v6167, 0.0
    %v6241 = vadd.f32 %v6239, %v6240
    %v6242 = vsel %vm2459, %v6168, 0.0
    %v6243 = vadd.f32 %v6241, %v6242
    %v6244 = vsel %vm2459, %v6169, 0.0
    %v6245 = vadd.f32 %v6243, %v6244
    %v6246 = vsel %vm2459, %v6170, 0.0
    %v6247 = vadd.f32 %v6245, %v6246
    %v6248 = vsel %vm2459, %v6171, 0.0
    %v6249 = vadd.f32 %v6247, %v6248
    %v6250 = vsel %vm2459, %v6172, 0.0
    %v6251 = vadd.f32 %v6249, %v6250
    %v6252 = vsel %vm2459, %v6173, 0.0
    %v6253 = vadd.f32 %v6251, %v6252
    %v6254 = vsel %vm2459, %v6174, 0.0
    %v6255 = vadd.f32 %v6253, %v6254
    %v6256 = vsel %vm2459, %v6175, 0.0
    %v6257 = vadd.f32 %v6255, %v6256
    %v6258 = vsel %vm2459, %v6176, 0.0
    %v6259 = vadd.f32 %v6257, %v6258
    %v6260 = vsel %vm2459, %v6177, 0.0
    %v6261 = vadd.f32 %v6259, %v6260
    %v6262 = vsel %vm2459, %v6178, 0.0
    %v6263 = vadd.f32 %v6261, %v6262
    %v6264 = vsel %vm2459, %v6179, 0.0
    %v6265 = vadd.f32 %v6263, %v6264
    %v6266 = vsel %vm2459, %v6180, 0.0
    %v6267 = vadd.f32 %v6265, %v6266
    %v6268 = vsel %vm2459, %v6181, 0.0
    %v6269 = vadd.f32 %v6267, %v6268
    %v6270 = vsel %vm2459, %v6182, 0.0
    %v6271 = vadd.f32 %v6269, %v6270
    %v6272 = vsel %vm2459, %v6183, 0.0
    %v6273 = vadd.f32 %v6271, %v6272
    %v6274 = vsel %vm2459, %v6184, 0.0
    %v6275 = vadd.f32 %v6273, %v6274
    %v6276 = vsel %vm2459, %v6185, 0.0
    %v6277 = vadd.f32 %v6275, %v6276
    %v6278 = vsel %vm2459, %v6186, 0.0
    %v6279 = vadd.f32 %v6277, %v6278
    %v6280 = vsel %vm2459, %v6187, 0.0
    %v6281 = vadd.f32 %v6279, %v6280
    %v6282 = vsel %vm2459, %v6188, 0.0
    %v6283 = vadd.f32 %v6281, %v6282
    %v6284 = vsel %vm2459, %v6189, 0.0
    %v6285 = vadd.f32 %v6283, %v6284
    %v6286 = vsel %vm2459, %v6190, 0.0
    %v6287 = vadd.f32 %v6285, %v6286
    %v6288 = vsel %vm2459, %v6191, 0.0
    %v6289 = vadd.f32 %v6287, %v6288
    %v6290 = vsel %vm2459, %v6192, 0.0
    %v6291 = vadd.f32 %v6289, %v6290
    %v6292 = vsel %vm2459, %v6193, 0.0
    %v6293 = vadd.f32 %v6291, %v6292
    %v6294 = vsel %vm2459, %v6194, 0.0
    %v6295 = vadd.f32 %v6293, %v6294
    %v6296 = vsel %vm2459, %v6195, 0.0
    %v6297 = vadd.f32 %v6295, %v6296
    %v6298 = vsel %vm2459, %v6196, 0.0
    %v6299 = vadd.f32 %v6297, %v6298
    %v6300 = vsel %vm2459, %v6197, 0.0
    %v6301 = vadd.f32 %v6299, %v6300
    %v6302 = vsel %vm2459, %v6198, 0.0
    %v6303 = vadd.f32 %v6301, %v6302
    %v6304 = vsel %vm2459, %v6199, 0.0
    %v6305 = vadd.f32 %v6303, %v6304
    %v6306 = vsel %vm2459, %v6200, 0.0
    %v6307 = vadd.f32 %v6305, %v6306
    %v6308 = vsel %vm2459, %v6201, 0.0
    %v6309 = vadd.f32 %v6307, %v6308
    %v6310 = vsel %vm2459, %v6202, 0.0
    %v6311 = vadd.f32 %v6309, %v6310
    %v6312 = vsel %vm2459, %v6203, 0.0
    %v6313 = vadd.f32 %v6311, %v6312
    %v6314 = vsel %vm2459, %v6204, 0.0
    %v6315 = vadd.f32 %v6313, %v6314
    %v6316 = vsel %vm2459, %v6205, 0.0
    %v6317 = vadd.f32 %v6315, %v6316
    %v6318 = vsel %vm2459, %v6206, 0.0
    %v6319 = vadd.f32 %v6317, %v6318
    %v6320 = vsel %vm2459, %v6207, 0.0
    %v6321 = vadd.f32 %v6319, %v6320
    %v6322 = vsel %vm2459, %v6208, 0.0
    %v6323 = vadd.f32 %v6321, %v6322
    %v6324 = vsel %vm2459, %v6209, 0.0
    %v6325 = vadd.f32 %v6323, %v6324
    %v6326 = vsel %vm2459, %v6210, 0.0
    %v6327 = vadd.f32 %v6325, %v6326
    %v6328 = vsel %vm2459, %v6211, 0.0
    %v6329 = vadd.f32 %v6327, %v6328
    %v6330 = vsel %vm2459, %v6212, 0.0
    %v6331 = vadd.f32 %v6329, %v6330
    %v6332 = vsel %vm2459, %v6213, 0.0
    %v6333 = vadd.f32 %v6331, %v6332
    %v6334 = vsel %vm2459, %v6214, 0.0
    %v6335 = vadd.f32 %v6333, %v6334
    %v6336 = vsel %vm2459, %v6215, 0.0
    %v6337 = vadd.f32 %v6335, %v6336
    %v6338 = vsel %vm2459, %v6216, 0.0
    %v6339 = vadd.f32 %v6337, %v6338
    %v6340 = vsel %vm2459, %v6217, 0.0
    %v6341 = vadd.f32 %v6339, %v6340
    %v6342 = vsel %vm2459, %v6218, 0.0
    %v6343 = vadd.f32 %v6341, %v6342
    %v6344 = vsel %vm2459, %v6219, 0.0
    %v6345 = vadd.f32 %v6343, %v6344
    %v6346 = vsel %vm2459, %v6220, 0.0
    %v6347 = vadd.f32 %v6345, %v6346
    %v6348 = vrot.slane %v6347, 4
    %v6349 = vadd.f32 %v6347, %v6348
    %v6350 = vrot.slane %v6349, 2
    %v6351 = vadd.f32 %v6349, %v6350
    %v6352 = vrot.slane %v6351, 1
    %v6353 = vadd.f32 %v6351, %v6352
    %v6354 = vmul.f32 %v6353, %v2593
    %v6355 = vadd.f32 %v6354, 1e-05
    %v6356 = vrsqrt.pop %v6355
    %v6357 = vmul.f32 %v6093, %v6356
    %v6358 = vmul.f32 %v6094, %v6356
    %v6359 = vmul.f32 %v6095, %v6356
    %v6360 = vmul.f32 %v6096, %v6356
    %v6361 = vmul.f32 %v6097, %v6356
    %v6362 = vmul.f32 %v6098, %v6356
    %v6363 = vmul.f32 %v6099, %v6356
    %v6364 = vmul.f32 %v6100, %v6356
    %v6365 = vmul.f32 %v6101, %v6356
    %v6366 = vmul.f32 %v6102, %v6356
    %v6367 = vmul.f32 %v6103, %v6356
    %v6368 = vmul.f32 %v6104, %v6356
    %v6369 = vmul.f32 %v6105, %v6356
    %v6370 = vmul.f32 %v6106, %v6356
    %v6371 = vmul.f32 %v6107, %v6356
    %v6372 = vmul.f32 %v6108, %v6356
    %v6373 = vmul.f32 %v6109, %v6356
    %v6374 = vmul.f32 %v6110, %v6356
    %v6375 = vmul.f32 %v6111, %v6356
    %v6376 = vmul.f32 %v6112, %v6356
    %v6377 = vmul.f32 %v6113, %v6356
    %v6378 = vmul.f32 %v6114, %v6356
    %v6379 = vmul.f32 %v6115, %v6356
    %v6380 = vmul.f32 %v6116, %v6356
    %v6381 = vmul.f32 %v6117, %v6356
    %v6382 = vmul.f32 %v6118, %v6356
    %v6383 = vmul.f32 %v6119, %v6356
    %v6384 = vmul.f32 %v6120, %v6356
    %v6385 = vmul.f32 %v6121, %v6356
    %v6386 = vmul.f32 %v6122, %v6356
    %v6387 = vmul.f32 %v6123, %v6356
    %v6388 = vmul.f32 %v6124, %v6356
    %v6389 = vmul.f32 %v6125, %v6356
    %v6390 = vmul.f32 %v6126, %v6356
    %v6391 = vmul.f32 %v6127, %v6356
    %v6392 = vmul.f32 %v6128, %v6356
    %v6393 = vmul.f32 %v6129, %v6356
    %v6394 = vmul.f32 %v6130, %v6356
    %v6395 = vmul.f32 %v6131, %v6356
    %v6396 = vmul.f32 %v6132, %v6356
    %v6397 = vmul.f32 %v6133, %v6356
    %v6398 = vmul.f32 %v6134, %v6356
    %v6399 = vmul.f32 %v6135, %v6356
    %v6400 = vmul.f32 %v6136, %v6356
    %v6401 = vmul.f32 %v6137, %v6356
    %v6402 = vmul.f32 %v6138, %v6356
    %v6403 = vmul.f32 %v6139, %v6356
    %v6404 = vmul.f32 %v6140, %v6356
    %v6405 = vmul.f32 %v6141, %v6356
    %v6406 = vmul.f32 %v6142, %v6356
    %v6407 = vmul.f32 %v6143, %v6356
    %v6408 = vmul.f32 %v6144, %v6356
    %v6409 = vmul.f32 %v6145, %v6356
    %v6410 = vmul.f32 %v6146, %v6356
    %v6411 = vmul.f32 %v6147, %v6356
    %v6412 = vmul.f32 %v6148, %v6356
    %v6413 = vmul.f32 %v6149, %v6356
    %v6414 = vmul.f32 %v6150, %v6356
    %v6415 = vmul.f32 %v6151, %v6356
    %v6416 = vmul.f32 %v6152, %v6356
    %v6417 = vmul.f32 %v6153, %v6356
    %v6418 = vmul.f32 %v6154, %v6356
    %v6419 = vmul.f32 %v6155, %v6356
    %v6420 = vmul.f32 %v6156, %v6356
    %v6421 = vld [vmem:[%s7] sm:$0x1]
    %v6423 = vlaneseq
    %v6424 = vshrl.u32 %v6423, 7
    %v6425 = vsub.s32 0, %v6424
    %v6426 = vrot.slane %v6421, %v6425
    %v6428 = vmul.f32 %v6357, %v6426
    %v6429 = vmul.f32 %v6358, %v6426
    %v6430 = vmul.f32 %v6359, %v6426
    %v6431 = vmul.f32 %v6360, %v6426
    %v6432 = vmul.f32 %v6361, %v6426
    %v6433 = vmul.f32 %v6362, %v6426
    %v6434 = vmul.f32 %v6363, %v6426
    %v6435 = vmul.f32 %v6364, %v6426
    %v6436 = vmul.f32 %v6365, %v6426
    %v6437 = vmul.f32 %v6366, %v6426
    %v6438 = vmul.f32 %v6367, %v6426
    %v6439 = vmul.f32 %v6368, %v6426
    %v6440 = vmul.f32 %v6369, %v6426
    %v6441 = vmul.f32 %v6370, %v6426
    %v6442 = vmul.f32 %v6371, %v6426
    %v6443 = vmul.f32 %v6372, %v6426
    %v6444 = vmul.f32 %v6373, %v6426
    %v6445 = vmul.f32 %v6374, %v6426
    %v6446 = vmul.f32 %v6375, %v6426
    %v6447 = vmul.f32 %v6376, %v6426
    %v6448 = vmul.f32 %v6377, %v6426
    %v6449 = vmul.f32 %v6378, %v6426
    %v6450 = vmul.f32 %v6379, %v6426
    %v6451 = vmul.f32 %v6380, %v6426
    %v6452 = vmul.f32 %v6381, %v6426
    %v6453 = vmul.f32 %v6382, %v6426
    %v6454 = vmul.f32 %v6383, %v6426
    %v6455 = vmul.f32 %v6384, %v6426
    %v6456 = vmul.f32 %v6385, %v6426
    %v6457 = vmul.f32 %v6386, %v6426
    %v6458 = vmul.f32 %v6387, %v6426
    %v6459 = vmul.f32 %v6388, %v6426
    %v6460 = vmul.f32 %v6389, %v6426
    %v6461 = vmul.f32 %v6390, %v6426
    %v6462 = vmul.f32 %v6391, %v6426
    %v6463 = vmul.f32 %v6392, %v6426
    %v6464 = vmul.f32 %v6393, %v6426
    %v6465 = vmul.f32 %v6394, %v6426
    %v6466 = vmul.f32 %v6395, %v6426
    %v6467 = vmul.f32 %v6396, %v6426
    %v6468 = vmul.f32 %v6397, %v6426
    %v6469 = vmul.f32 %v6398, %v6426
    %v6470 = vmul.f32 %v6399, %v6426
    %v6471 = vmul.f32 %v6400, %v6426
    %v6472 = vmul.f32 %v6401, %v6426
    %v6473 = vmul.f32 %v6402, %v6426
    %v6474 = vmul.f32 %v6403, %v6426
    %v6475 = vmul.f32 %v6404, %v6426
    %v6476 = vmul.f32 %v6405, %v6426
    %v6477 = vmul.f32 %v6406, %v6426
    %v6478 = vmul.f32 %v6407, %v6426
    %v6479 = vmul.f32 %v6408, %v6426
    %v6480 = vmul.f32 %v6409, %v6426
    %v6481 = vmul.f32 %v6410, %v6426
    %v6482 = vmul.f32 %v6411, %v6426
    %v6483 = vmul.f32 %v6412, %v6426
    %v6484 = vmul.f32 %v6413, %v6426
    %v6485 = vmul.f32 %v6414, %v6426
    %v6486 = vmul.f32 %v6415, %v6426
    %v6487 = vmul.f32 %v6416, %v6426
    %v6488 = vmul.f32 %v6417, %v6426
    %v6489 = vmul.f32 %v6418, %v6426
    %v6490 = vmul.f32 %v6419, %v6426
    %v6491 = vmul.f32 %v6420, %v6426
    %v6492 = vld [vmem:[%s8] sm:$0x1]
    %v6494 = vlaneseq
    %v6495 = vshrl.u32 %v6494, 7
    %v6496 = vsub.s32 0, %v6495
    %v6497 = vrot.slane %v6492, %v6496
    %v6499 = vadd.f32 %v6428, %v6497
    %v6500 = vadd.f32 %v6429, %v6497
    %v6501 = vadd.f32 %v6430, %v6497
    %v6502 = vadd.f32 %v6431, %v6497
    %v6503 = vadd.f32 %v6432, %v6497
    %v6504 = vadd.f32 %v6433, %v6497
    %v6505 = vadd.f32 %v6434, %v6497
    %v6506 = vadd.f32 %v6435, %v6497
    %v6507 = vadd.f32 %v6436, %v6497
    %v6508 = vadd.f32 %v6437, %v6497
    %v6509 = vadd.f32 %v6438, %v6497
    %v6510 = vadd.f32 %v6439, %v6497
    %v6511 = vadd.f32 %v6440, %v6497
    %v6512 = vadd.f32 %v6441, %v6497
    %v6513 = vadd.f32 %v6442, %v6497
    %v6514 = vadd.f32 %v6443, %v6497
    %v6515 = vadd.f32 %v6444, %v6497
    %v6516 = vadd.f32 %v6445, %v6497
    %v6517 = vadd.f32 %v6446, %v6497
    %v6518 = vadd.f32 %v6447, %v6497
    %v6519 = vadd.f32 %v6448, %v6497
    %v6520 = vadd.f32 %v6449, %v6497
    %v6521 = vadd.f32 %v6450, %v6497
    %v6522 = vadd.f32 %v6451, %v6497
    %v6523 = vadd.f32 %v6452, %v6497
    %v6524 = vadd.f32 %v6453, %v6497
    %v6525 = vadd.f32 %v6454, %v6497
    %v6526 = vadd.f32 %v6455, %v6497
    %v6527 = vadd.f32 %v6456, %v6497
    %v6528 = vadd.f32 %v6457, %v6497
    %v6529 = vadd.f32 %v6458, %v6497
    %v6530 = vadd.f32 %v6459, %v6497
    %v6531 = vadd.f32 %v6460, %v6497
    %v6532 = vadd.f32 %v6461, %v6497
    %v6533 = vadd.f32 %v6462, %v6497
    %v6534 = vadd.f32 %v6463, %v6497
    %v6535 = vadd.f32 %v6464, %v6497
    %v6536 = vadd.f32 %v6465, %v6497
    %v6537 = vadd.f32 %v6466, %v6497
    %v6538 = vadd.f32 %v6467, %v6497
    %v6539 = vadd.f32 %v6468, %v6497
    %v6540 = vadd.f32 %v6469, %v6497
    %v6541 = vadd.f32 %v6470, %v6497
    %v6542 = vadd.f32 %v6471, %v6497
    %v6543 = vadd.f32 %v6472, %v6497
    %v6544 = vadd.f32 %v6473, %v6497
    %v6545 = vadd.f32 %v6474, %v6497
    %v6546 = vadd.f32 %v6475, %v6497
    %v6547 = vadd.f32 %v6476, %v6497
    %v6548 = vadd.f32 %v6477, %v6497
    %v6549 = vadd.f32 %v6478, %v6497
    %v6550 = vadd.f32 %v6479, %v6497
    %v6551 = vadd.f32 %v6480, %v6497
    %v6552 = vadd.f32 %v6481, %v6497
    %v6553 = vadd.f32 %v6482, %v6497
    %v6554 = vadd.f32 %v6483, %v6497
    %v6555 = vadd.f32 %v6484, %v6497
    %v6556 = vadd.f32 %v6485, %v6497
    %v6557 = vadd.f32 %v6486, %v6497
    %v6558 = vadd.f32 %v6487, %v6497
    %v6559 = vadd.f32 %v6488, %v6497
    %v6560 = vadd.f32 %v6489, %v6497
    %v6561 = vadd.f32 %v6490, %v6497
    %v6562 = vadd.f32 %v6491, %v6497
    %vm6563 = vcmp.gt.f32.partialorder %v6499, 0.0
    %vm6564 = vcmp.gt.f32.partialorder %v6500, 0.0
    %vm6565 = vcmp.gt.f32.partialorder %v6501, 0.0
    %vm6566 = vcmp.gt.f32.partialorder %v6502, 0.0
    %vm6567 = vcmp.gt.f32.partialorder %v6503, 0.0
    %vm6568 = vcmp.gt.f32.partialorder %v6504, 0.0
    %vm6569 = vcmp.gt.f32.partialorder %v6505, 0.0
    %vm6570 = vcmp.gt.f32.partialorder %v6506, 0.0
    %vm6571 = vcmp.gt.f32.partialorder %v6507, 0.0
    %vm6572 = vcmp.gt.f32.partialorder %v6508, 0.0
    %vm6573 = vcmp.gt.f32.partialorder %v6509, 0.0
    %vm6574 = vcmp.gt.f32.partialorder %v6510, 0.0
    %vm6575 = vcmp.gt.f32.partialorder %v6511, 0.0
    %vm6576 = vcmp.gt.f32.partialorder %v6512, 0.0
    %vm6577 = vcmp.gt.f32.partialorder %v6513, 0.0
    %vm6578 = vcmp.gt.f32.partialorder %v6514, 0.0
    %vm6579 = vcmp.gt.f32.partialorder %v6515, 0.0
    %vm6580 = vcmp.gt.f32.partialorder %v6516, 0.0
    %vm6581 = vcmp.gt.f32.partialorder %v6517, 0.0
    %vm6582 = vcmp.gt.f32.partialorder %v6518, 0.0
    %vm6583 = vcmp.gt.f32.partialorder %v6519, 0.0
    %vm6584 = vcmp.gt.f32.partialorder %v6520, 0.0
    %vm6585 = vcmp.gt.f32.partialorder %v6521, 0.0
    %vm6586 = vcmp.gt.f32.partialorder %v6522, 0.0
    %vm6587 = vcmp.gt.f32.partialorder %v6523, 0.0
    %vm6588 = vcmp.gt.f32.partialorder %v6524, 0.0
    %vm6589 = vcmp.gt.f32.partialorder %v6525, 0.0
    %vm6590 = vcmp.gt.f32.partialorder %v6526, 0.0
    %vm6591 = vcmp.gt.f32.partialorder %v6527, 0.0
    %vm6592 = vcmp.gt.f32.partialorder %v6528, 0.0
    %vm6593 = vcmp.gt.f32.partialorder %v6529, 0.0
    %vm6594 = vcmp.gt.f32.partialorder %v6530, 0.0
    %vm6595 = vcmp.gt.f32.partialorder %v6531, 0.0
    %vm6596 = vcmp.gt.f32.partialorder %v6532, 0.0
    %vm6597 = vcmp.gt.f32.partialorder %v6533, 0.0
    %vm6598 = vcmp.gt.f32.partialorder %v6534, 0.0
    %vm6599 = vcmp.gt.f32.partialorder %v6535, 0.0
    %vm6600 = vcmp.gt.f32.partialorder %v6536, 0.0
    %vm6601 = vcmp.gt.f32.partialorder %v6537, 0.0
    %vm6602 = vcmp.gt.f32.partialorder %v6538, 0.0
    %vm6603 = vcmp.gt.f32.partialorder %v6539, 0.0
    %vm6604 = vcmp.gt.f32.partialorder %v6540, 0.0
    %vm6605 = vcmp.gt.f32.partialorder %v6541, 0.0
    %vm6606 = vcmp.gt.f32.partialorder %v6542, 0.0
    %vm6607 = vcmp.gt.f32.partialorder %v6543, 0.0
    %vm6608 = vcmp.gt.f32.partialorder %v6544, 0.0
    %vm6609 = vcmp.gt.f32.partialorder %v6545, 0.0
    %vm6610 = vcmp.gt.f32.partialorder %v6546, 0.0
    %vm6611 = vcmp.gt.f32.partialorder %v6547, 0.0
    %vm6612 = vcmp.gt.f32.partialorder %v6548, 0.0
    %vm6613 = vcmp.gt.f32.partialorder %v6549, 0.0
    %vm6614 = vcmp.gt.f32.partialorder %v6550, 0.0
    %vm6615 = vcmp.gt.f32.partialorder %v6551, 0.0
    %vm6616 = vcmp.gt.f32.partialorder %v6552, 0.0
    %vm6617 = vcmp.gt.f32.partialorder %v6553, 0.0
    %vm6618 = vcmp.gt.f32.partialorder %v6554, 0.0
    %vm6619 = vcmp.gt.f32.partialorder %v6555, 0.0
    %vm6620 = vcmp.gt.f32.partialorder %v6556, 0.0
    %vm6621 = vcmp.gt.f32.partialorder %v6557, 0.0
    %vm6622 = vcmp.gt.f32.partialorder %v6558, 0.0
    %vm6623 = vcmp.gt.f32.partialorder %v6559, 0.0
    %vm6624 = vcmp.gt.f32.partialorder %v6560, 0.0
    %vm6625 = vcmp.gt.f32.partialorder %v6561, 0.0
    %vm6626 = vcmp.gt.f32.partialorder %v6562, 0.0
    %v6627 = vmul.f32 %v6499, 0.2
    %v6628 = vmul.f32 %v6500, 0.2
    %v6629 = vmul.f32 %v6501, 0.2
    %v6630 = vmul.f32 %v6502, 0.2
    %v6631 = vmul.f32 %v6503, 0.2
    %v6632 = vmul.f32 %v6504, 0.2
    %v6633 = vmul.f32 %v6505, 0.2
    %v6634 = vmul.f32 %v6506, 0.2
    %v6635 = vmul.f32 %v6507, 0.2
    %v6636 = vmul.f32 %v6508, 0.2
    %v6637 = vmul.f32 %v6509, 0.2
    %v6638 = vmul.f32 %v6510, 0.2
    %v6639 = vmul.f32 %v6511, 0.2
    %v6640 = vmul.f32 %v6512, 0.2
    %v6641 = vmul.f32 %v6513, 0.2
    %v6642 = vmul.f32 %v6514, 0.2
    %v6643 = vmul.f32 %v6515, 0.2
    %v6644 = vmul.f32 %v6516, 0.2
    %v6645 = vmul.f32 %v6517, 0.2
    %v6646 = vmul.f32 %v6518, 0.2
    %v6647 = vmul.f32 %v6519, 0.2
    %v6648 = vmul.f32 %v6520, 0.2
    %v6649 = vmul.f32 %v6521, 0.2
    %v6650 = vmul.f32 %v6522, 0.2
    %v6651 = vmul.f32 %v6523, 0.2
    %v6652 = vmul.f32 %v6524, 0.2
    %v6653 = vmul.f32 %v6525, 0.2
    %v6654 = vmul.f32 %v6526, 0.2
    %v6655 = vmul.f32 %v6527, 0.2
    %v6656 = vmul.f32 %v6528, 0.2
    %v6657 = vmul.f32 %v6529, 0.2
    %v6658 = vmul.f32 %v6530, 0.2
    %v6659 = vmul.f32 %v6531, 0.2
    %v6660 = vmul.f32 %v6532, 0.2
    %v6661 = vmul.f32 %v6533, 0.2
    %v6662 = vmul.f32 %v6534, 0.2
    %v6663 = vmul.f32 %v6535, 0.2
    %v6664 = vmul.f32 %v6536, 0.2
    %v6665 = vmul.f32 %v6537, 0.2
    %v6666 = vmul.f32 %v6538, 0.2
    %v6667 = vmul.f32 %v6539, 0.2
    %v6668 = vmul.f32 %v6540, 0.2
    %v6669 = vmul.f32 %v6541, 0.2
    %v6670 = vmul.f32 %v6542, 0.2
    %v6671 = vmul.f32 %v6543, 0.2
    %v6672 = vmul.f32 %v6544, 0.2
    %v6673 = vmul.f32 %v6545, 0.2
    %v6674 = vmul.f32 %v6546, 0.2
    %v6675 = vmul.f32 %v6547, 0.2
    %v6676 = vmul.f32 %v6548, 0.2
    %v6677 = vmul.f32 %v6549, 0.2
    %v6678 = vmul.f32 %v6550, 0.2
    %v6679 = vmul.f32 %v6551, 0.2
    %v6680 = vmul.f32 %v6552, 0.2
    %v6681 = vmul.f32 %v6553, 0.2
    %v6682 = vmul.f32 %v6554, 0.2
    %v6683 = vmul.f32 %v6555, 0.2
    %v6684 = vmul.f32 %v6556, 0.2
    %v6685 = vmul.f32 %v6557, 0.2
    %v6686 = vmul.f32 %v6558, 0.2
    %v6687 = vmul.f32 %v6559, 0.2
    %v6688 = vmul.f32 %v6560, 0.2
    %v6689 = vmul.f32 %v6561, 0.2
    %v6690 = vmul.f32 %v6562, 0.2
    %v6691 = vsel %vm6563, %v6499, %v6627
    %v6692 = vsel %vm6564, %v6500, %v6628
    %v6693 = vsel %vm6565, %v6501, %v6629
    %v6694 = vsel %vm6566, %v6502, %v6630
    %v6695 = vsel %vm6567, %v6503, %v6631
    %v6696 = vsel %vm6568, %v6504, %v6632
    %v6697 = vsel %vm6569, %v6505, %v6633
    %v6698 = vsel %vm6570, %v6506, %v6634
    %v6699 = vsel %vm6571, %v6507, %v6635
    %v6700 = vsel %vm6572, %v6508, %v6636
    %v6701 = vsel %vm6573, %v6509, %v6637
    %v6702 = vsel %vm6574, %v6510, %v6638
    %v6703 = vsel %vm6575, %v6511, %v6639
    %v6704 = vsel %vm6576, %v6512, %v6640
    %v6705 = vsel %vm6577, %v6513, %v6641
    %v6706 = vsel %vm6578, %v6514, %v6642
    %v6707 = vsel %vm6579, %v6515, %v6643
    %v6708 = vsel %vm6580, %v6516, %v6644
    %v6709 = vsel %vm6581, %v6517, %v6645
    %v6710 = vsel %vm6582, %v6518, %v6646
    %v6711 = vsel %vm6583, %v6519, %v6647
    %v6712 = vsel %vm6584, %v6520, %v6648
    %v6713 = vsel %vm6585, %v6521, %v6649
    %v6714 = vsel %vm6586, %v6522, %v6650
    %v6715 = vsel %vm6587, %v6523, %v6651
    %v6716 = vsel %vm6588, %v6524, %v6652
    %v6717 = vsel %vm6589, %v6525, %v6653
    %v6718 = vsel %vm6590, %v6526, %v6654
    %v6719 = vsel %vm6591, %v6527, %v6655
    %v6720 = vsel %vm6592, %v6528, %v6656
    %v6721 = vsel %vm6593, %v6529, %v6657
    %v6722 = vsel %vm6594, %v6530, %v6658
    %v6723 = vsel %vm6595, %v6531, %v6659
    %v6724 = vsel %vm6596, %v6532, %v6660
    %v6725 = vsel %vm6597, %v6533, %v6661
    %v6726 = vsel %vm6598, %v6534, %v6662
    %v6727 = vsel %vm6599, %v6535, %v6663
    %v6728 = vsel %vm6600, %v6536, %v6664
    %v6729 = vsel %vm6601, %v6537, %v6665
    %v6730 = vsel %vm6602, %v6538, %v6666
    %v6731 = vsel %vm6603, %v6539, %v6667
    %v6732 = vsel %vm6604, %v6540, %v6668
    %v6733 = vsel %vm6605, %v6541, %v6669
    %v6734 = vsel %vm6606, %v6542, %v6670
    %v6735 = vsel %vm6607, %v6543, %v6671
    %v6736 = vsel %vm6608, %v6544, %v6672
    %v6737 = vsel %vm6609, %v6545, %v6673
    %v6738 = vsel %vm6610, %v6546, %v6674
    %v6739 = vsel %vm6611, %v6547, %v6675
    %v6740 = vsel %vm6612, %v6548, %v6676
    %v6741 = vsel %vm6613, %v6549, %v6677
    %v6742 = vsel %vm6614, %v6550, %v6678
    %v6743 = vsel %vm6615, %v6551, %v6679
    %v6744 = vsel %vm6616, %v6552, %v6680
    %v6745 = vsel %vm6617, %v6553, %v6681
    %v6746 = vsel %vm6618, %v6554, %v6682
    %v6747 = vsel %vm6619, %v6555, %v6683
    %v6748 = vsel %vm6620, %v6556, %v6684
    %v6749 = vsel %vm6621, %v6557, %v6685
    %v6750 = vsel %vm6622, %v6558, %v6686
    %v6751 = vsel %vm6623, %v6559, %v6687
    %v6752 = vsel %vm6624, %v6560, %v6688
    %v6753 = vsel %vm6625, %v6561, %v6689
    %v6754 = vsel %vm6626, %v6562, %v6690
    %v6819 = vcombine.high %v6691, %v6691
    %v6821 = vunpack.c.l.s4 1983009808
    %v6822 = vunpack.c.0.s8 %v6821
    %v6823 = vlaneseq
    %v6824 = vshrl.u32 %v6823, 7
    %v6825 = vsub.s32 %v6822, %v6824
    %v6826 = vrot.slane %v6691, %v6825
    %v6828 = vunpack.c.l.s4 1983009808
    %v6829 = vunpack.c.0.s8 %v6828
    %v6830 = vlaneseq
    %v6831 = vshrl.u32 %v6830, 7
    %v6832 = vsub.s32 %v6829, %v6831
    %v6833 = vrot.slane %v6819, %v6832
    %v6834 = vcombine.high %v6826, %v6826
    %v6835 = vcombine.high %v6833, %v6833
    %v6836 = vcombine.high %v6692, %v6692
    %v6838 = vunpack.c.l.s4 1983009808
    %v6839 = vunpack.c.0.s8 %v6838
    %v6840 = vlaneseq
    %v6841 = vshrl.u32 %v6840, 7
    %v6842 = vsub.s32 %v6839, %v6841
    %v6843 = vrot.slane %v6692, %v6842
    %v6845 = vunpack.c.l.s4 1983009808
    %v6846 = vunpack.c.0.s8 %v6845
    %v6847 = vlaneseq
    %v6848 = vshrl.u32 %v6847, 7
    %v6849 = vsub.s32 %v6846, %v6848
    %v6850 = vrot.slane %v6836, %v6849
    %v6851 = vcombine.high %v6843, %v6843
    %v6852 = vcombine.high %v6850, %v6850
    %v6853 = vcombine.high %v6693, %v6693
    %v6855 = vunpack.c.l.s4 1983009808
    %v6856 = vunpack.c.0.s8 %v6855
    %v6857 = vlaneseq
    %v6858 = vshrl.u32 %v6857, 7
    %v6859 = vsub.s32 %v6856, %v6858
    %v6860 = vrot.slane %v6693, %v6859
    %v6862 = vunpack.c.l.s4 1983009808
    %v6863 = vunpack.c.0.s8 %v6862
    %v6864 = vlaneseq
    %v6865 = vshrl.u32 %v6864, 7
    %v6866 = vsub.s32 %v6863, %v6865
    %v6867 = vrot.slane %v6853, %v6866
    %v6868 = vcombine.high %v6860, %v6860
    %v6869 = vcombine.high %v6867, %v6867
    %v6870 = vcombine.high %v6694, %v6694
    %v6872 = vunpack.c.l.s4 1983009808
    %v6873 = vunpack.c.0.s8 %v6872
    %v6874 = vlaneseq
    %v6875 = vshrl.u32 %v6874, 7
    %v6876 = vsub.s32 %v6873, %v6875
    %v6877 = vrot.slane %v6694, %v6876
    %v6879 = vunpack.c.l.s4 1983009808
    %v6880 = vunpack.c.0.s8 %v6879
    %v6881 = vlaneseq
    %v6882 = vshrl.u32 %v6881, 7
    %v6883 = vsub.s32 %v6880, %v6882
    %v6884 = vrot.slane %v6870, %v6883
    %v6885 = vcombine.high %v6877, %v6877
    %v6886 = vcombine.high %v6884, %v6884
    %v6887 = vcombine.high %v6695, %v6695
    %v6889 = vunpack.c.l.s4 1983009808
    %v6890 = vunpack.c.0.s8 %v6889
    %v6891 = vlaneseq
    %v6892 = vshrl.u32 %v6891, 7
    %v6893 = vsub.s32 %v6890, %v6892
    %v6894 = vrot.slane %v6695, %v6893
    %v6896 = vunpack.c.l.s4 1983009808
    %v6897 = vunpack.c.0.s8 %v6896
    %v6898 = vlaneseq
    %v6899 = vshrl.u32 %v6898, 7
    %v6900 = vsub.s32 %v6897, %v6899
    %v6901 = vrot.slane %v6887, %v6900
    %v6902 = vcombine.high %v6894, %v6894
    %v6903 = vcombine.high %v6901, %v6901
    %v6904 = vcombine.high %v6696, %v6696
    %v6906 = vunpack.c.l.s4 1983009808
    %v6907 = vunpack.c.0.s8 %v6906
    %v6908 = vlaneseq
    %v6909 = vshrl.u32 %v6908, 7
    %v6910 = vsub.s32 %v6907, %v6909
    %v6911 = vrot.slane %v6696, %v6910
    %v6913 = vunpack.c.l.s4 1983009808
    %v6914 = vunpack.c.0.s8 %v6913
    %v6915 = vlaneseq
    %v6916 = vshrl.u32 %v6915, 7
    %v6917 = vsub.s32 %v6914, %v6916
    %v6918 = vrot.slane %v6904, %v6917
    %v6919 = vcombine.high %v6911, %v6911
    %v6920 = vcombine.high %v6918, %v6918
    %v6921 = vcombine.high %v6697, %v6697
    %v6923 = vunpack.c.l.s4 1983009808
    %v6924 = vunpack.c.0.s8 %v6923
    %v6925 = vlaneseq
    %v6926 = vshrl.u32 %v6925, 7
    %v6927 = vsub.s32 %v6924, %v6926
    %v6928 = vrot.slane %v6697, %v6927
    %v6930 = vunpack.c.l.s4 1983009808
    %v6931 = vunpack.c.0.s8 %v6930
    %v6932 = vlaneseq
    %v6933 = vshrl.u32 %v6932, 7
    %v6934 = vsub.s32 %v6931, %v6933
    %v6935 = vrot.slane %v6921, %v6934
    %v6936 = vcombine.high %v6928, %v6928
    %v6937 = vcombine.high %v6935, %v6935
    %v6938 = vcombine.high %v6698, %v6698
    %v6940 = vunpack.c.l.s4 1983009808
    %v6941 = vunpack.c.0.s8 %v6940
    %v6942 = vlaneseq
    %v6943 = vshrl.u32 %v6942, 7
    %v6944 = vsub.s32 %v6941, %v6943
    %v6945 = vrot.slane %v6698, %v6944
    %v6947 = vunpack.c.l.s4 1983009808
    %v6948 = vunpack.c.0.s8 %v6947
    %v6949 = vlaneseq
    %v6950 = vshrl.u32 %v6949, 7
    %v6951 = vsub.s32 %v6948, %v6950
    %v6952 = vrot.slane %v6938, %v6951
    %v6953 = vcombine.high %v6945, %v6945
    %v6954 = vcombine.high %v6952, %v6952
    %v6955 = vcombine.high %v6699, %v6699
    %v6957 = vunpack.c.l.s4 1983009808
    %v6958 = vunpack.c.0.s8 %v6957
    %v6959 = vlaneseq
    %v6960 = vshrl.u32 %v6959, 7
    %v6961 = vsub.s32 %v6958, %v6960
    %v6962 = vrot.slane %v6699, %v6961
    %v6964 = vunpack.c.l.s4 1983009808
    %v6965 = vunpack.c.0.s8 %v6964
    %v6966 = vlaneseq
    %v6967 = vshrl.u32 %v6966, 7
    %v6968 = vsub.s32 %v6965, %v6967
    %v6969 = vrot.slane %v6955, %v6968
    %v6970 = vcombine.high %v6962, %v6962
    %v6971 = vcombine.high %v6969, %v6969
    %v6972 = vcombine.high %v6700, %v6700
    %v6974 = vunpack.c.l.s4 1983009808
    %v6975 = vunpack.c.0.s8 %v6974
    %v6976 = vlaneseq
    %v6977 = vshrl.u32 %v6976, 7
    %v6978 = vsub.s32 %v6975, %v6977
    %v6979 = vrot.slane %v6700, %v6978
    %v6981 = vunpack.c.l.s4 1983009808
    %v6982 = vunpack.c.0.s8 %v6981
    %v6983 = vlaneseq
    %v6984 = vshrl.u32 %v6983, 7
    %v6985 = vsub.s32 %v6982, %v6984
    %v6986 = vrot.slane %v6972, %v6985
    %v6987 = vcombine.high %v6979, %v6979
    %v6988 = vcombine.high %v6986, %v6986
    %v6989 = vcombine.high %v6701, %v6701
    %v6991 = vunpack.c.l.s4 1983009808
    %v6992 = vunpack.c.0.s8 %v6991
    %v6993 = vlaneseq
    %v6994 = vshrl.u32 %v6993, 7
    %v6995 = vsub.s32 %v6992, %v6994
    %v6996 = vrot.slane %v6701, %v6995
    %v6998 = vunpack.c.l.s4 1983009808
    %v6999 = vunpack.c.0.s8 %v6998
    %v7000 = vlaneseq
    %v7001 = vshrl.u32 %v7000, 7
    %v7002 = vsub.s32 %v6999, %v7001
    %v7003 = vrot.slane %v6989, %v7002
    %v7004 = vcombine.high %v6996, %v6996
    %v7005 = vcombine.high %v7003, %v7003
    %v7006 = vcombine.high %v6702, %v6702
    %v7008 = vunpack.c.l.s4 1983009808
    %v7009 = vunpack.c.0.s8 %v7008
    %v7010 = vlaneseq
    %v7011 = vshrl.u32 %v7010, 7
    %v7012 = vsub.s32 %v7009, %v7011
    %v7013 = vrot.slane %v6702, %v7012
    %v7015 = vunpack.c.l.s4 1983009808
    %v7016 = vunpack.c.0.s8 %v7015
    %v7017 = vlaneseq
    %v7018 = vshrl.u32 %v7017, 7
    %v7019 = vsub.s32 %v7016, %v7018
    %v7020 = vrot.slane %v7006, %v7019
    %v7021 = vcombine.high %v7013, %v7013
    %v7022 = vcombine.high %v7020, %v7020
    %v7023 = vcombine.high %v6703, %v6703
    %v7025 = vunpack.c.l.s4 1983009808
    %v7026 = vunpack.c.0.s8 %v7025
    %v7027 = vlaneseq
    %v7028 = vshrl.u32 %v7027, 7
    %v7029 = vsub.s32 %v7026, %v7028
    %v7030 = vrot.slane %v6703, %v7029
    %v7032 = vunpack.c.l.s4 1983009808
    %v7033 = vunpack.c.0.s8 %v7032
    %v7034 = vlaneseq
    %v7035 = vshrl.u32 %v7034, 7
    %v7036 = vsub.s32 %v7033, %v7035
    %v7037 = vrot.slane %v7023, %v7036
    %v7038 = vcombine.high %v7030, %v7030
    %v7039 = vcombine.high %v7037, %v7037
    %v7040 = vcombine.high %v6704, %v6704
    %v7042 = vunpack.c.l.s4 1983009808
    %v7043 = vunpack.c.0.s8 %v7042
    %v7044 = vlaneseq
    %v7045 = vshrl.u32 %v7044, 7
    %v7046 = vsub.s32 %v7043, %v7045
    %v7047 = vrot.slane %v6704, %v7046
    %v7049 = vunpack.c.l.s4 1983009808
    %v7050 = vunpack.c.0.s8 %v7049
    %v7051 = vlaneseq
    %v7052 = vshrl.u32 %v7051, 7
    %v7053 = vsub.s32 %v7050, %v7052
    %v7054 = vrot.slane %v7040, %v7053
    %v7055 = vcombine.high %v7047, %v7047
    %v7056 = vcombine.high %v7054, %v7054
    %v7057 = vcombine.high %v6705, %v6705
    %v7059 = vunpack.c.l.s4 1983009808
    %v7060 = vunpack.c.0.s8 %v7059
    %v7061 = vlaneseq
    %v7062 = vshrl.u32 %v7061, 7
    %v7063 = vsub.s32 %v7060, %v7062
    %v7064 = vrot.slane %v6705, %v7063
    %v7066 = vunpack.c.l.s4 1983009808
    %v7067 = vunpack.c.0.s8 %v7066
    %v7068 = vlaneseq
    %v7069 = vshrl.u32 %v7068, 7
    %v7070 = vsub.s32 %v7067, %v7069
    %v7071 = vrot.slane %v7057, %v7070
    %v7072 = vcombine.high %v7064, %v7064
    %v7073 = vcombine.high %v7071, %v7071
    %v7074 = vcombine.high %v6706, %v6706
    %v7076 = vunpack.c.l.s4 1983009808
    %v7077 = vunpack.c.0.s8 %v7076
    %v7078 = vlaneseq
    %v7079 = vshrl.u32 %v7078, 7
    %v7080 = vsub.s32 %v7077, %v7079
    %v7081 = vrot.slane %v6706, %v7080
    %v7083 = vunpack.c.l.s4 1983009808
    %v7084 = vunpack.c.0.s8 %v7083
    %v7085 = vlaneseq
    %v7086 = vshrl.u32 %v7085, 7
    %v7087 = vsub.s32 %v7084, %v7086
    %v7088 = vrot.slane %v7074, %v7087
    %v7089 = vcombine.high %v7081, %v7081
    %v7090 = vcombine.high %v7088, %v7088
    %v7091 = vcombine.high %v6707, %v6707
    %v7093 = vunpack.c.l.s4 1983009808
    %v7094 = vunpack.c.0.s8 %v7093
    %v7095 = vlaneseq
    %v7096 = vshrl.u32 %v7095, 7
    %v7097 = vsub.s32 %v7094, %v7096
    %v7098 = vrot.slane %v6707, %v7097
    %v7100 = vunpack.c.l.s4 1983009808
    %v7101 = vunpack.c.0.s8 %v7100
    %v7102 = vlaneseq
    %v7103 = vshrl.u32 %v7102, 7
    %v7104 = vsub.s32 %v7101, %v7103
    %v7105 = vrot.slane %v7091, %v7104
    %v7106 = vcombine.high %v7098, %v7098
    %v7107 = vcombine.high %v7105, %v7105
    %v7108 = vcombine.high %v6708, %v6708
    %v7110 = vunpack.c.l.s4 1983009808
    %v7111 = vunpack.c.0.s8 %v7110
    %v7112 = vlaneseq
    %v7113 = vshrl.u32 %v7112, 7
    %v7114 = vsub.s32 %v7111, %v7113
    %v7115 = vrot.slane %v6708, %v7114
    %v7117 = vunpack.c.l.s4 1983009808
    %v7118 = vunpack.c.0.s8 %v7117
    %v7119 = vlaneseq
    %v7120 = vshrl.u32 %v7119, 7
    %v7121 = vsub.s32 %v7118, %v7120
    %v7122 = vrot.slane %v7108, %v7121
    %v7123 = vcombine.high %v7115, %v7115
    %v7124 = vcombine.high %v7122, %v7122
    %v7125 = vcombine.high %v6709, %v6709
    %v7127 = vunpack.c.l.s4 1983009808
    %v7128 = vunpack.c.0.s8 %v7127
    %v7129 = vlaneseq
    %v7130 = vshrl.u32 %v7129, 7
    %v7131 = vsub.s32 %v7128, %v7130
    %v7132 = vrot.slane %v6709, %v7131
    %v7134 = vunpack.c.l.s4 1983009808
    %v7135 = vunpack.c.0.s8 %v7134
    %v7136 = vlaneseq
    %v7137 = vshrl.u32 %v7136, 7
    %v7138 = vsub.s32 %v7135, %v7137
    %v7139 = vrot.slane %v7125, %v7138
    %v7140 = vcombine.high %v7132, %v7132
    %v7141 = vcombine.high %v7139, %v7139
    %v7142 = vcombine.high %v6710, %v6710
    %v7144 = vunpack.c.l.s4 1983009808
    %v7145 = vunpack.c.0.s8 %v7144
    %v7146 = vlaneseq
    %v7147 = vshrl.u32 %v7146, 7
    %v7148 = vsub.s32 %v7145, %v7147
    %v7149 = vrot.slane %v6710, %v7148
    %v7151 = vunpack.c.l.s4 1983009808
    %v7152 = vunpack.c.0.s8 %v7151
    %v7153 = vlaneseq
    %v7154 = vshrl.u32 %v7153, 7
    %v7155 = vsub.s32 %v7152, %v7154
    %v7156 = vrot.slane %v7142, %v7155
    %v7157 = vcombine.high %v7149, %v7149
    %v7158 = vcombine.high %v7156, %v7156
    %v7159 = vcombine.high %v6711, %v6711
    %v7161 = vunpack.c.l.s4 1983009808
    %v7162 = vunpack.c.0.s8 %v7161
    %v7163 = vlaneseq
    %v7164 = vshrl.u32 %v7163, 7
    %v7165 = vsub.s32 %v7162, %v7164
    %v7166 = vrot.slane %v6711, %v7165
    %v7168 = vunpack.c.l.s4 1983009808
    %v7169 = vunpack.c.0.s8 %v7168
    %v7170 = vlaneseq
    %v7171 = vshrl.u32 %v7170, 7
    %v7172 = vsub.s32 %v7169, %v7171
    %v7173 = vrot.slane %v7159, %v7172
    %v7174 = vcombine.high %v7166, %v7166
    %v7175 = vcombine.high %v7173, %v7173
    %v7176 = vcombine.high %v6712, %v6712
    %v7178 = vunpack.c.l.s4 1983009808
    %v7179 = vunpack.c.0.s8 %v7178
    %v7180 = vlaneseq
    %v7181 = vshrl.u32 %v7180, 7
    %v7182 = vsub.s32 %v7179, %v7181
    %v7183 = vrot.slane %v6712, %v7182
    %v7185 = vunpack.c.l.s4 1983009808
    %v7186 = vunpack.c.0.s8 %v7185
    %v7187 = vlaneseq
    %v7188 = vshrl.u32 %v7187, 7
    %v7189 = vsub.s32 %v7186, %v7188
    %v7190 = vrot.slane %v7176, %v7189
    %v7191 = vcombine.high %v7183, %v7183
    %v7192 = vcombine.high %v7190, %v7190
    %v7193 = vcombine.high %v6713, %v6713
    %v7195 = vunpack.c.l.s4 1983009808
    %v7196 = vunpack.c.0.s8 %v7195
    %v7197 = vlaneseq
    %v7198 = vshrl.u32 %v7197, 7
    %v7199 = vsub.s32 %v7196, %v7198
    %v7200 = vrot.slane %v6713, %v7199
    %v7202 = vunpack.c.l.s4 1983009808
    %v7203 = vunpack.c.0.s8 %v7202
    %v7204 = vlaneseq
    %v7205 = vshrl.u32 %v7204, 7
    %v7206 = vsub.s32 %v7203, %v7205
    %v7207 = vrot.slane %v7193, %v7206
    %v7208 = vcombine.high %v7200, %v7200
    %v7209 = vcombine.high %v7207, %v7207
    %v7210 = vcombine.high %v6714, %v6714
    %v7212 = vunpack.c.l.s4 1983009808
    %v7213 = vunpack.c.0.s8 %v7212
    %v7214 = vlaneseq
    %v7215 = vshrl.u32 %v7214, 7
    %v7216 = vsub.s32 %v7213, %v7215
    %v7217 = vrot.slane %v6714, %v7216
    %v7219 = vunpack.c.l.s4 1983009808
    %v7220 = vunpack.c.0.s8 %v7219
    %v7221 = vlaneseq
    %v7222 = vshrl.u32 %v7221, 7
    %v7223 = vsub.s32 %v7220, %v7222
    %v7224 = vrot.slane %v7210, %v7223
    %v7225 = vcombine.high %v7217, %v7217
    %v7226 = vcombine.high %v7224, %v7224
    %v7227 = vcombine.high %v6715, %v6715
    %v7229 = vunpack.c.l.s4 1983009808
    %v7230 = vunpack.c.0.s8 %v7229
    %v7231 = vlaneseq
    %v7232 = vshrl.u32 %v7231, 7
    %v7233 = vsub.s32 %v7230, %v7232
    %v7234 = vrot.slane %v6715, %v7233
    %v7236 = vunpack.c.l.s4 1983009808
    %v7237 = vunpack.c.0.s8 %v7236
    %v7238 = vlaneseq
    %v7239 = vshrl.u32 %v7238, 7
    %v7240 = vsub.s32 %v7237, %v7239
    %v7241 = vrot.slane %v7227, %v7240
    %v7242 = vcombine.high %v7234, %v7234
    %v7243 = vcombine.high %v7241, %v7241
    %v7244 = vcombine.high %v6716, %v6716
    %v7246 = vunpack.c.l.s4 1983009808
    %v7247 = vunpack.c.0.s8 %v7246
    %v7248 = vlaneseq
    %v7249 = vshrl.u32 %v7248, 7
    %v7250 = vsub.s32 %v7247, %v7249
    %v7251 = vrot.slane %v6716, %v7250
    %v7253 = vunpack.c.l.s4 1983009808
    %v7254 = vunpack.c.0.s8 %v7253
    %v7255 = vlaneseq
    %v7256 = vshrl.u32 %v7255, 7
    %v7257 = vsub.s32 %v7254, %v7256
    %v7258 = vrot.slane %v7244, %v7257
    %v7259 = vcombine.high %v7251, %v7251
    %v7260 = vcombine.high %v7258, %v7258
    %v7261 = vcombine.high %v6717, %v6717
    %v7263 = vunpack.c.l.s4 1983009808
    %v7264 = vunpack.c.0.s8 %v7263
    %v7265 = vlaneseq
    %v7266 = vshrl.u32 %v7265, 7
    %v7267 = vsub.s32 %v7264, %v7266
    %v7268 = vrot.slane %v6717, %v7267
    %v7270 = vunpack.c.l.s4 1983009808
    %v7271 = vunpack.c.0.s8 %v7270
    %v7272 = vlaneseq
    %v7273 = vshrl.u32 %v7272, 7
    %v7274 = vsub.s32 %v7271, %v7273
    %v7275 = vrot.slane %v7261, %v7274
    %v7276 = vcombine.high %v7268, %v7268
    %v7277 = vcombine.high %v7275, %v7275
    %v7278 = vcombine.high %v6718, %v6718
    %v7280 = vunpack.c.l.s4 1983009808
    %v7281 = vunpack.c.0.s8 %v7280
    %v7282 = vlaneseq
    %v7283 = vshrl.u32 %v7282, 7
    %v7284 = vsub.s32 %v7281, %v7283
    %v7285 = vrot.slane %v6718, %v7284
    %v7287 = vunpack.c.l.s4 1983009808
    %v7288 = vunpack.c.0.s8 %v7287
    %v7289 = vlaneseq
    %v7290 = vshrl.u32 %v7289, 7
    %v7291 = vsub.s32 %v7288, %v7290
    %v7292 = vrot.slane %v7278, %v7291
    %v7293 = vcombine.high %v7285, %v7285
    %v7294 = vcombine.high %v7292, %v7292
    %v7295 = vcombine.high %v6719, %v6719
    %v7297 = vunpack.c.l.s4 1983009808
    %v7298 = vunpack.c.0.s8 %v7297
    %v7299 = vlaneseq
    %v7300 = vshrl.u32 %v7299, 7
    %v7301 = vsub.s32 %v7298, %v7300
    %v7302 = vrot.slane %v6719, %v7301
    %v7304 = vunpack.c.l.s4 1983009808
    %v7305 = vunpack.c.0.s8 %v7304
    %v7306 = vlaneseq
    %v7307 = vshrl.u32 %v7306, 7
    %v7308 = vsub.s32 %v7305, %v7307
    %v7309 = vrot.slane %v7295, %v7308
    %v7310 = vcombine.high %v7302, %v7302
    %v7311 = vcombine.high %v7309, %v7309
    %v7312 = vcombine.high %v6720, %v6720
    %v7314 = vunpack.c.l.s4 1983009808
    %v7315 = vunpack.c.0.s8 %v7314
    %v7316 = vlaneseq
    %v7317 = vshrl.u32 %v7316, 7
    %v7318 = vsub.s32 %v7315, %v7317
    %v7319 = vrot.slane %v6720, %v7318
    %v7321 = vunpack.c.l.s4 1983009808
    %v7322 = vunpack.c.0.s8 %v7321
    %v7323 = vlaneseq
    %v7324 = vshrl.u32 %v7323, 7
    %v7325 = vsub.s32 %v7322, %v7324
    %v7326 = vrot.slane %v7312, %v7325
    %v7327 = vcombine.high %v7319, %v7319
    %v7328 = vcombine.high %v7326, %v7326
    %v7329 = vcombine.high %v6721, %v6721
    %v7331 = vunpack.c.l.s4 1983009808
    %v7332 = vunpack.c.0.s8 %v7331
    %v7333 = vlaneseq
    %v7334 = vshrl.u32 %v7333, 7
    %v7335 = vsub.s32 %v7332, %v7334
    %v7336 = vrot.slane %v6721, %v7335
    %v7338 = vunpack.c.l.s4 1983009808
    %v7339 = vunpack.c.0.s8 %v7338
    %v7340 = vlaneseq
    %v7341 = vshrl.u32 %v7340, 7
    %v7342 = vsub.s32 %v7339, %v7341
    %v7343 = vrot.slane %v7329, %v7342
    %v7344 = vcombine.high %v7336, %v7336
    %v7345 = vcombine.high %v7343, %v7343
    %v7346 = vcombine.high %v6722, %v6722
    %v7348 = vunpack.c.l.s4 1983009808
    %v7349 = vunpack.c.0.s8 %v7348
    %v7350 = vlaneseq
    %v7351 = vshrl.u32 %v7350, 7
    %v7352 = vsub.s32 %v7349, %v7351
    %v7353 = vrot.slane %v6722, %v7352
    %v7355 = vunpack.c.l.s4 1983009808
    %v7356 = vunpack.c.0.s8 %v7355
    %v7357 = vlaneseq
    %v7358 = vshrl.u32 %v7357, 7
    %v7359 = vsub.s32 %v7356, %v7358
    %v7360 = vrot.slane %v7346, %v7359
    %v7361 = vcombine.high %v7353, %v7353
    %v7362 = vcombine.high %v7360, %v7360
    %v7363 = vcombine.high %v6723, %v6723
    %v7365 = vunpack.c.l.s4 1983009808
    %v7366 = vunpack.c.0.s8 %v7365
    %v7367 = vlaneseq
    %v7368 = vshrl.u32 %v7367, 7
    %v7369 = vsub.s32 %v7366, %v7368
    %v7370 = vrot.slane %v6723, %v7369
    %v7372 = vunpack.c.l.s4 1983009808
    %v7373 = vunpack.c.0.s8 %v7372
    %v7374 = vlaneseq
    %v7375 = vshrl.u32 %v7374, 7
    %v7376 = vsub.s32 %v7373, %v7375
    %v7377 = vrot.slane %v7363, %v7376
    %v7378 = vcombine.high %v7370, %v7370
    %v7379 = vcombine.high %v7377, %v7377
    %v7380 = vcombine.high %v6724, %v6724
    %v7382 = vunpack.c.l.s4 1983009808
    %v7383 = vunpack.c.0.s8 %v7382
    %v7384 = vlaneseq
    %v7385 = vshrl.u32 %v7384, 7
    %v7386 = vsub.s32 %v7383, %v7385
    %v7387 = vrot.slane %v6724, %v7386
    %v7389 = vunpack.c.l.s4 1983009808
    %v7390 = vunpack.c.0.s8 %v7389
    %v7391 = vlaneseq
    %v7392 = vshrl.u32 %v7391, 7
    %v7393 = vsub.s32 %v7390, %v7392
    %v7394 = vrot.slane %v7380, %v7393
    %v7395 = vcombine.high %v7387, %v7387
    %v7396 = vcombine.high %v7394, %v7394
    %v7397 = vcombine.high %v6725, %v6725
    %v7399 = vunpack.c.l.s4 1983009808
    %v7400 = vunpack.c.0.s8 %v7399
    %v7401 = vlaneseq
    %v7402 = vshrl.u32 %v7401, 7
    %v7403 = vsub.s32 %v7400, %v7402
    %v7404 = vrot.slane %v6725, %v7403
    %v7406 = vunpack.c.l.s4 1983009808
    %v7407 = vunpack.c.0.s8 %v7406
    %v7408 = vlaneseq
    %v7409 = vshrl.u32 %v7408, 7
    %v7410 = vsub.s32 %v7407, %v7409
    %v7411 = vrot.slane %v7397, %v7410
    %v7412 = vcombine.high %v7404, %v7404
    %v7413 = vcombine.high %v7411, %v7411
    %v7414 = vcombine.high %v6726, %v6726
    %v7416 = vunpack.c.l.s4 1983009808
    %v7417 = vunpack.c.0.s8 %v7416
    %v7418 = vlaneseq
    %v7419 = vshrl.u32 %v7418, 7
    %v7420 = vsub.s32 %v7417, %v7419
    %v7421 = vrot.slane %v6726, %v7420
    %v7423 = vunpack.c.l.s4 1983009808
    %v7424 = vunpack.c.0.s8 %v7423
    %v7425 = vlaneseq
    %v7426 = vshrl.u32 %v7425, 7
    %v7427 = vsub.s32 %v7424, %v7426
    %v7428 = vrot.slane %v7414, %v7427
    %v7429 = vcombine.high %v7421, %v7421
    %v7430 = vcombine.high %v7428, %v7428
    %v7431 = vcombine.high %v6727, %v6727
    %v7433 = vunpack.c.l.s4 1983009808
    %v7434 = vunpack.c.0.s8 %v7433
    %v7435 = vlaneseq
    %v7436 = vshrl.u32 %v7435, 7
    %v7437 = vsub.s32 %v7434, %v7436
    %v7438 = vrot.slane %v6727, %v7437
    %v7440 = vunpack.c.l.s4 1983009808
    %v7441 = vunpack.c.0.s8 %v7440
    %v7442 = vlaneseq
    %v7443 = vshrl.u32 %v7442, 7
    %v7444 = vsub.s32 %v7441, %v7443
    %v7445 = vrot.slane %v7431, %v7444
    %v7446 = vcombine.high %v7438, %v7438
    %v7447 = vcombine.high %v7445, %v7445
    %v7448 = vcombine.high %v6728, %v6728
    %v7450 = vunpack.c.l.s4 1983009808
    %v7451 = vunpack.c.0.s8 %v7450
    %v7452 = vlaneseq
    %v7453 = vshrl.u32 %v7452, 7
    %v7454 = vsub.s32 %v7451, %v7453
    %v7455 = vrot.slane %v6728, %v7454
    %v7457 = vunpack.c.l.s4 1983009808
    %v7458 = vunpack.c.0.s8 %v7457
    %v7459 = vlaneseq
    %v7460 = vshrl.u32 %v7459, 7
    %v7461 = vsub.s32 %v7458, %v7460
    %v7462 = vrot.slane %v7448, %v7461
    %v7463 = vcombine.high %v7455, %v7455
    %v7464 = vcombine.high %v7462, %v7462
    %v7465 = vcombine.high %v6729, %v6729
    %v7467 = vunpack.c.l.s4 1983009808
    %v7468 = vunpack.c.0.s8 %v7467
    %v7469 = vlaneseq
    %v7470 = vshrl.u32 %v7469, 7
    %v7471 = vsub.s32 %v7468, %v7470
    %v7472 = vrot.slane %v6729, %v7471
    %v7474 = vunpack.c.l.s4 1983009808
    %v7475 = vunpack.c.0.s8 %v7474
    %v7476 = vlaneseq
    %v7477 = vshrl.u32 %v7476, 7
    %v7478 = vsub.s32 %v7475, %v7477
    %v7479 = vrot.slane %v7465, %v7478
    %v7480 = vcombine.high %v7472, %v7472
    %v7481 = vcombine.high %v7479, %v7479
    %v7482 = vcombine.high %v6730, %v6730
    %v7484 = vunpack.c.l.s4 1983009808
    %v7485 = vunpack.c.0.s8 %v7484
    %v7486 = vlaneseq
    %v7487 = vshrl.u32 %v7486, 7
    %v7488 = vsub.s32 %v7485, %v7487
    %v7489 = vrot.slane %v6730, %v7488
    %v7491 = vunpack.c.l.s4 1983009808
    %v7492 = vunpack.c.0.s8 %v7491
    %v7493 = vlaneseq
    %v7494 = vshrl.u32 %v7493, 7
    %v7495 = vsub.s32 %v7492, %v7494
    %v7496 = vrot.slane %v7482, %v7495
    %v7497 = vcombine.high %v7489, %v7489
    %v7498 = vcombine.high %v7496, %v7496
    %v7499 = vcombine.high %v6731, %v6731
    %v7501 = vunpack.c.l.s4 1983009808
    %v7502 = vunpack.c.0.s8 %v7501
    %v7503 = vlaneseq
    %v7504 = vshrl.u32 %v7503, 7
    %v7505 = vsub.s32 %v7502, %v7504
    %v7506 = vrot.slane %v6731, %v7505
    %v7508 = vunpack.c.l.s4 1983009808
    %v7509 = vunpack.c.0.s8 %v7508
    %v7510 = vlaneseq
    %v7511 = vshrl.u32 %v7510, 7
    %v7512 = vsub.s32 %v7509, %v7511
    %v7513 = vrot.slane %v7499, %v7512
    %v7514 = vcombine.high %v7506, %v7506
    %v7515 = vcombine.high %v7513, %v7513
    %v7516 = vcombine.high %v6732, %v6732
    %v7518 = vunpack.c.l.s4 1983009808
    %v7519 = vunpack.c.0.s8 %v7518
    %v7520 = vlaneseq
    %v7521 = vshrl.u32 %v7520, 7
    %v7522 = vsub.s32 %v7519, %v7521
    %v7523 = vrot.slane %v6732, %v7522
    %v7525 = vunpack.c.l.s4 1983009808
    %v7526 = vunpack.c.0.s8 %v7525
    %v7527 = vlaneseq
    %v7528 = vshrl.u32 %v7527, 7
    %v7529 = vsub.s32 %v7526, %v7528
    %v7530 = vrot.slane %v7516, %v7529
    %v7531 = vcombine.high %v7523, %v7523
    %v7532 = vcombine.high %v7530, %v7530
    %v7533 = vcombine.high %v6733, %v6733
    %v7535 = vunpack.c.l.s4 1983009808
    %v7536 = vunpack.c.0.s8 %v7535
    %v7537 = vlaneseq
    %v7538 = vshrl.u32 %v7537, 7
    %v7539 = vsub.s32 %v7536, %v7538
    %v7540 = vrot.slane %v6733, %v7539
    %v7542 = vunpack.c.l.s4 1983009808
    %v7543 = vunpack.c.0.s8 %v7542
    %v7544 = vlaneseq
    %v7545 = vshrl.u32 %v7544, 7
    %v7546 = vsub.s32 %v7543, %v7545
    %v7547 = vrot.slane %v7533, %v7546
    %v7548 = vcombine.high %v7540, %v7540
    %v7549 = vcombine.high %v7547, %v7547
    %v7550 = vcombine.high %v6734, %v6734
    %v7552 = vunpack.c.l.s4 1983009808
    %v7553 = vunpack.c.0.s8 %v7552
    %v7554 = vlaneseq
    %v7555 = vshrl.u32 %v7554, 7
    %v7556 = vsub.s32 %v7553, %v7555
    %v7557 = vrot.slane %v6734, %v7556
    %v7559 = vunpack.c.l.s4 1983009808
    %v7560 = vunpack.c.0.s8 %v7559
    %v7561 = vlaneseq
    %v7562 = vshrl.u32 %v7561, 7
    %v7563 = vsub.s32 %v7560, %v7562
    %v7564 = vrot.slane %v7550, %v7563
    %v7565 = vcombine.high %v7557, %v7557
    %v7566 = vcombine.high %v7564, %v7564
    %v7567 = vcombine.high %v6735, %v6735
    %v7569 = vunpack.c.l.s4 1983009808
    %v7570 = vunpack.c.0.s8 %v7569
    %v7571 = vlaneseq
    %v7572 = vshrl.u32 %v7571, 7
    %v7573 = vsub.s32 %v7570, %v7572
    %v7574 = vrot.slane %v6735, %v7573
    %v7576 = vunpack.c.l.s4 1983009808
    %v7577 = vunpack.c.0.s8 %v7576
    %v7578 = vlaneseq
    %v7579 = vshrl.u32 %v7578, 7
    %v7580 = vsub.s32 %v7577, %v7579
    %v7581 = vrot.slane %v7567, %v7580
    %v7582 = vcombine.high %v7574, %v7574
    %v7583 = vcombine.high %v7581, %v7581
    %v7584 = vcombine.high %v6736, %v6736
    %v7586 = vunpack.c.l.s4 1983009808
    %v7587 = vunpack.c.0.s8 %v7586
    %v7588 = vlaneseq
    %v7589 = vshrl.u32 %v7588, 7
    %v7590 = vsub.s32 %v7587, %v7589
    %v7591 = vrot.slane %v6736, %v7590
    %v7593 = vunpack.c.l.s4 1983009808
    %v7594 = vunpack.c.0.s8 %v7593
    %v7595 = vlaneseq
    %v7596 = vshrl.u32 %v7595, 7
    %v7597 = vsub.s32 %v7594, %v7596
    %v7598 = vrot.slane %v7584, %v7597
    %v7599 = vcombine.high %v7591, %v7591
    %v7600 = vcombine.high %v7598, %v7598
    %v7601 = vcombine.high %v6737, %v6737
    %v7603 = vunpack.c.l.s4 1983009808
    %v7604 = vunpack.c.0.s8 %v7603
    %v7605 = vlaneseq
    %v7606 = vshrl.u32 %v7605, 7
    %v7607 = vsub.s32 %v7604, %v7606
    %v7608 = vrot.slane %v6737, %v7607
    %v7610 = vunpack.c.l.s4 1983009808
    %v7611 = vunpack.c.0.s8 %v7610
    %v7612 = vlaneseq
    %v7613 = vshrl.u32 %v7612, 7
    %v7614 = vsub.s32 %v7611, %v7613
    %v7615 = vrot.slane %v7601, %v7614
    %v7616 = vcombine.high %v7608, %v7608
    %v7617 = vcombine.high %v7615, %v7615
    %v7618 = vcombine.high %v6738, %v6738
    %v7620 = vunpack.c.l.s4 1983009808
    %v7621 = vunpack.c.0.s8 %v7620
    %v7622 = vlaneseq
    %v7623 = vshrl.u32 %v7622, 7
    %v7624 = vsub.s32 %v7621, %v7623
    %v7625 = vrot.slane %v6738, %v7624
    %v7627 = vunpack.c.l.s4 1983009808
    %v7628 = vunpack.c.0.s8 %v7627
    %v7629 = vlaneseq
    %v7630 = vshrl.u32 %v7629, 7
    %v7631 = vsub.s32 %v7628, %v7630
    %v7632 = vrot.slane %v7618, %v7631
    %v7633 = vcombine.high %v7625, %v7625
    %v7634 = vcombine.high %v7632, %v7632
    %v7635 = vcombine.high %v6739, %v6739
    %v7637 = vunpack.c.l.s4 1983009808
    %v7638 = vunpack.c.0.s8 %v7637
    %v7639 = vlaneseq
    %v7640 = vshrl.u32 %v7639, 7
    %v7641 = vsub.s32 %v7638, %v7640
    %v7642 = vrot.slane %v6739, %v7641
    %v7644 = vunpack.c.l.s4 1983009808
    %v7645 = vunpack.c.0.s8 %v7644
    %v7646 = vlaneseq
    %v7647 = vshrl.u32 %v7646, 7
    %v7648 = vsub.s32 %v7645, %v7647
    %v7649 = vrot.slane %v7635, %v7648
    %v7650 = vcombine.high %v7642, %v7642
    %v7651 = vcombine.high %v7649, %v7649
    %v7652 = vcombine.high %v6740, %v6740
    %v7654 = vunpack.c.l.s4 1983009808
    %v7655 = vunpack.c.0.s8 %v7654
    %v7656 = vlaneseq
    %v7657 = vshrl.u32 %v7656, 7
    %v7658 = vsub.s32 %v7655, %v7657
    %v7659 = vrot.slane %v6740, %v7658
    %v7661 = vunpack.c.l.s4 1983009808
    %v7662 = vunpack.c.0.s8 %v7661
    %v7663 = vlaneseq
    %v7664 = vshrl.u32 %v7663, 7
    %v7665 = vsub.s32 %v7662, %v7664
    %v7666 = vrot.slane %v7652, %v7665
    %v7667 = vcombine.high %v7659, %v7659
    %v7668 = vcombine.high %v7666, %v7666
    %v7669 = vcombine.high %v6741, %v6741
    %v7671 = vunpack.c.l.s4 1983009808
    %v7672 = vunpack.c.0.s8 %v7671
    %v7673 = vlaneseq
    %v7674 = vshrl.u32 %v7673, 7
    %v7675 = vsub.s32 %v7672, %v7674
    %v7676 = vrot.slane %v6741, %v7675
    %v7678 = vunpack.c.l.s4 1983009808
    %v7679 = vunpack.c.0.s8 %v7678
    %v7680 = vlaneseq
    %v7681 = vshrl.u32 %v7680, 7
    %v7682 = vsub.s32 %v7679, %v7681
    %v7683 = vrot.slane %v7669, %v7682
    %v7684 = vcombine.high %v7676, %v7676
    %v7685 = vcombine.high %v7683, %v7683
    %v7686 = vcombine.high %v6742, %v6742
    %v7688 = vunpack.c.l.s4 1983009808
    %v7689 = vunpack.c.0.s8 %v7688
    %v7690 = vlaneseq
    %v7691 = vshrl.u32 %v7690, 7
    %v7692 = vsub.s32 %v7689, %v7691
    %v7693 = vrot.slane %v6742, %v7692
    %v7695 = vunpack.c.l.s4 1983009808
    %v7696 = vunpack.c.0.s8 %v7695
    %v7697 = vlaneseq
    %v7698 = vshrl.u32 %v7697, 7
    %v7699 = vsub.s32 %v7696, %v7698
    %v7700 = vrot.slane %v7686, %v7699
    %v7701 = vcombine.high %v7693, %v7693
    %v7702 = vcombine.high %v7700, %v7700
    %v7703 = vcombine.high %v6743, %v6743
    %v7705 = vunpack.c.l.s4 1983009808
    %v7706 = vunpack.c.0.s8 %v7705
    %v7707 = vlaneseq
    %v7708 = vshrl.u32 %v7707, 7
    %v7709 = vsub.s32 %v7706, %v7708
    %v7710 = vrot.slane %v6743, %v7709
    %v7712 = vunpack.c.l.s4 1983009808
    %v7713 = vunpack.c.0.s8 %v7712
    %v7714 = vlaneseq
    %v7715 = vshrl.u32 %v7714, 7
    %v7716 = vsub.s32 %v7713, %v7715
    %v7717 = vrot.slane %v7703, %v7716
    %v7718 = vcombine.high %v7710, %v7710
    %v7719 = vcombine.high %v7717, %v7717
    %v7720 = vcombine.high %v6744, %v6744
    %v7722 = vunpack.c.l.s4 1983009808
    %v7723 = vunpack.c.0.s8 %v7722
    %v7724 = vlaneseq
    %v7725 = vshrl.u32 %v7724, 7
    %v7726 = vsub.s32 %v7723, %v7725
    %v7727 = vrot.slane %v6744, %v7726
    %v7729 = vunpack.c.l.s4 1983009808
    %v7730 = vunpack.c.0.s8 %v7729
    %v7731 = vlaneseq
    %v7732 = vshrl.u32 %v7731, 7
    %v7733 = vsub.s32 %v7730, %v7732
    %v7734 = vrot.slane %v7720, %v7733
    %v7735 = vcombine.high %v7727, %v7727
    %v7736 = vcombine.high %v7734, %v7734
    %v7737 = vcombine.high %v6745, %v6745
    %v7739 = vunpack.c.l.s4 1983009808
    %v7740 = vunpack.c.0.s8 %v7739
    %v7741 = vlaneseq
    %v7742 = vshrl.u32 %v7741, 7
    %v7743 = vsub.s32 %v7740, %v7742
    %v7744 = vrot.slane %v6745, %v7743
    %v7746 = vunpack.c.l.s4 1983009808
    %v7747 = vunpack.c.0.s8 %v7746
    %v7748 = vlaneseq
    %v7749 = vshrl.u32 %v7748, 7
    %v7750 = vsub.s32 %v7747, %v7749
    %v7751 = vrot.slane %v7737, %v7750
    %v7752 = vcombine.high %v7744, %v7744
    %v7753 = vcombine.high %v7751, %v7751
    %v7754 = vcombine.high %v6746, %v6746
    %v7756 = vunpack.c.l.s4 1983009808
    %v7757 = vunpack.c.0.s8 %v7756
    %v7758 = vlaneseq
    %v7759 = vshrl.u32 %v7758, 7
    %v7760 = vsub.s32 %v7757, %v7759
    %v7761 = vrot.slane %v6746, %v7760
    %v7763 = vunpack.c.l.s4 1983009808
    %v7764 = vunpack.c.0.s8 %v7763
    %v7765 = vlaneseq
    %v7766 = vshrl.u32 %v7765, 7
    %v7767 = vsub.s32 %v7764, %v7766
    %v7768 = vrot.slane %v7754, %v7767
    %v7769 = vcombine.high %v7761, %v7761
    %v7770 = vcombine.high %v7768, %v7768
    %v7771 = vcombine.high %v6747, %v6747
    %v7773 = vunpack.c.l.s4 1983009808
    %v7774 = vunpack.c.0.s8 %v7773
    %v7775 = vlaneseq
    %v7776 = vshrl.u32 %v7775, 7
    %v7777 = vsub.s32 %v7774, %v7776
    %v7778 = vrot.slane %v6747, %v7777
    %v7780 = vunpack.c.l.s4 1983009808
    %v7781 = vunpack.c.0.s8 %v7780
    %v7782 = vlaneseq
    %v7783 = vshrl.u32 %v7782, 7
    %v7784 = vsub.s32 %v7781, %v7783
    %v7785 = vrot.slane %v7771, %v7784
    %v7786 = vcombine.high %v7778, %v7778
    %v7787 = vcombine.high %v7785, %v7785
    %v7788 = vcombine.high %v6748, %v6748
    %v7790 = vunpack.c.l.s4 1983009808
    %v7791 = vunpack.c.0.s8 %v7790
    %v7792 = vlaneseq
    %v7793 = vshrl.u32 %v7792, 7
    %v7794 = vsub.s32 %v7791, %v7793
    %v7795 = vrot.slane %v6748, %v7794
    %v7797 = vunpack.c.l.s4 1983009808
    %v7798 = vunpack.c.0.s8 %v7797
    %v7799 = vlaneseq
    %v7800 = vshrl.u32 %v7799, 7
    %v7801 = vsub.s32 %v7798, %v7800
    %v7802 = vrot.slane %v7788, %v7801
    %v7803 = vcombine.high %v7795, %v7795
    %v7804 = vcombine.high %v7802, %v7802
    %v7805 = vcombine.high %v6749, %v6749
    %v7807 = vunpack.c.l.s4 1983009808
    %v7808 = vunpack.c.0.s8 %v7807
    %v7809 = vlaneseq
    %v7810 = vshrl.u32 %v7809, 7
    %v7811 = vsub.s32 %v7808, %v7810
    %v7812 = vrot.slane %v6749, %v7811
    %v7814 = vunpack.c.l.s4 1983009808
    %v7815 = vunpack.c.0.s8 %v7814
    %v7816 = vlaneseq
    %v7817 = vshrl.u32 %v7816, 7
    %v7818 = vsub.s32 %v7815, %v7817
    %v7819 = vrot.slane %v7805, %v7818
    %v7820 = vcombine.high %v7812, %v7812
    %v7821 = vcombine.high %v7819, %v7819
    %v7822 = vcombine.high %v6750, %v6750
    %v7824 = vunpack.c.l.s4 1983009808
    %v7825 = vunpack.c.0.s8 %v7824
    %v7826 = vlaneseq
    %v7827 = vshrl.u32 %v7826, 7
    %v7828 = vsub.s32 %v7825, %v7827
    %v7829 = vrot.slane %v6750, %v7828
    %v7831 = vunpack.c.l.s4 1983009808
    %v7832 = vunpack.c.0.s8 %v7831
    %v7833 = vlaneseq
    %v7834 = vshrl.u32 %v7833, 7
    %v7835 = vsub.s32 %v7832, %v7834
    %v7836 = vrot.slane %v7822, %v7835
    %v7837 = vcombine.high %v7829, %v7829
    %v7838 = vcombine.high %v7836, %v7836
    %v7839 = vcombine.high %v6751, %v6751
    %v7841 = vunpack.c.l.s4 1983009808
    %v7842 = vunpack.c.0.s8 %v7841
    %v7843 = vlaneseq
    %v7844 = vshrl.u32 %v7843, 7
    %v7845 = vsub.s32 %v7842, %v7844
    %v7846 = vrot.slane %v6751, %v7845
    %v7848 = vunpack.c.l.s4 1983009808
    %v7849 = vunpack.c.0.s8 %v7848
    %v7850 = vlaneseq
    %v7851 = vshrl.u32 %v7850, 7
    %v7852 = vsub.s32 %v7849, %v7851
    %v7853 = vrot.slane %v7839, %v7852
    %v7854 = vcombine.high %v7846, %v7846
    %v7855 = vcombine.high %v7853, %v7853
    %v7856 = vcombine.high %v6752, %v6752
    %v7858 = vunpack.c.l.s4 1983009808
    %v7859 = vunpack.c.0.s8 %v7858
    %v7860 = vlaneseq
    %v7861 = vshrl.u32 %v7860, 7
    %v7862 = vsub.s32 %v7859, %v7861
    %v7863 = vrot.slane %v6752, %v7862
    %v7865 = vunpack.c.l.s4 1983009808
    %v7866 = vunpack.c.0.s8 %v7865
    %v7867 = vlaneseq
    %v7868 = vshrl.u32 %v7867, 7
    %v7869 = vsub.s32 %v7866, %v7868
    %v7870 = vrot.slane %v7856, %v7869
    %v7871 = vcombine.high %v7863, %v7863
    %v7872 = vcombine.high %v7870, %v7870
    %v7873 = vcombine.high %v6753, %v6753
    %v7875 = vunpack.c.l.s4 1983009808
    %v7876 = vunpack.c.0.s8 %v7875
    %v7877 = vlaneseq
    %v7878 = vshrl.u32 %v7877, 7
    %v7879 = vsub.s32 %v7876, %v7878
    %v7880 = vrot.slane %v6753, %v7879
    %v7882 = vunpack.c.l.s4 1983009808
    %v7883 = vunpack.c.0.s8 %v7882
    %v7884 = vlaneseq
    %v7885 = vshrl.u32 %v7884, 7
    %v7886 = vsub.s32 %v7883, %v7885
    %v7887 = vrot.slane %v7873, %v7886
    %v7888 = vcombine.high %v7880, %v7880
    %v7889 = vcombine.high %v7887, %v7887
    %v7890 = vcombine.high %v6754, %v6754
    %v7892 = vunpack.c.l.s4 1983009808
    %v7893 = vunpack.c.0.s8 %v7892
    %v7894 = vlaneseq
    %v7895 = vshrl.u32 %v7894, 7
    %v7896 = vsub.s32 %v7893, %v7895
    %v7897 = vrot.slane %v6754, %v7896
    %v7899 = vunpack.c.l.s4 1983009808
    %v7900 = vunpack.c.0.s8 %v7899
    %v7901 = vlaneseq
    %v7902 = vshrl.u32 %v7901, 7
    %v7903 = vsub.s32 %v7900, %v7902
    %v7904 = vrot.slane %v7890, %v7903
    %v7905 = vcombine.high %v7897, %v7897
    %v7906 = vcombine.high %v7904, %v7904
    %vm8163 = vcmask 517120
    %v8164 = vsel %vm8163, %v6826, -inf
    %v8165 = vrot.slane %v8164, 4
    %v8166 = vmax.f32 %v8164, %v8165
    %v8167 = vrot.slane %v8166, 2
    %v8168 = vmax.f32 %v8166, %v8167
    %v8169 = vrot.slane %v8168, 1
    %v8170 = vmax.f32 %v8168, %v8169
    %v8171 = vsel %vm8163, %v6834, -inf
    %v8172 = vrot.slane %v8171, 4
    %v8173 = vmax.f32 %v8171, %v8172
    %v8174 = vrot.slane %v8173, 2
    %v8175 = vmax.f32 %v8173, %v8174
    %v8176 = vrot.slane %v8175, 1
    %v8177 = vmax.f32 %v8175, %v8176
    %v8178 = vsel %vm8163, %v6833, -inf
    %v8179 = vrot.slane %v8178, 4
    %v8180 = vmax.f32 %v8178, %v8179
    %v8181 = vrot.slane %v8180, 2
    %v8182 = vmax.f32 %v8180, %v8181
    %v8183 = vrot.slane %v8182, 1
    %v8184 = vmax.f32 %v8182, %v8183
    %v8185 = vsel %vm8163, %v6835, -inf
    %v8186 = vrot.slane %v8185, 4
    %v8187 = vmax.f32 %v8185, %v8186
    %v8188 = vrot.slane %v8187, 2
    %v8189 = vmax.f32 %v8187, %v8188
    %v8190 = vrot.slane %v8189, 1
    %v8191 = vmax.f32 %v8189, %v8190
    %v8192 = vsel %vm8163, %v6843, -inf
    %v8193 = vrot.slane %v8192, 4
    %v8194 = vmax.f32 %v8192, %v8193
    %v8195 = vrot.slane %v8194, 2
    %v8196 = vmax.f32 %v8194, %v8195
    %v8197 = vrot.slane %v8196, 1
    %v8198 = vmax.f32 %v8196, %v8197
    %v8199 = vsel %vm8163, %v6851, -inf
    %v8200 = vrot.slane %v8199, 4
    %v8201 = vmax.f32 %v8199, %v8200
    %v8202 = vrot.slane %v8201, 2
    %v8203 = vmax.f32 %v8201, %v8202
    %v8204 = vrot.slane %v8203, 1
    %v8205 = vmax.f32 %v8203, %v8204
    %v8206 = vsel %vm8163, %v6850, -inf
    %v8207 = vrot.slane %v8206, 4
    %v8208 = vmax.f32 %v8206, %v8207
    %v8209 = vrot.slane %v8208, 2
    %v8210 = vmax.f32 %v8208, %v8209
    %v8211 = vrot.slane %v8210, 1
    %v8212 = vmax.f32 %v8210, %v8211
    %v8213 = vsel %vm8163, %v6852, -inf
    %v8214 = vrot.slane %v8213, 4
    %v8215 = vmax.f32 %v8213, %v8214
    %v8216 = vrot.slane %v8215, 2
    %v8217 = vmax.f32 %v8215, %v8216
    %v8218 = vrot.slane %v8217, 1
    %v8219 = vmax.f32 %v8217, %v8218
    %v8220 = vsel %vm8163, %v6860, -inf
    %v8221 = vrot.slane %v8220, 4
    %v8222 = vmax.f32 %v8220, %v8221
    %v8223 = vrot.slane %v8222, 2
    %v8224 = vmax.f32 %v8222, %v8223
    %v8225 = vrot.slane %v8224, 1
    %v8226 = vmax.f32 %v8224, %v8225
    %v8227 = vsel %vm8163, %v6868, -inf
    %v8228 = vrot.slane %v8227, 4
    %v8229 = vmax.f32 %v8227, %v8228
    %v8230 = vrot.slane %v8229, 2
    %v8231 = vmax.f32 %v8229, %v8230
    %v8232 = vrot.slane %v8231, 1
    %v8233 = vmax.f32 %v8231, %v8232
    %v8234 = vsel %vm8163, %v6867, -inf
    %v8235 = vrot.slane %v8234, 4
    %v8236 = vmax.f32 %v8234, %v8235
    %v8237 = vrot.slane %v8236, 2
    %v8238 = vmax.f32 %v8236, %v8237
    %v8239 = vrot.slane %v8238, 1
    %v8240 = vmax.f32 %v8238, %v8239
    %v8241 = vsel %vm8163, %v6869, -inf
    %v8242 = vrot.slane %v8241, 4
    %v8243 = vmax.f32 %v8241, %v8242
    %v8244 = vrot.slane %v8243, 2
    %v8245 = vmax.f32 %v8243, %v8244
    %v8246 = vrot.slane %v8245, 1
    %v8247 = vmax.f32 %v8245, %v8246
    %v8248 = vsel %vm8163, %v6877, -inf
    %v8249 = vrot.slane %v8248, 4
    %v8250 = vmax.f32 %v8248, %v8249
    %v8251 = vrot.slane %v8250, 2
    %v8252 = vmax.f32 %v8250, %v8251
    %v8253 = vrot.slane %v8252, 1
    %v8254 = vmax.f32 %v8252, %v8253
    %v8255 = vsel %vm8163, %v6885, -inf
    %v8256 = vrot.slane %v8255, 4
    %v8257 = vmax.f32 %v8255, %v8256
    %v8258 = vrot.slane %v8257, 2
    %v8259 = vmax.f32 %v8257, %v8258
    %v8260 = vrot.slane %v8259, 1
    %v8261 = vmax.f32 %v8259, %v8260
    %v8262 = vsel %vm8163, %v6884, -inf
    %v8263 = vrot.slane %v8262, 4
    %v8264 = vmax.f32 %v8262, %v8263
    %v8265 = vrot.slane %v8264, 2
    %v8266 = vmax.f32 %v8264, %v8265
    %v8267 = vrot.slane %v8266, 1
    %v8268 = vmax.f32 %v8266, %v8267
    %v8269 = vsel %vm8163, %v6886, -inf
    %v8270 = vrot.slane %v8269, 4
    %v8271 = vmax.f32 %v8269, %v8270
    %v8272 = vrot.slane %v8271, 2
    %v8273 = vmax.f32 %v8271, %v8272
    %v8274 = vrot.slane %v8273, 1
    %v8275 = vmax.f32 %v8273, %v8274
    %v8276 = vsel %vm8163, %v6894, -inf
    %v8277 = vrot.slane %v8276, 4
    %v8278 = vmax.f32 %v8276, %v8277
    %v8279 = vrot.slane %v8278, 2
    %v8280 = vmax.f32 %v8278, %v8279
    %v8281 = vrot.slane %v8280, 1
    %v8282 = vmax.f32 %v8280, %v8281
    %v8283 = vsel %vm8163, %v6902, -inf
    %v8284 = vrot.slane %v8283, 4
    %v8285 = vmax.f32 %v8283, %v8284
    %v8286 = vrot.slane %v8285, 2
    %v8287 = vmax.f32 %v8285, %v8286
    %v8288 = vrot.slane %v8287, 1
    %v8289 = vmax.f32 %v8287, %v8288
    %v8290 = vsel %vm8163, %v6901, -inf
    %v8291 = vrot.slane %v8290, 4
    %v8292 = vmax.f32 %v8290, %v8291
    %v8293 = vrot.slane %v8292, 2
    %v8294 = vmax.f32 %v8292, %v8293
    %v8295 = vrot.slane %v8294, 1
    %v8296 = vmax.f32 %v8294, %v8295
    %v8297 = vsel %vm8163, %v6903, -inf
    %v8298 = vrot.slane %v8297, 4
    %v8299 = vmax.f32 %v8297, %v8298
    %v8300 = vrot.slane %v8299, 2
    %v8301 = vmax.f32 %v8299, %v8300
    %v8302 = vrot.slane %v8301, 1
    %v8303 = vmax.f32 %v8301, %v8302
    %v8304 = vsel %vm8163, %v6911, -inf
    %v8305 = vrot.slane %v8304, 4
    %v8306 = vmax.f32 %v8304, %v8305
    %v8307 = vrot.slane %v8306, 2
    %v8308 = vmax.f32 %v8306, %v8307
    %v8309 = vrot.slane %v8308, 1
    %v8310 = vmax.f32 %v8308, %v8309
    %v8311 = vsel %vm8163, %v6919, -inf
    %v8312 = vrot.slane %v8311, 4
    %v8313 = vmax.f32 %v8311, %v8312
    %v8314 = vrot.slane %v8313, 2
    %v8315 = vmax.f32 %v8313, %v8314
    %v8316 = vrot.slane %v8315, 1
    %v8317 = vmax.f32 %v8315, %v8316
    %v8318 = vsel %vm8163, %v6918, -inf
    %v8319 = vrot.slane %v8318, 4
    %v8320 = vmax.f32 %v8318, %v8319
    %v8321 = vrot.slane %v8320, 2
    %v8322 = vmax.f32 %v8320, %v8321
    %v8323 = vrot.slane %v8322, 1
    %v8324 = vmax.f32 %v8322, %v8323
    %v8325 = vsel %vm8163, %v6920, -inf
    %v8326 = vrot.slane %v8325, 4
    %v8327 = vmax.f32 %v8325, %v8326
    %v8328 = vrot.slane %v8327, 2
    %v8329 = vmax.f32 %v8327, %v8328
    %v8330 = vrot.slane %v8329, 1
    %v8331 = vmax.f32 %v8329, %v8330
    %v8332 = vsel %vm8163, %v6928, -inf
    %v8333 = vrot.slane %v8332, 4
    %v8334 = vmax.f32 %v8332, %v8333
    %v8335 = vrot.slane %v8334, 2
    %v8336 = vmax.f32 %v8334, %v8335
    %v8337 = vrot.slane %v8336, 1
    %v8338 = vmax.f32 %v8336, %v8337
    %v8339 = vsel %vm8163, %v6936, -inf
    %v8340 = vrot.slane %v8339, 4
    %v8341 = vmax.f32 %v8339, %v8340
    %v8342 = vrot.slane %v8341, 2
    %v8343 = vmax.f32 %v8341, %v8342
    %v8344 = vrot.slane %v8343, 1
    %v8345 = vmax.f32 %v8343, %v8344
    %v8346 = vsel %vm8163, %v6935, -inf
    %v8347 = vrot.slane %v8346, 4
    %v8348 = vmax.f32 %v8346, %v8347
    %v8349 = vrot.slane %v8348, 2
    %v8350 = vmax.f32 %v8348, %v8349
    %v8351 = vrot.slane %v8350, 1
    %v8352 = vmax.f32 %v8350, %v8351
    %v8353 = vsel %vm8163, %v6937, -inf
    %v8354 = vrot.slane %v8353, 4
    %v8355 = vmax.f32 %v8353, %v8354
    %v8356 = vrot.slane %v8355, 2
    %v8357 = vmax.f32 %v8355, %v8356
    %v8358 = vrot.slane %v8357, 1
    %v8359 = vmax.f32 %v8357, %v8358
    %v8360 = vsel %vm8163, %v6945, -inf
    %v8361 = vrot.slane %v8360, 4
    %v8362 = vmax.f32 %v8360, %v8361
    %v8363 = vrot.slane %v8362, 2
    %v8364 = vmax.f32 %v8362, %v8363
    %v8365 = vrot.slane %v8364, 1
    %v8366 = vmax.f32 %v8364, %v8365
    %v8367 = vsel %vm8163, %v6953, -inf
    %v8368 = vrot.slane %v8367, 4
    %v8369 = vmax.f32 %v8367, %v8368
    %v8370 = vrot.slane %v8369, 2
    %v8371 = vmax.f32 %v8369, %v8370
    %v8372 = vrot.slane %v8371, 1
    %v8373 = vmax.f32 %v8371, %v8372
    %v8374 = vsel %vm8163, %v6952, -inf
    %v8375 = vrot.slane %v8374, 4
    %v8376 = vmax.f32 %v8374, %v8375
    %v8377 = vrot.slane %v8376, 2
    %v8378 = vmax.f32 %v8376, %v8377
    %v8379 = vrot.slane %v8378, 1
    %v8380 = vmax.f32 %v8378, %v8379
    %v8381 = vsel %vm8163, %v6954, -inf
    %v8382 = vrot.slane %v8381, 4
    %v8383 = vmax.f32 %v8381, %v8382
    %v8384 = vrot.slane %v8383, 2
    %v8385 = vmax.f32 %v8383, %v8384
    %v8386 = vrot.slane %v8385, 1
    %v8387 = vmax.f32 %v8385, %v8386
    %v8388 = vsel %vm8163, %v6962, -inf
    %v8389 = vrot.slane %v8388, 4
    %v8390 = vmax.f32 %v8388, %v8389
    %v8391 = vrot.slane %v8390, 2
    %v8392 = vmax.f32 %v8390, %v8391
    %v8393 = vrot.slane %v8392, 1
    %v8394 = vmax.f32 %v8392, %v8393
    %v8395 = vsel %vm8163, %v6970, -inf
    %v8396 = vrot.slane %v8395, 4
    %v8397 = vmax.f32 %v8395, %v8396
    %v8398 = vrot.slane %v8397, 2
    %v8399 = vmax.f32 %v8397, %v8398
    %v8400 = vrot.slane %v8399, 1
    %v8401 = vmax.f32 %v8399, %v8400
    %v8402 = vsel %vm8163, %v6969, -inf
    %v8403 = vrot.slane %v8402, 4
    %v8404 = vmax.f32 %v8402, %v8403
    %v8405 = vrot.slane %v8404, 2
    %v8406 = vmax.f32 %v8404, %v8405
    %v8407 = vrot.slane %v8406, 1
    %v8408 = vmax.f32 %v8406, %v8407
    %v8409 = vsel %vm8163, %v6971, -inf
    %v8410 = vrot.slane %v8409, 4
    %v8411 = vmax.f32 %v8409, %v8410
    %v8412 = vrot.slane %v8411, 2
    %v8413 = vmax.f32 %v8411, %v8412
    %v8414 = vrot.slane %v8413, 1
    %v8415 = vmax.f32 %v8413, %v8414
    %v8416 = vsel %vm8163, %v6979, -inf
    %v8417 = vrot.slane %v8416, 4
    %v8418 = vmax.f32 %v8416, %v8417
    %v8419 = vrot.slane %v8418, 2
    %v8420 = vmax.f32 %v8418, %v8419
    %v8421 = vrot.slane %v8420, 1
    %v8422 = vmax.f32 %v8420, %v8421
    %v8423 = vsel %vm8163, %v6987, -inf
    %v8424 = vrot.slane %v8423, 4
    %v8425 = vmax.f32 %v8423, %v8424
    %v8426 = vrot.slane %v8425, 2
    %v8427 = vmax.f32 %v8425, %v8426
    %v8428 = vrot.slane %v8427, 1
    %v8429 = vmax.f32 %v8427, %v8428
    %v8430 = vsel %vm8163, %v6986, -inf
    %v8431 = vrot.slane %v8430, 4
    %v8432 = vmax.f32 %v8430, %v8431
    %v8433 = vrot.slane %v8432, 2
    %v8434 = vmax.f32 %v8432, %v8433
    %v8435 = vrot.slane %v8434, 1
    %v8436 = vmax.f32 %v8434, %v8435
    %v8437 = vsel %vm8163, %v6988, -inf
    %v8438 = vrot.slane %v8437, 4
    %v8439 = vmax.f32 %v8437, %v8438
    %v8440 = vrot.slane %v8439, 2
    %v8441 = vmax.f32 %v8439, %v8440
    %v8442 = vrot.slane %v8441, 1
    %v8443 = vmax.f32 %v8441, %v8442
    %v8444 = vsel %vm8163, %v6996, -inf
    %v8445 = vrot.slane %v8444, 4
    %v8446 = vmax.f32 %v8444, %v8445
    %v8447 = vrot.slane %v8446, 2
    %v8448 = vmax.f32 %v8446, %v8447
    %v8449 = vrot.slane %v8448, 1
    %v8450 = vmax.f32 %v8448, %v8449
    %v8451 = vsel %vm8163, %v7004, -inf
    %v8452 = vrot.slane %v8451, 4
    %v8453 = vmax.f32 %v8451, %v8452
    %v8454 = vrot.slane %v8453, 2
    %v8455 = vmax.f32 %v8453, %v8454
    %v8456 = vrot.slane %v8455, 1
    %v8457 = vmax.f32 %v8455, %v8456
    %v8458 = vsel %vm8163, %v7003, -inf
    %v8459 = vrot.slane %v8458, 4
    %v8460 = vmax.f32 %v8458, %v8459
    %v8461 = vrot.slane %v8460, 2
    %v8462 = vmax.f32 %v8460, %v8461
    %v8463 = vrot.slane %v8462, 1
    %v8464 = vmax.f32 %v8462, %v8463
    %v8465 = vsel %vm8163, %v7005, -inf
    %v8466 = vrot.slane %v8465, 4
    %v8467 = vmax.f32 %v8465, %v8466
    %v8468 = vrot.slane %v8467, 2
    %v8469 = vmax.f32 %v8467, %v8468
    %v8470 = vrot.slane %v8469, 1
    %v8471 = vmax.f32 %v8469, %v8470
    %v8472 = vsel %vm8163, %v7013, -inf
    %v8473 = vrot.slane %v8472, 4
    %v8474 = vmax.f32 %v8472, %v8473
    %v8475 = vrot.slane %v8474, 2
    %v8476 = vmax.f32 %v8474, %v8475
    %v8477 = vrot.slane %v8476, 1
    %v8478 = vmax.f32 %v8476, %v8477
    %v8479 = vsel %vm8163, %v7021, -inf
    %v8480 = vrot.slane %v8479, 4
    %v8481 = vmax.f32 %v8479, %v8480
    %v8482 = vrot.slane %v8481, 2
    %v8483 = vmax.f32 %v8481, %v8482
    %v8484 = vrot.slane %v8483, 1
    %v8485 = vmax.f32 %v8483, %v8484
    %v8486 = vsel %vm8163, %v7020, -inf
    %v8487 = vrot.slane %v8486, 4
    %v8488 = vmax.f32 %v8486, %v8487
    %v8489 = vrot.slane %v8488, 2
    %v8490 = vmax.f32 %v8488, %v8489
    %v8491 = vrot.slane %v8490, 1
    %v8492 = vmax.f32 %v8490, %v8491
    %v8493 = vsel %vm8163, %v7022, -inf
    %v8494 = vrot.slane %v8493, 4
    %v8495 = vmax.f32 %v8493, %v8494
    %v8496 = vrot.slane %v8495, 2
    %v8497 = vmax.f32 %v8495, %v8496
    %v8498 = vrot.slane %v8497, 1
    %v8499 = vmax.f32 %v8497, %v8498
    %v8500 = vsel %vm8163, %v7030, -inf
    %v8501 = vrot.slane %v8500, 4
    %v8502 = vmax.f32 %v8500, %v8501
    %v8503 = vrot.slane %v8502, 2
    %v8504 = vmax.f32 %v8502, %v8503
    %v8505 = vrot.slane %v8504, 1
    %v8506 = vmax.f32 %v8504, %v8505
    %v8507 = vsel %vm8163, %v7038, -inf
    %v8508 = vrot.slane %v8507, 4
    %v8509 = vmax.f32 %v8507, %v8508
    %v8510 = vrot.slane %v8509, 2
    %v8511 = vmax.f32 %v8509, %v8510
    %v8512 = vrot.slane %v8511, 1
    %v8513 = vmax.f32 %v8511, %v8512
    %v8514 = vsel %vm8163, %v7037, -inf
    %v8515 = vrot.slane %v8514, 4
    %v8516 = vmax.f32 %v8514, %v8515
    %v8517 = vrot.slane %v8516, 2
    %v8518 = vmax.f32 %v8516, %v8517
    %v8519 = vrot.slane %v8518, 1
    %v8520 = vmax.f32 %v8518, %v8519
    %v8521 = vsel %vm8163, %v7039, -inf
    %v8522 = vrot.slane %v8521, 4
    %v8523 = vmax.f32 %v8521, %v8522
    %v8524 = vrot.slane %v8523, 2
    %v8525 = vmax.f32 %v8523, %v8524
    %v8526 = vrot.slane %v8525, 1
    %v8527 = vmax.f32 %v8525, %v8526
    %v8528 = vsel %vm8163, %v7047, -inf
    %v8529 = vrot.slane %v8528, 4
    %v8530 = vmax.f32 %v8528, %v8529
    %v8531 = vrot.slane %v8530, 2
    %v8532 = vmax.f32 %v8530, %v8531
    %v8533 = vrot.slane %v8532, 1
    %v8534 = vmax.f32 %v8532, %v8533
    %v8535 = vsel %vm8163, %v7055, -inf
    %v8536 = vrot.slane %v8535, 4
    %v8537 = vmax.f32 %v8535, %v8536
    %v8538 = vrot.slane %v8537, 2
    %v8539 = vmax.f32 %v8537, %v8538
    %v8540 = vrot.slane %v8539, 1
    %v8541 = vmax.f32 %v8539, %v8540
    %v8542 = vsel %vm8163, %v7054, -inf
    %v8543 = vrot.slane %v8542, 4
    %v8544 = vmax.f32 %v8542, %v8543
    %v8545 = vrot.slane %v8544, 2
    %v8546 = vmax.f32 %v8544, %v8545
    %v8547 = vrot.slane %v8546, 1
    %v8548 = vmax.f32 %v8546, %v8547
    %v8549 = vsel %vm8163, %v7056, -inf
    %v8550 = vrot.slane %v8549, 4
    %v8551 = vmax.f32 %v8549, %v8550
    %v8552 = vrot.slane %v8551, 2
    %v8553 = vmax.f32 %v8551, %v8552
    %v8554 = vrot.slane %v8553, 1
    %v8555 = vmax.f32 %v8553, %v8554
    %v8556 = vsel %vm8163, %v7064, -inf
    %v8557 = vrot.slane %v8556, 4
    %v8558 = vmax.f32 %v8556, %v8557
    %v8559 = vrot.slane %v8558, 2
    %v8560 = vmax.f32 %v8558, %v8559
    %v8561 = vrot.slane %v8560, 1
    %v8562 = vmax.f32 %v8560, %v8561
    %v8563 = vsel %vm8163, %v7072, -inf
    %v8564 = vrot.slane %v8563, 4
    %v8565 = vmax.f32 %v8563, %v8564
    %v8566 = vrot.slane %v8565, 2
    %v8567 = vmax.f32 %v8565, %v8566
    %v8568 = vrot.slane %v8567, 1
    %v8569 = vmax.f32 %v8567, %v8568
    %v8570 = vsel %vm8163, %v7071, -inf
    %v8571 = vrot.slane %v8570, 4
    %v8572 = vmax.f32 %v8570, %v8571
    %v8573 = vrot.slane %v8572, 2
    %v8574 = vmax.f32 %v8572, %v8573
    %v8575 = vrot.slane %v8574, 1
    %v8576 = vmax.f32 %v8574, %v8575
    %v8577 = vsel %vm8163, %v7073, -inf
    %v8578 = vrot.slane %v8577, 4
    %v8579 = vmax.f32 %v8577, %v8578
    %v8580 = vrot.slane %v8579, 2
    %v8581 = vmax.f32 %v8579, %v8580
    %v8582 = vrot.slane %v8581, 1
    %v8583 = vmax.f32 %v8581, %v8582
    %v8584 = vsel %vm8163, %v7081, -inf
    %v8585 = vrot.slane %v8584, 4
    %v8586 = vmax.f32 %v8584, %v8585
    %v8587 = vrot.slane %v8586, 2
    %v8588 = vmax.f32 %v8586, %v8587
    %v8589 = vrot.slane %v8588, 1
    %v8590 = vmax.f32 %v8588, %v8589
    %v8591 = vsel %vm8163, %v7089, -inf
    %v8592 = vrot.slane %v8591, 4
    %v8593 = vmax.f32 %v8591, %v8592
    %v8594 = vrot.slane %v8593, 2
    %v8595 = vmax.f32 %v8593, %v8594
    %v8596 = vrot.slane %v8595, 1
    %v8597 = vmax.f32 %v8595, %v8596
    %v8598 = vsel %vm8163, %v7088, -inf
    %v8599 = vrot.slane %v8598, 4
    %v8600 = vmax.f32 %v8598, %v8599
    %v8601 = vrot.slane %v8600, 2
    %v8602 = vmax.f32 %v8600, %v8601
    %v8603 = vrot.slane %v8602, 1
    %v8604 = vmax.f32 %v8602, %v8603
    %v8605 = vsel %vm8163, %v7090, -inf
    %v8606 = vrot.slane %v8605, 4
    %v8607 = vmax.f32 %v8605, %v8606
    %v8608 = vrot.slane %v8607, 2
    %v8609 = vmax.f32 %v8607, %v8608
    %v8610 = vrot.slane %v8609, 1
    %v8611 = vmax.f32 %v8609, %v8610
    %v8612 = vsel %vm8163, %v7098, -inf
    %v8613 = vrot.slane %v8612, 4
    %v8614 = vmax.f32 %v8612, %v8613
    %v8615 = vrot.slane %v8614, 2
    %v8616 = vmax.f32 %v8614, %v8615
    %v8617 = vrot.slane %v8616, 1
    %v8618 = vmax.f32 %v8616, %v8617
    %v8619 = vsel %vm8163, %v7106, -inf
    %v8620 = vrot.slane %v8619, 4
    %v8621 = vmax.f32 %v8619, %v8620
    %v8622 = vrot.slane %v8621, 2
    %v8623 = vmax.f32 %v8621, %v8622
    %v8624 = vrot.slane %v8623, 1
    %v8625 = vmax.f32 %v8623, %v8624
    %v8626 = vsel %vm8163, %v7105, -inf
    %v8627 = vrot.slane %v8626, 4
    %v8628 = vmax.f32 %v8626, %v8627
    %v8629 = vrot.slane %v8628, 2
    %v8630 = vmax.f32 %v8628, %v8629
    %v8631 = vrot.slane %v8630, 1
    %v8632 = vmax.f32 %v8630, %v8631
    %v8633 = vsel %vm8163, %v7107, -inf
    %v8634 = vrot.slane %v8633, 4
    %v8635 = vmax.f32 %v8633, %v8634
    %v8636 = vrot.slane %v8635, 2
    %v8637 = vmax.f32 %v8635, %v8636
    %v8638 = vrot.slane %v8637, 1
    %v8639 = vmax.f32 %v8637, %v8638
    %v8640 = vsel %vm8163, %v7115, -inf
    %v8641 = vrot.slane %v8640, 4
    %v8642 = vmax.f32 %v8640, %v8641
    %v8643 = vrot.slane %v8642, 2
    %v8644 = vmax.f32 %v8642, %v8643
    %v8645 = vrot.slane %v8644, 1
    %v8646 = vmax.f32 %v8644, %v8645
    %v8647 = vsel %vm8163, %v7123, -inf
    %v8648 = vrot.slane %v8647, 4
    %v8649 = vmax.f32 %v8647, %v8648
    %v8650 = vrot.slane %v8649, 2
    %v8651 = vmax.f32 %v8649, %v8650
    %v8652 = vrot.slane %v8651, 1
    %v8653 = vmax.f32 %v8651, %v8652
    %v8654 = vsel %vm8163, %v7122, -inf
    %v8655 = vrot.slane %v8654, 4
    %v8656 = vmax.f32 %v8654, %v8655
    %v8657 = vrot.slane %v8656, 2
    %v8658 = vmax.f32 %v8656, %v8657
    %v8659 = vrot.slane %v8658, 1
    %v8660 = vmax.f32 %v8658, %v8659
    %v8661 = vsel %vm8163, %v7124, -inf
    %v8662 = vrot.slane %v8661, 4
    %v8663 = vmax.f32 %v8661, %v8662
    %v8664 = vrot.slane %v8663, 2
    %v8665 = vmax.f32 %v8663, %v8664
    %v8666 = vrot.slane %v8665, 1
    %v8667 = vmax.f32 %v8665, %v8666
    %v8668 = vsel %vm8163, %v7132, -inf
    %v8669 = vrot.slane %v8668, 4
    %v8670 = vmax.f32 %v8668, %v8669
    %v8671 = vrot.slane %v8670, 2
    %v8672 = vmax.f32 %v8670, %v8671
    %v8673 = vrot.slane %v8672, 1
    %v8674 = vmax.f32 %v8672, %v8673
    %v8675 = vsel %vm8163, %v7140, -inf
    %v8676 = vrot.slane %v8675, 4
    %v8677 = vmax.f32 %v8675, %v8676
    %v8678 = vrot.slane %v8677, 2
    %v8679 = vmax.f32 %v8677, %v8678
    %v8680 = vrot.slane %v8679, 1
    %v8681 = vmax.f32 %v8679, %v8680
    %v8682 = vsel %vm8163, %v7139, -inf
    %v8683 = vrot.slane %v8682, 4
    %v8684 = vmax.f32 %v8682, %v8683
    %v8685 = vrot.slane %v8684, 2
    %v8686 = vmax.f32 %v8684, %v8685
    %v8687 = vrot.slane %v8686, 1
    %v8688 = vmax.f32 %v8686, %v8687
    %v8689 = vsel %vm8163, %v7141, -inf
    %v8690 = vrot.slane %v8689, 4
    %v8691 = vmax.f32 %v8689, %v8690
    %v8692 = vrot.slane %v8691, 2
    %v8693 = vmax.f32 %v8691, %v8692
    %v8694 = vrot.slane %v8693, 1
    %v8695 = vmax.f32 %v8693, %v8694
    %v8696 = vsel %vm8163, %v7149, -inf
    %v8697 = vrot.slane %v8696, 4
    %v8698 = vmax.f32 %v8696, %v8697
    %v8699 = vrot.slane %v8698, 2
    %v8700 = vmax.f32 %v8698, %v8699
    %v8701 = vrot.slane %v8700, 1
    %v8702 = vmax.f32 %v8700, %v8701
    %v8703 = vsel %vm8163, %v7157, -inf
    %v8704 = vrot.slane %v8703, 4
    %v8705 = vmax.f32 %v8703, %v8704
    %v8706 = vrot.slane %v8705, 2
    %v8707 = vmax.f32 %v8705, %v8706
    %v8708 = vrot.slane %v8707, 1
    %v8709 = vmax.f32 %v8707, %v8708
    %v8710 = vsel %vm8163, %v7156, -inf
    %v8711 = vrot.slane %v8710, 4
    %v8712 = vmax.f32 %v8710, %v8711
    %v8713 = vrot.slane %v8712, 2
    %v8714 = vmax.f32 %v8712, %v8713
    %v8715 = vrot.slane %v8714, 1
    %v8716 = vmax.f32 %v8714, %v8715
    %v8717 = vsel %vm8163, %v7158, -inf
    %v8718 = vrot.slane %v8717, 4
    %v8719 = vmax.f32 %v8717, %v8718
    %v8720 = vrot.slane %v8719, 2
    %v8721 = vmax.f32 %v8719, %v8720
    %v8722 = vrot.slane %v8721, 1
    %v8723 = vmax.f32 %v8721, %v8722
    %v8724 = vsel %vm8163, %v7166, -inf
    %v8725 = vrot.slane %v8724, 4
    %v8726 = vmax.f32 %v8724, %v8725
    %v8727 = vrot.slane %v8726, 2
    %v8728 = vmax.f32 %v8726, %v8727
    %v8729 = vrot.slane %v8728, 1
    %v8730 = vmax.f32 %v8728, %v8729
    %v8731 = vsel %vm8163, %v7174, -inf
    %v8732 = vrot.slane %v8731, 4
    %v8733 = vmax.f32 %v8731, %v8732
    %v8734 = vrot.slane %v8733, 2
    %v8735 = vmax.f32 %v8733, %v8734
    %v8736 = vrot.slane %v8735, 1
    %v8737 = vmax.f32 %v8735, %v8736
    %v8738 = vsel %vm8163, %v7173, -inf
    %v8739 = vrot.slane %v8738, 4
    %v8740 = vmax.f32 %v8738, %v8739
    %v8741 = vrot.slane %v8740, 2
    %v8742 = vmax.f32 %v8740, %v8741
    %v8743 = vrot.slane %v8742, 1
    %v8744 = vmax.f32 %v8742, %v8743
    %v8745 = vsel %vm8163, %v7175, -inf
    %v8746 = vrot.slane %v8745, 4
    %v8747 = vmax.f32 %v8745, %v8746
    %v8748 = vrot.slane %v8747, 2
    %v8749 = vmax.f32 %v8747, %v8748
    %v8750 = vrot.slane %v8749, 1
    %v8751 = vmax.f32 %v8749, %v8750
    %v8752 = vsel %vm8163, %v7183, -inf
    %v8753 = vrot.slane %v8752, 4
    %v8754 = vmax.f32 %v8752, %v8753
    %v8755 = vrot.slane %v8754, 2
    %v8756 = vmax.f32 %v8754, %v8755
    %v8757 = vrot.slane %v8756, 1
    %v8758 = vmax.f32 %v8756, %v8757
    %v8759 = vsel %vm8163, %v7191, -inf
    %v8760 = vrot.slane %v8759, 4
    %v8761 = vmax.f32 %v8759, %v8760
    %v8762 = vrot.slane %v8761, 2
    %v8763 = vmax.f32 %v8761, %v8762
    %v8764 = vrot.slane %v8763, 1
    %v8765 = vmax.f32 %v8763, %v8764
    %v8766 = vsel %vm8163, %v7190, -inf
    %v8767 = vrot.slane %v8766, 4
    %v8768 = vmax.f32 %v8766, %v8767
    %v8769 = vrot.slane %v8768, 2
    %v8770 = vmax.f32 %v8768, %v8769
    %v8771 = vrot.slane %v8770, 1
    %v8772 = vmax.f32 %v8770, %v8771
    %v8773 = vsel %vm8163, %v7192, -inf
    %v8774 = vrot.slane %v8773, 4
    %v8775 = vmax.f32 %v8773, %v8774
    %v8776 = vrot.slane %v8775, 2
    %v8777 = vmax.f32 %v8775, %v8776
    %v8778 = vrot.slane %v8777, 1
    %v8779 = vmax.f32 %v8777, %v8778
    %v8780 = vsel %vm8163, %v7200, -inf
    %v8781 = vrot.slane %v8780, 4
    %v8782 = vmax.f32 %v8780, %v8781
    %v8783 = vrot.slane %v8782, 2
    %v8784 = vmax.f32 %v8782, %v8783
    %v8785 = vrot.slane %v8784, 1
    %v8786 = vmax.f32 %v8784, %v8785
    %v8787 = vsel %vm8163, %v7208, -inf
    %v8788 = vrot.slane %v8787, 4
    %v8789 = vmax.f32 %v8787, %v8788
    %v8790 = vrot.slane %v8789, 2
    %v8791 = vmax.f32 %v8789, %v8790
    %v8792 = vrot.slane %v8791, 1
    %v8793 = vmax.f32 %v8791, %v8792
    %v8794 = vsel %vm8163, %v7207, -inf
    %v8795 = vrot.slane %v8794, 4
    %v8796 = vmax.f32 %v8794, %v8795
    %v8797 = vrot.slane %v8796, 2
    %v8798 = vmax.f32 %v8796, %v8797
    %v8799 = vrot.slane %v8798, 1
    %v8800 = vmax.f32 %v8798, %v8799
    %v8801 = vsel %vm8163, %v7209, -inf
    %v8802 = vrot.slane %v8801, 4
    %v8803 = vmax.f32 %v8801, %v8802
    %v8804 = vrot.slane %v8803, 2
    %v8805 = vmax.f32 %v8803, %v8804
    %v8806 = vrot.slane %v8805, 1
    %v8807 = vmax.f32 %v8805, %v8806
    %v8808 = vsel %vm8163, %v7217, -inf
    %v8809 = vrot.slane %v8808, 4
    %v8810 = vmax.f32 %v8808, %v8809
    %v8811 = vrot.slane %v8810, 2
    %v8812 = vmax.f32 %v8810, %v8811
    %v8813 = vrot.slane %v8812, 1
    %v8814 = vmax.f32 %v8812, %v8813
    %v8815 = vsel %vm8163, %v7225, -inf
    %v8816 = vrot.slane %v8815, 4
    %v8817 = vmax.f32 %v8815, %v8816
    %v8818 = vrot.slane %v8817, 2
    %v8819 = vmax.f32 %v8817, %v8818
    %v8820 = vrot.slane %v8819, 1
    %v8821 = vmax.f32 %v8819, %v8820
    %v8822 = vsel %vm8163, %v7224, -inf
    %v8823 = vrot.slane %v8822, 4
    %v8824 = vmax.f32 %v8822, %v8823
    %v8825 = vrot.slane %v8824, 2
    %v8826 = vmax.f32 %v8824, %v8825
    %v8827 = vrot.slane %v8826, 1
    %v8828 = vmax.f32 %v8826, %v8827
    %v8829 = vsel %vm8163, %v7226, -inf
    %v8830 = vrot.slane %v8829, 4
    %v8831 = vmax.f32 %v8829, %v8830
    %v8832 = vrot.slane %v8831, 2
    %v8833 = vmax.f32 %v8831, %v8832
    %v8834 = vrot.slane %v8833, 1
    %v8835 = vmax.f32 %v8833, %v8834
    %v8836 = vsel %vm8163, %v7234, -inf
    %v8837 = vrot.slane %v8836, 4
    %v8838 = vmax.f32 %v8836, %v8837
    %v8839 = vrot.slane %v8838, 2
    %v8840 = vmax.f32 %v8838, %v8839
    %v8841 = vrot.slane %v8840, 1
    %v8842 = vmax.f32 %v8840, %v8841
    %v8843 = vsel %vm8163, %v7242, -inf
    %v8844 = vrot.slane %v8843, 4
    %v8845 = vmax.f32 %v8843, %v8844
    %v8846 = vrot.slane %v8845, 2
    %v8847 = vmax.f32 %v8845, %v8846
    %v8848 = vrot.slane %v8847, 1
    %v8849 = vmax.f32 %v8847, %v8848
    %v8850 = vsel %vm8163, %v7241, -inf
    %v8851 = vrot.slane %v8850, 4
    %v8852 = vmax.f32 %v8850, %v8851
    %v8853 = vrot.slane %v8852, 2
    %v8854 = vmax.f32 %v8852, %v8853
    %v8855 = vrot.slane %v8854, 1
    %v8856 = vmax.f32 %v8854, %v8855
    %v8857 = vsel %vm8163, %v7243, -inf
    %v8858 = vrot.slane %v8857, 4
    %v8859 = vmax.f32 %v8857, %v8858
    %v8860 = vrot.slane %v8859, 2
    %v8861 = vmax.f32 %v8859, %v8860
    %v8862 = vrot.slane %v8861, 1
    %v8863 = vmax.f32 %v8861, %v8862
    %v8864 = vsel %vm8163, %v7251, -inf
    %v8865 = vrot.slane %v8864, 4
    %v8866 = vmax.f32 %v8864, %v8865
    %v8867 = vrot.slane %v8866, 2
    %v8868 = vmax.f32 %v8866, %v8867
    %v8869 = vrot.slane %v8868, 1
    %v8870 = vmax.f32 %v8868, %v8869
    %v8871 = vsel %vm8163, %v7259, -inf
    %v8872 = vrot.slane %v8871, 4
    %v8873 = vmax.f32 %v8871, %v8872
    %v8874 = vrot.slane %v8873, 2
    %v8875 = vmax.f32 %v8873, %v8874
    %v8876 = vrot.slane %v8875, 1
    %v8877 = vmax.f32 %v8875, %v8876
    %v8878 = vsel %vm8163, %v7258, -inf
    %v8879 = vrot.slane %v8878, 4
    %v8880 = vmax.f32 %v8878, %v8879
    %v8881 = vrot.slane %v8880, 2
    %v8882 = vmax.f32 %v8880, %v8881
    %v8883 = vrot.slane %v8882, 1
    %v8884 = vmax.f32 %v8882, %v8883
    %v8885 = vsel %vm8163, %v7260, -inf
    %v8886 = vrot.slane %v8885, 4
    %v8887 = vmax.f32 %v8885, %v8886
    %v8888 = vrot.slane %v8887, 2
    %v8889 = vmax.f32 %v8887, %v8888
    %v8890 = vrot.slane %v8889, 1
    %v8891 = vmax.f32 %v8889, %v8890
    %v8892 = vsel %vm8163, %v7268, -inf
    %v8893 = vrot.slane %v8892, 4
    %v8894 = vmax.f32 %v8892, %v8893
    %v8895 = vrot.slane %v8894, 2
    %v8896 = vmax.f32 %v8894, %v8895
    %v8897 = vrot.slane %v8896, 1
    %v8898 = vmax.f32 %v8896, %v8897
    %v8899 = vsel %vm8163, %v7276, -inf
    %v8900 = vrot.slane %v8899, 4
    %v8901 = vmax.f32 %v8899, %v8900
    %v8902 = vrot.slane %v8901, 2
    %v8903 = vmax.f32 %v8901, %v8902
    %v8904 = vrot.slane %v8903, 1
    %v8905 = vmax.f32 %v8903, %v8904
    %v8906 = vsel %vm8163, %v7275, -inf
    %v8907 = vrot.slane %v8906, 4
    %v8908 = vmax.f32 %v8906, %v8907
    %v8909 = vrot.slane %v8908, 2
    %v8910 = vmax.f32 %v8908, %v8909
    %v8911 = vrot.slane %v8910, 1
    %v8912 = vmax.f32 %v8910, %v8911
    %v8913 = vsel %vm8163, %v7277, -inf
    %v8914 = vrot.slane %v8913, 4
    %v8915 = vmax.f32 %v8913, %v8914
    %v8916 = vrot.slane %v8915, 2
    %v8917 = vmax.f32 %v8915, %v8916
    %v8918 = vrot.slane %v8917, 1
    %v8919 = vmax.f32 %v8917, %v8918
    %v8920 = vsel %vm8163, %v7285, -inf
    %v8921 = vrot.slane %v8920, 4
    %v8922 = vmax.f32 %v8920, %v8921
    %v8923 = vrot.slane %v8922, 2
    %v8924 = vmax.f32 %v8922, %v8923
    %v8925 = vrot.slane %v8924, 1
    %v8926 = vmax.f32 %v8924, %v8925
    %v8927 = vsel %vm8163, %v7293, -inf
    %v8928 = vrot.slane %v8927, 4
    %v8929 = vmax.f32 %v8927, %v8928
    %v8930 = vrot.slane %v8929, 2
    %v8931 = vmax.f32 %v8929, %v8930
    %v8932 = vrot.slane %v8931, 1
    %v8933 = vmax.f32 %v8931, %v8932
    %v8934 = vsel %vm8163, %v7292, -inf
    %v8935 = vrot.slane %v8934, 4
    %v8936 = vmax.f32 %v8934, %v8935
    %v8937 = vrot.slane %v8936, 2
    %v8938 = vmax.f32 %v8936, %v8937
    %v8939 = vrot.slane %v8938, 1
    %v8940 = vmax.f32 %v8938, %v8939
    %v8941 = vsel %vm8163, %v7294, -inf
    %v8942 = vrot.slane %v8941, 4
    %v8943 = vmax.f32 %v8941, %v8942
    %v8944 = vrot.slane %v8943, 2
    %v8945 = vmax.f32 %v8943, %v8944
    %v8946 = vrot.slane %v8945, 1
    %v8947 = vmax.f32 %v8945, %v8946
    %v8948 = vsel %vm8163, %v7302, -inf
    %v8949 = vrot.slane %v8948, 4
    %v8950 = vmax.f32 %v8948, %v8949
    %v8951 = vrot.slane %v8950, 2
    %v8952 = vmax.f32 %v8950, %v8951
    %v8953 = vrot.slane %v8952, 1
    %v8954 = vmax.f32 %v8952, %v8953
    %v8955 = vsel %vm8163, %v7310, -inf
    %v8956 = vrot.slane %v8955, 4
    %v8957 = vmax.f32 %v8955, %v8956
    %v8958 = vrot.slane %v8957, 2
    %v8959 = vmax.f32 %v8957, %v8958
    %v8960 = vrot.slane %v8959, 1
    %v8961 = vmax.f32 %v8959, %v8960
    %v8962 = vsel %vm8163, %v7309, -inf
    %v8963 = vrot.slane %v8962, 4
    %v8964 = vmax.f32 %v8962, %v8963
    %v8965 = vrot.slane %v8964, 2
    %v8966 = vmax.f32 %v8964, %v8965
    %v8967 = vrot.slane %v8966, 1
    %v8968 = vmax.f32 %v8966, %v8967
    %v8969 = vsel %vm8163, %v7311, -inf
    %v8970 = vrot.slane %v8969, 4
    %v8971 = vmax.f32 %v8969, %v8970
    %v8972 = vrot.slane %v8971, 2
    %v8973 = vmax.f32 %v8971, %v8972
    %v8974 = vrot.slane %v8973, 1
    %v8975 = vmax.f32 %v8973, %v8974
    %v8976 = vsel %vm8163, %v7319, -inf
    %v8977 = vrot.slane %v8976, 4
    %v8978 = vmax.f32 %v8976, %v8977
    %v8979 = vrot.slane %v8978, 2
    %v8980 = vmax.f32 %v8978, %v8979
    %v8981 = vrot.slane %v8980, 1
    %v8982 = vmax.f32 %v8980, %v8981
    %v8983 = vsel %vm8163, %v7327, -inf
    %v8984 = vrot.slane %v8983, 4
    %v8985 = vmax.f32 %v8983, %v8984
    %v8986 = vrot.slane %v8985, 2
    %v8987 = vmax.f32 %v8985, %v8986
    %v8988 = vrot.slane %v8987, 1
    %v8989 = vmax.f32 %v8987, %v8988
    %v8990 = vsel %vm8163, %v7326, -inf
    %v8991 = vrot.slane %v8990, 4
    %v8992 = vmax.f32 %v8990, %v8991
    %v8993 = vrot.slane %v8992, 2
    %v8994 = vmax.f32 %v8992, %v8993
    %v8995 = vrot.slane %v8994, 1
    %v8996 = vmax.f32 %v8994, %v8995
    %v8997 = vsel %vm8163, %v7328, -inf
    %v8998 = vrot.slane %v8997, 4
    %v8999 = vmax.f32 %v8997, %v8998
    %v9000 = vrot.slane %v8999, 2
    %v9001 = vmax.f32 %v8999, %v9000
    %v9002 = vrot.slane %v9001, 1
    %v9003 = vmax.f32 %v9001, %v9002
    %v9004 = vsel %vm8163, %v7336, -inf
    %v9005 = vrot.slane %v9004, 4
    %v9006 = vmax.f32 %v9004, %v9005
    %v9007 = vrot.slane %v9006, 2
    %v9008 = vmax.f32 %v9006, %v9007
    %v9009 = vrot.slane %v9008, 1
    %v9010 = vmax.f32 %v9008, %v9009
    %v9011 = vsel %vm8163, %v7344, -inf
    %v9012 = vrot.slane %v9011, 4
    %v9013 = vmax.f32 %v9011, %v9012
    %v9014 = vrot.slane %v9013, 2
    %v9015 = vmax.f32 %v9013, %v9014
    %v9016 = vrot.slane %v9015, 1
    %v9017 = vmax.f32 %v9015, %v9016
    %v9018 = vsel %vm8163, %v7343, -inf
    %v9019 = vrot.slane %v9018, 4
    %v9020 = vmax.f32 %v9018, %v9019
    %v9021 = vrot.slane %v9020, 2
    %v9022 = vmax.f32 %v9020, %v9021
    %v9023 = vrot.slane %v9022, 1
    %v9024 = vmax.f32 %v9022, %v9023
    %v9025 = vsel %vm8163, %v7345, -inf
    %v9026 = vrot.slane %v9025, 4
    %v9027 = vmax.f32 %v9025, %v9026
    %v9028 = vrot.slane %v9027, 2
    %v9029 = vmax.f32 %v9027, %v9028
    %v9030 = vrot.slane %v9029, 1
    %v9031 = vmax.f32 %v9029, %v9030
    %v9032 = vsel %vm8163, %v7353, -inf
    %v9033 = vrot.slane %v9032, 4
    %v9034 = vmax.f32 %v9032, %v9033
    %v9035 = vrot.slane %v9034, 2
    %v9036 = vmax.f32 %v9034, %v9035
    %v9037 = vrot.slane %v9036, 1
    %v9038 = vmax.f32 %v9036, %v9037
    %v9039 = vsel %vm8163, %v7361, -inf
    %v9040 = vrot.slane %v9039, 4
    %v9041 = vmax.f32 %v9039, %v9040
    %v9042 = vrot.slane %v9041, 2
    %v9043 = vmax.f32 %v9041, %v9042
    %v9044 = vrot.slane %v9043, 1
    %v9045 = vmax.f32 %v9043, %v9044
    %v9046 = vsel %vm8163, %v7360, -inf
    %v9047 = vrot.slane %v9046, 4
    %v9048 = vmax.f32 %v9046, %v9047
    %v9049 = vrot.slane %v9048, 2
    %v9050 = vmax.f32 %v9048, %v9049
    %v9051 = vrot.slane %v9050, 1
    %v9052 = vmax.f32 %v9050, %v9051
    %v9053 = vsel %vm8163, %v7362, -inf
    %v9054 = vrot.slane %v9053, 4
    %v9055 = vmax.f32 %v9053, %v9054
    %v9056 = vrot.slane %v9055, 2
    %v9057 = vmax.f32 %v9055, %v9056
    %v9058 = vrot.slane %v9057, 1
    %v9059 = vmax.f32 %v9057, %v9058
    %v9060 = vsel %vm8163, %v7370, -inf
    %v9061 = vrot.slane %v9060, 4
    %v9062 = vmax.f32 %v9060, %v9061
    %v9063 = vrot.slane %v9062, 2
    %v9064 = vmax.f32 %v9062, %v9063
    %v9065 = vrot.slane %v9064, 1
    %v9066 = vmax.f32 %v9064, %v9065
    %v9067 = vsel %vm8163, %v7378, -inf
    %v9068 = vrot.slane %v9067, 4
    %v9069 = vmax.f32 %v9067, %v9068
    %v9070 = vrot.slane %v9069, 2
    %v9071 = vmax.f32 %v9069, %v9070
    %v9072 = vrot.slane %v9071, 1
    %v9073 = vmax.f32 %v9071, %v9072
    %v9074 = vsel %vm8163, %v7377, -inf
    %v9075 = vrot.slane %v9074, 4
    %v9076 = vmax.f32 %v9074, %v9075
    %v9077 = vrot.slane %v9076, 2
    %v9078 = vmax.f32 %v9076, %v9077
    %v9079 = vrot.slane %v9078, 1
    %v9080 = vmax.f32 %v9078, %v9079
    %v9081 = vsel %vm8163, %v7379, -inf
    %v9082 = vrot.slane %v9081, 4
    %v9083 = vmax.f32 %v9081, %v9082
    %v9084 = vrot.slane %v9083, 2
    %v9085 = vmax.f32 %v9083, %v9084
    %v9086 = vrot.slane %v9085, 1
    %v9087 = vmax.f32 %v9085, %v9086
    %v9088 = vsel %vm8163, %v7387, -inf
    %v9089 = vrot.slane %v9088, 4
    %v9090 = vmax.f32 %v9088, %v9089
    %v9091 = vrot.slane %v9090, 2
    %v9092 = vmax.f32 %v9090, %v9091
    %v9093 = vrot.slane %v9092, 1
    %v9094 = vmax.f32 %v9092, %v9093
    %v9095 = vsel %vm8163, %v7395, -inf
    %v9096 = vrot.slane %v9095, 4
    %v9097 = vmax.f32 %v9095, %v9096
    %v9098 = vrot.slane %v9097, 2
    %v9099 = vmax.f32 %v9097, %v9098
    %v9100 = vrot.slane %v9099, 1
    %v9101 = vmax.f32 %v9099, %v9100
    %v9102 = vsel %vm8163, %v7394, -inf
    %v9103 = vrot.slane %v9102, 4
    %v9104 = vmax.f32 %v9102, %v9103
    %v9105 = vrot.slane %v9104, 2
    %v9106 = vmax.f32 %v9104, %v9105
    %v9107 = vrot.slane %v9106, 1
    %v9108 = vmax.f32 %v9106, %v9107
    %v9109 = vsel %vm8163, %v7396, -inf
    %v9110 = vrot.slane %v9109, 4
    %v9111 = vmax.f32 %v9109, %v9110
    %v9112 = vrot.slane %v9111, 2
    %v9113 = vmax.f32 %v9111, %v9112
    %v9114 = vrot.slane %v9113, 1
    %v9115 = vmax.f32 %v9113, %v9114
    %v9116 = vsel %vm8163, %v7404, -inf
    %v9117 = vrot.slane %v9116, 4
    %v9118 = vmax.f32 %v9116, %v9117
    %v9119 = vrot.slane %v9118, 2
    %v9120 = vmax.f32 %v9118, %v9119
    %v9121 = vrot.slane %v9120, 1
    %v9122 = vmax.f32 %v9120, %v9121
    %v9123 = vsel %vm8163, %v7412, -inf
    %v9124 = vrot.slane %v9123, 4
    %v9125 = vmax.f32 %v9123, %v9124
    %v9126 = vrot.slane %v9125, 2
    %v9127 = vmax.f32 %v9125, %v9126
    %v9128 = vrot.slane %v9127, 1
    %v9129 = vmax.f32 %v9127, %v9128
    %v9130 = vsel %vm8163, %v7411, -inf
    %v9131 = vrot.slane %v9130, 4
    %v9132 = vmax.f32 %v9130, %v9131
    %v9133 = vrot.slane %v9132, 2
    %v9134 = vmax.f32 %v9132, %v9133
    %v9135 = vrot.slane %v9134, 1
    %v9136 = vmax.f32 %v9134, %v9135
    %v9137 = vsel %vm8163, %v7413, -inf
    %v9138 = vrot.slane %v9137, 4
    %v9139 = vmax.f32 %v9137, %v9138
    %v9140 = vrot.slane %v9139, 2
    %v9141 = vmax.f32 %v9139, %v9140
    %v9142 = vrot.slane %v9141, 1
    %v9143 = vmax.f32 %v9141, %v9142
    %v9144 = vsel %vm8163, %v7421, -inf
    %v9145 = vrot.slane %v9144, 4
    %v9146 = vmax.f32 %v9144, %v9145
    %v9147 = vrot.slane %v9146, 2
    %v9148 = vmax.f32 %v9146, %v9147
    %v9149 = vrot.slane %v9148, 1
    %v9150 = vmax.f32 %v9148, %v9149
    %v9151 = vsel %vm8163, %v7429, -inf
    %v9152 = vrot.slane %v9151, 4
    %v9153 = vmax.f32 %v9151, %v9152
    %v9154 = vrot.slane %v9153, 2
    %v9155 = vmax.f32 %v9153, %v9154
    %v9156 = vrot.slane %v9155, 1
    %v9157 = vmax.f32 %v9155, %v9156
    %v9158 = vsel %vm8163, %v7428, -inf
    %v9159 = vrot.slane %v9158, 4
    %v9160 = vmax.f32 %v9158, %v9159
    %v9161 = vrot.slane %v9160, 2
    %v9162 = vmax.f32 %v9160, %v9161
    %v9163 = vrot.slane %v9162, 1
    %v9164 = vmax.f32 %v9162, %v9163
    %v9165 = vsel %vm8163, %v7430, -inf
    %v9166 = vrot.slane %v9165, 4
    %v9167 = vmax.f32 %v9165, %v9166
    %v9168 = vrot.slane %v9167, 2
    %v9169 = vmax.f32 %v9167, %v9168
    %v9170 = vrot.slane %v9169, 1
    %v9171 = vmax.f32 %v9169, %v9170
    %v9172 = vsel %vm8163, %v7438, -inf
    %v9173 = vrot.slane %v9172, 4
    %v9174 = vmax.f32 %v9172, %v9173
    %v9175 = vrot.slane %v9174, 2
    %v9176 = vmax.f32 %v9174, %v9175
    %v9177 = vrot.slane %v9176, 1
    %v9178 = vmax.f32 %v9176, %v9177
    %v9179 = vsel %vm8163, %v7446, -inf
    %v9180 = vrot.slane %v9179, 4
    %v9181 = vmax.f32 %v9179, %v9180
    %v9182 = vrot.slane %v9181, 2
    %v9183 = vmax.f32 %v9181, %v9182
    %v9184 = vrot.slane %v9183, 1
    %v9185 = vmax.f32 %v9183, %v9184
    %v9186 = vsel %vm8163, %v7445, -inf
    %v9187 = vrot.slane %v9186, 4
    %v9188 = vmax.f32 %v9186, %v9187
    %v9189 = vrot.slane %v9188, 2
    %v9190 = vmax.f32 %v9188, %v9189
    %v9191 = vrot.slane %v9190, 1
    %v9192 = vmax.f32 %v9190, %v9191
    %v9193 = vsel %vm8163, %v7447, -inf
    %v9194 = vrot.slane %v9193, 4
    %v9195 = vmax.f32 %v9193, %v9194
    %v9196 = vrot.slane %v9195, 2
    %v9197 = vmax.f32 %v9195, %v9196
    %v9198 = vrot.slane %v9197, 1
    %v9199 = vmax.f32 %v9197, %v9198
    %v9200 = vsel %vm8163, %v7455, -inf
    %v9201 = vrot.slane %v9200, 4
    %v9202 = vmax.f32 %v9200, %v9201
    %v9203 = vrot.slane %v9202, 2
    %v9204 = vmax.f32 %v9202, %v9203
    %v9205 = vrot.slane %v9204, 1
    %v9206 = vmax.f32 %v9204, %v9205
    %v9207 = vsel %vm8163, %v7463, -inf
    %v9208 = vrot.slane %v9207, 4
    %v9209 = vmax.f32 %v9207, %v9208
    %v9210 = vrot.slane %v9209, 2
    %v9211 = vmax.f32 %v9209, %v9210
    %v9212 = vrot.slane %v9211, 1
    %v9213 = vmax.f32 %v9211, %v9212
    %v9214 = vsel %vm8163, %v7462, -inf
    %v9215 = vrot.slane %v9214, 4
    %v9216 = vmax.f32 %v9214, %v9215
    %v9217 = vrot.slane %v9216, 2
    %v9218 = vmax.f32 %v9216, %v9217
    %v9219 = vrot.slane %v9218, 1
    %v9220 = vmax.f32 %v9218, %v9219
    %v9221 = vsel %vm8163, %v7464, -inf
    %v9222 = vrot.slane %v9221, 4
    %v9223 = vmax.f32 %v9221, %v9222
    %v9224 = vrot.slane %v9223, 2
    %v9225 = vmax.f32 %v9223, %v9224
    %v9226 = vrot.slane %v9225, 1
    %v9227 = vmax.f32 %v9225, %v9226
    %v9228 = vsel %vm8163, %v7472, -inf
    %v9229 = vrot.slane %v9228, 4
    %v9230 = vmax.f32 %v9228, %v9229
    %v9231 = vrot.slane %v9230, 2
    %v9232 = vmax.f32 %v9230, %v9231
    %v9233 = vrot.slane %v9232, 1
    %v9234 = vmax.f32 %v9232, %v9233
    %v9235 = vsel %vm8163, %v7480, -inf
    %v9236 = vrot.slane %v9235, 4
    %v9237 = vmax.f32 %v9235, %v9236
    %v9238 = vrot.slane %v9237, 2
    %v9239 = vmax.f32 %v9237, %v9238
    %v9240 = vrot.slane %v9239, 1
    %v9241 = vmax.f32 %v9239, %v9240
    %v9242 = vsel %vm8163, %v7479, -inf
    %v9243 = vrot.slane %v9242, 4
    %v9244 = vmax.f32 %v9242, %v9243
    %v9245 = vrot.slane %v9244, 2
    %v9246 = vmax.f32 %v9244, %v9245
    %v9247 = vrot.slane %v9246, 1
    %v9248 = vmax.f32 %v9246, %v9247
    %v9249 = vsel %vm8163, %v7481, -inf
    %v9250 = vrot.slane %v9249, 4
    %v9251 = vmax.f32 %v9249, %v9250
    %v9252 = vrot.slane %v9251, 2
    %v9253 = vmax.f32 %v9251, %v9252
    %v9254 = vrot.slane %v9253, 1
    %v9255 = vmax.f32 %v9253, %v9254
    %v9256 = vsel %vm8163, %v7489, -inf
    %v9257 = vrot.slane %v9256, 4
    %v9258 = vmax.f32 %v9256, %v9257
    %v9259 = vrot.slane %v9258, 2
    %v9260 = vmax.f32 %v9258, %v9259
    %v9261 = vrot.slane %v9260, 1
    %v9262 = vmax.f32 %v9260, %v9261
    %v9263 = vsel %vm8163, %v7497, -inf
    %v9264 = vrot.slane %v9263, 4
    %v9265 = vmax.f32 %v9263, %v9264
    %v9266 = vrot.slane %v9265, 2
    %v9267 = vmax.f32 %v9265, %v9266
    %v9268 = vrot.slane %v9267, 1
    %v9269 = vmax.f32 %v9267, %v9268
    %v9270 = vsel %vm8163, %v7496, -inf
    %v9271 = vrot.slane %v9270, 4
    %v9272 = vmax.f32 %v9270, %v9271
    %v9273 = vrot.slane %v9272, 2
    %v9274 = vmax.f32 %v9272, %v9273
    %v9275 = vrot.slane %v9274, 1
    %v9276 = vmax.f32 %v9274, %v9275
    %v9277 = vsel %vm8163, %v7498, -inf
    %v9278 = vrot.slane %v9277, 4
    %v9279 = vmax.f32 %v9277, %v9278
    %v9280 = vrot.slane %v9279, 2
    %v9281 = vmax.f32 %v9279, %v9280
    %v9282 = vrot.slane %v9281, 1
    %v9283 = vmax.f32 %v9281, %v9282
    %v9284 = vsel %vm8163, %v7506, -inf
    %v9285 = vrot.slane %v9284, 4
    %v9286 = vmax.f32 %v9284, %v9285
    %v9287 = vrot.slane %v9286, 2
    %v9288 = vmax.f32 %v9286, %v9287
    %v9289 = vrot.slane %v9288, 1
    %v9290 = vmax.f32 %v9288, %v9289
    %v9291 = vsel %vm8163, %v7514, -inf
    %v9292 = vrot.slane %v9291, 4
    %v9293 = vmax.f32 %v9291, %v9292
    %v9294 = vrot.slane %v9293, 2
    %v9295 = vmax.f32 %v9293, %v9294
    %v9296 = vrot.slane %v9295, 1
    %v9297 = vmax.f32 %v9295, %v9296
    %v9298 = vsel %vm8163, %v7513, -inf
    %v9299 = vrot.slane %v9298, 4
    %v9300 = vmax.f32 %v9298, %v9299
    %v9301 = vrot.slane %v9300, 2
    %v9302 = vmax.f32 %v9300, %v9301
    %v9303 = vrot.slane %v9302, 1
    %v9304 = vmax.f32 %v9302, %v9303
    %v9305 = vsel %vm8163, %v7515, -inf
    %v9306 = vrot.slane %v9305, 4
    %v9307 = vmax.f32 %v9305, %v9306
    %v9308 = vrot.slane %v9307, 2
    %v9309 = vmax.f32 %v9307, %v9308
    %v9310 = vrot.slane %v9309, 1
    %v9311 = vmax.f32 %v9309, %v9310
    %v9312 = vsel %vm8163, %v7523, -inf
    %v9313 = vrot.slane %v9312, 4
    %v9314 = vmax.f32 %v9312, %v9313
    %v9315 = vrot.slane %v9314, 2
    %v9316 = vmax.f32 %v9314, %v9315
    %v9317 = vrot.slane %v9316, 1
    %v9318 = vmax.f32 %v9316, %v9317
    %v9319 = vsel %vm8163, %v7531, -inf
    %v9320 = vrot.slane %v9319, 4
    %v9321 = vmax.f32 %v9319, %v9320
    %v9322 = vrot.slane %v9321, 2
    %v9323 = vmax.f32 %v9321, %v9322
    %v9324 = vrot.slane %v9323, 1
    %v9325 = vmax.f32 %v9323, %v9324
    %v9326 = vsel %vm8163, %v7530, -inf
    %v9327 = vrot.slane %v9326, 4
    %v9328 = vmax.f32 %v9326, %v9327
    %v9329 = vrot.slane %v9328, 2
    %v9330 = vmax.f32 %v9328, %v9329
    %v9331 = vrot.slane %v9330, 1
    %v9332 = vmax.f32 %v9330, %v9331
    %v9333 = vsel %vm8163, %v7532, -inf
    %v9334 = vrot.slane %v9333, 4
    %v9335 = vmax.f32 %v9333, %v9334
    %v9336 = vrot.slane %v9335, 2
    %v9337 = vmax.f32 %v9335, %v9336
    %v9338 = vrot.slane %v9337, 1
    %v9339 = vmax.f32 %v9337, %v9338
    %v9340 = vsel %vm8163, %v7540, -inf
    %v9341 = vrot.slane %v9340, 4
    %v9342 = vmax.f32 %v9340, %v9341
    %v9343 = vrot.slane %v9342, 2
    %v9344 = vmax.f32 %v9342, %v9343
    %v9345 = vrot.slane %v9344, 1
    %v9346 = vmax.f32 %v9344, %v9345
    %v9347 = vsel %vm8163, %v7548, -inf
    %v9348 = vrot.slane %v9347, 4
    %v9349 = vmax.f32 %v9347, %v9348
    %v9350 = vrot.slane %v9349, 2
    %v9351 = vmax.f32 %v9349, %v9350
    %v9352 = vrot.slane %v9351, 1
    %v9353 = vmax.f32 %v9351, %v9352
    %v9354 = vsel %vm8163, %v7547, -inf
    %v9355 = vrot.slane %v9354, 4
    %v9356 = vmax.f32 %v9354, %v9355
    %v9357 = vrot.slane %v9356, 2
    %v9358 = vmax.f32 %v9356, %v9357
    %v9359 = vrot.slane %v9358, 1
    %v9360 = vmax.f32 %v9358, %v9359
    %v9361 = vsel %vm8163, %v7549, -inf
    %v9362 = vrot.slane %v9361, 4
    %v9363 = vmax.f32 %v9361, %v9362
    %v9364 = vrot.slane %v9363, 2
    %v9365 = vmax.f32 %v9363, %v9364
    %v9366 = vrot.slane %v9365, 1
    %v9367 = vmax.f32 %v9365, %v9366
    %v9368 = vsel %vm8163, %v7557, -inf
    %v9369 = vrot.slane %v9368, 4
    %v9370 = vmax.f32 %v9368, %v9369
    %v9371 = vrot.slane %v9370, 2
    %v9372 = vmax.f32 %v9370, %v9371
    %v9373 = vrot.slane %v9372, 1
    %v9374 = vmax.f32 %v9372, %v9373
    %v9375 = vsel %vm8163, %v7565, -inf
    %v9376 = vrot.slane %v9375, 4
    %v9377 = vmax.f32 %v9375, %v9376
    %v9378 = vrot.slane %v9377, 2
    %v9379 = vmax.f32 %v9377, %v9378
    %v9380 = vrot.slane %v9379, 1
    %v9381 = vmax.f32 %v9379, %v9380
    %v9382 = vsel %vm8163, %v7564, -inf
    %v9383 = vrot.slane %v9382, 4
    %v9384 = vmax.f32 %v9382, %v9383
    %v9385 = vrot.slane %v9384, 2
    %v9386 = vmax.f32 %v9384, %v9385
    %v9387 = vrot.slane %v9386, 1
    %v9388 = vmax.f32 %v9386, %v9387
    %v9389 = vsel %vm8163, %v7566, -inf
    %v9390 = vrot.slane %v9389, 4
    %v9391 = vmax.f32 %v9389, %v9390
    %v9392 = vrot.slane %v9391, 2
    %v9393 = vmax.f32 %v9391, %v9392
    %v9394 = vrot.slane %v9393, 1
    %v9395 = vmax.f32 %v9393, %v9394
    %v9396 = vsel %vm8163, %v7574, -inf
    %v9397 = vrot.slane %v9396, 4
    %v9398 = vmax.f32 %v9396, %v9397
    %v9399 = vrot.slane %v9398, 2
    %v9400 = vmax.f32 %v9398, %v9399
    %v9401 = vrot.slane %v9400, 1
    %v9402 = vmax.f32 %v9400, %v9401
    %v9403 = vsel %vm8163, %v7582, -inf
    %v9404 = vrot.slane %v9403, 4
    %v9405 = vmax.f32 %v9403, %v9404
    %v9406 = vrot.slane %v9405, 2
    %v9407 = vmax.f32 %v9405, %v9406
    %v9408 = vrot.slane %v9407, 1
    %v9409 = vmax.f32 %v9407, %v9408
    %v9410 = vsel %vm8163, %v7581, -inf
    %v9411 = vrot.slane %v9410, 4
    %v9412 = vmax.f32 %v9410, %v9411
    %v9413 = vrot.slane %v9412, 2
    %v9414 = vmax.f32 %v9412, %v9413
    %v9415 = vrot.slane %v9414, 1
    %v9416 = vmax.f32 %v9414, %v9415
    %v9417 = vsel %vm8163, %v7583, -inf
    %v9418 = vrot.slane %v9417, 4
    %v9419 = vmax.f32 %v9417, %v9418
    %v9420 = vrot.slane %v9419, 2
    %v9421 = vmax.f32 %v9419, %v9420
    %v9422 = vrot.slane %v9421, 1
    %v9423 = vmax.f32 %v9421, %v9422
    %v9424 = vsel %vm8163, %v7591, -inf
    %v9425 = vrot.slane %v9424, 4
    %v9426 = vmax.f32 %v9424, %v9425
    %v9427 = vrot.slane %v9426, 2
    %v9428 = vmax.f32 %v9426, %v9427
    %v9429 = vrot.slane %v9428, 1
    %v9430 = vmax.f32 %v9428, %v9429
    %v9431 = vsel %vm8163, %v7599, -inf
    %v9432 = vrot.slane %v9431, 4
    %v9433 = vmax.f32 %v9431, %v9432
    %v9434 = vrot.slane %v9433, 2
    %v9435 = vmax.f32 %v9433, %v9434
    %v9436 = vrot.slane %v9435, 1
    %v9437 = vmax.f32 %v9435, %v9436
    %v9438 = vsel %vm8163, %v7598, -inf
    %v9439 = vrot.slane %v9438, 4
    %v9440 = vmax.f32 %v9438, %v9439
    %v9441 = vrot.slane %v9440, 2
    %v9442 = vmax.f32 %v9440, %v9441
    %v9443 = vrot.slane %v9442, 1
    %v9444 = vmax.f32 %v9442, %v9443
    %v9445 = vsel %vm8163, %v7600, -inf
    %v9446 = vrot.slane %v9445, 4
    %v9447 = vmax.f32 %v9445, %v9446
    %v9448 = vrot.slane %v9447, 2
    %v9449 = vmax.f32 %v9447, %v9448
    %v9450 = vrot.slane %v9449, 1
    %v9451 = vmax.f32 %v9449, %v9450
    %v9452 = vsel %vm8163, %v7608, -inf
    %v9453 = vrot.slane %v9452, 4
    %v9454 = vmax.f32 %v9452, %v9453
    %v9455 = vrot.slane %v9454, 2
    %v9456 = vmax.f32 %v9454, %v9455
    %v9457 = vrot.slane %v9456, 1
    %v9458 = vmax.f32 %v9456, %v9457
    %v9459 = vsel %vm8163, %v7616, -inf
    %v9460 = vrot.slane %v9459, 4
    %v9461 = vmax.f32 %v9459, %v9460
    %v9462 = vrot.slane %v9461, 2
    %v9463 = vmax.f32 %v9461, %v9462
    %v9464 = vrot.slane %v9463, 1
    %v9465 = vmax.f32 %v9463, %v9464
    %v9466 = vsel %vm8163, %v7615, -inf
    %v9467 = vrot.slane %v9466, 4
    %v9468 = vmax.f32 %v9466, %v9467
    %v9469 = vrot.slane %v9468, 2
    %v9470 = vmax.f32 %v9468, %v9469
    %v9471 = vrot.slane %v9470, 1
    %v9472 = vmax.f32 %v9470, %v9471
    %v9473 = vsel %vm8163, %v7617, -inf
    %v9474 = vrot.slane %v9473, 4
    %v9475 = vmax.f32 %v9473, %v9474
    %v9476 = vrot.slane %v9475, 2
    %v9477 = vmax.f32 %v9475, %v9476
    %v9478 = vrot.slane %v9477, 1
    %v9479 = vmax.f32 %v9477, %v9478
    %v9480 = vsel %vm8163, %v7625, -inf
    %v9481 = vrot.slane %v9480, 4
    %v9482 = vmax.f32 %v9480, %v9481
    %v9483 = vrot.slane %v9482, 2
    %v9484 = vmax.f32 %v9482, %v9483
    %v9485 = vrot.slane %v9484, 1
    %v9486 = vmax.f32 %v9484, %v9485
    %v9487 = vsel %vm8163, %v7633, -inf
    %v9488 = vrot.slane %v9487, 4
    %v9489 = vmax.f32 %v9487, %v9488
    %v9490 = vrot.slane %v9489, 2
    %v9491 = vmax.f32 %v9489, %v9490
    %v9492 = vrot.slane %v9491, 1
    %v9493 = vmax.f32 %v9491, %v9492
    %v9494 = vsel %vm8163, %v7632, -inf
    %v9495 = vrot.slane %v9494, 4
    %v9496 = vmax.f32 %v9494, %v9495
    %v9497 = vrot.slane %v9496, 2
    %v9498 = vmax.f32 %v9496, %v9497
    %v9499 = vrot.slane %v9498, 1
    %v9500 = vmax.f32 %v9498, %v9499
    %v9501 = vsel %vm8163, %v7634, -inf
    %v9502 = vrot.slane %v9501, 4
    %v9503 = vmax.f32 %v9501, %v9502
    %v9504 = vrot.slane %v9503, 2
    %v9505 = vmax.f32 %v9503, %v9504
    %v9506 = vrot.slane %v9505, 1
    %v9507 = vmax.f32 %v9505, %v9506
    %v9508 = vsel %vm8163, %v7642, -inf
    %v9509 = vrot.slane %v9508, 4
    %v9510 = vmax.f32 %v9508, %v9509
    %v9511 = vrot.slane %v9510, 2
    %v9512 = vmax.f32 %v9510, %v9511
    %v9513 = vrot.slane %v9512, 1
    %v9514 = vmax.f32 %v9512, %v9513
    %v9515 = vsel %vm8163, %v7650, -inf
    %v9516 = vrot.slane %v9515, 4
    %v9517 = vmax.f32 %v9515, %v9516
    %v9518 = vrot.slane %v9517, 2
    %v9519 = vmax.f32 %v9517, %v9518
    %v9520 = vrot.slane %v9519, 1
    %v9521 = vmax.f32 %v9519, %v9520
    %v9522 = vsel %vm8163, %v7649, -inf
    %v9523 = vrot.slane %v9522, 4
    %v9524 = vmax.f32 %v9522, %v9523
    %v9525 = vrot.slane %v9524, 2
    %v9526 = vmax.f32 %v9524, %v9525
    %v9527 = vrot.slane %v9526, 1
    %v9528 = vmax.f32 %v9526, %v9527
    %v9529 = vsel %vm8163, %v7651, -inf
    %v9530 = vrot.slane %v9529, 4
    %v9531 = vmax.f32 %v9529, %v9530
    %v9532 = vrot.slane %v9531, 2
    %v9533 = vmax.f32 %v9531, %v9532
    %v9534 = vrot.slane %v9533, 1
    %v9535 = vmax.f32 %v9533, %v9534
    %v9536 = vsel %vm8163, %v7659, -inf
    %v9537 = vrot.slane %v9536, 4
    %v9538 = vmax.f32 %v9536, %v9537
    %v9539 = vrot.slane %v9538, 2
    %v9540 = vmax.f32 %v9538, %v9539
    %v9541 = vrot.slane %v9540, 1
    %v9542 = vmax.f32 %v9540, %v9541
    %v9543 = vsel %vm8163, %v7667, -inf
    %v9544 = vrot.slane %v9543, 4
    %v9545 = vmax.f32 %v9543, %v9544
    %v9546 = vrot.slane %v9545, 2
    %v9547 = vmax.f32 %v9545, %v9546
    %v9548 = vrot.slane %v9547, 1
    %v9549 = vmax.f32 %v9547, %v9548
    %v9550 = vsel %vm8163, %v7666, -inf
    %v9551 = vrot.slane %v9550, 4
    %v9552 = vmax.f32 %v9550, %v9551
    %v9553 = vrot.slane %v9552, 2
    %v9554 = vmax.f32 %v9552, %v9553
    %v9555 = vrot.slane %v9554, 1
    %v9556 = vmax.f32 %v9554, %v9555
    %v9557 = vsel %vm8163, %v7668, -inf
    %v9558 = vrot.slane %v9557, 4
    %v9559 = vmax.f32 %v9557, %v9558
    %v9560 = vrot.slane %v9559, 2
    %v9561 = vmax.f32 %v9559, %v9560
    %v9562 = vrot.slane %v9561, 1
    %v9563 = vmax.f32 %v9561, %v9562
    %v9564 = vsel %vm8163, %v7676, -inf
    %v9565 = vrot.slane %v9564, 4
    %v9566 = vmax.f32 %v9564, %v9565
    %v9567 = vrot.slane %v9566, 2
    %v9568 = vmax.f32 %v9566, %v9567
    %v9569 = vrot.slane %v9568, 1
    %v9570 = vmax.f32 %v9568, %v9569
    %v9571 = vsel %vm8163, %v7684, -inf
    %v9572 = vrot.slane %v9571, 4
    %v9573 = vmax.f32 %v9571, %v9572
    %v9574 = vrot.slane %v9573, 2
    %v9575 = vmax.f32 %v9573, %v9574
    %v9576 = vrot.slane %v9575, 1
    %v9577 = vmax.f32 %v9575, %v9576
    %v9578 = vsel %vm8163, %v7683, -inf
    %v9579 = vrot.slane %v9578, 4
    %v9580 = vmax.f32 %v9578, %v9579
    %v9581 = vrot.slane %v9580, 2
    %v9582 = vmax.f32 %v9580, %v9581
    %v9583 = vrot.slane %v9582, 1
    %v9584 = vmax.f32 %v9582, %v9583
    %v9585 = vsel %vm8163, %v7685, -inf
    %v9586 = vrot.slane %v9585, 4
    %v9587 = vmax.f32 %v9585, %v9586
    %v9588 = vrot.slane %v9587, 2
    %v9589 = vmax.f32 %v9587, %v9588
    %v9590 = vrot.slane %v9589, 1
    %v9591 = vmax.f32 %v9589, %v9590
    %v9592 = vsel %vm8163, %v7693, -inf
    %v9593 = vrot.slane %v9592, 4
    %v9594 = vmax.f32 %v9592, %v9593
    %v9595 = vrot.slane %v9594, 2
    %v9596 = vmax.f32 %v9594, %v9595
    %v9597 = vrot.slane %v9596, 1
    %v9598 = vmax.f32 %v9596, %v9597
    %v9599 = vsel %vm8163, %v7701, -inf
    %v9600 = vrot.slane %v9599, 4
    %v9601 = vmax.f32 %v9599, %v9600
    %v9602 = vrot.slane %v9601, 2
    %v9603 = vmax.f32 %v9601, %v9602
    %v9604 = vrot.slane %v9603, 1
    %v9605 = vmax.f32 %v9603, %v9604
    %v9606 = vsel %vm8163, %v7700, -inf
    %v9607 = vrot.slane %v9606, 4
    %v9608 = vmax.f32 %v9606, %v9607
    %v9609 = vrot.slane %v9608, 2
    %v9610 = vmax.f32 %v9608, %v9609
    %v9611 = vrot.slane %v9610, 1
    %v9612 = vmax.f32 %v9610, %v9611
    %v9613 = vsel %vm8163, %v7702, -inf
    %v9614 = vrot.slane %v9613, 4
    %v9615 = vmax.f32 %v9613, %v9614
    %v9616 = vrot.slane %v9615, 2
    %v9617 = vmax.f32 %v9615, %v9616
    %v9618 = vrot.slane %v9617, 1
    %v9619 = vmax.f32 %v9617, %v9618
    %v9620 = vsel %vm8163, %v7710, -inf
    %v9621 = vrot.slane %v9620, 4
    %v9622 = vmax.f32 %v9620, %v9621
    %v9623 = vrot.slane %v9622, 2
    %v9624 = vmax.f32 %v9622, %v9623
    %v9625 = vrot.slane %v9624, 1
    %v9626 = vmax.f32 %v9624, %v9625
    %v9627 = vsel %vm8163, %v7718, -inf
    %v9628 = vrot.slane %v9627, 4
    %v9629 = vmax.f32 %v9627, %v9628
    %v9630 = vrot.slane %v9629, 2
    %v9631 = vmax.f32 %v9629, %v9630
    %v9632 = vrot.slane %v9631, 1
    %v9633 = vmax.f32 %v9631, %v9632
    %v9634 = vsel %vm8163, %v7717, -inf
    %v9635 = vrot.slane %v9634, 4
    %v9636 = vmax.f32 %v9634, %v9635
    %v9637 = vrot.slane %v9636, 2
    %v9638 = vmax.f32 %v9636, %v9637
    %v9639 = vrot.slane %v9638, 1
    %v9640 = vmax.f32 %v9638, %v9639
    %v9641 = vsel %vm8163, %v7719, -inf
    %v9642 = vrot.slane %v9641, 4
    %v9643 = vmax.f32 %v9641, %v9642
    %v9644 = vrot.slane %v9643, 2
    %v9645 = vmax.f32 %v9643, %v9644
    %v9646 = vrot.slane %v9645, 1
    %v9647 = vmax.f32 %v9645, %v9646
    %v9648 = vsel %vm8163, %v7727, -inf
    %v9649 = vrot.slane %v9648, 4
    %v9650 = vmax.f32 %v9648, %v9649
    %v9651 = vrot.slane %v9650, 2
    %v9652 = vmax.f32 %v9650, %v9651
    %v9653 = vrot.slane %v9652, 1
    %v9654 = vmax.f32 %v9652, %v9653
    %v9655 = vsel %vm8163, %v7735, -inf
    %v9656 = vrot.slane %v9655, 4
    %v9657 = vmax.f32 %v9655, %v9656
    %v9658 = vrot.slane %v9657, 2
    %v9659 = vmax.f32 %v9657, %v9658
    %v9660 = vrot.slane %v9659, 1
    %v9661 = vmax.f32 %v9659, %v9660
    %v9662 = vsel %vm8163, %v7734, -inf
    %v9663 = vrot.slane %v9662, 4
    %v9664 = vmax.f32 %v9662, %v9663
    %v9665 = vrot.slane %v9664, 2
    %v9666 = vmax.f32 %v9664, %v9665
    %v9667 = vrot.slane %v9666, 1
    %v9668 = vmax.f32 %v9666, %v9667
    %v9669 = vsel %vm8163, %v7736, -inf
    %v9670 = vrot.slane %v9669, 4
    %v9671 = vmax.f32 %v9669, %v9670
    %v9672 = vrot.slane %v9671, 2
    %v9673 = vmax.f32 %v9671, %v9672
    %v9674 = vrot.slane %v9673, 1
    %v9675 = vmax.f32 %v9673, %v9674
    %v9676 = vsel %vm8163, %v7744, -inf
    %v9677 = vrot.slane %v9676, 4
    %v9678 = vmax.f32 %v9676, %v9677
    %v9679 = vrot.slane %v9678, 2
    %v9680 = vmax.f32 %v9678, %v9679
    %v9681 = vrot.slane %v9680, 1
    %v9682 = vmax.f32 %v9680, %v9681
    %v9683 = vsel %vm8163, %v7752, -inf
    %v9684 = vrot.slane %v9683, 4
    %v9685 = vmax.f32 %v9683, %v9684
    %v9686 = vrot.slane %v9685, 2
    %v9687 = vmax.f32 %v9685, %v9686
    %v9688 = vrot.slane %v9687, 1
    %v9689 = vmax.f32 %v9687, %v9688
    %v9690 = vsel %vm8163, %v7751, -inf
    %v9691 = vrot.slane %v9690, 4
    %v9692 = vmax.f32 %v9690, %v9691
    %v9693 = vrot.slane %v9692, 2
    %v9694 = vmax.f32 %v9692, %v9693
    %v9695 = vrot.slane %v9694, 1
    %v9696 = vmax.f32 %v9694, %v9695
    %v9697 = vsel %vm8163, %v7753, -inf
    %v9698 = vrot.slane %v9697, 4
    %v9699 = vmax.f32 %v9697, %v9698
    %v9700 = vrot.slane %v9699, 2
    %v9701 = vmax.f32 %v9699, %v9700
    %v9702 = vrot.slane %v9701, 1
    %v9703 = vmax.f32 %v9701, %v9702
    %v9704 = vsel %vm8163, %v7761, -inf
    %v9705 = vrot.slane %v9704, 4
    %v9706 = vmax.f32 %v9704, %v9705
    %v9707 = vrot.slane %v9706, 2
    %v9708 = vmax.f32 %v9706, %v9707
    %v9709 = vrot.slane %v9708, 1
    %v9710 = vmax.f32 %v9708, %v9709
    %v9711 = vsel %vm8163, %v7769, -inf
    %v9712 = vrot.slane %v9711, 4
    %v9713 = vmax.f32 %v9711, %v9712
    %v9714 = vrot.slane %v9713, 2
    %v9715 = vmax.f32 %v9713, %v9714
    %v9716 = vrot.slane %v9715, 1
    %v9717 = vmax.f32 %v9715, %v9716
    %v9718 = vsel %vm8163, %v7768, -inf
    %v9719 = vrot.slane %v9718, 4
    %v9720 = vmax.f32 %v9718, %v9719
    %v9721 = vrot.slane %v9720, 2
    %v9722 = vmax.f32 %v9720, %v9721
    %v9723 = vrot.slane %v9722, 1
    %v9724 = vmax.f32 %v9722, %v9723
    %v9725 = vsel %vm8163, %v7770, -inf
    %v9726 = vrot.slane %v9725, 4
    %v9727 = vmax.f32 %v9725, %v9726
    %v9728 = vrot.slane %v9727, 2
    %v9729 = vmax.f32 %v9727, %v9728
    %v9730 = vrot.slane %v9729, 1
    %v9731 = vmax.f32 %v9729, %v9730
    %v9732 = vsel %vm8163, %v7778, -inf
    %v9733 = vrot.slane %v9732, 4
    %v9734 = vmax.f32 %v9732, %v9733
    %v9735 = vrot.slane %v9734, 2
    %v9736 = vmax.f32 %v9734, %v9735
    %v9737 = vrot.slane %v9736, 1
    %v9738 = vmax.f32 %v9736, %v9737
    %v9739 = vsel %vm8163, %v7786, -inf
    %v9740 = vrot.slane %v9739, 4
    %v9741 = vmax.f32 %v9739, %v9740
    %v9742 = vrot.slane %v9741, 2
    %v9743 = vmax.f32 %v9741, %v9742
    %v9744 = vrot.slane %v9743, 1
    %v9745 = vmax.f32 %v9743, %v9744
    %v9746 = vsel %vm8163, %v7785, -inf
    %v9747 = vrot.slane %v9746, 4
    %v9748 = vmax.f32 %v9746, %v9747
    %v9749 = vrot.slane %v9748, 2
    %v9750 = vmax.f32 %v9748, %v9749
    %v9751 = vrot.slane %v9750, 1
    %v9752 = vmax.f32 %v9750, %v9751
    %v9753 = vsel %vm8163, %v7787, -inf
    %v9754 = vrot.slane %v9753, 4
    %v9755 = vmax.f32 %v9753, %v9754
    %v9756 = vrot.slane %v9755, 2
    %v9757 = vmax.f32 %v9755, %v9756
    %v9758 = vrot.slane %v9757, 1
    %v9759 = vmax.f32 %v9757, %v9758
    %v9760 = vsel %vm8163, %v7795, -inf
    %v9761 = vrot.slane %v9760, 4
    %v9762 = vmax.f32 %v9760, %v9761
    %v9763 = vrot.slane %v9762, 2
    %v9764 = vmax.f32 %v9762, %v9763
    %v9765 = vrot.slane %v9764, 1
    %v9766 = vmax.f32 %v9764, %v9765
    %v9767 = vsel %vm8163, %v7803, -inf
    %v9768 = vrot.slane %v9767, 4
    %v9769 = vmax.f32 %v9767, %v9768
    %v9770 = vrot.slane %v9769, 2
    %v9771 = vmax.f32 %v9769, %v9770
    %v9772 = vrot.slane %v9771, 1
    %v9773 = vmax.f32 %v9771, %v9772
    %v9774 = vsel %vm8163, %v7802, -inf
    %v9775 = vrot.slane %v9774, 4
    %v9776 = vmax.f32 %v9774, %v9775
    %v9777 = vrot.slane %v9776, 2
    %v9778 = vmax.f32 %v9776, %v9777
    %v9779 = vrot.slane %v9778, 1
    %v9780 = vmax.f32 %v9778, %v9779
    %v9781 = vsel %vm8163, %v7804, -inf
    %v9782 = vrot.slane %v9781, 4
    %v9783 = vmax.f32 %v9781, %v9782
    %v9784 = vrot.slane %v9783, 2
    %v9785 = vmax.f32 %v9783, %v9784
    %v9786 = vrot.slane %v9785, 1
    %v9787 = vmax.f32 %v9785, %v9786
    %v9788 = vsel %vm8163, %v7812, -inf
    %v9789 = vrot.slane %v9788, 4
    %v9790 = vmax.f32 %v9788, %v9789
    %v9791 = vrot.slane %v9790, 2
    %v9792 = vmax.f32 %v9790, %v9791
    %v9793 = vrot.slane %v9792, 1
    %v9794 = vmax.f32 %v9792, %v9793
    %v9795 = vsel %vm8163, %v7820, -inf
    %v9796 = vrot.slane %v9795, 4
    %v9797 = vmax.f32 %v9795, %v9796
    %v9798 = vrot.slane %v9797, 2
    %v9799 = vmax.f32 %v9797, %v9798
    %v9800 = vrot.slane %v9799, 1
    %v9801 = vmax.f32 %v9799, %v9800
    %v9802 = vsel %vm8163, %v7819, -inf
    %v9803 = vrot.slane %v9802, 4
    %v9804 = vmax.f32 %v9802, %v9803
    %v9805 = vrot.slane %v9804, 2
    %v9806 = vmax.f32 %v9804, %v9805
    %v9807 = vrot.slane %v9806, 1
    %v9808 = vmax.f32 %v9806, %v9807
    %v9809 = vsel %vm8163, %v7821, -inf
    %v9810 = vrot.slane %v9809, 4
    %v9811 = vmax.f32 %v9809, %v9810
    %v9812 = vrot.slane %v9811, 2
    %v9813 = vmax.f32 %v9811, %v9812
    %v9814 = vrot.slane %v9813, 1
    %v9815 = vmax.f32 %v9813, %v9814
    %v9816 = vsel %vm8163, %v7829, -inf
    %v9817 = vrot.slane %v9816, 4
    %v9818 = vmax.f32 %v9816, %v9817
    %v9819 = vrot.slane %v9818, 2
    %v9820 = vmax.f32 %v9818, %v9819
    %v9821 = vrot.slane %v9820, 1
    %v9822 = vmax.f32 %v9820, %v9821
    %v9823 = vsel %vm8163, %v7837, -inf
    %v9824 = vrot.slane %v9823, 4
    %v9825 = vmax.f32 %v9823, %v9824
    %v9826 = vrot.slane %v9825, 2
    %v9827 = vmax.f32 %v9825, %v9826
    %v9828 = vrot.slane %v9827, 1
    %v9829 = vmax.f32 %v9827, %v9828
    %v9830 = vsel %vm8163, %v7836, -inf
    %v9831 = vrot.slane %v9830, 4
    %v9832 = vmax.f32 %v9830, %v9831
    %v9833 = vrot.slane %v9832, 2
    %v9834 = vmax.f32 %v9832, %v9833
    %v9835 = vrot.slane %v9834, 1
    %v9836 = vmax.f32 %v9834, %v9835
    %v9837 = vsel %vm8163, %v7838, -inf
    %v9838 = vrot.slane %v9837, 4
    %v9839 = vmax.f32 %v9837, %v9838
    %v9840 = vrot.slane %v9839, 2
    %v9841 = vmax.f32 %v9839, %v9840
    %v9842 = vrot.slane %v9841, 1
    %v9843 = vmax.f32 %v9841, %v9842
    %v9844 = vsel %vm8163, %v7846, -inf
    %v9845 = vrot.slane %v9844, 4
    %v9846 = vmax.f32 %v9844, %v9845
    %v9847 = vrot.slane %v9846, 2
    %v9848 = vmax.f32 %v9846, %v9847
    %v9849 = vrot.slane %v9848, 1
    %v9850 = vmax.f32 %v9848, %v9849
    %v9851 = vsel %vm8163, %v7854, -inf
    %v9852 = vrot.slane %v9851, 4
    %v9853 = vmax.f32 %v9851, %v9852
    %v9854 = vrot.slane %v9853, 2
    %v9855 = vmax.f32 %v9853, %v9854
    %v9856 = vrot.slane %v9855, 1
    %v9857 = vmax.f32 %v9855, %v9856
    %v9858 = vsel %vm8163, %v7853, -inf
    %v9859 = vrot.slane %v9858, 4
    %v9860 = vmax.f32 %v9858, %v9859
    %v9861 = vrot.slane %v9860, 2
    %v9862 = vmax.f32 %v9860, %v9861
    %v9863 = vrot.slane %v9862, 1
    %v9864 = vmax.f32 %v9862, %v9863
    %v9865 = vsel %vm8163, %v7855, -inf
    %v9866 = vrot.slane %v9865, 4
    %v9867 = vmax.f32 %v9865, %v9866
    %v9868 = vrot.slane %v9867, 2
    %v9869 = vmax.f32 %v9867, %v9868
    %v9870 = vrot.slane %v9869, 1
    %v9871 = vmax.f32 %v9869, %v9870
    %v9872 = vsel %vm8163, %v7863, -inf
    %v9873 = vrot.slane %v9872, 4
    %v9874 = vmax.f32 %v9872, %v9873
    %v9875 = vrot.slane %v9874, 2
    %v9876 = vmax.f32 %v9874, %v9875
    %v9877 = vrot.slane %v9876, 1
    %v9878 = vmax.f32 %v9876, %v9877
    %v9879 = vsel %vm8163, %v7871, -inf
    %v9880 = vrot.slane %v9879, 4
    %v9881 = vmax.f32 %v9879, %v9880
    %v9882 = vrot.slane %v9881, 2
    %v9883 = vmax.f32 %v9881, %v9882
    %v9884 = vrot.slane %v9883, 1
    %v9885 = vmax.f32 %v9883, %v9884
    %v9886 = vsel %vm8163, %v7870, -inf
    %v9887 = vrot.slane %v9886, 4
    %v9888 = vmax.f32 %v9886, %v9887
    %v9889 = vrot.slane %v9888, 2
    %v9890 = vmax.f32 %v9888, %v9889
    %v9891 = vrot.slane %v9890, 1
    %v9892 = vmax.f32 %v9890, %v9891
    %v9893 = vsel %vm8163, %v7872, -inf
    %v9894 = vrot.slane %v9893, 4
    %v9895 = vmax.f32 %v9893, %v9894
    %v9896 = vrot.slane %v9895, 2
    %v9897 = vmax.f32 %v9895, %v9896
    %v9898 = vrot.slane %v9897, 1
    %v9899 = vmax.f32 %v9897, %v9898
    %v9900 = vsel %vm8163, %v7880, -inf
    %v9901 = vrot.slane %v9900, 4
    %v9902 = vmax.f32 %v9900, %v9901
    %v9903 = vrot.slane %v9902, 2
    %v9904 = vmax.f32 %v9902, %v9903
    %v9905 = vrot.slane %v9904, 1
    %v9906 = vmax.f32 %v9904, %v9905
    %v9907 = vsel %vm8163, %v7888, -inf
    %v9908 = vrot.slane %v9907, 4
    %v9909 = vmax.f32 %v9907, %v9908
    %v9910 = vrot.slane %v9909, 2
    %v9911 = vmax.f32 %v9909, %v9910
    %v9912 = vrot.slane %v9911, 1
    %v9913 = vmax.f32 %v9911, %v9912
    %v9914 = vsel %vm8163, %v7887, -inf
    %v9915 = vrot.slane %v9914, 4
    %v9916 = vmax.f32 %v9914, %v9915
    %v9917 = vrot.slane %v9916, 2
    %v9918 = vmax.f32 %v9916, %v9917
    %v9919 = vrot.slane %v9918, 1
    %v9920 = vmax.f32 %v9918, %v9919
    %v9921 = vsel %vm8163, %v7889, -inf
    %v9922 = vrot.slane %v9921, 4
    %v9923 = vmax.f32 %v9921, %v9922
    %v9924 = vrot.slane %v9923, 2
    %v9925 = vmax.f32 %v9923, %v9924
    %v9926 = vrot.slane %v9925, 1
    %v9927 = vmax.f32 %v9925, %v9926
    %v9928 = vsel %vm8163, %v7897, -inf
    %v9929 = vrot.slane %v9928, 4
    %v9930 = vmax.f32 %v9928, %v9929
    %v9931 = vrot.slane %v9930, 2
    %v9932 = vmax.f32 %v9930, %v9931
    %v9933 = vrot.slane %v9932, 1
    %v9934 = vmax.f32 %v9932, %v9933
    %v9935 = vsel %vm8163, %v7905, -inf
    %v9936 = vrot.slane %v9935, 4
    %v9937 = vmax.f32 %v9935, %v9936
    %v9938 = vrot.slane %v9937, 2
    %v9939 = vmax.f32 %v9937, %v9938
    %v9940 = vrot.slane %v9939, 1
    %v9941 = vmax.f32 %v9939, %v9940
    %v9942 = vsel %vm8163, %v7904, -inf
    %v9943 = vrot.slane %v9942, 4
    %v9944 = vmax.f32 %v9942, %v9943
    %v9945 = vrot.slane %v9944, 2
    %v9946 = vmax.f32 %v9944, %v9945
    %v9947 = vrot.slane %v9946, 1
    %v9948 = vmax.f32 %v9946, %v9947
    %v9949 = vsel %vm8163, %v7906, -inf
    %v9950 = vrot.slane %v9949, 4
    %v9951 = vmax.f32 %v9949, %v9950
    %v9952 = vrot.slane %v9951, 2
    %v9953 = vmax.f32 %v9951, %v9952
    %v9954 = vrot.slane %v9953, 1
    %v9955 = vmax.f32 %v9953, %v9954
    %v9956 = vsel %vm2459, %v8170, -inf
    %v9957 = vsel %vm2459, %v8226, -inf
    %v9958 = vmax.f32 %v9956, %v9957
    %v9959 = vsel %vm2459, %v8177, -inf
    %v9960 = vsel %vm2459, %v8233, -inf
    %v9961 = vmax.f32 %v9959, %v9960
    %v9962 = vsel %vm2459, %v8184, -inf
    %v9963 = vsel %vm2459, %v8240, -inf
    %v9964 = vmax.f32 %v9962, %v9963
    %v9965 = vsel %vm2459, %v8191, -inf
    %v9966 = vsel %vm2459, %v8247, -inf
    %v9967 = vmax.f32 %v9965, %v9966
    %v9968 = vsel %vm2459, %v8198, -inf
    %v9969 = vsel %vm2459, %v8254, -inf
    %v9970 = vmax.f32 %v9968, %v9969
    %v9971 = vsel %vm2459, %v8205, -inf
    %v9972 = vsel %vm2459, %v8261, -inf
    %v9973 = vmax.f32 %v9971, %v9972
    %v9974 = vsel %vm2459, %v8212, -inf
    %v9975 = vsel %vm2459, %v8268, -inf
    %v9976 = vmax.f32 %v9974, %v9975
    %v9977 = vsel %vm2459, %v8219, -inf
    %v9978 = vsel %vm2459, %v8275, -inf
    %v9979 = vmax.f32 %v9977, %v9978
    %v9980 = vsel %vm2459, %v8282, -inf
    %v9981 = vsel %vm2459, %v8338, -inf
    %v9982 = vmax.f32 %v9980, %v9981
    %v9983 = vsel %vm2459, %v8289, -inf
    %v9984 = vsel %vm2459, %v8345, -inf
    %v9985 = vmax.f32 %v9983, %v9984
    %v9986 = vsel %vm2459, %v8296, -inf
    %v9987 = vsel %vm2459, %v8352, -inf
    %v9988 = vmax.f32 %v9986, %v9987
    %v9989 = vsel %vm2459, %v8303, -inf
    %v9990 = vsel %vm2459, %v8359, -inf
    %v9991 = vmax.f32 %v9989, %v9990
    %v9992 = vsel %vm2459, %v8310, -inf
    %v9993 = vsel %vm2459, %v8366, -inf
    %v9994 = vmax.f32 %v9992, %v9993
    %v9995 = vsel %vm2459, %v8317, -inf
    %v9996 = vsel %vm2459, %v8373, -inf
    %v9997 = vmax.f32 %v9995, %v9996
    %v9998 = vsel %vm2459, %v8324, -inf
    %v9999 = vsel %vm2459, %v8380, -inf
    %v10000 = vmax.f32 %v9998, %v9999
    %v10001 = vsel %vm2459, %v8331, -inf
    %v10002 = vsel %vm2459, %v8387, -inf
    %v10003 = vmax.f32 %v10001, %v10002
    %v10004 = vsel %vm2459, %v8394, -inf
    %v10005 = vsel %vm2459, %v8450, -inf
    %v10006 = vmax.f32 %v10004, %v10005
    %v10007 = vsel %vm2459, %v8401, -inf
    %v10008 = vsel %vm2459, %v8457, -inf
    %v10009 = vmax.f32 %v10007, %v10008
    %v10010 = vsel %vm2459, %v8408, -inf
    %v10011 = vsel %vm2459, %v8464, -inf
    %v10012 = vmax.f32 %v10010, %v10011
    %v10013 = vsel %vm2459, %v8415, -inf
    %v10014 = vsel %vm2459, %v8471, -inf
    %v10015 = vmax.f32 %v10013, %v10014
    %v10016 = vsel %vm2459, %v8422, -inf
    %v10017 = vsel %vm2459, %v8478, -inf
    %v10018 = vmax.f32 %v10016, %v10017
    %v10019 = vsel %vm2459, %v8429, -inf
    %v10020 = vsel %vm2459, %v8485, -inf
    %v10021 = vmax.f32 %v10019, %v10020
    %v10022 = vsel %vm2459, %v8436, -inf
    %v10023 = vsel %vm2459, %v8492, -inf
    %v10024 = vmax.f32 %v10022, %v10023
    %v10025 = vsel %vm2459, %v8443, -inf
    %v10026 = vsel %vm2459, %v8499, -inf
    %v10027 = vmax.f32 %v10025, %v10026
    %v10028 = vsel %vm2459, %v8506, -inf
    %v10029 = vsel %vm2459, %v8562, -inf
    %v10030 = vmax.f32 %v10028, %v10029
    %v10031 = vsel %vm2459, %v8513, -inf
    %v10032 = vsel %vm2459, %v8569, -inf
    %v10033 = vmax.f32 %v10031, %v10032
    %v10034 = vsel %vm2459, %v8520, -inf
    %v10035 = vsel %vm2459, %v8576, -inf
    %v10036 = vmax.f32 %v10034, %v10035
    %v10037 = vsel %vm2459, %v8527, -inf
    %v10038 = vsel %vm2459, %v8583, -inf
    %v10039 = vmax.f32 %v10037, %v10038
    %v10040 = vsel %vm2459, %v8534, -inf
    %v10041 = vsel %vm2459, %v8590, -inf
    %v10042 = vmax.f32 %v10040, %v10041
    %v10043 = vsel %vm2459, %v8541, -inf
    %v10044 = vsel %vm2459, %v8597, -inf
    %v10045 = vmax.f32 %v10043, %v10044
    %v10046 = vsel %vm2459, %v8548, -inf
    %v10047 = vsel %vm2459, %v8604, -inf
    %v10048 = vmax.f32 %v10046, %v10047
    %v10049 = vsel %vm2459, %v8555, -inf
    %v10050 = vsel %vm2459, %v8611, -inf
    %v10051 = vmax.f32 %v10049, %v10050
    %v10052 = vsel %vm2459, %v8618, -inf
    %v10053 = vsel %vm2459, %v8674, -inf
    %v10054 = vmax.f32 %v10052, %v10053
    %v10055 = vsel %vm2459, %v8625, -inf
    %v10056 = vsel %vm2459, %v8681, -inf
    %v10057 = vmax.f32 %v10055, %v10056
    %v10058 = vsel %vm2459, %v8632, -inf
    %v10059 = vsel %vm2459, %v8688, -inf
    %v10060 = vmax.f32 %v10058, %v10059
    %v10061 = vsel %vm2459, %v8639, -inf
    %v10062 = vsel %vm2459, %v8695, -inf
    %v10063 = vmax.f32 %v10061, %v10062
    %v10064 = vsel %vm2459, %v8646, -inf
    %v10065 = vsel %vm2459, %v8702, -inf
    %v10066 = vmax.f32 %v10064, %v10065
    %v10067 = vsel %vm2459, %v8653, -inf
    %v10068 = vsel %vm2459, %v8709, -inf
    %v10069 = vmax.f32 %v10067, %v10068
    %v10070 = vsel %vm2459, %v8660, -inf
    %v10071 = vsel %vm2459, %v8716, -inf
    %v10072 = vmax.f32 %v10070, %v10071
    %v10073 = vsel %vm2459, %v8667, -inf
    %v10074 = vsel %vm2459, %v8723, -inf
    %v10075 = vmax.f32 %v10073, %v10074
    %v10076 = vsel %vm2459, %v8730, -inf
    %v10077 = vsel %vm2459, %v8786, -inf
    %v10078 = vmax.f32 %v10076, %v10077
    %v10079 = vsel %vm2459, %v8737, -inf
    %v10080 = vsel %vm2459, %v8793, -inf
    %v10081 = vmax.f32 %v10079, %v10080
    %v10082 = vsel %vm2459, %v8744, -inf
    %v10083 = vsel %vm2459, %v8800, -inf
    %v10084 = vmax.f32 %v10082, %v10083
    %v10085 = vsel %vm2459, %v8751, -inf
    %v10086 = vsel %vm2459, %v8807, -inf
    %v10087 = vmax.f32 %v10085, %v10086
    %v10088 = vsel %vm2459, %v8758, -inf
    %v10089 = vsel %vm2459, %v8814, -inf
    %v10090 = vmax.f32 %v10088, %v10089
    %v10091 = vsel %vm2459, %v8765, -inf
    %v10092 = vsel %vm2459, %v8821, -inf
    %v10093 = vmax.f32 %v10091, %v10092
    %v10094 = vsel %vm2459, %v8772, -inf
    %v10095 = vsel %vm2459, %v8828, -inf
    %v10096 = vmax.f32 %v10094, %v10095
    %v10097 = vsel %vm2459, %v8779, -inf
    %v10098 = vsel %vm2459, %v8835, -inf
    %v10099 = vmax.f32 %v10097, %v10098
    %v10100 = vsel %vm2459, %v8842, -inf
    %v10101 = vsel %vm2459, %v8898, -inf
    %v10102 = vmax.f32 %v10100, %v10101
    %v10103 = vsel %vm2459, %v8849, -inf
    %v10104 = vsel %vm2459, %v8905, -inf
    %v10105 = vmax.f32 %v10103, %v10104
    %v10106 = vsel %vm2459, %v8856, -inf
    %v10107 = vsel %vm2459, %v8912, -inf
    %v10108 = vmax.f32 %v10106, %v10107
    %v10109 = vsel %vm2459, %v8863, -inf
    %v10110 = vsel %vm2459, %v8919, -inf
    %v10111 = vmax.f32 %v10109, %v10110
    %v10112 = vsel %vm2459, %v8870, -inf
    %v10113 = vsel %vm2459, %v8926, -inf
    %v10114 = vmax.f32 %v10112, %v10113
    %v10115 = vsel %vm2459, %v8877, -inf
    %v10116 = vsel %vm2459, %v8933, -inf
    %v10117 = vmax.f32 %v10115, %v10116
    %v10118 = vsel %vm2459, %v8884, -inf
    %v10119 = vsel %vm2459, %v8940, -inf
    %v10120 = vmax.f32 %v10118, %v10119
    %v10121 = vsel %vm2459, %v8891, -inf
    %v10122 = vsel %vm2459, %v8947, -inf
    %v10123 = vmax.f32 %v10121, %v10122
    %v10124 = vsel %vm2459, %v8954, -inf
    %v10125 = vsel %vm2459, %v9010, -inf
    %v10126 = vmax.f32 %v10124, %v10125
    %v10127 = vsel %vm2459, %v8961, -inf
    %v10128 = vsel %vm2459, %v9017, -inf
    %v10129 = vmax.f32 %v10127, %v10128
    %v10130 = vsel %vm2459, %v8968, -inf
    %v10131 = vsel %vm2459, %v9024, -inf
    %v10132 = vmax.f32 %v10130, %v10131
    %v10133 = vsel %vm2459, %v8975, -inf
    %v10134 = vsel %vm2459, %v9031, -inf
    %v10135 = vmax.f32 %v10133, %v10134
    %v10136 = vsel %vm2459, %v8982, -inf
    %v10137 = vsel %vm2459, %v9038, -inf
    %v10138 = vmax.f32 %v10136, %v10137
    %v10139 = vsel %vm2459, %v8989, -inf
    %v10140 = vsel %vm2459, %v9045, -inf
    %v10141 = vmax.f32 %v10139, %v10140
    %v10142 = vsel %vm2459, %v8996, -inf
    %v10143 = vsel %vm2459, %v9052, -inf
    %v10144 = vmax.f32 %v10142, %v10143
    %v10145 = vsel %vm2459, %v9003, -inf
    %v10146 = vsel %vm2459, %v9059, -inf
    %v10147 = vmax.f32 %v10145, %v10146
    %v10148 = vsel %vm2459, %v9066, -inf
    %v10149 = vsel %vm2459, %v9122, -inf
    %v10150 = vmax.f32 %v10148, %v10149
    %v10151 = vsel %vm2459, %v9073, -inf
    %v10152 = vsel %vm2459, %v9129, -inf
    %v10153 = vmax.f32 %v10151, %v10152
    %v10154 = vsel %vm2459, %v9080, -inf
    %v10155 = vsel %vm2459, %v9136, -inf
    %v10156 = vmax.f32 %v10154, %v10155
    %v10157 = vsel %vm2459, %v9087, -inf
    %v10158 = vsel %vm2459, %v9143, -inf
    %v10159 = vmax.f32 %v10157, %v10158
    %v10160 = vsel %vm2459, %v9094, -inf
    %v10161 = vsel %vm2459, %v9150, -inf
    %v10162 = vmax.f32 %v10160, %v10161
    %v10163 = vsel %vm2459, %v9101, -inf
    %v10164 = vsel %vm2459, %v9157, -inf
    %v10165 = vmax.f32 %v10163, %v10164
    %v10166 = vsel %vm2459, %v9108, -inf
    %v10167 = vsel %vm2459, %v9164, -inf
    %v10168 = vmax.f32 %v10166, %v10167
    %v10169 = vsel %vm2459, %v9115, -inf
    %v10170 = vsel %vm2459, %v9171, -inf
    %v10171 = vmax.f32 %v10169, %v10170
    %v10172 = vsel %vm2459, %v9178, -inf
    %v10173 = vsel %vm2459, %v9234, -inf
    %v10174 = vmax.f32 %v10172, %v10173
    %v10175 = vsel %vm2459, %v9185, -inf
    %v10176 = vsel %vm2459, %v9241, -inf
    %v10177 = vmax.f32 %v10175, %v10176
    %v10178 = vsel %vm2459, %v9192, -inf
    %v10179 = vsel %vm2459, %v9248, -inf
    %v10180 = vmax.f32 %v10178, %v10179
    %v10181 = vsel %vm2459, %v9199, -inf
    %v10182 = vsel %vm2459, %v9255, -inf
    %v10183 = vmax.f32 %v10181, %v10182
    %v10184 = vsel %vm2459, %v9206, -inf
    %v10185 = vsel %vm2459, %v9262, -inf
    %v10186 = vmax.f32 %v10184, %v10185
    %v10187 = vsel %vm2459, %v9213, -inf
    %v10188 = vsel %vm2459, %v9269, -inf
    %v10189 = vmax.f32 %v10187, %v10188
    %v10190 = vsel %vm2459, %v9220, -inf
    %v10191 = vsel %vm2459, %v9276, -inf
    %v10192 = vmax.f32 %v10190, %v10191
    %v10193 = vsel %vm2459, %v9227, -inf
    %v10194 = vsel %vm2459, %v9283, -inf
    %v10195 = vmax.f32 %v10193, %v10194
    %v10196 = vsel %vm2459, %v9290, -inf
    %v10197 = vsel %vm2459, %v9346, -inf
    %v10198 = vmax.f32 %v10196, %v10197
    %v10199 = vsel %vm2459, %v9297, -inf
    %v10200 = vsel %vm2459, %v9353, -inf
    %v10201 = vmax.f32 %v10199, %v10200
    %v10202 = vsel %vm2459, %v9304, -inf
    %v10203 = vsel %vm2459, %v9360, -inf
    %v10204 = vmax.f32 %v10202, %v10203
    %v10205 = vsel %vm2459, %v9311, -inf
    %v10206 = vsel %vm2459, %v9367, -inf
    %v10207 = vmax.f32 %v10205, %v10206
    %v10208 = vsel %vm2459, %v9318, -inf
    %v10209 = vsel %vm2459, %v9374, -inf
    %v10210 = vmax.f32 %v10208, %v10209
    %v10211 = vsel %vm2459, %v9325, -inf
    %v10212 = vsel %vm2459, %v9381, -inf
    %v10213 = vmax.f32 %v10211, %v10212
    %v10214 = vsel %vm2459, %v9332, -inf
    %v10215 = vsel %vm2459, %v9388, -inf
    %v10216 = vmax.f32 %v10214, %v10215
    %v10217 = vsel %vm2459, %v9339, -inf
    %v10218 = vsel %vm2459, %v9395, -inf
    %v10219 = vmax.f32 %v10217, %v10218
    %v10220 = vsel %vm2459, %v9402, -inf
    %v10221 = vsel %vm2459, %v9458, -inf
    %v10222 = vmax.f32 %v10220, %v10221
    %v10223 = vsel %vm2459, %v9409, -inf
    %v10224 = vsel %vm2459, %v9465, -inf
    %v10225 = vmax.f32 %v10223, %v10224
    %v10226 = vsel %vm2459, %v9416, -inf
    %v10227 = vsel %vm2459, %v9472, -inf
    %v10228 = vmax.f32 %v10226, %v10227
    %v10229 = vsel %vm2459, %v9423, -inf
    %v10230 = vsel %vm2459, %v9479, -inf
    %v10231 = vmax.f32 %v10229, %v10230
    %v10232 = vsel %vm2459, %v9430, -inf
    %v10233 = vsel %vm2459, %v9486, -inf
    %v10234 = vmax.f32 %v10232, %v10233
    %v10235 = vsel %vm2459, %v9437, -inf
    %v10236 = vsel %vm2459, %v9493, -inf
    %v10237 = vmax.f32 %v10235, %v10236
    %v10238 = vsel %vm2459, %v9444, -inf
    %v10239 = vsel %vm2459, %v9500, -inf
    %v10240 = vmax.f32 %v10238, %v10239
    %v10241 = vsel %vm2459, %v9451, -inf
    %v10242 = vsel %vm2459, %v9507, -inf
    %v10243 = vmax.f32 %v10241, %v10242
    %v10244 = vsel %vm2459, %v9514, -inf
    %v10245 = vsel %vm2459, %v9570, -inf
    %v10246 = vmax.f32 %v10244, %v10245
    %v10247 = vsel %vm2459, %v9521, -inf
    %v10248 = vsel %vm2459, %v9577, -inf
    %v10249 = vmax.f32 %v10247, %v10248
    %v10250 = vsel %vm2459, %v9528, -inf
    %v10251 = vsel %vm2459, %v9584, -inf
    %v10252 = vmax.f32 %v10250, %v10251
    %v10253 = vsel %vm2459, %v9535, -inf
    %v10254 = vsel %vm2459, %v9591, -inf
    %v10255 = vmax.f32 %v10253, %v10254
    %v10256 = vsel %vm2459, %v9542, -inf
    %v10257 = vsel %vm2459, %v9598, -inf
    %v10258 = vmax.f32 %v10256, %v10257
    %v10259 = vsel %vm2459, %v9549, -inf
    %v10260 = vsel %vm2459, %v9605, -inf
    %v10261 = vmax.f32 %v10259, %v10260
    %v10262 = vsel %vm2459, %v9556, -inf
    %v10263 = vsel %vm2459, %v9612, -inf
    %v10264 = vmax.f32 %v10262, %v10263
    %v10265 = vsel %vm2459, %v9563, -inf
    %v10266 = vsel %vm2459, %v9619, -inf
    %v10267 = vmax.f32 %v10265, %v10266
    %v10268 = vsel %vm2459, %v9626, -inf
    %v10269 = vsel %vm2459, %v9682, -inf
    %v10270 = vmax.f32 %v10268, %v10269
    %v10271 = vsel %vm2459, %v9633, -inf
    %v10272 = vsel %vm2459, %v9689, -inf
    %v10273 = vmax.f32 %v10271, %v10272
    %v10274 = vsel %vm2459, %v9640, -inf
    %v10275 = vsel %vm2459, %v9696, -inf
    %v10276 = vmax.f32 %v10274, %v10275
    %v10277 = vsel %vm2459, %v9647, -inf
    %v10278 = vsel %vm2459, %v9703, -inf
    %v10279 = vmax.f32 %v10277, %v10278
    %v10280 = vsel %vm2459, %v9654, -inf
    %v10281 = vsel %vm2459, %v9710, -inf
    %v10282 = vmax.f32 %v10280, %v10281
    %v10283 = vsel %vm2459, %v9661, -inf
    %v10284 = vsel %vm2459, %v9717, -inf
    %v10285 = vmax.f32 %v10283, %v10284
    %v10286 = vsel %vm2459, %v9668, -inf
    %v10287 = vsel %vm2459, %v9724, -inf
    %v10288 = vmax.f32 %v10286, %v10287
    %v10289 = vsel %vm2459, %v9675, -inf
    %v10290 = vsel %vm2459, %v9731, -inf
    %v10291 = vmax.f32 %v10289, %v10290
    %v10292 = vsel %vm2459, %v9738, -inf
    %v10293 = vsel %vm2459, %v9794, -inf
    %v10294 = vmax.f32 %v10292, %v10293
    %v10295 = vsel %vm2459, %v9745, -inf
    %v10296 = vsel %vm2459, %v9801, -inf
    %v10297 = vmax.f32 %v10295, %v10296
    %v10298 = vsel %vm2459, %v9752, -inf
    %v10299 = vsel %vm2459, %v9808, -inf
    %v10300 = vmax.f32 %v10298, %v10299
    %v10301 = vsel %vm2459, %v9759, -inf
    %v10302 = vsel %vm2459, %v9815, -inf
    %v10303 = vmax.f32 %v10301, %v10302
    %v10304 = vsel %vm2459, %v9766, -inf
    %v10305 = vsel %vm2459, %v9822, -inf
    %v10306 = vmax.f32 %v10304, %v10305
    %v10307 = vsel %vm2459, %v9773, -inf
    %v10308 = vsel %vm2459, %v9829, -inf
    %v10309 = vmax.f32 %v10307, %v10308
    %v10310 = vsel %vm2459, %v9780, -inf
    %v10311 = vsel %vm2459, %v9836, -inf
    %v10312 = vmax.f32 %v10310, %v10311
    %v10313 = vsel %vm2459, %v9787, -inf
    %v10314 = vsel %vm2459, %v9843, -inf
    %v10315 = vmax.f32 %v10313, %v10314
    %v10316 = vsel %vm2459, %v9850, -inf
    %v10317 = vsel %vm2459, %v9906, -inf
    %v10318 = vmax.f32 %v10316, %v10317
    %v10319 = vsel %vm2459, %v9857, -inf
    %v10320 = vsel %vm2459, %v9913, -inf
    %v10321 = vmax.f32 %v10319, %v10320
    %v10322 = vsel %vm2459, %v9864, -inf
    %v10323 = vsel %vm2459, %v9920, -inf
    %v10324 = vmax.f32 %v10322, %v10323
    %v10325 = vsel %vm2459, %v9871, -inf
    %v10326 = vsel %vm2459, %v9927, -inf
    %v10327 = vmax.f32 %v10325, %v10326
    %v10328 = vsel %vm2459, %v9878, -inf
    %v10329 = vsel %vm2459, %v9934, -inf
    %v10330 = vmax.f32 %v10328, %v10329
    %v10331 = vsel %vm2459, %v9885, -inf
    %v10332 = vsel %vm2459, %v9941, -inf
    %v10333 = vmax.f32 %v10331, %v10332
    %v10334 = vsel %vm2459, %v9892, -inf
    %v10335 = vsel %vm2459, %v9948, -inf
    %v10336 = vmax.f32 %v10334, %v10335
    %v10337 = vsel %vm2459, %v9899, -inf
    %v10338 = vsel %vm2459, %v9955, -inf
    %v10339 = vmax.f32 %v10337, %v10338
    %vm10468 = vcmask 1041409
    %v10469 = vsel %vm10468, %v9961, %v9958
    %vm10470 = vcmask 1042434
    %v10471 = vsel %vm10470, %v9964, %v10469
    %vm10472 = vcmask 1043459
    %v10473 = vsel %vm10472, %v9967, %v10471
    %vm10474 = vcmask 1044484
    %v10475 = vsel %vm10474, %v9970, %v10473
    %vm10476 = vcmask 1045509
    %v10477 = vsel %vm10476, %v9973, %v10475
    %vm10478 = vcmask 1046534
    %v10479 = vsel %vm10478, %v9976, %v10477
    %vm10480 = vcmask 1047559
    %v10481 = vsel %vm10480, %v9979, %v10479
    %v10482 = vsel %vm10468, %v9985, %v9982
    %v10483 = vsel %vm10470, %v9988, %v10482
    %v10484 = vsel %vm10472, %v9991, %v10483
    %v10485 = vsel %vm10474, %v9994, %v10484
    %v10486 = vsel %vm10476, %v9997, %v10485
    %v10487 = vsel %vm10478, %v10000, %v10486
    %v10488 = vsel %vm10480, %v10003, %v10487
    %v10489 = vsel %vm10468, %v10009, %v10006
    %v10490 = vsel %vm10470, %v10012, %v10489
    %v10491 = vsel %vm10472, %v10015, %v10490
    %v10492 = vsel %vm10474, %v10018, %v10491
    %v10493 = vsel %vm10476, %v10021, %v10492
    %v10494 = vsel %vm10478, %v10024, %v10493
    %v10495 = vsel %vm10480, %v10027, %v10494
    %v10496 = vsel %vm10468, %v10033, %v10030
    %v10497 = vsel %vm10470, %v10036, %v10496
    %v10498 = vsel %vm10472, %v10039, %v10497
    %v10499 = vsel %vm10474, %v10042, %v10498
    %v10500 = vsel %vm10476, %v10045, %v10499
    %v10501 = vsel %vm10478, %v10048, %v10500
    %v10502 = vsel %vm10480, %v10051, %v10501
    %v10503 = vsel %vm10468, %v10057, %v10054
    %v10504 = vsel %vm10470, %v10060, %v10503
    %v10505 = vsel %vm10472, %v10063, %v10504
    %v10506 = vsel %vm10474, %v10066, %v10505
    %v10507 = vsel %vm10476, %v10069, %v10506
    %v10508 = vsel %vm10478, %v10072, %v10507
    %v10509 = vsel %vm10480, %v10075, %v10508
    %v10510 = vsel %vm10468, %v10081, %v10078
    %v10511 = vsel %vm10470, %v10084, %v10510
    %v10512 = vsel %vm10472, %v10087, %v10511
    %v10513 = vsel %vm10474, %v10090, %v10512
    %v10514 = vsel %vm10476, %v10093, %v10513
    %v10515 = vsel %vm10478, %v10096, %v10514
    %v10516 = vsel %vm10480, %v10099, %v10515
    %v10517 = vsel %vm10468, %v10105, %v10102
    %v10518 = vsel %vm10470, %v10108, %v10517
    %v10519 = vsel %vm10472, %v10111, %v10518
    %v10520 = vsel %vm10474, %v10114, %v10519
    %v10521 = vsel %vm10476, %v10117, %v10520
    %v10522 = vsel %vm10478, %v10120, %v10521
    %v10523 = vsel %vm10480, %v10123, %v10522
    %v10524 = vsel %vm10468, %v10129, %v10126
    %v10525 = vsel %vm10470, %v10132, %v10524
    %v10526 = vsel %vm10472, %v10135, %v10525
    %v10527 = vsel %vm10474, %v10138, %v10526
    %v10528 = vsel %vm10476, %v10141, %v10527
    %v10529 = vsel %vm10478, %v10144, %v10528
    %v10530 = vsel %vm10480, %v10147, %v10529
    %v10531 = vsel %vm10468, %v10153, %v10150
    %v10532 = vsel %vm10470, %v10156, %v10531
    %v10533 = vsel %vm10472, %v10159, %v10532
    %v10534 = vsel %vm10474, %v10162, %v10533
    %v10535 = vsel %vm10476, %v10165, %v10534
    %v10536 = vsel %vm10478, %v10168, %v10535
    %v10537 = vsel %vm10480, %v10171, %v10536
    %v10538 = vsel %vm10468, %v10177, %v10174
    %v10539 = vsel %vm10470, %v10180, %v10538
    %v10540 = vsel %vm10472, %v10183, %v10539
    %v10541 = vsel %vm10474, %v10186, %v10540
    %v10542 = vsel %vm10476, %v10189, %v10541
    %v10543 = vsel %vm10478, %v10192, %v10542
    %v10544 = vsel %vm10480, %v10195, %v10543
    %v10545 = vsel %vm10468, %v10201, %v10198
    %v10546 = vsel %vm10470, %v10204, %v10545
    %v10547 = vsel %vm10472, %v10207, %v10546
    %v10548 = vsel %vm10474, %v10210, %v10547
    %v10549 = vsel %vm10476, %v10213, %v10548
    %v10550 = vsel %vm10478, %v10216, %v10549
    %v10551 = vsel %vm10480, %v10219, %v10550
    %v10552 = vsel %vm10468, %v10225, %v10222
    %v10553 = vsel %vm10470, %v10228, %v10552
    %v10554 = vsel %vm10472, %v10231, %v10553
    %v10555 = vsel %vm10474, %v10234, %v10554
    %v10556 = vsel %vm10476, %v10237, %v10555
    %v10557 = vsel %vm10478, %v10240, %v10556
    %v10558 = vsel %vm10480, %v10243, %v10557
    %v10559 = vsel %vm10468, %v10249, %v10246
    %v10560 = vsel %vm10470, %v10252, %v10559
    %v10561 = vsel %vm10472, %v10255, %v10560
    %v10562 = vsel %vm10474, %v10258, %v10561
    %v10563 = vsel %vm10476, %v10261, %v10562
    %v10564 = vsel %vm10478, %v10264, %v10563
    %v10565 = vsel %vm10480, %v10267, %v10564
    %v10566 = vsel %vm10468, %v10273, %v10270
    %v10567 = vsel %vm10470, %v10276, %v10566
    %v10568 = vsel %vm10472, %v10279, %v10567
    %v10569 = vsel %vm10474, %v10282, %v10568
    %v10570 = vsel %vm10476, %v10285, %v10569
    %v10571 = vsel %vm10478, %v10288, %v10570
    %v10572 = vsel %vm10480, %v10291, %v10571
    %v10573 = vsel %vm10468, %v10297, %v10294
    %v10574 = vsel %vm10470, %v10300, %v10573
    %v10575 = vsel %vm10472, %v10303, %v10574
    %v10576 = vsel %vm10474, %v10306, %v10575
    %v10577 = vsel %vm10476, %v10309, %v10576
    %v10578 = vsel %vm10478, %v10312, %v10577
    %v10579 = vsel %vm10480, %v10315, %v10578
    %v10580 = vsel %vm10468, %v10321, %v10318
    %v10581 = vsel %vm10470, %v10324, %v10580
    %v10582 = vsel %vm10472, %v10327, %v10581
    %v10583 = vsel %vm10474, %v10330, %v10582
    %v10584 = vsel %vm10476, %v10333, %v10583
    %v10585 = vsel %vm10478, %v10336, %v10584
    %v10586 = vsel %vm10480, %v10339, %v10585
    %10603 = vst.msk [vmem:[#allocation2] sm:$0xff] %vm2459, %v10481
    %10604 = vst.msk [vmem:[#allocation2 + $0x8] sm:$0xff] %vm2459, %v10488
    %10605 = vst.msk [vmem:[#allocation2 + $0x10] sm:$0xff] %vm2459, %v10495
    %10606 = vst.msk [vmem:[#allocation2 + $0x18] sm:$0xff] %vm2459, %v10502
    %10607 = vst.msk [vmem:[#allocation2 + $0x20] sm:$0xff] %vm2459, %v10509
    %10608 = vst.msk [vmem:[#allocation2 + $0x28] sm:$0xff] %vm2459, %v10516
    %10609 = vst.msk [vmem:[#allocation2 + $0x30] sm:$0xff] %vm2459, %v10523
    %10610 = vst.msk [vmem:[#allocation2 + $0x38] sm:$0xff] %vm2459, %v10530
    %10611 = vst.msk [vmem:[#allocation2 + $0x40] sm:$0xff] %vm2459, %v10537
    %10612 = vst.msk [vmem:[#allocation2 + $0x48] sm:$0xff] %vm2459, %v10544
    %10613 = vst.msk [vmem:[#allocation2 + $0x50] sm:$0xff] %vm2459, %v10551
    %10614 = vst.msk [vmem:[#allocation2 + $0x58] sm:$0xff] %vm2459, %v10558
    %10615 = vst.msk [vmem:[#allocation2 + $0x60] sm:$0xff] %vm2459, %v10565
    %10616 = vst.msk [vmem:[#allocation2 + $0x68] sm:$0xff] %vm2459, %v10572
    %10617 = vst.msk [vmem:[#allocation2 + $0x70] sm:$0xff] %vm2459, %v10579
    %10618 = vst.msk [vmem:[#allocation2 + $0x78] sm:$0xff] %vm2459, %v10586
    // Predicated region
    $region38: #{encoder_block_forward.1} parent=1 // pred_check
      _
    $region39: #{encoder_block_forward.1} parent=1 // pred_check_branch
      %10620 = sbr.rel (0) target = $region41
    $region40: #{encoder_block_forward.1} parent=1 // pred_region
      %s10622 = ssub.s32 2048, 2048
      %10623 = vsyncadd [#allocation3], %s10622
      %s10624 = sshll.u32 [#allocation2], 4
      %s10625 = int_to_ptr.vmem [resolvable:$true] %s10624
      %10630 = dma.vmem_to_hbm [thread:$0]  %s10625, 2048, %s9, [#allocation3], 128, 128, 8
    $region41: #{encoder_block_forward.1} parent=1 // pred_fallthru
      _
    // Predicated region
    $region42: #{encoder_block_forward.1} parent=1 // pred_check
      _
    $region43: #{encoder_block_forward.1} parent=1 // pred_check_branch
      %10632 = sbr.rel (0) target = $region45
    $region44: #{encoder_block_forward.1} parent=1 // pred_region
      %10633 = dma.done [#allocation3], 2048
    $region45: #{encoder_block_forward.1} parent=1 // pred_fallthru
      _
    %10634 = vsyncpa [#allocation3], 1

</llo_original>
